<compile_context>
chip_gen: v7x
topology: tpu7x:2x2x1
jax: 0.10.0
libtpu: 0.0.40
codegen_flags: <defaults>
</compile_context>

<pallas_src>
import functools

import jax
import jax.numpy as jnp
from jax import lax
from jax.experimental import pallas as pl
from jax.experimental.pallas import tpu as pltpu

_HIGHEST = lax.Precision.HIGHEST


def _lgag_kernel(c0_ref, wg_ref, wx_ref, mask_ref, b2_ref, w1_ref,
                 g_ref, x_ref, o_ref, *, W):
    """Fused LGAG forward for one image (spatial flattened to H*W lanes).

    c0_ref   : (1,)       f32 SMEM  -- folded a1*conv1_bias + b1
    wg_ref   : (9, C, C)  f32 VMEM  -- per-tap block-diag grouped taps, BN-folded
    wx_ref   : (9, C, C)  f32 VMEM
    mask_ref : (9, 1, HW) f32 VMEM  -- 0/1 zero-padding halo masks per tap
    b2_ref   : (C, 1)     f32 VMEM  -- 2*b (shared BN shift appears twice)
    w1_ref   : (1, C)     f32 VMEM  -- a1 * conv1 weight
    g_ref    : (C, HW)    VMEM      -- unpadded input g
    x_ref    : (C, HW)    VMEM      -- unpadded input x
    o_ref    : (C, HW)    VMEM      -- output x * attn
    """
    C, HW = o_ref.shape
    gv = g_ref[...].astype(jnp.float32)
    xv = x_ref[...].astype(jnp.float32)

    acc = jnp.zeros((C, HW), jnp.float32)
    for kh in range(3):
        for kw in range(3):
            t = kh * 3 + kw
            d = (kh - 1) * W + (kw - 1)          # flattened offset of this tap
            if d == 0:
                tg, tx = gv, xv                  # centre tap: no shift, mask is all-ones
            else:
                m = mask_ref[t]                  # (1, HW), broadcast over channels
                sh = (-d) % HW                   # out[p] = in[p + d]
                tg = pltpu.roll(gv, sh, 1) * m
                tx = pltpu.roll(xv, sh, 1) * m
            # Block-diagonal grouped channel mixing on the MXU (shared tap for all oc).
            acc = acc + jnp.dot(wg_ref[t], tg,
                                preferred_element_type=jnp.float32,
                                precision=_HIGHEST)
            acc = acc + jnp.dot(wx_ref[t], tx,
                                preferred_element_type=jnp.float32,
                                precision=_HIGHEST)

    # relu(bn(conv_g) + bn(conv_x)) == relu(acc + 2*b) since a is folded into the taps.
    s = jnp.maximum(acc + b2_ref[...], 0.0)
    # 1x1 conv (C -> 1) + bn1, both folded into w1 / c0.
    z = jnp.dot(w1_ref[...], s, preferred_element_type=jnp.float32,
                precision=_HIGHEST) + c0_ref[0]
    attn = pl.reciprocal(1.0 + jnp.exp(-z), approx=False)     # sigmoid (exp on EUP)
    o_ref[...] = (xv * attn).astype(o_ref.dtype)               # aligned epilogue


def _expand_grouped(w, groups):
    """(C, C//groups, 3, 3) grouped-conv weights -> dense block-diag (9, C, C)."""
    C, cpg = w.shape[0], w.shape[1]
    ic_of = (jnp.arange(C)[:, None] // cpg) * cpg + jnp.arange(cpg)[None, :]  # (C, cpg)
    onehot = jax.nn.one_hot(ic_of, C, dtype=w.dtype)                          # (C, cpg, C)
    full = jnp.einsum('ojhw,ojc->ochw', w, onehot, precision=_HIGHEST)        # (oc, ic, kh, kw)
    return jnp.transpose(full, (2, 3, 0, 1)).reshape(9, C, C)


def _tap_masks(H, W):
    """0/1 validity masks per 3x3 tap on the flattened H*W axis (zero padding)."""
    rows = jnp.arange(H)
    cols = jnp.arange(W)
    out = []
    for kh in range(3):
        for kw in range(3):
            dh, dw = kh - 1, kw - 1
            rok = (rows + dh >= 0) & (rows + dh < H)
            cok = (cols + dw >= 0) & (cols + dw < W)
            out.append((rok[:, None] & cok[None, :]).reshape(1, H * W))
    return jnp.stack(out).astype(jnp.float32)                                 # (9, 1, HW)


def lgag_forward(g, x, wg, wx,
                 bn_gamma, bn_beta, bn_mean, bn_var,
                 conv1_w, conv1_b,
                 bn1_gamma, bn1_beta, bn1_mean, bn1_var,
                 *, groups=4, eps=1e-5):
    """LGAG.forward (inference-mode BN). g/x are NCHW (f32 or bf16)."""
    N, C, H, W = x.shape
    HW = H * W
    f32 = jnp.float32

    # Fold the BatchNorms into the tiny weights on the host (free scalar math).
    a = bn_gamma.astype(f32) / jnp.sqrt(bn_var.astype(f32) + eps)
    b = bn_beta.astype(f32) - bn_mean.astype(f32) * a
    a1 = bn1_gamma.astype(f32) / jnp.sqrt(bn1_var.astype(f32) + eps)
    b1 = bn1_beta.astype(f32) - bn1_mean.astype(f32) * a1

    wg_mat = a[None, :, None] * _expand_grouped(wg.astype(f32), groups)   # (9, C, C)
    wx_mat = a[None, :, None] * _expand_grouped(wx.astype(f32), groups)   # (9, C, C)
    b2 = (2.0 * b).reshape(C, 1)
    w1row = a1 * conv1_w.reshape(1, C).astype(f32)                        # (1, C)
    c0 = a1 * conv1_b.astype(f32).reshape(1) + b1.reshape(1)              # (1,)
    masks = _tap_masks(H, W)                                              # (9, 1, HW)

    # Metadata-only reshapes (no transpose / pad / copy): lane axis becomes H*W.
    g2 = g.reshape(N, C, HW)
    x2 = x.reshape(N, C, HW)

    smem_spec = pl.BlockSpec(memory_space=pltpu.MemorySpace.SMEM)
    in_specs = [
        smem_spec,                                           # c0 (scalar)
        pl.BlockSpec((9, C, C), lambda n: (0, 0, 0)),        # wg_mat
        pl.BlockSpec((9, C, C), lambda n: (0, 0, 0)),        # wx_mat
        pl.BlockSpec((9, 1, HW), lambda n: (0, 0, 0)),       # halo masks
        pl.BlockSpec((C, 1), lambda n: (0, 0)),              # 2*b
        pl.BlockSpec((1, C), lambda n: (0, 0)),              # folded 1x1 weight
        pl.BlockSpec((None, C, HW), lambda n: (n, 0, 0)),    # g (per image)
        pl.BlockSpec((None, C, HW), lambda n: (n, 0, 0)),    # x (per image)
    ]
    out_specs = pl.BlockSpec((None, C, HW), lambda n: (n, 0, 0))

    # Advisory cost model for XLA's scheduler.
    flops = int(N * (36 * C * C * HW + 22 * C * HW + 4 * HW))
    bytes_accessed = int(4 * (3 * N * C * HW + 18 * C * C + 9 * HW + 2 * C + 2))
    cost = pl.CostEstimate(flops=flops, transcendentals=int(N * HW),
                           bytes_accessed=bytes_accessed)

    # Explicit VMEM budget: double-buffered 2 inputs + 1 output + parameters,
    # clamped to 64 MiB so it is valid on every generation (incl. v7x).
    block_bytes = 4 * C * HW
    param_bytes = 4 * (18 * C * C + 9 * HW + 2 * C + 2)
    vmem_limit = int(min(64 * 2 ** 20,
                         max(8 * 2 ** 20, 8 * block_bytes + 2 * param_bytes)))

    kernel = functools.partial(_lgag_kernel, W=W)
    out = pl.pallas_call(
        kernel,
        out_shape=jax.ShapeDtypeStruct((N, C, HW), x.dtype),
        grid=(N,),
        in_specs=in_specs,
        out_specs=out_specs,
        compiler_params=pltpu.CompilerParams(
            dimension_semantics=("parallel",),
            vmem_limit_bytes=vmem_limit),
        cost_estimate=cost,
    )(c0, wg_mat, wx_mat, masks, b2, w1row, g2, x2)
    return out.reshape(N, C, H, W)


def _reference(g, x, wg, wx,
               bn_gamma, bn_beta, bn_mean, bn_var,
               conv1_w, conv1_b,
               bn1_gamma, bn1_beta, bn1_mean, bn1_var,
               *, groups=4, eps=1e-5):
    """Plain-JAX reference of LGAG.forward (inference-mode BN)."""
    dn = ('NCHW', 'OIHW', 'NCHW')

    def conv3x3(inp, w):
        return jax.lax.conv_general_dilated(
            inp, w, window_strides=(1, 1), padding=((1, 1), (1, 1)),
            dimension_numbers=dn, feature_group_count=groups,
            precision=_HIGHEST)

    a = bn_gamma / jnp.sqrt(bn_var + eps)
    b = bn_beta - bn_mean * a
    g_bn = a[None, :, None, None] * conv3x3(g, wg) + b[None, :, None, None]
    x_bn = a[None, :, None, None] * conv3x3(x, wx) + b[None, :, None, None]
    attn = jnp.maximum(g_bn + x_bn, 0.0)

    C = x.shape[1]
    z = jnp.einsum('nchw,c->nhw', attn, conv1_w.reshape(C),
                   precision=_HIGHEST)[:, None, :, :]
    z = z + conv1_b.reshape(1, 1, 1, 1)
    a1 = bn1_gamma / jnp.sqrt(bn1_var + eps)
    b1 = bn1_beta - bn1_mean * a1
    z = a1.reshape(1, 1, 1, 1) * z + b1.reshape(1, 1, 1, 1)
    attn = jax.nn.sigmoid(z)
    return x * attn


if __name__ == "__main__":
    key = jax.random.PRNGKey(0)
    keys = jax.random.split(key, 14)

    N, C, H, W = 2, 4, 16, 16
    groups = 4
    cpg = C // groups

    g = jax.random.normal(keys[0], (N, C, H, W), jnp.float32)
    x = jax.random.normal(keys[1], (N, C, H, W), jnp.float32)

    # Grouped 3x3 conv weights (PyTorch layout: (out, in/groups, 3, 3), no bias).
    bound3 = 1.0 / ((cpg * 9) ** 0.5)
    wg = jax.random.uniform(keys[2], (C, cpg, 3, 3), jnp.float32, -bound3, bound3)
    wx = jax.random.uniform(keys[3], (C, cpg, 3, 3), jnp.float32, -bound3, bound3)

    # Shared BatchNorm2d(C) parameters / running stats.
    bn_gamma = jax.random.uniform(keys[4], (C,), jnp.float32, 0.5, 1.5)
    bn_beta = 0.1 * jax.random.normal(keys[5], (C,), jnp.float32)
    bn_mean = 0.1 * jax.random.normal(keys[6], (C,), jnp.float32)
    bn_var = jax.random.uniform(keys[7], (C,), jnp.float32, 0.5, 1.5)

    # conv1: 1x1 Conv2d(C -> 1) with bias.
    bound1 = 1.0 / (C ** 0.5)
    conv1_w = jax.random.uniform(keys[8], (1, C, 1, 1), jnp.float32, -bound1, bound1)
    conv1_b = jax.random.uniform(keys[9], (1,), jnp.float32, -bound1, bound1)

    # BatchNorm2d(1).
    bn1_gamma = jax.random.uniform(keys[10], (1,), jnp.float32, 0.5, 1.5)
    bn1_beta = 0.1 * jax.random.normal(keys[11], (1,), jnp.float32)
    bn1_mean = 0.1 * jax.random.normal(keys[12], (1,), jnp.float32)
    bn1_var = jax.random.uniform(keys[13], (1,), jnp.float32, 0.5, 1.5)

    y = lgag_forward(g, x, wg, wx,
                     bn_gamma, bn_beta, bn_mean, bn_var,
                     conv1_w, conv1_b,
                     bn1_gamma, bn1_beta, bn1_mean, bn1_var,
                     groups=groups)
    jax.block_until_ready(y)

    ref = _reference(g, x, wg, wx,
                     bn_gamma, bn_beta, bn_mean, bn_var,
                     conv1_w, conv1_b,
                     bn1_gamma, bn1_beta, bn1_mean, bn1_var,
                     groups=groups)

    assert y.shape == (N, C, H, W)
    assert jnp.allclose(y, ref, atol=1e-4, rtol=1e-4), "mismatch vs reference"

    print("KERNEL_OK")
</pallas_src>

<mosaic_0001>
module attributes {stable_mosaic.version = 11 : i64} {
  func.func @_lgag_kernel(%arg0: i32, %arg1: memref<1xf32, #tpu.memory_space<smem>>, %arg2: memref<9x4x4xf32, #tpu.memory_space<vmem>>, %arg3: memref<9x4x4xf32, #tpu.memory_space<vmem>>, %arg4: memref<9x1x256xf32, #tpu.memory_space<vmem>>, %arg5: memref<4x1xf32, #tpu.memory_space<vmem>>, %arg6: memref<1x4xf32, #tpu.memory_space<vmem>>, %arg7: memref<1x4x256xf32, #tpu.memory_space<vmem>>, %arg8: memref<1x4x256xf32, #tpu.memory_space<vmem>>, %arg9: memref<1x4x256xf32, #tpu.memory_space<vmem>>) attributes {dimension_semantics = [#tpu.dimension_semantics<parallel>], iteration_bounds = array<i64: 2>, scalar_prefetch = 0 : i64, scratch_operands = 0 : i64, tpu.core_type = #tpu.core_type<tc>, window_params = [{transform_indices = @transform_0, window_bounds = array<i64: 1>}, {pipeline_mode = #tpu.pipeline_mode<synchronous>, transform_indices = @transform_1, window_bounds = array<i64: 9, 4, 4>}, {pipeline_mode = #tpu.pipeline_mode<synchronous>, transform_indices = @transform_2, window_bounds = array<i64: 9, 4, 4>}, {pipeline_mode = #tpu.pipeline_mode<synchronous>, transform_indices = @transform_3, window_bounds = array<i64: 9, 1, 256>}, {pipeline_mode = #tpu.pipeline_mode<synchronous>, transform_indices = @transform_4, window_bounds = array<i64: 4, 1>}, {pipeline_mode = #tpu.pipeline_mode<synchronous>, transform_indices = @transform_5, window_bounds = array<i64: 1, 4>}, {transform_indices = @transform_6, window_bounds = array<i64: 1, 4, 256>}, {transform_indices = @transform_7, window_bounds = array<i64: 1, 4, 256>}, {transform_indices = @transform_8, window_bounds = array<i64: 1, 4, 256>}]} {
    %c0 = arith.constant 0 : index
    %c0_0 = arith.constant 0 : index
    %c0_1 = arith.constant 0 : index
    %0 = vector.load %arg7[%c0, %c0_0, %c0_1] : memref<1x4x256xf32, #tpu.memory_space<vmem>>, vector<1x4x256xf32>
    %1 = vector.shape_cast %0 : vector<1x4x256xf32> to vector<4x256xf32>
    %c0_2 = arith.constant 0 : index
    %c0_3 = arith.constant 0 : index
    %c0_4 = arith.constant 0 : index
    %2 = vector.load %arg8[%c0_2, %c0_3, %c0_4] : memref<1x4x256xf32, #tpu.memory_space<vmem>>, vector<1x4x256xf32>
    %3 = vector.shape_cast %2 : vector<1x4x256xf32> to vector<4x256xf32>
    %cst = arith.constant 0.000000e+00 : f32
    %4 = vector.broadcast %cst : f32 to vector<4x256xf32>
    %c0_5 = arith.constant 0 : index
    %c0_6 = arith.constant 0 : index
    %c0_7 = arith.constant 0 : index
    %5 = vector.load %arg4[%c0_5, %c0_6, %c0_7] : memref<9x1x256xf32, #tpu.memory_space<vmem>>, vector<1x1x256xf32>
    %6 = vector.shape_cast %5 : vector<1x1x256xf32> to vector<1x256xf32>
    %c17_i32 = arith.constant 17 : i32
    %7 = tpu.dynamic_rotate %1 by %c17_i32 dim 1 : vector<4x256xf32>, i32 -> vector<4x256xf32>
    %8 = vector.broadcast %6 : vector<1x256xf32> to vector<4x256xf32>
    %9 = arith.mulf %7, %8 : vector<4x256xf32>
    %c17_i32_8 = arith.constant 17 : i32
    %10 = tpu.dynamic_rotate %3 by %c17_i32_8 dim 1 : vector<4x256xf32>, i32 -> vector<4x256xf32>
    %11 = vector.broadcast %6 : vector<1x256xf32> to vector<4x256xf32>
    %12 = arith.mulf %10, %11 : vector<4x256xf32>
    %c0_9 = arith.constant 0 : index
    %c0_10 = arith.constant 0 : index
    %c0_11 = arith.constant 0 : index
    %13 = vector.load %arg2[%c0_9, %c0_10, %c0_11] : memref<9x4x4xf32, #tpu.memory_space<vmem>>, vector<1x4x4xf32>
    %14 = vector.shape_cast %13 : vector<1x4x4xf32> to vector<4x4xf32>
    %cst_12 = arith.constant dense<0.000000e+00> : vector<4x256xf32>
    %15 = tpu.matmul %14, %9, %cst_12 {dimension_numbers = #tpu.dot_dimension_numbers<[1], [0], [0], [1], [0, 0, 1, 1], [], []>, precision = #tpu.contract_precision<fp32>} : vector<4x4xf32>, vector<4x256xf32>, vector<4x256xf32> -> vector<4x256xf32>
    %16 = arith.addf %4, %15 : vector<4x256xf32>
    %c0_13 = arith.constant 0 : index
    %c0_14 = arith.constant 0 : index
    %c0_15 = arith.constant 0 : index
    %17 = vector.load %arg3[%c0_13, %c0_14, %c0_15] : memref<9x4x4xf32, #tpu.memory_space<vmem>>, vector<1x4x4xf32>
    %18 = vector.shape_cast %17 : vector<1x4x4xf32> to vector<4x4xf32>
    %cst_16 = arith.constant dense<0.000000e+00> : vector<4x256xf32>
    %19 = tpu.matmul %18, %12, %cst_16 {dimension_numbers = #tpu.dot_dimension_numbers<[1], [0], [0], [1], [0, 0, 1, 1], [], []>, precision = #tpu.contract_precision<fp32>} : vector<4x4xf32>, vector<4x256xf32>, vector<4x256xf32> -> vector<4x256xf32>
    %20 = arith.addf %16, %19 : vector<4x256xf32>
    %c1 = arith.constant 1 : index
    %c0_17 = arith.constant 0 : index
    %c0_18 = arith.constant 0 : index
    %21 = vector.load %arg4[%c1, %c0_17, %c0_18] : memref<9x1x256xf32, #tpu.memory_space<vmem>>, vector<1x1x256xf32>
    %22 = vector.shape_cast %21 : vector<1x1x256xf32> to vector<1x256xf32>
    %c16_i32 = arith.constant 16 : i32
    %23 = tpu.dynamic_rotate %1 by %c16_i32 dim 1 : vector<4x256xf32>, i32 -> vector<4x256xf32>
    %24 = vector.broadcast %22 : vector<1x256xf32> to vector<4x256xf32>
    %25 = arith.mulf %23, %24 : vector<4x256xf32>
    %c16_i32_19 = arith.constant 16 : i32
    %26 = tpu.dynamic_rotate %3 by %c16_i32_19 dim 1 : vector<4x256xf32>, i32 -> vector<4x256xf32>
    %27 = vector.broadcast %22 : vector<1x256xf32> to vector<4x256xf32>
    %28 = arith.mulf %26, %27 : vector<4x256xf32>
    %c1_20 = arith.constant 1 : index
    %c0_21 = arith.constant 0 : index
    %c0_22 = arith.constant 0 : index
    %29 = vector.load %arg2[%c1_20, %c0_21, %c0_22] : memref<9x4x4xf32, #tpu.memory_space<vmem>>, vector<1x4x4xf32>
    %30 = vector.shape_cast %29 : vector<1x4x4xf32> to vector<4x4xf32>
    %cst_23 = arith.constant dense<0.000000e+00> : vector<4x256xf32>
    %31 = tpu.matmul %30, %25, %cst_23 {dimension_numbers = #tpu.dot_dimension_numbers<[1], [0], [0], [1], [0, 0, 1, 1], [], []>, precision = #tpu.contract_precision<fp32>} : vector<4x4xf32>, vector<4x256xf32>, vector<4x256xf32> -> vector<4x256xf32>
    %32 = arith.addf %20, %31 : vector<4x256xf32>
    %c1_24 = arith.constant 1 : index
    %c0_25 = arith.constant 0 : index
    %c0_26 = arith.constant 0 : index
    %33 = vector.load %arg3[%c1_24, %c0_25, %c0_26] : memref<9x4x4xf32, #tpu.memory_space<vmem>>, vector<1x4x4xf32>
    %34 = vector.shape_cast %33 : vector<1x4x4xf32> to vector<4x4xf32>
    %cst_27 = arith.constant dense<0.000000e+00> : vector<4x256xf32>
    %35 = tpu.matmul %34, %28, %cst_27 {dimension_numbers = #tpu.dot_dimension_numbers<[1], [0], [0], [1], [0, 0, 1, 1], [], []>, precision = #tpu.contract_precision<fp32>} : vector<4x4xf32>, vector<4x256xf32>, vector<4x256xf32> -> vector<4x256xf32>
    %36 = arith.addf %32, %35 : vector<4x256xf32>
    %c2 = arith.constant 2 : index
    %c0_28 = arith.constant 0 : index
    %c0_29 = arith.constant 0 : index
    %37 = vector.load %arg4[%c2, %c0_28, %c0_29] : memref<9x1x256xf32, #tpu.memory_space<vmem>>, vector<1x1x256xf32>
    %38 = vector.shape_cast %37 : vector<1x1x256xf32> to vector<1x256xf32>
    %c15_i32 = arith.constant 15 : i32
    %39 = tpu.dynamic_rotate %1 by %c15_i32 dim 1 : vector<4x256xf32>, i32 -> vector<4x256xf32>
    %40 = vector.broadcast %38 : vector<1x256xf32> to vector<4x256xf32>
    %41 = arith.mulf %39, %40 : vector<4x256xf32>
    %c15_i32_30 = arith.constant 15 : i32
    %42 = tpu.dynamic_rotate %3 by %c15_i32_30 dim 1 : vector<4x256xf32>, i32 -> vector<4x256xf32>
    %43 = vector.broadcast %38 : vector<1x256xf32> to vector<4x256xf32>
    %44 = arith.mulf %42, %43 : vector<4x256xf32>
    %c2_31 = arith.constant 2 : index
    %c0_32 = arith.constant 0 : index
    %c0_33 = arith.constant 0 : index
    %45 = vector.load %arg2[%c2_31, %c0_32, %c0_33] : memref<9x4x4xf32, #tpu.memory_space<vmem>>, vector<1x4x4xf32>
    %46 = vector.shape_cast %45 : vector<1x4x4xf32> to vector<4x4xf32>
    %cst_34 = arith.constant dense<0.000000e+00> : vector<4x256xf32>
    %47 = tpu.matmul %46, %41, %cst_34 {dimension_numbers = #tpu.dot_dimension_numbers<[1], [0], [0], [1], [0, 0, 1, 1], [], []>, precision = #tpu.contract_precision<fp32>} : vector<4x4xf32>, vector<4x256xf32>, vector<4x256xf32> -> vector<4x256xf32>
    %48 = arith.addf %36, %47 : vector<4x256xf32>
    %c2_35 = arith.constant 2 : index
    %c0_36 = arith.constant 0 : index
    %c0_37 = arith.constant 0 : index
    %49 = vector.load %arg3[%c2_35, %c0_36, %c0_37] : memref<9x4x4xf32, #tpu.memory_space<vmem>>, vector<1x4x4xf32>
    %50 = vector.shape_cast %49 : vector<1x4x4xf32> to vector<4x4xf32>
    %cst_38 = arith.constant dense<0.000000e+00> : vector<4x256xf32>
    %51 = tpu.matmul %50, %44, %cst_38 {dimension_numbers = #tpu.dot_dimension_numbers<[1], [0], [0], [1], [0, 0, 1, 1], [], []>, precision = #tpu.contract_precision<fp32>} : vector<4x4xf32>, vector<4x256xf32>, vector<4x256xf32> -> vector<4x256xf32>
    %52 = arith.addf %48, %51 : vector<4x256xf32>
    %c3 = arith.constant 3 : index
    %c0_39 = arith.constant 0 : index
    %c0_40 = arith.constant 0 : index
    %53 = vector.load %arg4[%c3, %c0_39, %c0_40] : memref<9x1x256xf32, #tpu.memory_space<vmem>>, vector<1x1x256xf32>
    %54 = vector.shape_cast %53 : vector<1x1x256xf32> to vector<1x256xf32>
    %c1_i32 = arith.constant 1 : i32
    %55 = tpu.dynamic_rotate %1 by %c1_i32 dim 1 : vector<4x256xf32>, i32 -> vector<4x256xf32>
    %56 = vector.broadcast %54 : vector<1x256xf32> to vector<4x256xf32>
    %57 = arith.mulf %55, %56 : vector<4x256xf32>
    %c1_i32_41 = arith.constant 1 : i32
    %58 = tpu.dynamic_rotate %3 by %c1_i32_41 dim 1 : vector<4x256xf32>, i32 -> vector<4x256xf32>
    %59 = vector.broadcast %54 : vector<1x256xf32> to vector<4x256xf32>
    %60 = arith.mulf %58, %59 : vector<4x256xf32>
    %c3_42 = arith.constant 3 : index
    %c0_43 = arith.constant 0 : index
    %c0_44 = arith.constant 0 : index
    %61 = vector.load %arg2[%c3_42, %c0_43, %c0_44] : memref<9x4x4xf32, #tpu.memory_space<vmem>>, vector<1x4x4xf32>
    %62 = vector.shape_cast %61 : vector<1x4x4xf32> to vector<4x4xf32>
    %cst_45 = arith.constant dense<0.000000e+00> : vector<4x256xf32>
    %63 = tpu.matmul %62, %57, %cst_45 {dimension_numbers = #tpu.dot_dimension_numbers<[1], [0], [0], [1], [0, 0, 1, 1], [], []>, precision = #tpu.contract_precision<fp32>} : vector<4x4xf32>, vector<4x256xf32>, vector<4x256xf32> -> vector<4x256xf32>
    %64 = arith.addf %52, %63 : vector<4x256xf32>
    %c3_46 = arith.constant 3 : index
    %c0_47 = arith.constant 0 : index
    %c0_48 = arith.constant 0 : index
    %65 = vector.load %arg3[%c3_46, %c0_47, %c0_48] : memref<9x4x4xf32, #tpu.memory_space<vmem>>, vector<1x4x4xf32>
    %66 = vector.shape_cast %65 : vector<1x4x4xf32> to vector<4x4xf32>
    %cst_49 = arith.constant dense<0.000000e+00> : vector<4x256xf32>
    %67 = tpu.matmul %66, %60, %cst_49 {dimension_numbers = #tpu.dot_dimension_numbers<[1], [0], [0], [1], [0, 0, 1, 1], [], []>, precision = #tpu.contract_precision<fp32>} : vector<4x4xf32>, vector<4x256xf32>, vector<4x256xf32> -> vector<4x256xf32>
    %68 = arith.addf %64, %67 : vector<4x256xf32>
    %c4 = arith.constant 4 : index
    %c0_50 = arith.constant 0 : index
    %c0_51 = arith.constant 0 : index
    %69 = vector.load %arg2[%c4, %c0_50, %c0_51] : memref<9x4x4xf32, #tpu.memory_space<vmem>>, vector<1x4x4xf32>
    %70 = vector.shape_cast %69 : vector<1x4x4xf32> to vector<4x4xf32>
    %cst_52 = arith.constant dense<0.000000e+00> : vector<4x256xf32>
    %71 = tpu.matmul %70, %1, %cst_52 {dimension_numbers = #tpu.dot_dimension_numbers<[1], [0], [0], [1], [0, 0, 1, 1], [], []>, precision = #tpu.contract_precision<fp32>} : vector<4x4xf32>, vector<4x256xf32>, vector<4x256xf32> -> vector<4x256xf32>
    %72 = arith.addf %68, %71 : vector<4x256xf32>
    %c4_53 = arith.constant 4 : index
    %c0_54 = arith.constant 0 : index
    %c0_55 = arith.constant 0 : index
    %73 = vector.load %arg3[%c4_53, %c0_54, %c0_55] : memref<9x4x4xf32, #tpu.memory_space<vmem>>, vector<1x4x4xf32>
    %74 = vector.shape_cast %73 : vector<1x4x4xf32> to vector<4x4xf32>
    %cst_56 = arith.constant dense<0.000000e+00> : vector<4x256xf32>
    %75 = tpu.matmul %74, %3, %cst_56 {dimension_numbers = #tpu.dot_dimension_numbers<[1], [0], [0], [1], [0, 0, 1, 1], [], []>, precision = #tpu.contract_precision<fp32>} : vector<4x4xf32>, vector<4x256xf32>, vector<4x256xf32> -> vector<4x256xf32>
    %76 = arith.addf %72, %75 : vector<4x256xf32>
    %c5 = arith.constant 5 : index
    %c0_57 = arith.constant 0 : index
    %c0_58 = arith.constant 0 : index
    %77 = vector.load %arg4[%c5, %c0_57, %c0_58] : memref<9x1x256xf32, #tpu.memory_space<vmem>>, vector<1x1x256xf32>
    %78 = vector.shape_cast %77 : vector<1x1x256xf32> to vector<1x256xf32>
    %c255_i32 = arith.constant 255 : i32
    %79 = tpu.dynamic_rotate %1 by %c255_i32 dim 1 : vector<4x256xf32>, i32 -> vector<4x256xf32>
    %80 = vector.broadcast %78 : vector<1x256xf32> to vector<4x256xf32>
    %81 = arith.mulf %79, %80 : vector<4x256xf32>
    %c255_i32_59 = arith.constant 255 : i32
    %82 = tpu.dynamic_rotate %3 by %c255_i32_59 dim 1 : vector<4x256xf32>, i32 -> vector<4x256xf32>
    %83 = vector.broadcast %78 : vector<1x256xf32> to vector<4x256xf32>
    %84 = arith.mulf %82, %83 : vector<4x256xf32>
    %c5_60 = arith.constant 5 : index
    %c0_61 = arith.constant 0 : index
    %c0_62 = arith.constant 0 : index
    %85 = vector.load %arg2[%c5_60, %c0_61, %c0_62] : memref<9x4x4xf32, #tpu.memory_space<vmem>>, vector<1x4x4xf32>
    %86 = vector.shape_cast %85 : vector<1x4x4xf32> to vector<4x4xf32>
    %cst_63 = arith.constant dense<0.000000e+00> : vector<4x256xf32>
    %87 = tpu.matmul %86, %81, %cst_63 {dimension_numbers = #tpu.dot_dimension_numbers<[1], [0], [0], [1], [0, 0, 1, 1], [], []>, precision = #tpu.contract_precision<fp32>} : vector<4x4xf32>, vector<4x256xf32>, vector<4x256xf32> -> vector<4x256xf32>
    %88 = arith.addf %76, %87 : vector<4x256xf32>
    %c5_64 = arith.constant 5 : index
    %c0_65 = arith.constant 0 : index
    %c0_66 = arith.constant 0 : index
    %89 = vector.load %arg3[%c5_64, %c0_65, %c0_66] : memref<9x4x4xf32, #tpu.memory_space<vmem>>, vector<1x4x4xf32>
    %90 = vector.shape_cast %89 : vector<1x4x4xf32> to vector<4x4xf32>
    %cst_67 = arith.constant dense<0.000000e+00> : vector<4x256xf32>
    %91 = tpu.matmul %90, %84, %cst_67 {dimension_numbers = #tpu.dot_dimension_numbers<[1], [0], [0], [1], [0, 0, 1, 1], [], []>, precision = #tpu.contract_precision<fp32>} : vector<4x4xf32>, vector<4x256xf32>, vector<4x256xf32> -> vector<4x256xf32>
    %92 = arith.addf %88, %91 : vector<4x256xf32>
    %c6 = arith.constant 6 : index
    %c0_68 = arith.constant 0 : index
    %c0_69 = arith.constant 0 : index
    %93 = vector.load %arg4[%c6, %c0_68, %c0_69] : memref<9x1x256xf32, #tpu.memory_space<vmem>>, vector<1x1x256xf32>
    %94 = vector.shape_cast %93 : vector<1x1x256xf32> to vector<1x256xf32>
    %c241_i32 = arith.constant 241 : i32
    %95 = tpu.dynamic_rotate %1 by %c241_i32 dim 1 : vector<4x256xf32>, i32 -> vector<4x256xf32>
    %96 = vector.broadcast %94 : vector<1x256xf32> to vector<4x256xf32>
    %97 = arith.mulf %95, %96 : vector<4x256xf32>
    %c241_i32_70 = arith.constant 241 : i32
    %98 = tpu.dynamic_rotate %3 by %c241_i32_70 dim 1 : vector<4x256xf32>, i32 -> vector<4x256xf32>
    %99 = vector.broadcast %94 : vector<1x256xf32> to vector<4x256xf32>
    %100 = arith.mulf %98, %99 : vector<4x256xf32>
    %c6_71 = arith.constant 6 : index
    %c0_72 = arith.constant 0 : index
    %c0_73 = arith.constant 0 : index
    %101 = vector.load %arg2[%c6_71, %c0_72, %c0_73] : memref<9x4x4xf32, #tpu.memory_space<vmem>>, vector<1x4x4xf32>
    %102 = vector.shape_cast %101 : vector<1x4x4xf32> to vector<4x4xf32>
    %cst_74 = arith.constant dense<0.000000e+00> : vector<4x256xf32>
    %103 = tpu.matmul %102, %97, %cst_74 {dimension_numbers = #tpu.dot_dimension_numbers<[1], [0], [0], [1], [0, 0, 1, 1], [], []>, precision = #tpu.contract_precision<fp32>} : vector<4x4xf32>, vector<4x256xf32>, vector<4x256xf32> -> vector<4x256xf32>
    %104 = arith.addf %92, %103 : vector<4x256xf32>
    %c6_75 = arith.constant 6 : index
    %c0_76 = arith.constant 0 : index
    %c0_77 = arith.constant 0 : index
    %105 = vector.load %arg3[%c6_75, %c0_76, %c0_77] : memref<9x4x4xf32, #tpu.memory_space<vmem>>, vector<1x4x4xf32>
    %106 = vector.shape_cast %105 : vector<1x4x4xf32> to vector<4x4xf32>
    %cst_78 = arith.constant dense<0.000000e+00> : vector<4x256xf32>
    %107 = tpu.matmul %106, %100, %cst_78 {dimension_numbers = #tpu.dot_dimension_numbers<[1], [0], [0], [1], [0, 0, 1, 1], [], []>, precision = #tpu.contract_precision<fp32>} : vector<4x4xf32>, vector<4x256xf32>, vector<4x256xf32> -> vector<4x256xf32>
    %108 = arith.addf %104, %107 : vector<4x256xf32>
    %c7 = arith.constant 7 : index
    %c0_79 = arith.constant 0 : index
    %c0_80 = arith.constant 0 : index
    %109 = vector.load %arg4[%c7, %c0_79, %c0_80] : memref<9x1x256xf32, #tpu.memory_space<vmem>>, vector<1x1x256xf32>
    %110 = vector.shape_cast %109 : vector<1x1x256xf32> to vector<1x256xf32>
    %c240_i32 = arith.constant 240 : i32
    %111 = tpu.dynamic_rotate %1 by %c240_i32 dim 1 : vector<4x256xf32>, i32 -> vector<4x256xf32>
    %112 = vector.broadcast %110 : vector<1x256xf32> to vector<4x256xf32>
    %113 = arith.mulf %111, %112 : vector<4x256xf32>
    %c240_i32_81 = arith.constant 240 : i32
    %114 = tpu.dynamic_rotate %3 by %c240_i32_81 dim 1 : vector<4x256xf32>, i32 -> vector<4x256xf32>
    %115 = vector.broadcast %110 : vector<1x256xf32> to vector<4x256xf32>
    %116 = arith.mulf %114, %115 : vector<4x256xf32>
    %c7_82 = arith.constant 7 : index
    %c0_83 = arith.constant 0 : index
    %c0_84 = arith.constant 0 : index
    %117 = vector.load %arg2[%c7_82, %c0_83, %c0_84] : memref<9x4x4xf32, #tpu.memory_space<vmem>>, vector<1x4x4xf32>
    %118 = vector.shape_cast %117 : vector<1x4x4xf32> to vector<4x4xf32>
    %cst_85 = arith.constant dense<0.000000e+00> : vector<4x256xf32>
    %119 = tpu.matmul %118, %113, %cst_85 {dimension_numbers = #tpu.dot_dimension_numbers<[1], [0], [0], [1], [0, 0, 1, 1], [], []>, precision = #tpu.contract_precision<fp32>} : vector<4x4xf32>, vector<4x256xf32>, vector<4x256xf32> -> vector<4x256xf32>
    %120 = arith.addf %108, %119 : vector<4x256xf32>
    %c7_86 = arith.constant 7 : index
    %c0_87 = arith.constant 0 : index
    %c0_88 = arith.constant 0 : index
    %121 = vector.load %arg3[%c7_86, %c0_87, %c0_88] : memref<9x4x4xf32, #tpu.memory_space<vmem>>, vector<1x4x4xf32>
    %122 = vector.shape_cast %121 : vector<1x4x4xf32> to vector<4x4xf32>
    %cst_89 = arith.constant dense<0.000000e+00> : vector<4x256xf32>
    %123 = tpu.matmul %122, %116, %cst_89 {dimension_numbers = #tpu.dot_dimension_numbers<[1], [0], [0], [1], [0, 0, 1, 1], [], []>, precision = #tpu.contract_precision<fp32>} : vector<4x4xf32>, vector<4x256xf32>, vector<4x256xf32> -> vector<4x256xf32>
    %124 = arith.addf %120, %123 : vector<4x256xf32>
    %c8 = arith.constant 8 : index
    %c0_90 = arith.constant 0 : index
    %c0_91 = arith.constant 0 : index
    %125 = vector.load %arg4[%c8, %c0_90, %c0_91] : memref<9x1x256xf32, #tpu.memory_space<vmem>>, vector<1x1x256xf32>
    %126 = vector.shape_cast %125 : vector<1x1x256xf32> to vector<1x256xf32>
    %c239_i32 = arith.constant 239 : i32
    %127 = tpu.dynamic_rotate %1 by %c239_i32 dim 1 : vector<4x256xf32>, i32 -> vector<4x256xf32>
    %128 = vector.broadcast %126 : vector<1x256xf32> to vector<4x256xf32>
    %129 = arith.mulf %127, %128 : vector<4x256xf32>
    %c239_i32_92 = arith.constant 239 : i32
    %130 = tpu.dynamic_rotate %3 by %c239_i32_92 dim 1 : vector<4x256xf32>, i32 -> vector<4x256xf32>
    %131 = vector.broadcast %126 : vector<1x256xf32> to vector<4x256xf32>
    %132 = arith.mulf %130, %131 : vector<4x256xf32>
    %c8_93 = arith.constant 8 : index
    %c0_94 = arith.constant 0 : index
    %c0_95 = arith.constant 0 : index
    %133 = vector.load %arg2[%c8_93, %c0_94, %c0_95] : memref<9x4x4xf32, #tpu.memory_space<vmem>>, vector<1x4x4xf32>
    %134 = vector.shape_cast %133 : vector<1x4x4xf32> to vector<4x4xf32>
    %cst_96 = arith.constant dense<0.000000e+00> : vector<4x256xf32>
    %135 = tpu.matmul %134, %129, %cst_96 {dimension_numbers = #tpu.dot_dimension_numbers<[1], [0], [0], [1], [0, 0, 1, 1], [], []>, precision = #tpu.contract_precision<fp32>} : vector<4x4xf32>, vector<4x256xf32>, vector<4x256xf32> -> vector<4x256xf32>
    %136 = arith.addf %124, %135 : vector<4x256xf32>
    %c8_97 = arith.constant 8 : index
    %c0_98 = arith.constant 0 : index
    %c0_99 = arith.constant 0 : index
    %137 = vector.load %arg3[%c8_97, %c0_98, %c0_99] : memref<9x4x4xf32, #tpu.memory_space<vmem>>, vector<1x4x4xf32>
    %138 = vector.shape_cast %137 : vector<1x4x4xf32> to vector<4x4xf32>
    %cst_100 = arith.constant dense<0.000000e+00> : vector<4x256xf32>
    %139 = tpu.matmul %138, %132, %cst_100 {dimension_numbers = #tpu.dot_dimension_numbers<[1], [0], [0], [1], [0, 0, 1, 1], [], []>, precision = #tpu.contract_precision<fp32>} : vector<4x4xf32>, vector<4x256xf32>, vector<4x256xf32> -> vector<4x256xf32>
    %140 = arith.addf %136, %139 : vector<4x256xf32>
    %c0_101 = arith.constant 0 : index
    %c0_102 = arith.constant 0 : index
    %141 = vector.load %arg5[%c0_101, %c0_102] : memref<4x1xf32, #tpu.memory_space<vmem>>, vector<4x1xf32>
    %142 = vector.broadcast %141 : vector<4x1xf32> to vector<4x256xf32>
    %143 = arith.addf %140, %142 : vector<4x256xf32>
    %cst_103 = arith.constant 0.000000e+00 : f32
    %144 = vector.broadcast %cst_103 : f32 to vector<4x256xf32>
    %145 = arith.maximumf %143, %144 : vector<4x256xf32>
    %c0_104 = arith.constant 0 : index
    %c0_105 = arith.constant 0 : index
    %146 = vector.load %arg6[%c0_104, %c0_105] : memref<1x4xf32, #tpu.memory_space<vmem>>, vector<1x4xf32>
    %cst_106 = arith.constant dense<0.000000e+00> : vector<1x256xf32>
    %147 = tpu.matmul %146, %145, %cst_106 {dimension_numbers = #tpu.dot_dimension_numbers<[1], [0], [0], [1], [0, 0, 1, 1], [], []>, precision = #tpu.contract_precision<fp32>} : vector<1x4xf32>, vector<4x256xf32>, vector<1x256xf32> -> vector<1x256xf32>
    %c0_107 = arith.constant 0 : index
    %148 = memref.load %arg1[%c0_107] : memref<1xf32, #tpu.memory_space<smem>>
    %149 = vector.broadcast %148 : f32 to vector<1x256xf32>
    %150 = arith.addf %147, %149 : vector<1x256xf32>
    %cst_108 = arith.constant 0.000000e+00 : f32
    %151 = vector.broadcast %cst_108 : f32 to vector<1x256xf32>
    %152 = arith.subf %151, %150 : vector<1x256xf32>
    %153 = math.exp %152 : vector<1x256xf32>
    %cst_109 = arith.constant 1.000000e+00 : f32
    %154 = vector.broadcast %cst_109 : f32 to vector<1x256xf32>
    %155 = arith.addf %154, %153 : vector<1x256xf32>
    %156 = tpu.reciprocal %155 : vector<1x256xf32> -> vector<1x256xf32>
    %157 = vector.broadcast %156 : vector<1x256xf32> to vector<4x256xf32>
    %158 = arith.mulf %3, %157 : vector<4x256xf32>
    %c0_110 = arith.constant 0 : index
    %c0_111 = arith.constant 0 : index
    %c0_112 = arith.constant 0 : index
    %159 = vector.load %arg9[%c0_110, %c0_111, %c0_112] : memref<1x4x256xf32, #tpu.memory_space<vmem>>, vector<1x4x256xf32>
    %160 = vector.shape_cast %159 : vector<1x4x256xf32> to vector<4x256xf32>
    %161 = vector.shape_cast %158 : vector<4x256xf32> to vector<1x4x256xf32>
    tpu.vector_store %arg9[%c0_110, %c0_111, %c0_112], %161 {strides = array<i32>} : memref<1x4x256xf32, #tpu.memory_space<vmem>>, vector<1x4x256xf32>,
    return
  }
  func.func @transform_0(%arg0: i32) -> i32 {
    %c0_i32 = arith.constant 0 : i32
    %c0_i32_0 = arith.constant 0 : i32
    return %c0_i32 : i32
  }
  func.func @transform_1(%arg0: i32) -> (i32, i32, i32) {
    %c0_i32 = arith.constant 0 : i32
    %c0_i32_0 = arith.constant 0 : i32
    %c0_i32_1 = arith.constant 0 : i32
    %c0_i32_2 = arith.constant 0 : i32
    return %c0_i32, %c0_i32_0, %c0_i32_1 : i32, i32, i32
  }
  func.func @transform_2(%arg0: i32) -> (i32, i32, i32) {
    %c0_i32 = arith.constant 0 : i32
    %c0_i32_0 = arith.constant 0 : i32
    %c0_i32_1 = arith.constant 0 : i32
    %c0_i32_2 = arith.constant 0 : i32
    return %c0_i32, %c0_i32_0, %c0_i32_1 : i32, i32, i32
  }
  func.func @transform_3(%arg0: i32) -> (i32, i32, i32) {
    %c0_i32 = arith.constant 0 : i32
    %c0_i32_0 = arith.constant 0 : i32
    %c0_i32_1 = arith.constant 0 : i32
    %c0_i32_2 = arith.constant 0 : i32
    return %c0_i32, %c0_i32_0, %c0_i32_1 : i32, i32, i32
  }
  func.func @transform_4(%arg0: i32) -> (i32, i32) {
    %c0_i32 = arith.constant 0 : i32
    %c0_i32_0 = arith.constant 0 : i32
    %c0_i32_1 = arith.constant 0 : i32
    return %c0_i32, %c0_i32_0 : i32, i32
  }
  func.func @transform_5(%arg0: i32) -> (i32, i32) {
    %c0_i32 = arith.constant 0 : i32
    %c0_i32_0 = arith.constant 0 : i32
    %c0_i32_1 = arith.constant 0 : i32
    return %c0_i32, %c0_i32_0 : i32, i32
  }
  func.func @transform_6(%arg0: i32) -> (i32, i32, i32) {
    %c0_i32 = arith.constant 0 : i32
    %c0_i32_0 = arith.constant 0 : i32
    %c0_i32_1 = arith.constant 0 : i32
    return %arg0, %c0_i32, %c0_i32_0 : i32, i32, i32
  }
  func.func @transform_7(%arg0: i32) -> (i32, i32, i32) {
    %c0_i32 = arith.constant 0 : i32
    %c0_i32_0 = arith.constant 0 : i32
    %c0_i32_1 = arith.constant 0 : i32
    return %arg0, %c0_i32, %c0_i32_0 : i32, i32, i32
  }
  func.func @transform_8(%arg0: i32) -> (i32, i32, i32) {
    %c0_i32 = arith.constant 0 : i32
    %c0_i32_0 = arith.constant 0 : i32
    %c0_i32_1 = arith.constant 0 : i32
    return %arg0, %c0_i32, %c0_i32_0 : i32, i32, i32
  }
}

</mosaic_0001>

<llo_original>
// kernel: tpu_custom_call.1
$region0: #{tpu_custom_call.1}
  #allocation0 [shape = 'u32[]', space=smem, size = 0x4, offset = 0x4, fixed_abs, tag = 'smem constant byte address 0x4 - core index']
  #allocation1 [shape = 'u32[144,128]{1,0:T(1,128)}', space=vmem, size = 0x12000, scoped, tag = 'internal scratch']
  #allocation2 [shape = 'f32[1]{0:T(128)S(6)}', space=smem, size = 0x200, scoped, tag = 'scoped memory for tpu_custom_call.1']
  %s0 = inlined_call_operand.<no memory space> [shape: f32[1], index: 0, kind: input, shape index: {}]
  %s1 = inlined_call_operand.vmem [shape: f32[9,4,4], index: 1, kind: input, shape index: {}]
  %s2 = inlined_call_operand.vmem [shape: f32[9,4,4], index: 2, kind: input, shape index: {}]
  %s3 = inlined_call_operand.vmem [shape: f32[9,1,256], index: 3, kind: input, shape index: {}]
  %s4 = inlined_call_operand.vmem [shape: f32[4,1], index: 4, kind: input, shape index: {}]
  %s5 = inlined_call_operand.vmem [shape: f32[1,4], index: 5, kind: input, shape index: {}]
  %s6 = inlined_call_operand.vmem [shape: f32[2,4,256], index: 6, kind: input, shape index: {}]
  %s7 = inlined_call_operand.vmem [shape: f32[2,4,256], index: 7, kind: input, shape index: {}]
  %s8 = inlined_call_operand.hbm [shape: f32[2,4,256], index: 8, kind: output, shape index: {}]
  %s9 = sld [smem:[#allocation0]]
  $region65: #{tpu_custom_call.1} parent=0
    _
  %s11 = ssub.s32 1, %s9
  %s12 = scalar_select 0, %s11, %s9
  %13 = sst [smem:[#allocation2]] %s0
  $region1: #{tpu_custom_call.1} parent=0
    #allocation3 [shape = 'u8[8192]{0}', space=vmem, size = 0x2000, scoped, tag = 'output window, operand 0']
    #allocation4 [shape = 's32[2]{0}', space=sflag, size = 0x8, scoped, tag = 'scoped memory for tpu_custom_call.1']
    %14 = vsyncpa [#allocation4], 0
    %s15 = scalar_lea.sflag [#allocation4], 1
    %16 = vsyncpa %s15, 0
    loop: start=0, step=1, limit=4
    $region2: #{tpu_custom_call.1} parent=1 // loop_pre_header
      _
    $region3: #{tpu_custom_call.1} parent=1 // loop_header
      %s18 = sphi 0, %s22
      %p19 = scmp.ge.s32.totalorder %s18, 4
      %s26 = sphi 0, %s26
      %s28 = sphi 0, %s26
      %s29 = sphi 0, %s28
      %s43 = sphi 0, %s29
      %s47 = sphi 0, %s47
      %s49 = sphi 0, %s47
      %s50 = sphi 0, %s49
      %s64 = sphi 0, %s50
      %s68 = sphi 0, %s68
      %s70 = sphi 0, %s68
      %s71 = sphi 0, %s70
      %s85 = sphi 0, %s71
      %s89 = sphi 0, %s89
      %s91 = sphi 0, %s89
      %s92 = sphi 0, %s91
      %s106 = sphi 0, %s92
      %s110 = sphi 0, %s110
      %s112 = sphi 0, %s110
      %s113 = sphi 0, %s112
      %s127 = sphi 0, %s113
      %s131 = sphi 0, %s131
      %s133 = sphi 0, %s131
      %s134 = sphi 0, %s133
      %s148 = sphi 0, %s134
      %s154 = sphi 0, %s156
      %s157 = sphi 0, %s154
      %s158 = sphi 0, %s157
      %s174 = sphi 0, %s158
      %s180 = sphi 0, %s182
      %s183 = sphi 0, %s180
      %s184 = sphi 0, %s183
      %s200 = sphi 0, %s184
      %s206 = sphi 0, %s208
      %s209 = sphi 0, %s206
      %s210 = sphi 0, %s209
      %s226 = sphi 0, %s210
    $region4: #{tpu_custom_call.1} parent=1 // loop_header_branch
      %21 = sbr.rel (%p19) target = $region8
    $region5: #{tpu_custom_call.1} parent=1 // loop_body
      %s23 = ssub.s32 %s18, 1
      %s24 = ssub.s32 %s18, 2
      %s25 = sadd.s32 %s18, 1
      %s27 = sadd.s32 %s26, 1
      %p30 = scmp.eq.s32.totalorder %s18, 1
      %p31 = scmp.ne.s32.totalorder %s26, %s28
      %p32 = scmp.eq.s32.totalorder %s18, 0
      %p33 = por %p31, %p32
      %p34 = scmp.ne.s32.totalorder %s26, %s28
      %p35 = scmp.eq.s32.totalorder %s23, 1
      %p36 = por %p34, %p35
      %p37 = scmp.ne.s32.totalorder %s28, %s29
      %p38 = scmp.eq.s32.totalorder %s23, 0
      %p39 = por %p37, %p38
      %p40 = scmp.ne.s32.totalorder %s28, %s29
      %p41 = scmp.eq.s32.totalorder %s24, 1
      %p42 = por %p40, %p41
      %p44 = scmp.ne.s32.totalorder %s29, %s43
      %p45 = scmp.eq.s32.totalorder %s24, 0
      %p46 = por %p44, %p45
      %s48 = sadd.s32 %s47, 1
      %p51 = scmp.eq.s32.totalorder %s18, 1
      %p52 = scmp.ne.s32.totalorder %s47, %s49
      %p53 = scmp.eq.s32.totalorder %s18, 0
      %p54 = por %p52, %p53
      %p55 = scmp.ne.s32.totalorder %s47, %s49
      %p56 = scmp.eq.s32.totalorder %s23, 1
      %p57 = por %p55, %p56
      %p58 = scmp.ne.s32.totalorder %s49, %s50
      %p59 = scmp.eq.s32.totalorder %s23, 0
      %p60 = por %p58, %p59
      %p61 = scmp.ne.s32.totalorder %s49, %s50
      %p62 = scmp.eq.s32.totalorder %s24, 1
      %p63 = por %p61, %p62
      %p65 = scmp.ne.s32.totalorder %s50, %s64
      %p66 = scmp.eq.s32.totalorder %s24, 0
      %p67 = por %p65, %p66
      %s69 = sadd.s32 %s68, 1
      %p72 = scmp.eq.s32.totalorder %s18, 1
      %p73 = scmp.ne.s32.totalorder %s68, %s70
      %p74 = scmp.eq.s32.totalorder %s18, 0
      %p75 = por %p73, %p74
      %p76 = scmp.ne.s32.totalorder %s68, %s70
      %p77 = scmp.eq.s32.totalorder %s23, 1
      %p78 = por %p76, %p77
      %p79 = scmp.ne.s32.totalorder %s70, %s71
      %p80 = scmp.eq.s32.totalorder %s23, 0
      %p81 = por %p79, %p80
      %p82 = scmp.ne.s32.totalorder %s70, %s71
      %p83 = scmp.eq.s32.totalorder %s24, 1
      %p84 = por %p82, %p83
      %p86 = scmp.ne.s32.totalorder %s71, %s85
      %p87 = scmp.eq.s32.totalorder %s24, 0
      %p88 = por %p86, %p87
      %s90 = sadd.s32 %s89, 1
      %p93 = scmp.eq.s32.totalorder %s18, 1
      %p94 = scmp.ne.s32.totalorder %s89, %s91
      %p95 = scmp.eq.s32.totalorder %s18, 0
      %p96 = por %p94, %p95
      %p97 = scmp.ne.s32.totalorder %s89, %s91
      %p98 = scmp.eq.s32.totalorder %s23, 1
      %p99 = por %p97, %p98
      %p100 = scmp.ne.s32.totalorder %s91, %s92
      %p101 = scmp.eq.s32.totalorder %s23, 0
      %p102 = por %p100, %p101
      %p103 = scmp.ne.s32.totalorder %s91, %s92
      %p104 = scmp.eq.s32.totalorder %s24, 1
      %p105 = por %p103, %p104
      %p107 = scmp.ne.s32.totalorder %s92, %s106
      %p108 = scmp.eq.s32.totalorder %s24, 0
      %p109 = por %p107, %p108
      %s111 = sadd.s32 %s110, 1
      %p114 = scmp.eq.s32.totalorder %s18, 1
      %p115 = scmp.ne.s32.totalorder %s110, %s112
      %p116 = scmp.eq.s32.totalorder %s18, 0
      %p117 = por %p115, %p116
      %p118 = scmp.ne.s32.totalorder %s110, %s112
      %p119 = scmp.eq.s32.totalorder %s23, 1
      %p120 = por %p118, %p119
      %p121 = scmp.ne.s32.totalorder %s112, %s113
      %p122 = scmp.eq.s32.totalorder %s23, 0
      %p123 = por %p121, %p122
      %p124 = scmp.ne.s32.totalorder %s112, %s113
      %p125 = scmp.eq.s32.totalorder %s24, 1
      %p126 = por %p124, %p125
      %p128 = scmp.ne.s32.totalorder %s113, %s127
      %p129 = scmp.eq.s32.totalorder %s24, 0
      %p130 = por %p128, %p129
      %s132 = sadd.s32 %s131, 1
      %p135 = scmp.eq.s32.totalorder %s18, 1
      %p136 = scmp.ne.s32.totalorder %s131, %s133
      %p137 = scmp.eq.s32.totalorder %s18, 0
      %p138 = por %p136, %p137
      %p139 = scmp.ne.s32.totalorder %s131, %s133
      %p140 = scmp.eq.s32.totalorder %s23, 1
      %p141 = por %p139, %p140
      %p142 = scmp.ne.s32.totalorder %s133, %s134
      %p143 = scmp.eq.s32.totalorder %s23, 0
      %p144 = por %p142, %p143
      %p145 = scmp.ne.s32.totalorder %s133, %s134
      %p146 = scmp.eq.s32.totalorder %s24, 1
      %p147 = por %p145, %p146
      %p149 = scmp.ne.s32.totalorder %s134, %s148
      %p150 = scmp.eq.s32.totalorder %s24, 0
      %p151 = por %p149, %p150
      %s152 = ssub.s32 %s18, %s25
      %p153 = scmp.eq.s32.totalorder %s152, 0
      %s155 = sadd.s32 %s154, 1
      %s156 = scalar_select %p153, %s154, %s155
      %p159 = pneg %p153
      %p160 = scmp.eq.s32.totalorder %s18, 1
      %p161 = por %p159, %p160
      %p162 = scmp.ne.s32.totalorder %s154, %s157
      %p163 = scmp.eq.s32.totalorder %s18, 0
      %p164 = por %p162, %p163
      %p165 = scmp.ne.s32.totalorder %s154, %s157
      %p166 = scmp.eq.s32.totalorder %s23, 1
      %p167 = por %p165, %p166
      %p168 = scmp.ne.s32.totalorder %s157, %s158
      %p169 = scmp.eq.s32.totalorder %s23, 0
      %p170 = por %p168, %p169
      %p171 = scmp.ne.s32.totalorder %s157, %s158
      %p172 = scmp.eq.s32.totalorder %s24, 1
      %p173 = por %p171, %p172
      %p175 = scmp.ne.s32.totalorder %s158, %s174
      %p176 = scmp.eq.s32.totalorder %s24, 0
      %p177 = por %p175, %p176
      %s178 = ssub.s32 %s18, %s25
      %p179 = scmp.eq.s32.totalorder %s178, 0
      %s181 = sadd.s32 %s180, 1
      %s182 = scalar_select %p179, %s180, %s181
      %p185 = pneg %p179
      %p186 = scmp.eq.s32.totalorder %s18, 1
      %p187 = por %p185, %p186
      %p188 = scmp.ne.s32.totalorder %s180, %s183
      %p189 = scmp.eq.s32.totalorder %s18, 0
      %p190 = por %p188, %p189
      %p191 = scmp.ne.s32.totalorder %s180, %s183
      %p192 = scmp.eq.s32.totalorder %s23, 1
      %p193 = por %p191, %p192
      %p194 = scmp.ne.s32.totalorder %s183, %s184
      %p195 = scmp.eq.s32.totalorder %s23, 0
      %p196 = por %p194, %p195
      %p197 = scmp.ne.s32.totalorder %s183, %s184
      %p198 = scmp.eq.s32.totalorder %s24, 1
      %p199 = por %p197, %p198
      %p201 = scmp.ne.s32.totalorder %s184, %s200
      %p202 = scmp.eq.s32.totalorder %s24, 0
      %p203 = por %p201, %p202
      %s204 = ssub.s32 %s18, %s25
      %p205 = scmp.eq.s32.totalorder %s204, 0
      %s207 = sadd.s32 %s206, 1
      %s208 = scalar_select %p205, %s206, %s207
      %p211 = pneg %p205
      %p212 = scmp.eq.s32.totalorder %s18, 1
      %p213 = por %p211, %p212
      %p214 = scmp.ne.s32.totalorder %s206, %s209
      %p215 = scmp.eq.s32.totalorder %s18, 0
      %p216 = por %p214, %p215
      %p217 = scmp.ne.s32.totalorder %s206, %s209
      %p218 = scmp.eq.s32.totalorder %s23, 1
      %p219 = por %p217, %p218
      %p220 = scmp.ne.s32.totalorder %s209, %s210
      %p221 = scmp.eq.s32.totalorder %s23, 0
      %p222 = por %p220, %p221
      %p223 = scmp.ne.s32.totalorder %s209, %s210
      %p224 = scmp.eq.s32.totalorder %s24, 1
      %p225 = por %p223, %p224
      %p227 = scmp.ne.s32.totalorder %s210, %s226
      %p228 = scmp.eq.s32.totalorder %s24, 0
      %p229 = por %p227, %p228
      %p230 = scmp.le.s32.totalorder 1, %s18
      %p231 = scmp.lt.s32.totalorder %s18, 3
      %p232 = pnand %p230, %p231
      %p233 = pneg %p232
      // Predicated region
      $region9: #{tpu_custom_call.1} parent=5 // pred_check
        _
      $region10: #{tpu_custom_call.1} parent=5 // pred_check_branch
        %235 = sbr.rel (%p232) target = $region12
      $region11: #{tpu_custom_call.1} parent=5 // pred_region
        %s236 = ssub.s32 %s18, 1
        // Predicated region
        $region13: #{tpu_custom_call.1} parent=11 // pred_check
          %p237 = pneg %p39
        $region14: #{tpu_custom_call.1} parent=11 // pred_check_branch
          %239 = sbr.rel (%p237) target = $region16
        $region15: #{tpu_custom_call.1} parent=11 // pred_region
          _
        $region16: #{tpu_custom_call.1} parent=11 // pred_fallthru
          _
        // Predicated region
        $region17: #{tpu_custom_call.1} parent=11 // pred_check
          %p240 = pneg %p60
        $region18: #{tpu_custom_call.1} parent=11 // pred_check_branch
          %242 = sbr.rel (%p240) target = $region20
        $region19: #{tpu_custom_call.1} parent=11 // pred_region
          _
        $region20: #{tpu_custom_call.1} parent=11 // pred_fallthru
          _
        // Predicated region
        $region21: #{tpu_custom_call.1} parent=11 // pred_check
          %p243 = pneg %p81
        $region22: #{tpu_custom_call.1} parent=11 // pred_check_branch
          %245 = sbr.rel (%p243) target = $region24
        $region23: #{tpu_custom_call.1} parent=11 // pred_region
          _
        $region24: #{tpu_custom_call.1} parent=11 // pred_fallthru
          _
        // Predicated region
        $region25: #{tpu_custom_call.1} parent=11 // pred_check
          %p246 = pneg %p102
        $region26: #{tpu_custom_call.1} parent=11 // pred_check_branch
          %248 = sbr.rel (%p246) target = $region28
        $region27: #{tpu_custom_call.1} parent=11 // pred_region
          _
        $region28: #{tpu_custom_call.1} parent=11 // pred_fallthru
          _
        // Predicated region
        $region29: #{tpu_custom_call.1} parent=11 // pred_check
          %p249 = pneg %p123
        $region30: #{tpu_custom_call.1} parent=11 // pred_check_branch
          %251 = sbr.rel (%p249) target = $region32
        $region31: #{tpu_custom_call.1} parent=11 // pred_region
          _
        $region32: #{tpu_custom_call.1} parent=11 // pred_fallthru
          _
        // Predicated region
        $region33: #{tpu_custom_call.1} parent=11 // pred_check
          %p252 = pneg %p144
        $region34: #{tpu_custom_call.1} parent=11 // pred_check_branch
          %254 = sbr.rel (%p252) target = $region36
        $region35: #{tpu_custom_call.1} parent=11 // pred_region
          _
        $region36: #{tpu_custom_call.1} parent=11 // pred_fallthru
          _
      $region12: #{tpu_custom_call.1} parent=5 // pred_fallthru
        _
      %p255 = scmp.lt.s32.totalorder %s18, 2
      // Predicated region
      $region37: #{tpu_custom_call.1} parent=5 // pred_check
        %p256 = pneg %p255
      $region38: #{tpu_custom_call.1} parent=5 // pred_check_branch
        %258 = sbr.rel (%p256) target = $region40
      $region39: #{tpu_custom_call.1} parent=5 // pred_region
        // Predicated region
        $region41: #{tpu_custom_call.1} parent=39 // pred_check
          %p259 = pneg %p164
        $region42: #{tpu_custom_call.1} parent=39 // pred_check_branch
          %261 = sbr.rel (%p259) target = $region44
        $region43: #{tpu_custom_call.1} parent=39 // pred_region
          %p262 = scmp.lt.s32.totalorder %s18, 1
          %s263 = scalar_select %p262, %s18, 1
          %s264 = smul.addr %s263, 2
          %s265 = smul.addr %s264, 4
          %s266 = scalar_lea.vmem %s6, %s265
        $region44: #{tpu_custom_call.1} parent=39 // pred_fallthru
          _
        // Predicated region
        $region45: #{tpu_custom_call.1} parent=39 // pred_check
          %p267 = pneg %p190
        $region46: #{tpu_custom_call.1} parent=39 // pred_check_branch
          %269 = sbr.rel (%p267) target = $region48
        $region47: #{tpu_custom_call.1} parent=39 // pred_region
          %p270 = scmp.lt.s32.totalorder %s18, 1
          %s271 = scalar_select %p270, %s18, 1
          %s272 = smul.addr %s271, 2
          %s273 = smul.addr %s272, 4
          %s274 = scalar_lea.vmem %s7, %s273
        $region48: #{tpu_custom_call.1} parent=39 // pred_fallthru
          _
      $region40: #{tpu_custom_call.1} parent=5 // pred_fallthru
        _
      %p275 = scmp.le.s32.totalorder 1, %s18
      %p276 = scmp.lt.s32.totalorder %s18, 3
      %p277 = pnand %p275, %p276
      %p278 = pneg %p277
      // Predicated region
      $region49: #{tpu_custom_call.1} parent=5 // pred_check
        _
      $region50: #{tpu_custom_call.1} parent=5 // pred_check_branch
        %280 = sbr.rel (%p277) target = $region52
      $region51: #{tpu_custom_call.1} parent=5 // pred_region
        %s281 = ssub.s32 %s18, 1
        %p282 = pneg %p39
        %p283 = pneg %p36
        %p284 = pneg %p60
        %p285 = pneg %p57
        %p286 = pneg %p81
        %p287 = pneg %p78
        %p288 = pneg %p102
        %p289 = pneg %p99
        %p290 = pneg %p123
        %p291 = pneg %p120
        %p292 = pneg %p144
        %p293 = pneg %p141
        %p294 = scmp.lt.s32.totalorder %s23, 1
        %s295 = scalar_select %p294, %s23, 1
        %s296 = smul.addr %s295, 2
        %s297 = smul.addr %s296, 4
        %s298 = scalar_lea.vmem %s6, %s297
        %p299 = pneg %p170
        %p300 = pneg %p167
        %p301 = scmp.lt.s32.totalorder %s23, 1
        %s302 = scalar_select %p301, %s23, 1
        %s303 = smul.addr %s302, 2
        %s304 = smul.addr %s303, 4
        %s305 = scalar_lea.vmem %s7, %s304
        %p306 = pneg %p196
        %p307 = pneg %p193
        %p308 = pneg %p222
        %p309 = pneg %p219
        %s310 = sand.u32 %s209, 1
        %s311 = scalar_lea.sflag [#allocation4], %s310
        %s312 = sand.u32 %s209, 1
        %s313 = smul.addr %s312, 8
        %s314 = scalar_lea.vmem [#allocation3], %s313
        %p315 = scmp.lt.s32.totalorder %s23, 1
        %s316 = scalar_select %p315, %s23, 1
        %s317 = smul.addr %s316, 2
        %s318 = smul.addr %s317, 4
        %s319 = scalar_lea.vmem %s6, %s318
        %p320 = scmp.lt.s32.totalorder %s23, 1
        %s321 = scalar_select %p320, %s23, 1
        %s322 = smul.addr %s321, 2
        %s323 = smul.addr %s322, 4
        %s324 = scalar_lea.vmem %s7, %s323
        %v325 = vld [vmem:[%s319] sm:$0xff]
        %v326 = vld [vmem:[%s324] sm:$0xff]
        %v327 = vld [vmem:[%s3] sm:$0x3]
        %v329 = vcombine.high %v325, %v325
        %331 = vrot.lane.b32.xlu0 %v325, 17
        %v332 = vpop.permute.xlu0 %331
        %333 = vrot.lane.b32.xlu0 %v329, 17
        %v334 = vpop.permute.xlu0 %333
        %v335 = vlaneseq
        %v336 = vand.u32 %v335, 127
        %vm337 = vcmp.lt.s32.totalorder %v336, 17
        %v338 = vsel %vm337, %v332, %v334
        %v339 = vsel %vm337, %v334, %v332
        %v341 = vlaneseq
        %v342 = vshrl.u32 %v341, 7
        %v343 = vsub.s32 0, %v342
        %v344 = vrot.slane %v327, %v343
        %v345 = vlaneseq
        %v346 = vshrl.u32 %v345, 7
        %v347 = vsub.s32 1, %v346
        %v348 = vrot.slane %v327, %v347
        %v351 = vmul.f32 %v339, %v344
        %v352 = vmul.f32 %v338, %v348
        %v354 = vcombine.high %v326, %v326
        %356 = vrot.lane.b32.xlu0 %v326, 17
        %v357 = vpop.permute.xlu0 %356
        %358 = vrot.lane.b32.xlu0 %v354, 17
        %v359 = vpop.permute.xlu0 %358
        %v360 = vsel %vm337, %v357, %v359
        %v361 = vsel %vm337, %v359, %v357
        %v362 = vmul.f32 %v361, %v344
        %v363 = vmul.f32 %v360, %v348
        %v364 = vld [vmem:[%s1] sm:$0xf]
        %v365 = vld [vmem:[%s2] sm:$0xf]
        %vm366 = vcmask 31744
        %v368 = vsel %vm366, %v365, 0
        %vm370 = vcmask 1043456
        %v372 = vsel %vm370, %v362, 0
        %v375 = vsel %vm370, %v363, 0
        %v377 = vand.u32 %v375, 4294901760
        %378 = vmatprep.subr.mxu0 %v377
        %v379 = vand.u32 %v372, 4294901760
        %380 = vmatpush1.msra.mxu0 %v379
        %381 = vmatprep.subr.mxu0 0.0
        %382 = vmatpush1.msra.mxu0 0.0
        %383 = vmatprep.subr.mxu0 0.0
        %384 = vmatpush1.msra.mxu0 0.0
        %385 = vmatprep.subr.mxu0 0.0
        %386 = vmatpush1.msra.mxu0 0.0
        %387 = vmatprep.subr.mxu0 0.0
        %388 = vmatpush1.msra.mxu0 0.0
        %389 = vmatprep.subr.mxu0 0.0
        %390 = vmatpush1.msra.mxu0 0.0
        %391 = vmatprep.subr.mxu0 0.0
        %392 = vmatpush1.msra.mxu0 0.0
        %393 = vmatprep.subr.mxu0 0.0
        %394 = vmatpush1.msra.mxu0 0.0
        %395 = vmatprep.subr.mxu0 0.0
        %396 = vmatpush1.msra.mxu0 0.0
        %397 = vmatprep.subr.mxu0 0.0
        %398 = vmatpush1.msra.mxu0 0.0
        %399 = vmatprep.subr.mxu0 0.0
        %400 = vmatpush1.msra.mxu0 0.0
        %401 = vmatprep.subr.mxu0 0.0
        %402 = vmatpush1.msra.mxu0 0.0
        %403 = vmatprep.subr.mxu0 0.0
        %404 = vmatpush1.msra.mxu0 0.0
        %405 = vmatprep.subr.mxu0 0.0
        %406 = vmatpush1.msra.mxu0 0.0
        %407 = vmatprep.subr.mxu0 0.0
        %408 = vmatpush1.msra.mxu0 0.0
        %409 = vmatprep.subr.mxu0 0.0
        %410 = vmatpush1.msra.mxu0 0.0
        %411 = vmatprep.subr.mxu0 0.0
        %412 = vmatpush1.msra.mxu0 0.0
        %413 = vmatprep.subr.mxu0 0.0
        %414 = vmatpush1.msra.mxu0 0.0
        %415 = vmatprep.subr.mxu0 0.0
        %416 = vmatpush1.msra.mxu0 0.0
        %417 = vmatprep.subr.mxu0 0.0
        %418 = vmatpush1.msra.mxu0 0.0
        %419 = vmatprep.subr.mxu0 0.0
        %420 = vmatpush1.msra.mxu0 0.0
        %421 = vmatprep.subr.mxu0 0.0
        %422 = vmatpush1.msra.mxu0 0.0
        %423 = vmatprep.subr.mxu0 0.0
        %424 = vmatpush1.msra.mxu0 0.0
        %425 = vmatprep.subr.mxu0 0.0
        %426 = vmatpush1.msra.mxu0 0.0
        %427 = vmatprep.subr.mxu0 0.0
        %428 = vmatpush1.msra.mxu0 0.0
        %429 = vmatprep.subr.mxu0 0.0
        %430 = vmatpush1.msra.mxu0 0.0
        %431 = vmatprep.subr.mxu0 0.0
        %432 = vmatpush1.msra.mxu0 0.0
        %433 = vmatprep.subr.mxu0 0.0
        %434 = vmatpush1.msra.mxu0 0.0
        %435 = vmatprep.subr.mxu0 0.0
        %436 = vmatpush1.msra.mxu0 0.0
        %437 = vmatprep.subr.mxu0 0.0
        %438 = vmatpush1.msra.mxu0 0.0
        %439 = vmatprep.subr.mxu0 0.0
        %440 = vmatpush1.msra.mxu0 0.0
        %441 = vmatprep.subr.mxu0 0.0
        %442 = vmatpush1.msra.mxu0 0.0
        %443 = vmatprep.mubr.f32.mxu0 0.0
        %v444 = vand.u32 %v368, 4294901760
        %v445 = vsub.f32 %v368, %v444
        %v446 = vand.u32 %v445, 4294901760
        %v447 = vsub.f32 %v445, %v446
        %v448 = vand.u32 %v447, 4294901760
        %449 = vmatmul.mubr.f32.gmra.mrb[0].mxu0 %v448
        %v450 = vpop.f32.mrb[0].mxu0
        %v451 = vadd.f32 0.0, %v450
        %v452 = vpop.f32.mrb[0].mxu0
        %v453 = vadd.f32 0.0, %v452
        %454 = vdwg.mxu0
        %v455 = vand.u32 %v375, 4294901760
        %v456 = vsub.f32 %v375, %v455
        %v457 = vand.u32 %v456, 4294901760
        %v458 = vsub.f32 %v456, %v457
        %v459 = vand.u32 %v458, 4294901760
        %460 = vmatprep.subr.mxu0 %v459
        %v461 = vand.u32 %v372, 4294901760
        %v462 = vsub.f32 %v372, %v461
        %v463 = vand.u32 %v462, 4294901760
        %v464 = vsub.f32 %v462, %v463
        %v465 = vand.u32 %v464, 4294901760
        %466 = vmatpush1.msra.mxu0 %v465
        %467 = vmatprep.subr.mxu0 0.0
        %468 = vmatpush1.msra.mxu0 0.0
        %469 = vmatprep.subr.mxu0 0.0
        %470 = vmatpush1.msra.mxu0 0.0
        %471 = vmatprep.subr.mxu0 0.0
        %472 = vmatpush1.msra.mxu0 0.0
        %473 = vmatprep.subr.mxu0 0.0
        %474 = vmatpush1.msra.mxu0 0.0
        %475 = vmatprep.subr.mxu0 0.0
        %476 = vmatpush1.msra.mxu0 0.0
        %477 = vmatprep.subr.mxu0 0.0
        %478 = vmatpush1.msra.mxu0 0.0
        %479 = vmatprep.subr.mxu0 0.0
        %480 = vmatpush1.msra.mxu0 0.0
        %481 = vmatprep.subr.mxu0 0.0
        %482 = vmatpush1.msra.mxu0 0.0
        %483 = vmatprep.subr.mxu0 0.0
        %484 = vmatpush1.msra.mxu0 0.0
        %485 = vmatprep.subr.mxu0 0.0
        %486 = vmatpush1.msra.mxu0 0.0
        %487 = vmatprep.subr.mxu0 0.0
        %488 = vmatpush1.msra.mxu0 0.0
        %489 = vmatprep.subr.mxu0 0.0
        %490 = vmatpush1.msra.mxu0 0.0
        %491 = vmatprep.subr.mxu0 0.0
        %492 = vmatpush1.msra.mxu0 0.0
        %493 = vmatprep.subr.mxu0 0.0
        %494 = vmatpush1.msra.mxu0 0.0
        %495 = vmatprep.subr.mxu0 0.0
        %496 = vmatpush1.msra.mxu0 0.0
        %497 = vmatprep.subr.mxu0 0.0
        %498 = vmatpush1.msra.mxu0 0.0
        %499 = vmatprep.subr.mxu0 0.0
        %500 = vmatpush1.msra.mxu0 0.0
        %501 = vmatprep.subr.mxu0 0.0
        %502 = vmatpush1.msra.mxu0 0.0
        %503 = vmatprep.subr.mxu0 0.0
        %504 = vmatpush1.msra.mxu0 0.0
        %505 = vmatprep.subr.mxu0 0.0
        %506 = vmatpush1.msra.mxu0 0.0
        %507 = vmatprep.subr.mxu0 0.0
        %508 = vmatpush1.msra.mxu0 0.0
        %509 = vmatprep.subr.mxu0 0.0
        %510 = vmatpush1.msra.mxu0 0.0
        %511 = vmatprep.subr.mxu0 0.0
        %512 = vmatpush1.msra.mxu0 0.0
        %513 = vmatprep.subr.mxu0 0.0
        %514 = vmatpush1.msra.mxu0 0.0
        %515 = vmatprep.subr.mxu0 0.0
        %516 = vmatpush1.msra.mxu0 0.0
        %517 = vmatprep.subr.mxu0 0.0
        %518 = vmatpush1.msra.mxu0 0.0
        %519 = vmatprep.subr.mxu0 0.0
        %520 = vmatpush1.msra.mxu0 0.0
        %521 = vmatprep.subr.mxu0 0.0
        %522 = vmatpush1.msra.mxu0 0.0
        %523 = vmatprep.subr.mxu0 0.0
        %524 = vmatpush1.msra.mxu0 0.0
        %525 = vmatprep.subr.mxu0 0.0
        %526 = vmatpush1.msra.mxu0 0.0
        %527 = vmatprep.subr.mxu0 0.0
        %528 = vmatpush1.msra.mxu0 0.0
        %529 = vmatprep.mubr.f32.mxu0 0.0
        %v530 = vand.u32 %v368, 4294901760
        %531 = vmatmul.mubr.f32.gmra.mrb[0].mxu0 %v530
        %v532 = vpop.f32.mrb[0].mxu0
        %v533 = vadd.f32 %v451, %v532
        %v534 = vpop.f32.mrb[0].mxu0
        %v535 = vadd.f32 %v453, %v534
        %536 = vdwg.mxu0
        %v537 = vand.u32 %v375, 4294901760
        %v538 = vsub.f32 %v375, %v537
        %539 = vmatprep.subr.mxu0 %v538
        %v540 = vand.u32 %v372, 4294901760
        %v541 = vsub.f32 %v372, %v540
        %542 = vmatpush1.msra.mxu0 %v541
        %543 = vmatprep.subr.mxu0 0.0
        %544 = vmatpush1.msra.mxu0 0.0
        %545 = vmatprep.subr.mxu0 0.0
        %546 = vmatpush1.msra.mxu0 0.0
        %547 = vmatprep.subr.mxu0 0.0
        %548 = vmatpush1.msra.mxu0 0.0
        %549 = vmatprep.subr.mxu0 0.0
        %550 = vmatpush1.msra.mxu0 0.0
        %551 = vmatprep.subr.mxu0 0.0
        %552 = vmatpush1.msra.mxu0 0.0
        %553 = vmatprep.subr.mxu0 0.0
        %554 = vmatpush1.msra.mxu0 0.0
        %555 = vmatprep.subr.mxu0 0.0
        %556 = vmatpush1.msra.mxu0 0.0
        %557 = vmatprep.subr.mxu0 0.0
        %558 = vmatpush1.msra.mxu0 0.0
        %559 = vmatprep.subr.mxu0 0.0
        %560 = vmatpush1.msra.mxu0 0.0
        %561 = vmatprep.subr.mxu0 0.0
        %562 = vmatpush1.msra.mxu0 0.0
        %563 = vmatprep.subr.mxu0 0.0
        %564 = vmatpush1.msra.mxu0 0.0
        %565 = vmatprep.subr.mxu0 0.0
        %566 = vmatpush1.msra.mxu0 0.0
        %567 = vmatprep.subr.mxu0 0.0
        %568 = vmatpush1.msra.mxu0 0.0
        %569 = vmatprep.subr.mxu0 0.0
        %570 = vmatpush1.msra.mxu0 0.0
        %571 = vmatprep.subr.mxu0 0.0
        %572 = vmatpush1.msra.mxu0 0.0
        %573 = vmatprep.subr.mxu0 0.0
        %574 = vmatpush1.msra.mxu0 0.0
        %575 = vmatprep.subr.mxu0 0.0
        %576 = vmatpush1.msra.mxu0 0.0
        %577 = vmatprep.subr.mxu0 0.0
        %578 = vmatpush1.msra.mxu0 0.0
        %579 = vmatprep.subr.mxu0 0.0
        %580 = vmatpush1.msra.mxu0 0.0
        %581 = vmatprep.subr.mxu0 0.0
        %582 = vmatpush1.msra.mxu0 0.0
        %583 = vmatprep.subr.mxu0 0.0
        %584 = vmatpush1.msra.mxu0 0.0
        %585 = vmatprep.subr.mxu0 0.0
        %586 = vmatpush1.msra.mxu0 0.0
        %587 = vmatprep.subr.mxu0 0.0
        %588 = vmatpush1.msra.mxu0 0.0
        %589 = vmatprep.subr.mxu0 0.0
        %590 = vmatpush1.msra.mxu0 0.0
        %591 = vmatprep.subr.mxu0 0.0
        %592 = vmatpush1.msra.mxu0 0.0
        %593 = vmatprep.subr.mxu0 0.0
        %594 = vmatpush1.msra.mxu0 0.0
        %595 = vmatprep.subr.mxu0 0.0
        %596 = vmatpush1.msra.mxu0 0.0
        %597 = vmatprep.subr.mxu0 0.0
        %598 = vmatpush1.msra.mxu0 0.0
        %599 = vmatprep.subr.mxu0 0.0
        %600 = vmatpush1.msra.mxu0 0.0
        %601 = vmatprep.subr.mxu0 0.0
        %602 = vmatpush1.msra.mxu0 0.0
        %603 = vmatprep.subr.mxu0 0.0
        %604 = vmatpush1.msra.mxu0 0.0
        %605 = vmatprep.mubr.f32.mxu0 0.0
        %v606 = vand.u32 %v368, 4294901760
        %v607 = vsub.f32 %v368, %v606
        %608 = vmatmul.mubr.f32.gmra.mrb[0].mxu0 %v607
        %v609 = vpop.f32.mrb[0].mxu0
        %v610 = vadd.f32 %v533, %v609
        %v611 = vpop.f32.mrb[0].mxu0
        %v612 = vadd.f32 %v535, %v611
        %613 = vdwg.mxu0
        %v614 = vand.u32 %v375, 4294901760
        %615 = vmatprep.subr.mxu0 %v614
        %v616 = vand.u32 %v372, 4294901760
        %617 = vmatpush1.msra.mxu0 %v616
        %618 = vmatprep.subr.mxu0 0.0
        %619 = vmatpush1.msra.mxu0 0.0
        %620 = vmatprep.subr.mxu0 0.0
        %621 = vmatpush1.msra.mxu0 0.0
        %622 = vmatprep.subr.mxu0 0.0
        %623 = vmatpush1.msra.mxu0 0.0
        %624 = vmatprep.subr.mxu0 0.0
        %625 = vmatpush1.msra.mxu0 0.0
        %626 = vmatprep.subr.mxu0 0.0
        %627 = vmatpush1.msra.mxu0 0.0
        %628 = vmatprep.subr.mxu0 0.0
        %629 = vmatpush1.msra.mxu0 0.0
        %630 = vmatprep.subr.mxu0 0.0
        %631 = vmatpush1.msra.mxu0 0.0
        %632 = vmatprep.subr.mxu0 0.0
        %633 = vmatpush1.msra.mxu0 0.0
        %634 = vmatprep.subr.mxu0 0.0
        %635 = vmatpush1.msra.mxu0 0.0
        %636 = vmatprep.subr.mxu0 0.0
        %637 = vmatpush1.msra.mxu0 0.0
        %638 = vmatprep.subr.mxu0 0.0
        %639 = vmatpush1.msra.mxu0 0.0
        %640 = vmatprep.subr.mxu0 0.0
        %641 = vmatpush1.msra.mxu0 0.0
        %642 = vmatprep.subr.mxu0 0.0
        %643 = vmatpush1.msra.mxu0 0.0
        %644 = vmatprep.subr.mxu0 0.0
        %645 = vmatpush1.msra.mxu0 0.0
        %646 = vmatprep.subr.mxu0 0.0
        %647 = vmatpush1.msra.mxu0 0.0
        %648 = vmatprep.subr.mxu0 0.0
        %649 = vmatpush1.msra.mxu0 0.0
        %650 = vmatprep.subr.mxu0 0.0
        %651 = vmatpush1.msra.mxu0 0.0
        %652 = vmatprep.subr.mxu0 0.0
        %653 = vmatpush1.msra.mxu0 0.0
        %654 = vmatprep.subr.mxu0 0.0
        %655 = vmatpush1.msra.mxu0 0.0
        %656 = vmatprep.subr.mxu0 0.0
        %657 = vmatpush1.msra.mxu0 0.0
        %658 = vmatprep.subr.mxu0 0.0
        %659 = vmatpush1.msra.mxu0 0.0
        %660 = vmatprep.subr.mxu0 0.0
        %661 = vmatpush1.msra.mxu0 0.0
        %662 = vmatprep.subr.mxu0 0.0
        %663 = vmatpush1.msra.mxu0 0.0
        %664 = vmatprep.subr.mxu0 0.0
        %665 = vmatpush1.msra.mxu0 0.0
        %666 = vmatprep.subr.mxu0 0.0
        %667 = vmatpush1.msra.mxu0 0.0
        %668 = vmatprep.subr.mxu0 0.0
        %669 = vmatpush1.msra.mxu0 0.0
        %670 = vmatprep.subr.mxu0 0.0
        %671 = vmatpush1.msra.mxu0 0.0
        %672 = vmatprep.subr.mxu0 0.0
        %673 = vmatpush1.msra.mxu0 0.0
        %674 = vmatprep.subr.mxu0 0.0
        %675 = vmatpush1.msra.mxu0 0.0
        %676 = vmatprep.subr.mxu0 0.0
        %677 = vmatpush1.msra.mxu0 0.0
        %678 = vmatprep.subr.mxu0 0.0
        %679 = vmatpush1.msra.mxu0 0.0
        %680 = vmatprep.mubr.f32.mxu0 0.0
        %v681 = vand.u32 %v368, 4294901760
        %v682 = vsub.f32 %v368, %v681
        %v683 = vand.u32 %v682, 4294901760
        %684 = vmatmul.mubr.f32.gmra.mrb[0].mxu0 %v683
        %v685 = vpop.f32.mrb[0].mxu0
        %v686 = vadd.f32 %v610, %v685
        %v687 = vpop.f32.mrb[0].mxu0
        %v688 = vadd.f32 %v612, %v687
        %689 = vdwg.mxu0
        %v690 = vand.u32 %v375, 4294901760
        %v691 = vsub.f32 %v375, %v690
        %v692 = vand.u32 %v691, 4294901760
        %693 = vmatprep.subr.mxu0 %v692
        %v694 = vand.u32 %v372, 4294901760
        %v695 = vsub.f32 %v372, %v694
        %v696 = vand.u32 %v695, 4294901760
        %697 = vmatpush1.msra.mxu0 %v696
        %698 = vmatprep.subr.mxu0 0.0
        %699 = vmatpush1.msra.mxu0 0.0
        %700 = vmatprep.subr.mxu0 0.0
        %701 = vmatpush1.msra.mxu0 0.0
        %702 = vmatprep.subr.mxu0 0.0
        %703 = vmatpush1.msra.mxu0 0.0
        %704 = vmatprep.subr.mxu0 0.0
        %705 = vmatpush1.msra.mxu0 0.0
        %706 = vmatprep.subr.mxu0 0.0
        %707 = vmatpush1.msra.mxu0 0.0
        %708 = vmatprep.subr.mxu0 0.0
        %709 = vmatpush1.msra.mxu0 0.0
        %710 = vmatprep.subr.mxu0 0.0
        %711 = vmatpush1.msra.mxu0 0.0
        %712 = vmatprep.subr.mxu0 0.0
        %713 = vmatpush1.msra.mxu0 0.0
        %714 = vmatprep.subr.mxu0 0.0
        %715 = vmatpush1.msra.mxu0 0.0
        %716 = vmatprep.subr.mxu0 0.0
        %717 = vmatpush1.msra.mxu0 0.0
        %718 = vmatprep.subr.mxu0 0.0
        %719 = vmatpush1.msra.mxu0 0.0
        %720 = vmatprep.subr.mxu0 0.0
        %721 = vmatpush1.msra.mxu0 0.0
        %722 = vmatprep.subr.mxu0 0.0
        %723 = vmatpush1.msra.mxu0 0.0
        %724 = vmatprep.subr.mxu0 0.0
        %725 = vmatpush1.msra.mxu0 0.0
        %726 = vmatprep.subr.mxu0 0.0
        %727 = vmatpush1.msra.mxu0 0.0
        %728 = vmatprep.subr.mxu0 0.0
        %729 = vmatpush1.msra.mxu0 0.0
        %730 = vmatprep.subr.mxu0 0.0
        %731 = vmatpush1.msra.mxu0 0.0
        %732 = vmatprep.subr.mxu0 0.0
        %733 = vmatpush1.msra.mxu0 0.0
        %734 = vmatprep.subr.mxu0 0.0
        %735 = vmatpush1.msra.mxu0 0.0
        %736 = vmatprep.subr.mxu0 0.0
        %737 = vmatpush1.msra.mxu0 0.0
        %738 = vmatprep.subr.mxu0 0.0
        %739 = vmatpush1.msra.mxu0 0.0
        %740 = vmatprep.subr.mxu0 0.0
        %741 = vmatpush1.msra.mxu0 0.0
        %742 = vmatprep.subr.mxu0 0.0
        %743 = vmatpush1.msra.mxu0 0.0
        %744 = vmatprep.subr.mxu0 0.0
        %745 = vmatpush1.msra.mxu0 0.0
        %746 = vmatprep.subr.mxu0 0.0
        %747 = vmatpush1.msra.mxu0 0.0
        %748 = vmatprep.subr.mxu0 0.0
        %749 = vmatpush1.msra.mxu0 0.0
        %750 = vmatprep.subr.mxu0 0.0
        %751 = vmatpush1.msra.mxu0 0.0
        %752 = vmatprep.subr.mxu0 0.0
        %753 = vmatpush1.msra.mxu0 0.0
        %754 = vmatprep.subr.mxu0 0.0
        %755 = vmatpush1.msra.mxu0 0.0
        %756 = vmatprep.subr.mxu0 0.0
        %757 = vmatpush1.msra.mxu0 0.0
        %758 = vmatprep.subr.mxu0 0.0
        %759 = vmatpush1.msra.mxu0 0.0
        %760 = vmatprep.mubr.f32.mxu0 0.0
        %v761 = vand.u32 %v368, 4294901760
        %762 = vmatmul.mubr.f32.gmra.mrb[0].mxu0 %v761
        %v763 = vpop.f32.mrb[0].mxu0
        %v764 = vadd.f32 %v686, %v763
        %v765 = vpop.f32.mrb[0].mxu0
        %v766 = vadd.f32 %v688, %v765
        %767 = vdwg.mxu0
        %v768 = vand.u32 %v375, 4294901760
        %769 = vmatprep.subr.mxu0 %v768
        %v770 = vand.u32 %v372, 4294901760
        %771 = vmatpush1.msra.mxu0 %v770
        %772 = vmatprep.subr.mxu0 0.0
        %773 = vmatpush1.msra.mxu0 0.0
        %774 = vmatprep.subr.mxu0 0.0
        %775 = vmatpush1.msra.mxu0 0.0
        %776 = vmatprep.subr.mxu0 0.0
        %777 = vmatpush1.msra.mxu0 0.0
        %778 = vmatprep.subr.mxu0 0.0
        %779 = vmatpush1.msra.mxu0 0.0
        %780 = vmatprep.subr.mxu0 0.0
        %781 = vmatpush1.msra.mxu0 0.0
        %782 = vmatprep.subr.mxu0 0.0
        %783 = vmatpush1.msra.mxu0 0.0
        %784 = vmatprep.subr.mxu0 0.0
        %785 = vmatpush1.msra.mxu0 0.0
        %786 = vmatprep.subr.mxu0 0.0
        %787 = vmatpush1.msra.mxu0 0.0
        %788 = vmatprep.subr.mxu0 0.0
        %789 = vmatpush1.msra.mxu0 0.0
        %790 = vmatprep.subr.mxu0 0.0
        %791 = vmatpush1.msra.mxu0 0.0
        %792 = vmatprep.subr.mxu0 0.0
        %793 = vmatpush1.msra.mxu0 0.0
        %794 = vmatprep.subr.mxu0 0.0
        %795 = vmatpush1.msra.mxu0 0.0
        %796 = vmatprep.subr.mxu0 0.0
        %797 = vmatpush1.msra.mxu0 0.0
        %798 = vmatprep.subr.mxu0 0.0
        %799 = vmatpush1.msra.mxu0 0.0
        %800 = vmatprep.subr.mxu0 0.0
        %801 = vmatpush1.msra.mxu0 0.0
        %802 = vmatprep.subr.mxu0 0.0
        %803 = vmatpush1.msra.mxu0 0.0
        %804 = vmatprep.subr.mxu0 0.0
        %805 = vmatpush1.msra.mxu0 0.0
        %806 = vmatprep.subr.mxu0 0.0
        %807 = vmatpush1.msra.mxu0 0.0
        %808 = vmatprep.subr.mxu0 0.0
        %809 = vmatpush1.msra.mxu0 0.0
        %810 = vmatprep.subr.mxu0 0.0
        %811 = vmatpush1.msra.mxu0 0.0
        %812 = vmatprep.subr.mxu0 0.0
        %813 = vmatpush1.msra.mxu0 0.0
        %814 = vmatprep.subr.mxu0 0.0
        %815 = vmatpush1.msra.mxu0 0.0
        %816 = vmatprep.subr.mxu0 0.0
        %817 = vmatpush1.msra.mxu0 0.0
        %818 = vmatprep.subr.mxu0 0.0
        %819 = vmatpush1.msra.mxu0 0.0
        %820 = vmatprep.subr.mxu0 0.0
        %821 = vmatpush1.msra.mxu0 0.0
        %822 = vmatprep.subr.mxu0 0.0
        %823 = vmatpush1.msra.mxu0 0.0
        %824 = vmatprep.subr.mxu0 0.0
        %825 = vmatpush1.msra.mxu0 0.0
        %826 = vmatprep.subr.mxu0 0.0
        %827 = vmatpush1.msra.mxu0 0.0
        %828 = vmatprep.subr.mxu0 0.0
        %829 = vmatpush1.msra.mxu0 0.0
        %830 = vmatprep.subr.mxu0 0.0
        %831 = vmatpush1.msra.mxu0 0.0
        %832 = vmatprep.subr.mxu0 0.0
        %833 = vmatpush1.msra.mxu0 0.0
        %834 = vmatprep.mubr.f32.mxu0 0.0
        %v835 = vand.u32 %v368, 4294901760
        %836 = vmatmul.mubr.f32.gmra.mrb[0].mxu0 %v835
        %v837 = vpop.f32.mrb[0].mxu0
        %v838 = vadd.f32 %v764, %v837
        %v839 = vpop.f32.mrb[0].mxu0
        %v840 = vadd.f32 %v766, %v839
        %841 = vdwg.mxu0
        %v843 = vsel %vm366, %v364, 0
        %v846 = vsel %vm370, %v351, 0
        %v849 = vsel %vm370, %v352, 0
        %v851 = vand.u32 %v849, 4294901760
        %852 = vmatprep.subr.mxu0 %v851
        %v853 = vand.u32 %v846, 4294901760
        %854 = vmatpush1.msra.mxu0 %v853
        %855 = vmatprep.subr.mxu0 0.0
        %856 = vmatpush1.msra.mxu0 0.0
        %857 = vmatprep.subr.mxu0 0.0
        %858 = vmatpush1.msra.mxu0 0.0
        %859 = vmatprep.subr.mxu0 0.0
        %860 = vmatpush1.msra.mxu0 0.0
        %861 = vmatprep.subr.mxu0 0.0
        %862 = vmatpush1.msra.mxu0 0.0
        %863 = vmatprep.subr.mxu0 0.0
        %864 = vmatpush1.msra.mxu0 0.0
        %865 = vmatprep.subr.mxu0 0.0
        %866 = vmatpush1.msra.mxu0 0.0
        %867 = vmatprep.subr.mxu0 0.0
        %868 = vmatpush1.msra.mxu0 0.0
        %869 = vmatprep.subr.mxu0 0.0
        %870 = vmatpush1.msra.mxu0 0.0
        %871 = vmatprep.subr.mxu0 0.0
        %872 = vmatpush1.msra.mxu0 0.0
        %873 = vmatprep.subr.mxu0 0.0
        %874 = vmatpush1.msra.mxu0 0.0
        %875 = vmatprep.subr.mxu0 0.0
        %876 = vmatpush1.msra.mxu0 0.0
        %877 = vmatprep.subr.mxu0 0.0
        %878 = vmatpush1.msra.mxu0 0.0
        %879 = vmatprep.subr.mxu0 0.0
        %880 = vmatpush1.msra.mxu0 0.0
        %881 = vmatprep.subr.mxu0 0.0
        %882 = vmatpush1.msra.mxu0 0.0
        %883 = vmatprep.subr.mxu0 0.0
        %884 = vmatpush1.msra.mxu0 0.0
        %885 = vmatprep.subr.mxu0 0.0
        %886 = vmatpush1.msra.mxu0 0.0
        %887 = vmatprep.subr.mxu0 0.0
        %888 = vmatpush1.msra.mxu0 0.0
        %889 = vmatprep.subr.mxu0 0.0
        %890 = vmatpush1.msra.mxu0 0.0
        %891 = vmatprep.subr.mxu0 0.0
        %892 = vmatpush1.msra.mxu0 0.0
        %893 = vmatprep.subr.mxu0 0.0
        %894 = vmatpush1.msra.mxu0 0.0
        %895 = vmatprep.subr.mxu0 0.0
        %896 = vmatpush1.msra.mxu0 0.0
        %897 = vmatprep.subr.mxu0 0.0
        %898 = vmatpush1.msra.mxu0 0.0
        %899 = vmatprep.subr.mxu0 0.0
        %900 = vmatpush1.msra.mxu0 0.0
        %901 = vmatprep.subr.mxu0 0.0
        %902 = vmatpush1.msra.mxu0 0.0
        %903 = vmatprep.subr.mxu0 0.0
        %904 = vmatpush1.msra.mxu0 0.0
        %905 = vmatprep.subr.mxu0 0.0
        %906 = vmatpush1.msra.mxu0 0.0
        %907 = vmatprep.subr.mxu0 0.0
        %908 = vmatpush1.msra.mxu0 0.0
        %909 = vmatprep.subr.mxu0 0.0
        %910 = vmatpush1.msra.mxu0 0.0
        %911 = vmatprep.subr.mxu0 0.0
        %912 = vmatpush1.msra.mxu0 0.0
        %913 = vmatprep.subr.mxu0 0.0
        %914 = vmatpush1.msra.mxu0 0.0
        %915 = vmatprep.subr.mxu0 0.0
        %916 = vmatpush1.msra.mxu0 0.0
        %917 = vmatprep.mubr.f32.mxu0 0.0
        %v918 = vand.u32 %v843, 4294901760
        %v919 = vsub.f32 %v843, %v918
        %v920 = vand.u32 %v919, 4294901760
        %v921 = vsub.f32 %v919, %v920
        %v922 = vand.u32 %v921, 4294901760
        %923 = vmatmul.mubr.f32.gmra.mrb[0].mxu0 %v922
        %v924 = vpop.f32.mrb[0].mxu0
        %v925 = vadd.f32 %v838, %v924
        %v926 = vpop.f32.mrb[0].mxu0
        %v927 = vadd.f32 %v840, %v926
        %928 = vdwg.mxu0
        %v929 = vand.u32 %v849, 4294901760
        %v930 = vsub.f32 %v849, %v929
        %v931 = vand.u32 %v930, 4294901760
        %v932 = vsub.f32 %v930, %v931
        %v933 = vand.u32 %v932, 4294901760
        %934 = vmatprep.subr.mxu0 %v933
        %v935 = vand.u32 %v846, 4294901760
        %v936 = vsub.f32 %v846, %v935
        %v937 = vand.u32 %v936, 4294901760
        %v938 = vsub.f32 %v936, %v937
        %v939 = vand.u32 %v938, 4294901760
        %940 = vmatpush1.msra.mxu0 %v939
        %941 = vmatprep.subr.mxu0 0.0
        %942 = vmatpush1.msra.mxu0 0.0
        %943 = vmatprep.subr.mxu0 0.0
        %944 = vmatpush1.msra.mxu0 0.0
        %945 = vmatprep.subr.mxu0 0.0
        %946 = vmatpush1.msra.mxu0 0.0
        %947 = vmatprep.subr.mxu0 0.0
        %948 = vmatpush1.msra.mxu0 0.0
        %949 = vmatprep.subr.mxu0 0.0
        %950 = vmatpush1.msra.mxu0 0.0
        %951 = vmatprep.subr.mxu0 0.0
        %952 = vmatpush1.msra.mxu0 0.0
        %953 = vmatprep.subr.mxu0 0.0
        %954 = vmatpush1.msra.mxu0 0.0
        %955 = vmatprep.subr.mxu0 0.0
        %956 = vmatpush1.msra.mxu0 0.0
        %957 = vmatprep.subr.mxu0 0.0
        %958 = vmatpush1.msra.mxu0 0.0
        %959 = vmatprep.subr.mxu0 0.0
        %960 = vmatpush1.msra.mxu0 0.0
        %961 = vmatprep.subr.mxu0 0.0
        %962 = vmatpush1.msra.mxu0 0.0
        %963 = vmatprep.subr.mxu0 0.0
        %964 = vmatpush1.msra.mxu0 0.0
        %965 = vmatprep.subr.mxu0 0.0
        %966 = vmatpush1.msra.mxu0 0.0
        %967 = vmatprep.subr.mxu0 0.0
        %968 = vmatpush1.msra.mxu0 0.0
        %969 = vmatprep.subr.mxu0 0.0
        %970 = vmatpush1.msra.mxu0 0.0
        %971 = vmatprep.subr.mxu0 0.0
        %972 = vmatpush1.msra.mxu0 0.0
        %973 = vmatprep.subr.mxu0 0.0
        %974 = vmatpush1.msra.mxu0 0.0
        %975 = vmatprep.subr.mxu0 0.0
        %976 = vmatpush1.msra.mxu0 0.0
        %977 = vmatprep.subr.mxu0 0.0
        %978 = vmatpush1.msra.mxu0 0.0
        %979 = vmatprep.subr.mxu0 0.0
        %980 = vmatpush1.msra.mxu0 0.0
        %981 = vmatprep.subr.mxu0 0.0
        %982 = vmatpush1.msra.mxu0 0.0
        %983 = vmatprep.subr.mxu0 0.0
        %984 = vmatpush1.msra.mxu0 0.0
        %985 = vmatprep.subr.mxu0 0.0
        %986 = vmatpush1.msra.mxu0 0.0
        %987 = vmatprep.subr.mxu0 0.0
        %988 = vmatpush1.msra.mxu0 0.0
        %989 = vmatprep.subr.mxu0 0.0
        %990 = vmatpush1.msra.mxu0 0.0
        %991 = vmatprep.subr.mxu0 0.0
        %992 = vmatpush1.msra.mxu0 0.0
        %993 = vmatprep.subr.mxu0 0.0
        %994 = vmatpush1.msra.mxu0 0.0
        %995 = vmatprep.subr.mxu0 0.0
        %996 = vmatpush1.msra.mxu0 0.0
        %997 = vmatprep.subr.mxu0 0.0
        %998 = vmatpush1.msra.mxu0 0.0
        %999 = vmatprep.subr.mxu0 0.0
        %1000 = vmatpush1.msra.mxu0 0.0
        %1001 = vmatprep.subr.mxu0 0.0
        %1002 = vmatpush1.msra.mxu0 0.0
        %1003 = vmatprep.mubr.f32.mxu0 0.0
        %v1004 = vand.u32 %v843, 4294901760
        %1005 = vmatmul.mubr.f32.gmra.mrb[0].mxu0 %v1004
        %v1006 = vpop.f32.mrb[0].mxu0
        %v1007 = vadd.f32 %v925, %v1006
        %v1008 = vpop.f32.mrb[0].mxu0
        %v1009 = vadd.f32 %v927, %v1008
        %1010 = vdwg.mxu0
        %v1011 = vand.u32 %v849, 4294901760
        %v1012 = vsub.f32 %v849, %v1011
        %1013 = vmatprep.subr.mxu0 %v1012
        %v1014 = vand.u32 %v846, 4294901760
        %v1015 = vsub.f32 %v846, %v1014
        %1016 = vmatpush1.msra.mxu0 %v1015
        %1017 = vmatprep.subr.mxu0 0.0
        %1018 = vmatpush1.msra.mxu0 0.0
        %1019 = vmatprep.subr.mxu0 0.0
        %1020 = vmatpush1.msra.mxu0 0.0
        %1021 = vmatprep.subr.mxu0 0.0
        %1022 = vmatpush1.msra.mxu0 0.0
        %1023 = vmatprep.subr.mxu0 0.0
        %1024 = vmatpush1.msra.mxu0 0.0
        %1025 = vmatprep.subr.mxu0 0.0
        %1026 = vmatpush1.msra.mxu0 0.0
        %1027 = vmatprep.subr.mxu0 0.0
        %1028 = vmatpush1.msra.mxu0 0.0
        %1029 = vmatprep.subr.mxu0 0.0
        %1030 = vmatpush1.msra.mxu0 0.0
        %1031 = vmatprep.subr.mxu0 0.0
        %1032 = vmatpush1.msra.mxu0 0.0
        %1033 = vmatprep.subr.mxu0 0.0
        %1034 = vmatpush1.msra.mxu0 0.0
        %1035 = vmatprep.subr.mxu0 0.0
        %1036 = vmatpush1.msra.mxu0 0.0
        %1037 = vmatprep.subr.mxu0 0.0
        %1038 = vmatpush1.msra.mxu0 0.0
        %1039 = vmatprep.subr.mxu0 0.0
        %1040 = vmatpush1.msra.mxu0 0.0
        %1041 = vmatprep.subr.mxu0 0.0
        %1042 = vmatpush1.msra.mxu0 0.0
        %1043 = vmatprep.subr.mxu0 0.0
        %1044 = vmatpush1.msra.mxu0 0.0
        %1045 = vmatprep.subr.mxu0 0.0
        %1046 = vmatpush1.msra.mxu0 0.0
        %1047 = vmatprep.subr.mxu0 0.0
        %1048 = vmatpush1.msra.mxu0 0.0
        %1049 = vmatprep.subr.mxu0 0.0
        %1050 = vmatpush1.msra.mxu0 0.0
        %1051 = vmatprep.subr.mxu0 0.0
        %1052 = vmatpush1.msra.mxu0 0.0
        %1053 = vmatprep.subr.mxu0 0.0
        %1054 = vmatpush1.msra.mxu0 0.0
        %1055 = vmatprep.subr.mxu0 0.0
        %1056 = vmatpush1.msra.mxu0 0.0
        %1057 = vmatprep.subr.mxu0 0.0
        %1058 = vmatpush1.msra.mxu0 0.0
        %1059 = vmatprep.subr.mxu0 0.0
        %1060 = vmatpush1.msra.mxu0 0.0
        %1061 = vmatprep.subr.mxu0 0.0
        %1062 = vmatpush1.msra.mxu0 0.0
        %1063 = vmatprep.subr.mxu0 0.0
        %1064 = vmatpush1.msra.mxu0 0.0
        %1065 = vmatprep.subr.mxu0 0.0
        %1066 = vmatpush1.msra.mxu0 0.0
        %1067 = vmatprep.subr.mxu0 0.0
        %1068 = vmatpush1.msra.mxu0 0.0
        %1069 = vmatprep.subr.mxu0 0.0
        %1070 = vmatpush1.msra.mxu0 0.0
        %1071 = vmatprep.subr.mxu0 0.0
        %1072 = vmatpush1.msra.mxu0 0.0
        %1073 = vmatprep.subr.mxu0 0.0
        %1074 = vmatpush1.msra.mxu0 0.0
        %1075 = vmatprep.subr.mxu0 0.0
        %1076 = vmatpush1.msra.mxu0 0.0
        %1077 = vmatprep.subr.mxu0 0.0
        %1078 = vmatpush1.msra.mxu0 0.0
        %1079 = vmatprep.mubr.f32.mxu0 0.0
        %v1080 = vand.u32 %v843, 4294901760
        %v1081 = vsub.f32 %v843, %v1080
        %1082 = vmatmul.mubr.f32.gmra.mrb[0].mxu0 %v1081
        %v1083 = vpop.f32.mrb[0].mxu0
        %v1084 = vadd.f32 %v1007, %v1083
        %v1085 = vpop.f32.mrb[0].mxu0
        %v1086 = vadd.f32 %v1009, %v1085
        %1087 = vdwg.mxu0
        %v1088 = vand.u32 %v849, 4294901760
        %1089 = vmatprep.subr.mxu0 %v1088
        %v1090 = vand.u32 %v846, 4294901760
        %1091 = vmatpush1.msra.mxu0 %v1090
        %1092 = vmatprep.subr.mxu0 0.0
        %1093 = vmatpush1.msra.mxu0 0.0
        %1094 = vmatprep.subr.mxu0 0.0
        %1095 = vmatpush1.msra.mxu0 0.0
        %1096 = vmatprep.subr.mxu0 0.0
        %1097 = vmatpush1.msra.mxu0 0.0
        %1098 = vmatprep.subr.mxu0 0.0
        %1099 = vmatpush1.msra.mxu0 0.0
        %1100 = vmatprep.subr.mxu0 0.0
        %1101 = vmatpush1.msra.mxu0 0.0
        %1102 = vmatprep.subr.mxu0 0.0
        %1103 = vmatpush1.msra.mxu0 0.0
        %1104 = vmatprep.subr.mxu0 0.0
        %1105 = vmatpush1.msra.mxu0 0.0
        %1106 = vmatprep.subr.mxu0 0.0
        %1107 = vmatpush1.msra.mxu0 0.0
        %1108 = vmatprep.subr.mxu0 0.0
        %1109 = vmatpush1.msra.mxu0 0.0
        %1110 = vmatprep.subr.mxu0 0.0
        %1111 = vmatpush1.msra.mxu0 0.0
        %1112 = vmatprep.subr.mxu0 0.0
        %1113 = vmatpush1.msra.mxu0 0.0
        %1114 = vmatprep.subr.mxu0 0.0
        %1115 = vmatpush1.msra.mxu0 0.0
        %1116 = vmatprep.subr.mxu0 0.0
        %1117 = vmatpush1.msra.mxu0 0.0
        %1118 = vmatprep.subr.mxu0 0.0
        %1119 = vmatpush1.msra.mxu0 0.0
        %1120 = vmatprep.subr.mxu0 0.0
        %1121 = vmatpush1.msra.mxu0 0.0
        %1122 = vmatprep.subr.mxu0 0.0
        %1123 = vmatpush1.msra.mxu0 0.0
        %1124 = vmatprep.subr.mxu0 0.0
        %1125 = vmatpush1.msra.mxu0 0.0
        %1126 = vmatprep.subr.mxu0 0.0
        %1127 = vmatpush1.msra.mxu0 0.0
        %1128 = vmatprep.subr.mxu0 0.0
        %1129 = vmatpush1.msra.mxu0 0.0
        %1130 = vmatprep.subr.mxu0 0.0
        %1131 = vmatpush1.msra.mxu0 0.0
        %1132 = vmatprep.subr.mxu0 0.0
        %1133 = vmatpush1.msra.mxu0 0.0
        %1134 = vmatprep.subr.mxu0 0.0
        %1135 = vmatpush1.msra.mxu0 0.0
        %1136 = vmatprep.subr.mxu0 0.0
        %1137 = vmatpush1.msra.mxu0 0.0
        %1138 = vmatprep.subr.mxu0 0.0
        %1139 = vmatpush1.msra.mxu0 0.0
        %1140 = vmatprep.subr.mxu0 0.0
        %1141 = vmatpush1.msra.mxu0 0.0
        %1142 = vmatprep.subr.mxu0 0.0
        %1143 = vmatpush1.msra.mxu0 0.0
        %1144 = vmatprep.subr.mxu0 0.0
        %1145 = vmatpush1.msra.mxu0 0.0
        %1146 = vmatprep.subr.mxu0 0.0
        %1147 = vmatpush1.msra.mxu0 0.0
        %1148 = vmatprep.subr.mxu0 0.0
        %1149 = vmatpush1.msra.mxu0 0.0
        %1150 = vmatprep.subr.mxu0 0.0
        %1151 = vmatpush1.msra.mxu0 0.0
        %1152 = vmatprep.subr.mxu0 0.0
        %1153 = vmatpush1.msra.mxu0 0.0
        %1154 = vmatprep.mubr.f32.mxu0 0.0
        %v1155 = vand.u32 %v843, 4294901760
        %v1156 = vsub.f32 %v843, %v1155
        %v1157 = vand.u32 %v1156, 4294901760
        %1158 = vmatmul.mubr.f32.gmra.mrb[0].mxu0 %v1157
        %v1159 = vpop.f32.mrb[0].mxu0
        %v1160 = vadd.f32 %v1084, %v1159
        %v1161 = vpop.f32.mrb[0].mxu0
        %v1162 = vadd.f32 %v1086, %v1161
        %1163 = vdwg.mxu0
        %v1164 = vand.u32 %v849, 4294901760
        %v1165 = vsub.f32 %v849, %v1164
        %v1166 = vand.u32 %v1165, 4294901760
        %1167 = vmatprep.subr.mxu0 %v1166
        %v1168 = vand.u32 %v846, 4294901760
        %v1169 = vsub.f32 %v846, %v1168
        %v1170 = vand.u32 %v1169, 4294901760
        %1171 = vmatpush1.msra.mxu0 %v1170
        %1172 = vmatprep.subr.mxu0 0.0
        %1173 = vmatpush1.msra.mxu0 0.0
        %1174 = vmatprep.subr.mxu0 0.0
        %1175 = vmatpush1.msra.mxu0 0.0
        %1176 = vmatprep.subr.mxu0 0.0
        %1177 = vmatpush1.msra.mxu0 0.0
        %1178 = vmatprep.subr.mxu0 0.0
        %1179 = vmatpush1.msra.mxu0 0.0
        %1180 = vmatprep.subr.mxu0 0.0
        %1181 = vmatpush1.msra.mxu0 0.0
        %1182 = vmatprep.subr.mxu0 0.0
        %1183 = vmatpush1.msra.mxu0 0.0
        %1184 = vmatprep.subr.mxu0 0.0
        %1185 = vmatpush1.msra.mxu0 0.0
        %1186 = vmatprep.subr.mxu0 0.0
        %1187 = vmatpush1.msra.mxu0 0.0
        %1188 = vmatprep.subr.mxu0 0.0
        %1189 = vmatpush1.msra.mxu0 0.0
        %1190 = vmatprep.subr.mxu0 0.0
        %1191 = vmatpush1.msra.mxu0 0.0
        %1192 = vmatprep.subr.mxu0 0.0
        %1193 = vmatpush1.msra.mxu0 0.0
        %1194 = vmatprep.subr.mxu0 0.0
        %1195 = vmatpush1.msra.mxu0 0.0
        %1196 = vmatprep.subr.mxu0 0.0
        %1197 = vmatpush1.msra.mxu0 0.0
        %1198 = vmatprep.subr.mxu0 0.0
        %1199 = vmatpush1.msra.mxu0 0.0
        %1200 = vmatprep.subr.mxu0 0.0
        %1201 = vmatpush1.msra.mxu0 0.0
        %1202 = vmatprep.subr.mxu0 0.0
        %1203 = vmatpush1.msra.mxu0 0.0
        %1204 = vmatprep.subr.mxu0 0.0
        %1205 = vmatpush1.msra.mxu0 0.0
        %1206 = vmatprep.subr.mxu0 0.0
        %1207 = vmatpush1.msra.mxu0 0.0
        %1208 = vmatprep.subr.mxu0 0.0
        %1209 = vmatpush1.msra.mxu0 0.0
        %1210 = vmatprep.subr.mxu0 0.0
        %1211 = vmatpush1.msra.mxu0 0.0
        %1212 = vmatprep.subr.mxu0 0.0
        %1213 = vmatpush1.msra.mxu0 0.0
        %1214 = vmatprep.subr.mxu0 0.0
        %1215 = vmatpush1.msra.mxu0 0.0
        %1216 = vmatprep.subr.mxu0 0.0
        %1217 = vmatpush1.msra.mxu0 0.0
        %1218 = vmatprep.subr.mxu0 0.0
        %1219 = vmatpush1.msra.mxu0 0.0
        %1220 = vmatprep.subr.mxu0 0.0
        %1221 = vmatpush1.msra.mxu0 0.0
        %1222 = vmatprep.subr.mxu0 0.0
        %1223 = vmatpush1.msra.mxu0 0.0
        %1224 = vmatprep.subr.mxu0 0.0
        %1225 = vmatpush1.msra.mxu0 0.0
        %1226 = vmatprep.subr.mxu0 0.0
        %1227 = vmatpush1.msra.mxu0 0.0
        %1228 = vmatprep.subr.mxu0 0.0
        %1229 = vmatpush1.msra.mxu0 0.0
        %1230 = vmatprep.subr.mxu0 0.0
        %1231 = vmatpush1.msra.mxu0 0.0
        %1232 = vmatprep.subr.mxu0 0.0
        %1233 = vmatpush1.msra.mxu0 0.0
        %1234 = vmatprep.mubr.f32.mxu0 0.0
        %v1235 = vand.u32 %v843, 4294901760
        %1236 = vmatmul.mubr.f32.gmra.mrb[0].mxu0 %v1235
        %v1237 = vpop.f32.mrb[0].mxu0
        %v1238 = vadd.f32 %v1160, %v1237
        %v1239 = vpop.f32.mrb[0].mxu0
        %v1240 = vadd.f32 %v1162, %v1239
        %1241 = vdwg.mxu0
        %v1242 = vand.u32 %v849, 4294901760
        %1243 = vmatprep.subr.mxu0 %v1242
        %v1244 = vand.u32 %v846, 4294901760
        %1245 = vmatpush1.msra.mxu0 %v1244
        %1246 = vmatprep.subr.mxu0 0.0
        %1247 = vmatpush1.msra.mxu0 0.0
        %1248 = vmatprep.subr.mxu0 0.0
        %1249 = vmatpush1.msra.mxu0 0.0
        %1250 = vmatprep.subr.mxu0 0.0
        %1251 = vmatpush1.msra.mxu0 0.0
        %1252 = vmatprep.subr.mxu0 0.0
        %1253 = vmatpush1.msra.mxu0 0.0
        %1254 = vmatprep.subr.mxu0 0.0
        %1255 = vmatpush1.msra.mxu0 0.0
        %1256 = vmatprep.subr.mxu0 0.0
        %1257 = vmatpush1.msra.mxu0 0.0
        %1258 = vmatprep.subr.mxu0 0.0
        %1259 = vmatpush1.msra.mxu0 0.0
        %1260 = vmatprep.subr.mxu0 0.0
        %1261 = vmatpush1.msra.mxu0 0.0
        %1262 = vmatprep.subr.mxu0 0.0
        %1263 = vmatpush1.msra.mxu0 0.0
        %1264 = vmatprep.subr.mxu0 0.0
        %1265 = vmatpush1.msra.mxu0 0.0
        %1266 = vmatprep.subr.mxu0 0.0
        %1267 = vmatpush1.msra.mxu0 0.0
        %1268 = vmatprep.subr.mxu0 0.0
        %1269 = vmatpush1.msra.mxu0 0.0
        %1270 = vmatprep.subr.mxu0 0.0
        %1271 = vmatpush1.msra.mxu0 0.0
        %1272 = vmatprep.subr.mxu0 0.0
        %1273 = vmatpush1.msra.mxu0 0.0
        %1274 = vmatprep.subr.mxu0 0.0
        %1275 = vmatpush1.msra.mxu0 0.0
        %1276 = vmatprep.subr.mxu0 0.0
        %1277 = vmatpush1.msra.mxu0 0.0
        %1278 = vmatprep.subr.mxu0 0.0
        %1279 = vmatpush1.msra.mxu0 0.0
        %1280 = vmatprep.subr.mxu0 0.0
        %1281 = vmatpush1.msra.mxu0 0.0
        %1282 = vmatprep.subr.mxu0 0.0
        %1283 = vmatpush1.msra.mxu0 0.0
        %1284 = vmatprep.subr.mxu0 0.0
        %1285 = vmatpush1.msra.mxu0 0.0
        %1286 = vmatprep.subr.mxu0 0.0
        %1287 = vmatpush1.msra.mxu0 0.0
        %1288 = vmatprep.subr.mxu0 0.0
        %1289 = vmatpush1.msra.mxu0 0.0
        %1290 = vmatprep.subr.mxu0 0.0
        %1291 = vmatpush1.msra.mxu0 0.0
        %1292 = vmatprep.subr.mxu0 0.0
        %1293 = vmatpush1.msra.mxu0 0.0
        %1294 = vmatprep.subr.mxu0 0.0
        %1295 = vmatpush1.msra.mxu0 0.0
        %1296 = vmatprep.subr.mxu0 0.0
        %1297 = vmatpush1.msra.mxu0 0.0
        %1298 = vmatprep.subr.mxu0 0.0
        %1299 = vmatpush1.msra.mxu0 0.0
        %1300 = vmatprep.subr.mxu0 0.0
        %1301 = vmatpush1.msra.mxu0 0.0
        %1302 = vmatprep.subr.mxu0 0.0
        %1303 = vmatpush1.msra.mxu0 0.0
        %1304 = vmatprep.subr.mxu0 0.0
        %1305 = vmatpush1.msra.mxu0 0.0
        %1306 = vmatprep.subr.mxu0 0.0
        %1307 = vmatpush1.msra.mxu0 0.0
        %1308 = vmatprep.mubr.f32.mxu0 0.0
        %v1309 = vand.u32 %v843, 4294901760
        %1310 = vmatmul.mubr.f32.gmra.mrb[0].mxu0 %v1309
        %v1311 = vpop.f32.mrb[0].mxu0
        %v1312 = vadd.f32 %v1238, %v1311
        %v1313 = vpop.f32.mrb[0].mxu0
        %v1314 = vadd.f32 %v1240, %v1313
        %1315 = vdwg.mxu0
        %s1316 = scalar_lea.vmem %s3, 2
        %v1317 = vld [vmem:[%s1316] sm:$0x3]
        %1318 = vrot.lane.b32.xlu0 %v325, 16
        %v1319 = vpop.permute.xlu0 %1318
        %1320 = vrot.lane.b32.xlu0 %v329, 16
        %v1321 = vpop.permute.xlu0 %1320
        %vm1322 = vcmp.lt.s32.totalorder %v336, 16
        %v1323 = vsel %vm1322, %v1319, %v1321
        %v1324 = vsel %vm1322, %v1321, %v1319
        %v1326 = vlaneseq
        %v1327 = vshrl.u32 %v1326, 7
        %v1328 = vsub.s32 0, %v1327
        %v1329 = vrot.slane %v1317, %v1328
        %v1330 = vlaneseq
        %v1331 = vshrl.u32 %v1330, 7
        %v1332 = vsub.s32 1, %v1331
        %v1333 = vrot.slane %v1317, %v1332
        %v1336 = vmul.f32 %v1324, %v1329
        %v1337 = vmul.f32 %v1323, %v1333
        %1338 = vrot.lane.b32.xlu0 %v326, 16
        %v1339 = vpop.permute.xlu0 %1338
        %1340 = vrot.lane.b32.xlu0 %v354, 16
        %v1341 = vpop.permute.xlu0 %1340
        %v1342 = vsel %vm1322, %v1339, %v1341
        %v1343 = vsel %vm1322, %v1341, %v1339
        %v1344 = vmul.f32 %v1343, %v1329
        %v1345 = vmul.f32 %v1342, %v1333
        %s1346 = scalar_lea.vmem %s1, 4
        %v1347 = vld [vmem:[%s1346] sm:$0xf]
        %v1349 = vsel %vm366, %v1347, 0
        %v1352 = vsel %vm370, %v1336, 0
        %v1355 = vsel %vm370, %v1337, 0
        %v1357 = vand.u32 %v1355, 4294901760
        %1358 = vmatprep.subr.mxu0 %v1357
        %v1359 = vand.u32 %v1352, 4294901760
        %1360 = vmatpush1.msra.mxu0 %v1359
        %1361 = vmatprep.subr.mxu0 0.0
        %1362 = vmatpush1.msra.mxu0 0.0
        %1363 = vmatprep.subr.mxu0 0.0
        %1364 = vmatpush1.msra.mxu0 0.0
        %1365 = vmatprep.subr.mxu0 0.0
        %1366 = vmatpush1.msra.mxu0 0.0
        %1367 = vmatprep.subr.mxu0 0.0
        %1368 = vmatpush1.msra.mxu0 0.0
        %1369 = vmatprep.subr.mxu0 0.0
        %1370 = vmatpush1.msra.mxu0 0.0
        %1371 = vmatprep.subr.mxu0 0.0
        %1372 = vmatpush1.msra.mxu0 0.0
        %1373 = vmatprep.subr.mxu0 0.0
        %1374 = vmatpush1.msra.mxu0 0.0
        %1375 = vmatprep.subr.mxu0 0.0
        %1376 = vmatpush1.msra.mxu0 0.0
        %1377 = vmatprep.subr.mxu0 0.0
        %1378 = vmatpush1.msra.mxu0 0.0
        %1379 = vmatprep.subr.mxu0 0.0
        %1380 = vmatpush1.msra.mxu0 0.0
        %1381 = vmatprep.subr.mxu0 0.0
        %1382 = vmatpush1.msra.mxu0 0.0
        %1383 = vmatprep.subr.mxu0 0.0
        %1384 = vmatpush1.msra.mxu0 0.0
        %1385 = vmatprep.subr.mxu0 0.0
        %1386 = vmatpush1.msra.mxu0 0.0
        %1387 = vmatprep.subr.mxu0 0.0
        %1388 = vmatpush1.msra.mxu0 0.0
        %1389 = vmatprep.subr.mxu0 0.0
        %1390 = vmatpush1.msra.mxu0 0.0
        %1391 = vmatprep.subr.mxu0 0.0
        %1392 = vmatpush1.msra.mxu0 0.0
        %1393 = vmatprep.subr.mxu0 0.0
        %1394 = vmatpush1.msra.mxu0 0.0
        %1395 = vmatprep.subr.mxu0 0.0
        %1396 = vmatpush1.msra.mxu0 0.0
        %1397 = vmatprep.subr.mxu0 0.0
        %1398 = vmatpush1.msra.mxu0 0.0
        %1399 = vmatprep.subr.mxu0 0.0
        %1400 = vmatpush1.msra.mxu0 0.0
        %1401 = vmatprep.subr.mxu0 0.0
        %1402 = vmatpush1.msra.mxu0 0.0
        %1403 = vmatprep.subr.mxu0 0.0
        %1404 = vmatpush1.msra.mxu0 0.0
        %1405 = vmatprep.subr.mxu0 0.0
        %1406 = vmatpush1.msra.mxu0 0.0
        %1407 = vmatprep.subr.mxu0 0.0
        %1408 = vmatpush1.msra.mxu0 0.0
        %1409 = vmatprep.subr.mxu0 0.0
        %1410 = vmatpush1.msra.mxu0 0.0
        %1411 = vmatprep.subr.mxu0 0.0
        %1412 = vmatpush1.msra.mxu0 0.0
        %1413 = vmatprep.subr.mxu0 0.0
        %1414 = vmatpush1.msra.mxu0 0.0
        %1415 = vmatprep.subr.mxu0 0.0
        %1416 = vmatpush1.msra.mxu0 0.0
        %1417 = vmatprep.subr.mxu0 0.0
        %1418 = vmatpush1.msra.mxu0 0.0
        %1419 = vmatprep.subr.mxu0 0.0
        %1420 = vmatpush1.msra.mxu0 0.0
        %1421 = vmatprep.subr.mxu0 0.0
        %1422 = vmatpush1.msra.mxu0 0.0
        %1423 = vmatprep.mubr.f32.mxu0 0.0
        %v1424 = vand.u32 %v1349, 4294901760
        %v1425 = vsub.f32 %v1349, %v1424
        %v1426 = vand.u32 %v1425, 4294901760
        %v1427 = vsub.f32 %v1425, %v1426
        %v1428 = vand.u32 %v1427, 4294901760
        %1429 = vmatmul.mubr.f32.gmra.mrb[0].mxu0 %v1428
        %v1430 = vpop.f32.mrb[0].mxu0
        %v1431 = vadd.f32 0.0, %v1430
        %v1432 = vpop.f32.mrb[0].mxu0
        %v1433 = vadd.f32 0.0, %v1432
        %1434 = vdwg.mxu0
        %v1435 = vand.u32 %v1355, 4294901760
        %v1436 = vsub.f32 %v1355, %v1435
        %v1437 = vand.u32 %v1436, 4294901760
        %v1438 = vsub.f32 %v1436, %v1437
        %v1439 = vand.u32 %v1438, 4294901760
        %1440 = vmatprep.subr.mxu0 %v1439
        %v1441 = vand.u32 %v1352, 4294901760
        %v1442 = vsub.f32 %v1352, %v1441
        %v1443 = vand.u32 %v1442, 4294901760
        %v1444 = vsub.f32 %v1442, %v1443
        %v1445 = vand.u32 %v1444, 4294901760
        %1446 = vmatpush1.msra.mxu0 %v1445
        %1447 = vmatprep.subr.mxu0 0.0
        %1448 = vmatpush1.msra.mxu0 0.0
        %1449 = vmatprep.subr.mxu0 0.0
        %1450 = vmatpush1.msra.mxu0 0.0
        %1451 = vmatprep.subr.mxu0 0.0
        %1452 = vmatpush1.msra.mxu0 0.0
        %1453 = vmatprep.subr.mxu0 0.0
        %1454 = vmatpush1.msra.mxu0 0.0
        %1455 = vmatprep.subr.mxu0 0.0
        %1456 = vmatpush1.msra.mxu0 0.0
        %1457 = vmatprep.subr.mxu0 0.0
        %1458 = vmatpush1.msra.mxu0 0.0
        %1459 = vmatprep.subr.mxu0 0.0
        %1460 = vmatpush1.msra.mxu0 0.0
        %1461 = vmatprep.subr.mxu0 0.0
        %1462 = vmatpush1.msra.mxu0 0.0
        %1463 = vmatprep.subr.mxu0 0.0
        %1464 = vmatpush1.msra.mxu0 0.0
        %1465 = vmatprep.subr.mxu0 0.0
        %1466 = vmatpush1.msra.mxu0 0.0
        %1467 = vmatprep.subr.mxu0 0.0
        %1468 = vmatpush1.msra.mxu0 0.0
        %1469 = vmatprep.subr.mxu0 0.0
        %1470 = vmatpush1.msra.mxu0 0.0
        %1471 = vmatprep.subr.mxu0 0.0
        %1472 = vmatpush1.msra.mxu0 0.0
        %1473 = vmatprep.subr.mxu0 0.0
        %1474 = vmatpush1.msra.mxu0 0.0
        %1475 = vmatprep.subr.mxu0 0.0
        %1476 = vmatpush1.msra.mxu0 0.0
        %1477 = vmatprep.subr.mxu0 0.0
        %1478 = vmatpush1.msra.mxu0 0.0
        %1479 = vmatprep.subr.mxu0 0.0
        %1480 = vmatpush1.msra.mxu0 0.0
        %1481 = vmatprep.subr.mxu0 0.0
        %1482 = vmatpush1.msra.mxu0 0.0
        %1483 = vmatprep.subr.mxu0 0.0
        %1484 = vmatpush1.msra.mxu0 0.0
        %1485 = vmatprep.subr.mxu0 0.0
        %1486 = vmatpush1.msra.mxu0 0.0
        %1487 = vmatprep.subr.mxu0 0.0
        %1488 = vmatpush1.msra.mxu0 0.0
        %1489 = vmatprep.subr.mxu0 0.0
        %1490 = vmatpush1.msra.mxu0 0.0
        %1491 = vmatprep.subr.mxu0 0.0
        %1492 = vmatpush1.msra.mxu0 0.0
        %1493 = vmatprep.subr.mxu0 0.0
        %1494 = vmatpush1.msra.mxu0 0.0
        %1495 = vmatprep.subr.mxu0 0.0
        %1496 = vmatpush1.msra.mxu0 0.0
        %1497 = vmatprep.subr.mxu0 0.0
        %1498 = vmatpush1.msra.mxu0 0.0
        %1499 = vmatprep.subr.mxu0 0.0
        %1500 = vmatpush1.msra.mxu0 0.0
        %1501 = vmatprep.subr.mxu0 0.0
        %1502 = vmatpush1.msra.mxu0 0.0
        %1503 = vmatprep.subr.mxu0 0.0
        %1504 = vmatpush1.msra.mxu0 0.0
        %1505 = vmatprep.subr.mxu0 0.0
        %1506 = vmatpush1.msra.mxu0 0.0
        %1507 = vmatprep.subr.mxu0 0.0
        %1508 = vmatpush1.msra.mxu0 0.0
        %1509 = vmatprep.mubr.f32.mxu0 0.0
        %v1510 = vand.u32 %v1349, 4294901760
        %1511 = vmatmul.mubr.f32.gmra.mrb[0].mxu0 %v1510
        %v1512 = vpop.f32.mrb[0].mxu0
        %v1513 = vadd.f32 %v1431, %v1512
        %v1514 = vpop.f32.mrb[0].mxu0
        %v1515 = vadd.f32 %v1433, %v1514
        %1516 = vdwg.mxu0
        %v1517 = vand.u32 %v1355, 4294901760
        %v1518 = vsub.f32 %v1355, %v1517
        %1519 = vmatprep.subr.mxu0 %v1518
        %v1520 = vand.u32 %v1352, 4294901760
        %v1521 = vsub.f32 %v1352, %v1520
        %1522 = vmatpush1.msra.mxu0 %v1521
        %1523 = vmatprep.subr.mxu0 0.0
        %1524 = vmatpush1.msra.mxu0 0.0
        %1525 = vmatprep.subr.mxu0 0.0
        %1526 = vmatpush1.msra.mxu0 0.0
        %1527 = vmatprep.subr.mxu0 0.0
        %1528 = vmatpush1.msra.mxu0 0.0
        %1529 = vmatprep.subr.mxu0 0.0
        %1530 = vmatpush1.msra.mxu0 0.0
        %1531 = vmatprep.subr.mxu0 0.0
        %1532 = vmatpush1.msra.mxu0 0.0
        %1533 = vmatprep.subr.mxu0 0.0
        %1534 = vmatpush1.msra.mxu0 0.0
        %1535 = vmatprep.subr.mxu0 0.0
        %1536 = vmatpush1.msra.mxu0 0.0
        %1537 = vmatprep.subr.mxu0 0.0
        %1538 = vmatpush1.msra.mxu0 0.0
        %1539 = vmatprep.subr.mxu0 0.0
        %1540 = vmatpush1.msra.mxu0 0.0
        %1541 = vmatprep.subr.mxu0 0.0
        %1542 = vmatpush1.msra.mxu0 0.0
        %1543 = vmatprep.subr.mxu0 0.0
        %1544 = vmatpush1.msra.mxu0 0.0
        %1545 = vmatprep.subr.mxu0 0.0
        %1546 = vmatpush1.msra.mxu0 0.0
        %1547 = vmatprep.subr.mxu0 0.0
        %1548 = vmatpush1.msra.mxu0 0.0
        %1549 = vmatprep.subr.mxu0 0.0
        %1550 = vmatpush1.msra.mxu0 0.0
        %1551 = vmatprep.subr.mxu0 0.0
        %1552 = vmatpush1.msra.mxu0 0.0
        %1553 = vmatprep.subr.mxu0 0.0
        %1554 = vmatpush1.msra.mxu0 0.0
        %1555 = vmatprep.subr.mxu0 0.0
        %1556 = vmatpush1.msra.mxu0 0.0
        %1557 = vmatprep.subr.mxu0 0.0
        %1558 = vmatpush1.msra.mxu0 0.0
        %1559 = vmatprep.subr.mxu0 0.0
        %1560 = vmatpush1.msra.mxu0 0.0
        %1561 = vmatprep.subr.mxu0 0.0
        %1562 = vmatpush1.msra.mxu0 0.0
        %1563 = vmatprep.subr.mxu0 0.0
        %1564 = vmatpush1.msra.mxu0 0.0
        %1565 = vmatprep.subr.mxu0 0.0
        %1566 = vmatpush1.msra.mxu0 0.0
        %1567 = vmatprep.subr.mxu0 0.0
        %1568 = vmatpush1.msra.mxu0 0.0
        %1569 = vmatprep.subr.mxu0 0.0
        %1570 = vmatpush1.msra.mxu0 0.0
        %1571 = vmatprep.subr.mxu0 0.0
        %1572 = vmatpush1.msra.mxu0 0.0
        %1573 = vmatprep.subr.mxu0 0.0
        %1574 = vmatpush1.msra.mxu0 0.0
        %1575 = vmatprep.subr.mxu0 0.0
        %1576 = vmatpush1.msra.mxu0 0.0
        %1577 = vmatprep.subr.mxu0 0.0
        %1578 = vmatpush1.msra.mxu0 0.0
        %1579 = vmatprep.subr.mxu0 0.0
        %1580 = vmatpush1.msra.mxu0 0.0
        %1581 = vmatprep.subr.mxu0 0.0
        %1582 = vmatpush1.msra.mxu0 0.0
        %1583 = vmatprep.subr.mxu0 0.0
        %1584 = vmatpush1.msra.mxu0 0.0
        %1585 = vmatprep.mubr.f32.mxu0 0.0
        %v1586 = vand.u32 %v1349, 4294901760
        %v1587 = vsub.f32 %v1349, %v1586
        %1588 = vmatmul.mubr.f32.gmra.mrb[0].mxu0 %v1587
        %v1589 = vpop.f32.mrb[0].mxu0
        %v1590 = vadd.f32 %v1513, %v1589
        %v1591 = vpop.f32.mrb[0].mxu0
        %v1592 = vadd.f32 %v1515, %v1591
        %1593 = vdwg.mxu0
        %v1594 = vand.u32 %v1355, 4294901760
        %1595 = vmatprep.subr.mxu0 %v1594
        %v1596 = vand.u32 %v1352, 4294901760
        %1597 = vmatpush1.msra.mxu0 %v1596
        %1598 = vmatprep.subr.mxu0 0.0
        %1599 = vmatpush1.msra.mxu0 0.0
        %1600 = vmatprep.subr.mxu0 0.0
        %1601 = vmatpush1.msra.mxu0 0.0
        %1602 = vmatprep.subr.mxu0 0.0
        %1603 = vmatpush1.msra.mxu0 0.0
        %1604 = vmatprep.subr.mxu0 0.0
        %1605 = vmatpush1.msra.mxu0 0.0
        %1606 = vmatprep.subr.mxu0 0.0
        %1607 = vmatpush1.msra.mxu0 0.0
        %1608 = vmatprep.subr.mxu0 0.0
        %1609 = vmatpush1.msra.mxu0 0.0
        %1610 = vmatprep.subr.mxu0 0.0
        %1611 = vmatpush1.msra.mxu0 0.0
        %1612 = vmatprep.subr.mxu0 0.0
        %1613 = vmatpush1.msra.mxu0 0.0
        %1614 = vmatprep.subr.mxu0 0.0
        %1615 = vmatpush1.msra.mxu0 0.0
        %1616 = vmatprep.subr.mxu0 0.0
        %1617 = vmatpush1.msra.mxu0 0.0
        %1618 = vmatprep.subr.mxu0 0.0
        %1619 = vmatpush1.msra.mxu0 0.0
        %1620 = vmatprep.subr.mxu0 0.0
        %1621 = vmatpush1.msra.mxu0 0.0
        %1622 = vmatprep.subr.mxu0 0.0
        %1623 = vmatpush1.msra.mxu0 0.0
        %1624 = vmatprep.subr.mxu0 0.0
        %1625 = vmatpush1.msra.mxu0 0.0
        %1626 = vmatprep.subr.mxu0 0.0
        %1627 = vmatpush1.msra.mxu0 0.0
        %1628 = vmatprep.subr.mxu0 0.0
        %1629 = vmatpush1.msra.mxu0 0.0
        %1630 = vmatprep.subr.mxu0 0.0
        %1631 = vmatpush1.msra.mxu0 0.0
        %1632 = vmatprep.subr.mxu0 0.0
        %1633 = vmatpush1.msra.mxu0 0.0
        %1634 = vmatprep.subr.mxu0 0.0
        %1635 = vmatpush1.msra.mxu0 0.0
        %1636 = vmatprep.subr.mxu0 0.0
        %1637 = vmatpush1.msra.mxu0 0.0
        %1638 = vmatprep.subr.mxu0 0.0
        %1639 = vmatpush1.msra.mxu0 0.0
        %1640 = vmatprep.subr.mxu0 0.0
        %1641 = vmatpush1.msra.mxu0 0.0
        %1642 = vmatprep.subr.mxu0 0.0
        %1643 = vmatpush1.msra.mxu0 0.0
        %1644 = vmatprep.subr.mxu0 0.0
        %1645 = vmatpush1.msra.mxu0 0.0
        %1646 = vmatprep.subr.mxu0 0.0
        %1647 = vmatpush1.msra.mxu0 0.0
        %1648 = vmatprep.subr.mxu0 0.0
        %1649 = vmatpush1.msra.mxu0 0.0
        %1650 = vmatprep.subr.mxu0 0.0
        %1651 = vmatpush1.msra.mxu0 0.0
        %1652 = vmatprep.subr.mxu0 0.0
        %1653 = vmatpush1.msra.mxu0 0.0
        %1654 = vmatprep.subr.mxu0 0.0
        %1655 = vmatpush1.msra.mxu0 0.0
        %1656 = vmatprep.subr.mxu0 0.0
        %1657 = vmatpush1.msra.mxu0 0.0
        %1658 = vmatprep.subr.mxu0 0.0
        %1659 = vmatpush1.msra.mxu0 0.0
        %1660 = vmatprep.mubr.f32.mxu0 0.0
        %v1661 = vand.u32 %v1349, 4294901760
        %v1662 = vsub.f32 %v1349, %v1661
        %v1663 = vand.u32 %v1662, 4294901760
        %1664 = vmatmul.mubr.f32.gmra.mrb[0].mxu0 %v1663
        %v1665 = vpop.f32.mrb[0].mxu0
        %v1666 = vadd.f32 %v1590, %v1665
        %v1667 = vpop.f32.mrb[0].mxu0
        %v1668 = vadd.f32 %v1592, %v1667
        %1669 = vdwg.mxu0
        %v1670 = vand.u32 %v1355, 4294901760
        %v1671 = vsub.f32 %v1355, %v1670
        %v1672 = vand.u32 %v1671, 4294901760
        %1673 = vmatprep.subr.mxu0 %v1672
        %v1674 = vand.u32 %v1352, 4294901760
        %v1675 = vsub.f32 %v1352, %v1674
        %v1676 = vand.u32 %v1675, 4294901760
        %1677 = vmatpush1.msra.mxu0 %v1676
        %1678 = vmatprep.subr.mxu0 0.0
        %1679 = vmatpush1.msra.mxu0 0.0
        %1680 = vmatprep.subr.mxu0 0.0
        %1681 = vmatpush1.msra.mxu0 0.0
        %1682 = vmatprep.subr.mxu0 0.0
        %1683 = vmatpush1.msra.mxu0 0.0
        %1684 = vmatprep.subr.mxu0 0.0
        %1685 = vmatpush1.msra.mxu0 0.0
        %1686 = vmatprep.subr.mxu0 0.0
        %1687 = vmatpush1.msra.mxu0 0.0
        %1688 = vmatprep.subr.mxu0 0.0
        %1689 = vmatpush1.msra.mxu0 0.0
        %1690 = vmatprep.subr.mxu0 0.0
        %1691 = vmatpush1.msra.mxu0 0.0
        %1692 = vmatprep.subr.mxu0 0.0
        %1693 = vmatpush1.msra.mxu0 0.0
        %1694 = vmatprep.subr.mxu0 0.0
        %1695 = vmatpush1.msra.mxu0 0.0
        %1696 = vmatprep.subr.mxu0 0.0
        %1697 = vmatpush1.msra.mxu0 0.0
        %1698 = vmatprep.subr.mxu0 0.0
        %1699 = vmatpush1.msra.mxu0 0.0
        %1700 = vmatprep.subr.mxu0 0.0
        %1701 = vmatpush1.msra.mxu0 0.0
        %1702 = vmatprep.subr.mxu0 0.0
        %1703 = vmatpush1.msra.mxu0 0.0
        %1704 = vmatprep.subr.mxu0 0.0
        %1705 = vmatpush1.msra.mxu0 0.0
        %1706 = vmatprep.subr.mxu0 0.0
        %1707 = vmatpush1.msra.mxu0 0.0
        %1708 = vmatprep.subr.mxu0 0.0
        %1709 = vmatpush1.msra.mxu0 0.0
        %1710 = vmatprep.subr.mxu0 0.0
        %1711 = vmatpush1.msra.mxu0 0.0
        %1712 = vmatprep.subr.mxu0 0.0
        %1713 = vmatpush1.msra.mxu0 0.0
        %1714 = vmatprep.subr.mxu0 0.0
        %1715 = vmatpush1.msra.mxu0 0.0
        %1716 = vmatprep.subr.mxu0 0.0
        %1717 = vmatpush1.msra.mxu0 0.0
        %1718 = vmatprep.subr.mxu0 0.0
        %1719 = vmatpush1.msra.mxu0 0.0
        %1720 = vmatprep.subr.mxu0 0.0
        %1721 = vmatpush1.msra.mxu0 0.0
        %1722 = vmatprep.subr.mxu0 0.0
        %1723 = vmatpush1.msra.mxu0 0.0
        %1724 = vmatprep.subr.mxu0 0.0
        %1725 = vmatpush1.msra.mxu0 0.0
        %1726 = vmatprep.subr.mxu0 0.0
        %1727 = vmatpush1.msra.mxu0 0.0
        %1728 = vmatprep.subr.mxu0 0.0
        %1729 = vmatpush1.msra.mxu0 0.0
        %1730 = vmatprep.subr.mxu0 0.0
        %1731 = vmatpush1.msra.mxu0 0.0
        %1732 = vmatprep.subr.mxu0 0.0
        %1733 = vmatpush1.msra.mxu0 0.0
        %1734 = vmatprep.subr.mxu0 0.0
        %1735 = vmatpush1.msra.mxu0 0.0
        %1736 = vmatprep.subr.mxu0 0.0
        %1737 = vmatpush1.msra.mxu0 0.0
        %1738 = vmatprep.subr.mxu0 0.0
        %1739 = vmatpush1.msra.mxu0 0.0
        %1740 = vmatprep.mubr.f32.mxu0 0.0
        %v1741 = vand.u32 %v1349, 4294901760
        %1742 = vmatmul.mubr.f32.gmra.mrb[0].mxu0 %v1741
        %v1743 = vpop.f32.mrb[0].mxu0
        %v1744 = vadd.f32 %v1666, %v1743
        %v1745 = vpop.f32.mrb[0].mxu0
        %v1746 = vadd.f32 %v1668, %v1745
        %1747 = vdwg.mxu0
        %v1748 = vand.u32 %v1355, 4294901760
        %1749 = vmatprep.subr.mxu0 %v1748
        %v1750 = vand.u32 %v1352, 4294901760
        %1751 = vmatpush1.msra.mxu0 %v1750
        %1752 = vmatprep.subr.mxu0 0.0
        %1753 = vmatpush1.msra.mxu0 0.0
        %1754 = vmatprep.subr.mxu0 0.0
        %1755 = vmatpush1.msra.mxu0 0.0
        %1756 = vmatprep.subr.mxu0 0.0
        %1757 = vmatpush1.msra.mxu0 0.0
        %1758 = vmatprep.subr.mxu0 0.0
        %1759 = vmatpush1.msra.mxu0 0.0
        %1760 = vmatprep.subr.mxu0 0.0
        %1761 = vmatpush1.msra.mxu0 0.0
        %1762 = vmatprep.subr.mxu0 0.0
        %1763 = vmatpush1.msra.mxu0 0.0
        %1764 = vmatprep.subr.mxu0 0.0
        %1765 = vmatpush1.msra.mxu0 0.0
        %1766 = vmatprep.subr.mxu0 0.0
        %1767 = vmatpush1.msra.mxu0 0.0
        %1768 = vmatprep.subr.mxu0 0.0
        %1769 = vmatpush1.msra.mxu0 0.0
        %1770 = vmatprep.subr.mxu0 0.0
        %1771 = vmatpush1.msra.mxu0 0.0
        %1772 = vmatprep.subr.mxu0 0.0
        %1773 = vmatpush1.msra.mxu0 0.0
        %1774 = vmatprep.subr.mxu0 0.0
        %1775 = vmatpush1.msra.mxu0 0.0
        %1776 = vmatprep.subr.mxu0 0.0
        %1777 = vmatpush1.msra.mxu0 0.0
        %1778 = vmatprep.subr.mxu0 0.0
        %1779 = vmatpush1.msra.mxu0 0.0
        %1780 = vmatprep.subr.mxu0 0.0
        %1781 = vmatpush1.msra.mxu0 0.0
        %1782 = vmatprep.subr.mxu0 0.0
        %1783 = vmatpush1.msra.mxu0 0.0
        %1784 = vmatprep.subr.mxu0 0.0
        %1785 = vmatpush1.msra.mxu0 0.0
        %1786 = vmatprep.subr.mxu0 0.0
        %1787 = vmatpush1.msra.mxu0 0.0
        %1788 = vmatprep.subr.mxu0 0.0
        %1789 = vmatpush1.msra.mxu0 0.0
        %1790 = vmatprep.subr.mxu0 0.0
        %1791 = vmatpush1.msra.mxu0 0.0
        %1792 = vmatprep.subr.mxu0 0.0
        %1793 = vmatpush1.msra.mxu0 0.0
        %1794 = vmatprep.subr.mxu0 0.0
        %1795 = vmatpush1.msra.mxu0 0.0
        %1796 = vmatprep.subr.mxu0 0.0
        %1797 = vmatpush1.msra.mxu0 0.0
        %1798 = vmatprep.subr.mxu0 0.0
        %1799 = vmatpush1.msra.mxu0 0.0
        %1800 = vmatprep.subr.mxu0 0.0
        %1801 = vmatpush1.msra.mxu0 0.0
        %1802 = vmatprep.subr.mxu0 0.0
        %1803 = vmatpush1.msra.mxu0 0.0
        %1804 = vmatprep.subr.mxu0 0.0
        %1805 = vmatpush1.msra.mxu0 0.0
        %1806 = vmatprep.subr.mxu0 0.0
        %1807 = vmatpush1.msra.mxu0 0.0
        %1808 = vmatprep.subr.mxu0 0.0
        %1809 = vmatpush1.msra.mxu0 0.0
        %1810 = vmatprep.subr.mxu0 0.0
        %1811 = vmatpush1.msra.mxu0 0.0
        %1812 = vmatprep.subr.mxu0 0.0
        %1813 = vmatpush1.msra.mxu0 0.0
        %1814 = vmatprep.mubr.f32.mxu0 0.0
        %v1815 = vand.u32 %v1349, 4294901760
        %1816 = vmatmul.mubr.f32.gmra.mrb[0].mxu0 %v1815
        %v1817 = vpop.f32.mrb[0].mxu0
        %v1818 = vadd.f32 %v1744, %v1817
        %v1819 = vpop.f32.mrb[0].mxu0
        %v1820 = vadd.f32 %v1746, %v1819
        %1821 = vdwg.mxu0
        %v1822 = vadd.f32 %v1312, %v1818
        %v1823 = vadd.f32 %v1314, %v1820
        %s1824 = scalar_lea.vmem %s2, 4
        %v1825 = vld [vmem:[%s1824] sm:$0xf]
        %v1827 = vsel %vm366, %v1825, 0
        %v1830 = vsel %vm370, %v1344, 0
        %v1833 = vsel %vm370, %v1345, 0
        %v1835 = vand.u32 %v1833, 4294901760
        %1836 = vmatprep.subr.mxu0 %v1835
        %v1837 = vand.u32 %v1830, 4294901760
        %1838 = vmatpush1.msra.mxu0 %v1837
        %1839 = vmatprep.subr.mxu0 0.0
        %1840 = vmatpush1.msra.mxu0 0.0
        %1841 = vmatprep.subr.mxu0 0.0
        %1842 = vmatpush1.msra.mxu0 0.0
        %1843 = vmatprep.subr.mxu0 0.0
        %1844 = vmatpush1.msra.mxu0 0.0
        %1845 = vmatprep.subr.mxu0 0.0
        %1846 = vmatpush1.msra.mxu0 0.0
        %1847 = vmatprep.subr.mxu0 0.0
        %1848 = vmatpush1.msra.mxu0 0.0
        %1849 = vmatprep.subr.mxu0 0.0
        %1850 = vmatpush1.msra.mxu0 0.0
        %1851 = vmatprep.subr.mxu0 0.0
        %1852 = vmatpush1.msra.mxu0 0.0
        %1853 = vmatprep.subr.mxu0 0.0
        %1854 = vmatpush1.msra.mxu0 0.0
        %1855 = vmatprep.subr.mxu0 0.0
        %1856 = vmatpush1.msra.mxu0 0.0
        %1857 = vmatprep.subr.mxu0 0.0
        %1858 = vmatpush1.msra.mxu0 0.0
        %1859 = vmatprep.subr.mxu0 0.0
        %1860 = vmatpush1.msra.mxu0 0.0
        %1861 = vmatprep.subr.mxu0 0.0
        %1862 = vmatpush1.msra.mxu0 0.0
        %1863 = vmatprep.subr.mxu0 0.0
        %1864 = vmatpush1.msra.mxu0 0.0
        %1865 = vmatprep.subr.mxu0 0.0
        %1866 = vmatpush1.msra.mxu0 0.0
        %1867 = vmatprep.subr.mxu0 0.0
        %1868 = vmatpush1.msra.mxu0 0.0
        %1869 = vmatprep.subr.mxu0 0.0
        %1870 = vmatpush1.msra.mxu0 0.0
        %1871 = vmatprep.subr.mxu0 0.0
        %1872 = vmatpush1.msra.mxu0 0.0
        %1873 = vmatprep.subr.mxu0 0.0
        %1874 = vmatpush1.msra.mxu0 0.0
        %1875 = vmatprep.subr.mxu0 0.0
        %1876 = vmatpush1.msra.mxu0 0.0
        %1877 = vmatprep.subr.mxu0 0.0
        %1878 = vmatpush1.msra.mxu0 0.0
        %1879 = vmatprep.subr.mxu0 0.0
        %1880 = vmatpush1.msra.mxu0 0.0
        %1881 = vmatprep.subr.mxu0 0.0
        %1882 = vmatpush1.msra.mxu0 0.0
        %1883 = vmatprep.subr.mxu0 0.0
        %1884 = vmatpush1.msra.mxu0 0.0
        %1885 = vmatprep.subr.mxu0 0.0
        %1886 = vmatpush1.msra.mxu0 0.0
        %1887 = vmatprep.subr.mxu0 0.0
        %1888 = vmatpush1.msra.mxu0 0.0
        %1889 = vmatprep.subr.mxu0 0.0
        %1890 = vmatpush1.msra.mxu0 0.0
        %1891 = vmatprep.subr.mxu0 0.0
        %1892 = vmatpush1.msra.mxu0 0.0
        %1893 = vmatprep.subr.mxu0 0.0
        %1894 = vmatpush1.msra.mxu0 0.0
        %1895 = vmatprep.subr.mxu0 0.0
        %1896 = vmatpush1.msra.mxu0 0.0
        %1897 = vmatprep.subr.mxu0 0.0
        %1898 = vmatpush1.msra.mxu0 0.0
        %1899 = vmatprep.subr.mxu0 0.0
        %1900 = vmatpush1.msra.mxu0 0.0
        %1901 = vmatprep.mubr.f32.mxu0 0.0
        %v1902 = vand.u32 %v1827, 4294901760
        %v1903 = vsub.f32 %v1827, %v1902
        %v1904 = vand.u32 %v1903, 4294901760
        %v1905 = vsub.f32 %v1903, %v1904
        %v1906 = vand.u32 %v1905, 4294901760
        %1907 = vmatmul.mubr.f32.gmra.mrb[0].mxu0 %v1906
        %v1908 = vpop.f32.mrb[0].mxu0
        %v1909 = vadd.f32 0.0, %v1908
        %v1910 = vpop.f32.mrb[0].mxu0
        %v1911 = vadd.f32 0.0, %v1910
        %1912 = vdwg.mxu0
        %v1913 = vand.u32 %v1833, 4294901760
        %v1914 = vsub.f32 %v1833, %v1913
        %v1915 = vand.u32 %v1914, 4294901760
        %v1916 = vsub.f32 %v1914, %v1915
        %v1917 = vand.u32 %v1916, 4294901760
        %1918 = vmatprep.subr.mxu0 %v1917
        %v1919 = vand.u32 %v1830, 4294901760
        %v1920 = vsub.f32 %v1830, %v1919
        %v1921 = vand.u32 %v1920, 4294901760
        %v1922 = vsub.f32 %v1920, %v1921
        %v1923 = vand.u32 %v1922, 4294901760
        %1924 = vmatpush1.msra.mxu0 %v1923
        %1925 = vmatprep.subr.mxu0 0.0
        %1926 = vmatpush1.msra.mxu0 0.0
        %1927 = vmatprep.subr.mxu0 0.0
        %1928 = vmatpush1.msra.mxu0 0.0
        %1929 = vmatprep.subr.mxu0 0.0
        %1930 = vmatpush1.msra.mxu0 0.0
        %1931 = vmatprep.subr.mxu0 0.0
        %1932 = vmatpush1.msra.mxu0 0.0
        %1933 = vmatprep.subr.mxu0 0.0
        %1934 = vmatpush1.msra.mxu0 0.0
        %1935 = vmatprep.subr.mxu0 0.0
        %1936 = vmatpush1.msra.mxu0 0.0
        %1937 = vmatprep.subr.mxu0 0.0
        %1938 = vmatpush1.msra.mxu0 0.0
        %1939 = vmatprep.subr.mxu0 0.0
        %1940 = vmatpush1.msra.mxu0 0.0
        %1941 = vmatprep.subr.mxu0 0.0
        %1942 = vmatpush1.msra.mxu0 0.0
        %1943 = vmatprep.subr.mxu0 0.0
        %1944 = vmatpush1.msra.mxu0 0.0
        %1945 = vmatprep.subr.mxu0 0.0
        %1946 = vmatpush1.msra.mxu0 0.0
        %1947 = vmatprep.subr.mxu0 0.0
        %1948 = vmatpush1.msra.mxu0 0.0
        %1949 = vmatprep.subr.mxu0 0.0
        %1950 = vmatpush1.msra.mxu0 0.0
        %1951 = vmatprep.subr.mxu0 0.0
        %1952 = vmatpush1.msra.mxu0 0.0
        %1953 = vmatprep.subr.mxu0 0.0
        %1954 = vmatpush1.msra.mxu0 0.0
        %1955 = vmatprep.subr.mxu0 0.0
        %1956 = vmatpush1.msra.mxu0 0.0
        %1957 = vmatprep.subr.mxu0 0.0
        %1958 = vmatpush1.msra.mxu0 0.0
        %1959 = vmatprep.subr.mxu0 0.0
        %1960 = vmatpush1.msra.mxu0 0.0
        %1961 = vmatprep.subr.mxu0 0.0
        %1962 = vmatpush1.msra.mxu0 0.0
        %1963 = vmatprep.subr.mxu0 0.0
        %1964 = vmatpush1.msra.mxu0 0.0
        %1965 = vmatprep.subr.mxu0 0.0
        %1966 = vmatpush1.msra.mxu0 0.0
        %1967 = vmatprep.subr.mxu0 0.0
        %1968 = vmatpush1.msra.mxu0 0.0
        %1969 = vmatprep.subr.mxu0 0.0
        %1970 = vmatpush1.msra.mxu0 0.0
        %1971 = vmatprep.subr.mxu0 0.0
        %1972 = vmatpush1.msra.mxu0 0.0
        %1973 = vmatprep.subr.mxu0 0.0
        %1974 = vmatpush1.msra.mxu0 0.0
        %1975 = vmatprep.subr.mxu0 0.0
        %1976 = vmatpush1.msra.mxu0 0.0
        %1977 = vmatprep.subr.mxu0 0.0
        %1978 = vmatpush1.msra.mxu0 0.0
        %1979 = vmatprep.subr.mxu0 0.0
        %1980 = vmatpush1.msra.mxu0 0.0
        %1981 = vmatprep.subr.mxu0 0.0
        %1982 = vmatpush1.msra.mxu0 0.0
        %1983 = vmatprep.subr.mxu0 0.0
        %1984 = vmatpush1.msra.mxu0 0.0
        %1985 = vmatprep.subr.mxu0 0.0
        %1986 = vmatpush1.msra.mxu0 0.0
        %1987 = vmatprep.mubr.f32.mxu0 0.0
        %v1988 = vand.u32 %v1827, 4294901760
        %1989 = vmatmul.mubr.f32.gmra.mrb[0].mxu0 %v1988
        %v1990 = vpop.f32.mrb[0].mxu0
        %v1991 = vadd.f32 %v1909, %v1990
        %v1992 = vpop.f32.mrb[0].mxu0
        %v1993 = vadd.f32 %v1911, %v1992
        %1994 = vdwg.mxu0
        %v1995 = vand.u32 %v1833, 4294901760
        %v1996 = vsub.f32 %v1833, %v1995
        %1997 = vmatprep.subr.mxu0 %v1996
        %v1998 = vand.u32 %v1830, 4294901760
        %v1999 = vsub.f32 %v1830, %v1998
        %2000 = vmatpush1.msra.mxu0 %v1999
        %2001 = vmatprep.subr.mxu0 0.0
        %2002 = vmatpush1.msra.mxu0 0.0
        %2003 = vmatprep.subr.mxu0 0.0
        %2004 = vmatpush1.msra.mxu0 0.0
        %2005 = vmatprep.subr.mxu0 0.0
        %2006 = vmatpush1.msra.mxu0 0.0
        %2007 = vmatprep.subr.mxu0 0.0
        %2008 = vmatpush1.msra.mxu0 0.0
        %2009 = vmatprep.subr.mxu0 0.0
        %2010 = vmatpush1.msra.mxu0 0.0
        %2011 = vmatprep.subr.mxu0 0.0
        %2012 = vmatpush1.msra.mxu0 0.0
        %2013 = vmatprep.subr.mxu0 0.0
        %2014 = vmatpush1.msra.mxu0 0.0
        %2015 = vmatprep.subr.mxu0 0.0
        %2016 = vmatpush1.msra.mxu0 0.0
        %2017 = vmatprep.subr.mxu0 0.0
        %2018 = vmatpush1.msra.mxu0 0.0
        %2019 = vmatprep.subr.mxu0 0.0
        %2020 = vmatpush1.msra.mxu0 0.0
        %2021 = vmatprep.subr.mxu0 0.0
        %2022 = vmatpush1.msra.mxu0 0.0
        %2023 = vmatprep.subr.mxu0 0.0
        %2024 = vmatpush1.msra.mxu0 0.0
        %2025 = vmatprep.subr.mxu0 0.0
        %2026 = vmatpush1.msra.mxu0 0.0
        %2027 = vmatprep.subr.mxu0 0.0
        %2028 = vmatpush1.msra.mxu0 0.0
        %2029 = vmatprep.subr.mxu0 0.0
        %2030 = vmatpush1.msra.mxu0 0.0
        %2031 = vmatprep.subr.mxu0 0.0
        %2032 = vmatpush1.msra.mxu0 0.0
        %2033 = vmatprep.subr.mxu0 0.0
        %2034 = vmatpush1.msra.mxu0 0.0
        %2035 = vmatprep.subr.mxu0 0.0
        %2036 = vmatpush1.msra.mxu0 0.0
        %2037 = vmatprep.subr.mxu0 0.0
        %2038 = vmatpush1.msra.mxu0 0.0
        %2039 = vmatprep.subr.mxu0 0.0
        %2040 = vmatpush1.msra.mxu0 0.0
        %2041 = vmatprep.subr.mxu0 0.0
        %2042 = vmatpush1.msra.mxu0 0.0
        %2043 = vmatprep.subr.mxu0 0.0
        %2044 = vmatpush1.msra.mxu0 0.0
        %2045 = vmatprep.subr.mxu0 0.0
        %2046 = vmatpush1.msra.mxu0 0.0
        %2047 = vmatprep.subr.mxu0 0.0
        %2048 = vmatpush1.msra.mxu0 0.0
        %2049 = vmatprep.subr.mxu0 0.0
        %2050 = vmatpush1.msra.mxu0 0.0
        %2051 = vmatprep.subr.mxu0 0.0
        %2052 = vmatpush1.msra.mxu0 0.0
        %2053 = vmatprep.subr.mxu0 0.0
        %2054 = vmatpush1.msra.mxu0 0.0
        %2055 = vmatprep.subr.mxu0 0.0
        %2056 = vmatpush1.msra.mxu0 0.0
        %2057 = vmatprep.subr.mxu0 0.0
        %2058 = vmatpush1.msra.mxu0 0.0
        %2059 = vmatprep.subr.mxu0 0.0
        %2060 = vmatpush1.msra.mxu0 0.0
        %2061 = vmatprep.subr.mxu0 0.0
        %2062 = vmatpush1.msra.mxu0 0.0
        %2063 = vmatprep.mubr.f32.mxu0 0.0
        %v2064 = vand.u32 %v1827, 4294901760
        %v2065 = vsub.f32 %v1827, %v2064
        %2066 = vmatmul.mubr.f32.gmra.mrb[0].mxu0 %v2065
        %v2067 = vpop.f32.mrb[0].mxu0
        %v2068 = vadd.f32 %v1991, %v2067
        %v2069 = vpop.f32.mrb[0].mxu0
        %v2070 = vadd.f32 %v1993, %v2069
        %2071 = vdwg.mxu0
        %v2072 = vand.u32 %v1833, 4294901760
        %2073 = vmatprep.subr.mxu0 %v2072
        %v2074 = vand.u32 %v1830, 4294901760
        %2075 = vmatpush1.msra.mxu0 %v2074
        %2076 = vmatprep.subr.mxu0 0.0
        %2077 = vmatpush1.msra.mxu0 0.0
        %2078 = vmatprep.subr.mxu0 0.0
        %2079 = vmatpush1.msra.mxu0 0.0
        %2080 = vmatprep.subr.mxu0 0.0
        %2081 = vmatpush1.msra.mxu0 0.0
        %2082 = vmatprep.subr.mxu0 0.0
        %2083 = vmatpush1.msra.mxu0 0.0
        %2084 = vmatprep.subr.mxu0 0.0
        %2085 = vmatpush1.msra.mxu0 0.0
        %2086 = vmatprep.subr.mxu0 0.0
        %2087 = vmatpush1.msra.mxu0 0.0
        %2088 = vmatprep.subr.mxu0 0.0
        %2089 = vmatpush1.msra.mxu0 0.0
        %2090 = vmatprep.subr.mxu0 0.0
        %2091 = vmatpush1.msra.mxu0 0.0
        %2092 = vmatprep.subr.mxu0 0.0
        %2093 = vmatpush1.msra.mxu0 0.0
        %2094 = vmatprep.subr.mxu0 0.0
        %2095 = vmatpush1.msra.mxu0 0.0
        %2096 = vmatprep.subr.mxu0 0.0
        %2097 = vmatpush1.msra.mxu0 0.0
        %2098 = vmatprep.subr.mxu0 0.0
        %2099 = vmatpush1.msra.mxu0 0.0
        %2100 = vmatprep.subr.mxu0 0.0
        %2101 = vmatpush1.msra.mxu0 0.0
        %2102 = vmatprep.subr.mxu0 0.0
        %2103 = vmatpush1.msra.mxu0 0.0
        %2104 = vmatprep.subr.mxu0 0.0
        %2105 = vmatpush1.msra.mxu0 0.0
        %2106 = vmatprep.subr.mxu0 0.0
        %2107 = vmatpush1.msra.mxu0 0.0
        %2108 = vmatprep.subr.mxu0 0.0
        %2109 = vmatpush1.msra.mxu0 0.0
        %2110 = vmatprep.subr.mxu0 0.0
        %2111 = vmatpush1.msra.mxu0 0.0
        %2112 = vmatprep.subr.mxu0 0.0
        %2113 = vmatpush1.msra.mxu0 0.0
        %2114 = vmatprep.subr.mxu0 0.0
        %2115 = vmatpush1.msra.mxu0 0.0
        %2116 = vmatprep.subr.mxu0 0.0
        %2117 = vmatpush1.msra.mxu0 0.0
        %2118 = vmatprep.subr.mxu0 0.0
        %2119 = vmatpush1.msra.mxu0 0.0
        %2120 = vmatprep.subr.mxu0 0.0
        %2121 = vmatpush1.msra.mxu0 0.0
        %2122 = vmatprep.subr.mxu0 0.0
        %2123 = vmatpush1.msra.mxu0 0.0
        %2124 = vmatprep.subr.mxu0 0.0
        %2125 = vmatpush1.msra.mxu0 0.0
        %2126 = vmatprep.subr.mxu0 0.0
        %2127 = vmatpush1.msra.mxu0 0.0
        %2128 = vmatprep.subr.mxu0 0.0
        %2129 = vmatpush1.msra.mxu0 0.0
        %2130 = vmatprep.subr.mxu0 0.0
        %2131 = vmatpush1.msra.mxu0 0.0
        %2132 = vmatprep.subr.mxu0 0.0
        %2133 = vmatpush1.msra.mxu0 0.0
        %2134 = vmatprep.subr.mxu0 0.0
        %2135 = vmatpush1.msra.mxu0 0.0
        %2136 = vmatprep.subr.mxu0 0.0
        %2137 = vmatpush1.msra.mxu0 0.0
        %2138 = vmatprep.mubr.f32.mxu0 0.0
        %v2139 = vand.u32 %v1827, 4294901760
        %v2140 = vsub.f32 %v1827, %v2139
        %v2141 = vand.u32 %v2140, 4294901760
        %2142 = vmatmul.mubr.f32.gmra.mrb[0].mxu0 %v2141
        %v2143 = vpop.f32.mrb[0].mxu0
        %v2144 = vadd.f32 %v2068, %v2143
        %v2145 = vpop.f32.mrb[0].mxu0
        %v2146 = vadd.f32 %v2070, %v2145
        %2147 = vdwg.mxu0
        %v2148 = vand.u32 %v1833, 4294901760
        %v2149 = vsub.f32 %v1833, %v2148
        %v2150 = vand.u32 %v2149, 4294901760
        %2151 = vmatprep.subr.mxu0 %v2150
        %v2152 = vand.u32 %v1830, 4294901760
        %v2153 = vsub.f32 %v1830, %v2152
        %v2154 = vand.u32 %v2153, 4294901760
        %2155 = vmatpush1.msra.mxu0 %v2154
        %2156 = vmatprep.subr.mxu0 0.0
        %2157 = vmatpush1.msra.mxu0 0.0
        %2158 = vmatprep.subr.mxu0 0.0
        %2159 = vmatpush1.msra.mxu0 0.0
        %2160 = vmatprep.subr.mxu0 0.0
        %2161 = vmatpush1.msra.mxu0 0.0
        %2162 = vmatprep.subr.mxu0 0.0
        %2163 = vmatpush1.msra.mxu0 0.0
        %2164 = vmatprep.subr.mxu0 0.0
        %2165 = vmatpush1.msra.mxu0 0.0
        %2166 = vmatprep.subr.mxu0 0.0
        %2167 = vmatpush1.msra.mxu0 0.0
        %2168 = vmatprep.subr.mxu0 0.0
        %2169 = vmatpush1.msra.mxu0 0.0
        %2170 = vmatprep.subr.mxu0 0.0
        %2171 = vmatpush1.msra.mxu0 0.0
        %2172 = vmatprep.subr.mxu0 0.0
        %2173 = vmatpush1.msra.mxu0 0.0
        %2174 = vmatprep.subr.mxu0 0.0
        %2175 = vmatpush1.msra.mxu0 0.0
        %2176 = vmatprep.subr.mxu0 0.0
        %2177 = vmatpush1.msra.mxu0 0.0
        %2178 = vmatprep.subr.mxu0 0.0
        %2179 = vmatpush1.msra.mxu0 0.0
        %2180 = vmatprep.subr.mxu0 0.0
        %2181 = vmatpush1.msra.mxu0 0.0
        %2182 = vmatprep.subr.mxu0 0.0
        %2183 = vmatpush1.msra.mxu0 0.0
        %2184 = vmatprep.subr.mxu0 0.0
        %2185 = vmatpush1.msra.mxu0 0.0
        %2186 = vmatprep.subr.mxu0 0.0
        %2187 = vmatpush1.msra.mxu0 0.0
        %2188 = vmatprep.subr.mxu0 0.0
        %2189 = vmatpush1.msra.mxu0 0.0
        %2190 = vmatprep.subr.mxu0 0.0
        %2191 = vmatpush1.msra.mxu0 0.0
        %2192 = vmatprep.subr.mxu0 0.0
        %2193 = vmatpush1.msra.mxu0 0.0
        %2194 = vmatprep.subr.mxu0 0.0
        %2195 = vmatpush1.msra.mxu0 0.0
        %2196 = vmatprep.subr.mxu0 0.0
        %2197 = vmatpush1.msra.mxu0 0.0
        %2198 = vmatprep.subr.mxu0 0.0
        %2199 = vmatpush1.msra.mxu0 0.0
        %2200 = vmatprep.subr.mxu0 0.0
        %2201 = vmatpush1.msra.mxu0 0.0
        %2202 = vmatprep.subr.mxu0 0.0
        %2203 = vmatpush1.msra.mxu0 0.0
        %2204 = vmatprep.subr.mxu0 0.0
        %2205 = vmatpush1.msra.mxu0 0.0
        %2206 = vmatprep.subr.mxu0 0.0
        %2207 = vmatpush1.msra.mxu0 0.0
        %2208 = vmatprep.subr.mxu0 0.0
        %2209 = vmatpush1.msra.mxu0 0.0
        %2210 = vmatprep.subr.mxu0 0.0
        %2211 = vmatpush1.msra.mxu0 0.0
        %2212 = vmatprep.subr.mxu0 0.0
        %2213 = vmatpush1.msra.mxu0 0.0
        %2214 = vmatprep.subr.mxu0 0.0
        %2215 = vmatpush1.msra.mxu0 0.0
        %2216 = vmatprep.subr.mxu0 0.0
        %2217 = vmatpush1.msra.mxu0 0.0
        %2218 = vmatprep.mubr.f32.mxu0 0.0
        %v2219 = vand.u32 %v1827, 4294901760
        %2220 = vmatmul.mubr.f32.gmra.mrb[0].mxu0 %v2219
        %v2221 = vpop.f32.mrb[0].mxu0
        %v2222 = vadd.f32 %v2144, %v2221
        %v2223 = vpop.f32.mrb[0].mxu0
        %v2224 = vadd.f32 %v2146, %v2223
        %2225 = vdwg.mxu0
        %v2226 = vand.u32 %v1833, 4294901760
        %2227 = vmatprep.subr.mxu0 %v2226
        %v2228 = vand.u32 %v1830, 4294901760
        %2229 = vmatpush1.msra.mxu0 %v2228
        %2230 = vmatprep.subr.mxu0 0.0
        %2231 = vmatpush1.msra.mxu0 0.0
        %2232 = vmatprep.subr.mxu0 0.0
        %2233 = vmatpush1.msra.mxu0 0.0
        %2234 = vmatprep.subr.mxu0 0.0
        %2235 = vmatpush1.msra.mxu0 0.0
        %2236 = vmatprep.subr.mxu0 0.0
        %2237 = vmatpush1.msra.mxu0 0.0
        %2238 = vmatprep.subr.mxu0 0.0
        %2239 = vmatpush1.msra.mxu0 0.0
        %2240 = vmatprep.subr.mxu0 0.0
        %2241 = vmatpush1.msra.mxu0 0.0
        %2242 = vmatprep.subr.mxu0 0.0
        %2243 = vmatpush1.msra.mxu0 0.0
        %2244 = vmatprep.subr.mxu0 0.0
        %2245 = vmatpush1.msra.mxu0 0.0
        %2246 = vmatprep.subr.mxu0 0.0
        %2247 = vmatpush1.msra.mxu0 0.0
        %2248 = vmatprep.subr.mxu0 0.0
        %2249 = vmatpush1.msra.mxu0 0.0
        %2250 = vmatprep.subr.mxu0 0.0
        %2251 = vmatpush1.msra.mxu0 0.0
        %2252 = vmatprep.subr.mxu0 0.0
        %2253 = vmatpush1.msra.mxu0 0.0
        %2254 = vmatprep.subr.mxu0 0.0
        %2255 = vmatpush1.msra.mxu0 0.0
        %2256 = vmatprep.subr.mxu0 0.0
        %2257 = vmatpush1.msra.mxu0 0.0
        %2258 = vmatprep.subr.mxu0 0.0
        %2259 = vmatpush1.msra.mxu0 0.0
        %2260 = vmatprep.subr.mxu0 0.0
        %2261 = vmatpush1.msra.mxu0 0.0
        %2262 = vmatprep.subr.mxu0 0.0
        %2263 = vmatpush1.msra.mxu0 0.0
        %2264 = vmatprep.subr.mxu0 0.0
        %2265 = vmatpush1.msra.mxu0 0.0
        %2266 = vmatprep.subr.mxu0 0.0
        %2267 = vmatpush1.msra.mxu0 0.0
        %2268 = vmatprep.subr.mxu0 0.0
        %2269 = vmatpush1.msra.mxu0 0.0
        %2270 = vmatprep.subr.mxu0 0.0
        %2271 = vmatpush1.msra.mxu0 0.0
        %2272 = vmatprep.subr.mxu0 0.0
        %2273 = vmatpush1.msra.mxu0 0.0
        %2274 = vmatprep.subr.mxu0 0.0
        %2275 = vmatpush1.msra.mxu0 0.0
        %2276 = vmatprep.subr.mxu0 0.0
        %2277 = vmatpush1.msra.mxu0 0.0
        %2278 = vmatprep.subr.mxu0 0.0
        %2279 = vmatpush1.msra.mxu0 0.0
        %2280 = vmatprep.subr.mxu0 0.0
        %2281 = vmatpush1.msra.mxu0 0.0
        %2282 = vmatprep.subr.mxu0 0.0
        %2283 = vmatpush1.msra.mxu0 0.0
        %2284 = vmatprep.subr.mxu0 0.0
        %2285 = vmatpush1.msra.mxu0 0.0
        %2286 = vmatprep.subr.mxu0 0.0
        %2287 = vmatpush1.msra.mxu0 0.0
        %2288 = vmatprep.subr.mxu0 0.0
        %2289 = vmatpush1.msra.mxu0 0.0
        %2290 = vmatprep.subr.mxu0 0.0
        %2291 = vmatpush1.msra.mxu0 0.0
        %2292 = vmatprep.mubr.f32.mxu0 0.0
        %v2293 = vand.u32 %v1827, 4294901760
        %2294 = vmatmul.mubr.f32.gmra.mrb[0].mxu0 %v2293
        %v2295 = vpop.f32.mrb[0].mxu0
        %v2296 = vadd.f32 %v2222, %v2295
        %v2297 = vpop.f32.mrb[0].mxu0
        %v2298 = vadd.f32 %v2224, %v2297
        %2299 = vdwg.mxu0
        %v2300 = vadd.f32 %v1822, %v2296
        %v2301 = vadd.f32 %v1823, %v2298
        %s2302 = scalar_lea.vmem %s3, 4
        %v2303 = vld [vmem:[%s2302] sm:$0x3]
        %2304 = vrot.lane.b32.xlu0 %v325, 15
        %v2305 = vpop.permute.xlu0 %2304
        %2306 = vrot.lane.b32.xlu0 %v329, 15
        %v2307 = vpop.permute.xlu0 %2306
        %vm2308 = vcmp.lt.s32.totalorder %v336, 15
        %v2309 = vsel %vm2308, %v2305, %v2307
        %v2310 = vsel %vm2308, %v2307, %v2305
        %v2312 = vlaneseq
        %v2313 = vshrl.u32 %v2312, 7
        %v2314 = vsub.s32 0, %v2313
        %v2315 = vrot.slane %v2303, %v2314
        %v2316 = vlaneseq
        %v2317 = vshrl.u32 %v2316, 7
        %v2318 = vsub.s32 1, %v2317
        %v2319 = vrot.slane %v2303, %v2318
        %v2322 = vmul.f32 %v2310, %v2315
        %v2323 = vmul.f32 %v2309, %v2319
        %2324 = vrot.lane.b32.xlu0 %v326, 15
        %v2325 = vpop.permute.xlu0 %2324
        %2326 = vrot.lane.b32.xlu0 %v354, 15
        %v2327 = vpop.permute.xlu0 %2326
        %v2328 = vsel %vm2308, %v2325, %v2327
        %v2329 = vsel %vm2308, %v2327, %v2325
        %v2330 = vmul.f32 %v2329, %v2315
        %v2331 = vmul.f32 %v2328, %v2319
        %s2332 = scalar_lea.vmem %s1, 8
        %v2333 = vld [vmem:[%s2332] sm:$0xf]
        %v2335 = vsel %vm366, %v2333, 0
        %v2338 = vsel %vm370, %v2322, 0
        %v2341 = vsel %vm370, %v2323, 0
        %v2343 = vand.u32 %v2341, 4294901760
        %2344 = vmatprep.subr.mxu0 %v2343
        %v2345 = vand.u32 %v2338, 4294901760
        %2346 = vmatpush1.msra.mxu0 %v2345
        %2347 = vmatprep.subr.mxu0 0.0
        %2348 = vmatpush1.msra.mxu0 0.0
        %2349 = vmatprep.subr.mxu0 0.0
        %2350 = vmatpush1.msra.mxu0 0.0
        %2351 = vmatprep.subr.mxu0 0.0
        %2352 = vmatpush1.msra.mxu0 0.0
        %2353 = vmatprep.subr.mxu0 0.0
        %2354 = vmatpush1.msra.mxu0 0.0
        %2355 = vmatprep.subr.mxu0 0.0
        %2356 = vmatpush1.msra.mxu0 0.0
        %2357 = vmatprep.subr.mxu0 0.0
        %2358 = vmatpush1.msra.mxu0 0.0
        %2359 = vmatprep.subr.mxu0 0.0
        %2360 = vmatpush1.msra.mxu0 0.0
        %2361 = vmatprep.subr.mxu0 0.0
        %2362 = vmatpush1.msra.mxu0 0.0
        %2363 = vmatprep.subr.mxu0 0.0
        %2364 = vmatpush1.msra.mxu0 0.0
        %2365 = vmatprep.subr.mxu0 0.0
        %2366 = vmatpush1.msra.mxu0 0.0
        %2367 = vmatprep.subr.mxu0 0.0
        %2368 = vmatpush1.msra.mxu0 0.0
        %2369 = vmatprep.subr.mxu0 0.0
        %2370 = vmatpush1.msra.mxu0 0.0
        %2371 = vmatprep.subr.mxu0 0.0
        %2372 = vmatpush1.msra.mxu0 0.0
        %2373 = vmatprep.subr.mxu0 0.0
        %2374 = vmatpush1.msra.mxu0 0.0
        %2375 = vmatprep.subr.mxu0 0.0
        %2376 = vmatpush1.msra.mxu0 0.0
        %2377 = vmatprep.subr.mxu0 0.0
        %2378 = vmatpush1.msra.mxu0 0.0
        %2379 = vmatprep.subr.mxu0 0.0
        %2380 = vmatpush1.msra.mxu0 0.0
        %2381 = vmatprep.subr.mxu0 0.0
        %2382 = vmatpush1.msra.mxu0 0.0
        %2383 = vmatprep.subr.mxu0 0.0
        %2384 = vmatpush1.msra.mxu0 0.0
        %2385 = vmatprep.subr.mxu0 0.0
        %2386 = vmatpush1.msra.mxu0 0.0
        %2387 = vmatprep.subr.mxu0 0.0
        %2388 = vmatpush1.msra.mxu0 0.0
        %2389 = vmatprep.subr.mxu0 0.0
        %2390 = vmatpush1.msra.mxu0 0.0
        %2391 = vmatprep.subr.mxu0 0.0
        %2392 = vmatpush1.msra.mxu0 0.0
        %2393 = vmatprep.subr.mxu0 0.0
        %2394 = vmatpush1.msra.mxu0 0.0
        %2395 = vmatprep.subr.mxu0 0.0
        %2396 = vmatpush1.msra.mxu0 0.0
        %2397 = vmatprep.subr.mxu0 0.0
        %2398 = vmatpush1.msra.mxu0 0.0
        %2399 = vmatprep.subr.mxu0 0.0
        %2400 = vmatpush1.msra.mxu0 0.0
        %2401 = vmatprep.subr.mxu0 0.0
        %2402 = vmatpush1.msra.mxu0 0.0
        %2403 = vmatprep.subr.mxu0 0.0
        %2404 = vmatpush1.msra.mxu0 0.0
        %2405 = vmatprep.subr.mxu0 0.0
        %2406 = vmatpush1.msra.mxu0 0.0
        %2407 = vmatprep.subr.mxu0 0.0
        %2408 = vmatpush1.msra.mxu0 0.0
        %2409 = vmatprep.mubr.f32.mxu0 0.0
        %v2410 = vand.u32 %v2335, 4294901760
        %v2411 = vsub.f32 %v2335, %v2410
        %v2412 = vand.u32 %v2411, 4294901760
        %v2413 = vsub.f32 %v2411, %v2412
        %v2414 = vand.u32 %v2413, 4294901760
        %2415 = vmatmul.mubr.f32.gmra.mrb[0].mxu0 %v2414
        %v2416 = vpop.f32.mrb[0].mxu0
        %v2417 = vadd.f32 0.0, %v2416
        %v2418 = vpop.f32.mrb[0].mxu0
        %v2419 = vadd.f32 0.0, %v2418
        %2420 = vdwg.mxu0
        %v2421 = vand.u32 %v2341, 4294901760
        %v2422 = vsub.f32 %v2341, %v2421
        %v2423 = vand.u32 %v2422, 4294901760
        %v2424 = vsub.f32 %v2422, %v2423
        %v2425 = vand.u32 %v2424, 4294901760
        %2426 = vmatprep.subr.mxu0 %v2425
        %v2427 = vand.u32 %v2338, 4294901760
        %v2428 = vsub.f32 %v2338, %v2427
        %v2429 = vand.u32 %v2428, 4294901760
        %v2430 = vsub.f32 %v2428, %v2429
        %v2431 = vand.u32 %v2430, 4294901760
        %2432 = vmatpush1.msra.mxu0 %v2431
        %2433 = vmatprep.subr.mxu0 0.0
        %2434 = vmatpush1.msra.mxu0 0.0
        %2435 = vmatprep.subr.mxu0 0.0
        %2436 = vmatpush1.msra.mxu0 0.0
        %2437 = vmatprep.subr.mxu0 0.0
        %2438 = vmatpush1.msra.mxu0 0.0
        %2439 = vmatprep.subr.mxu0 0.0
        %2440 = vmatpush1.msra.mxu0 0.0
        %2441 = vmatprep.subr.mxu0 0.0
        %2442 = vmatpush1.msra.mxu0 0.0
        %2443 = vmatprep.subr.mxu0 0.0
        %2444 = vmatpush1.msra.mxu0 0.0
        %2445 = vmatprep.subr.mxu0 0.0
        %2446 = vmatpush1.msra.mxu0 0.0
        %2447 = vmatprep.subr.mxu0 0.0
        %2448 = vmatpush1.msra.mxu0 0.0
        %2449 = vmatprep.subr.mxu0 0.0
        %2450 = vmatpush1.msra.mxu0 0.0
        %2451 = vmatprep.subr.mxu0 0.0
        %2452 = vmatpush1.msra.mxu0 0.0
        %2453 = vmatprep.subr.mxu0 0.0
        %2454 = vmatpush1.msra.mxu0 0.0
        %2455 = vmatprep.subr.mxu0 0.0
        %2456 = vmatpush1.msra.mxu0 0.0
        %2457 = vmatprep.subr.mxu0 0.0
        %2458 = vmatpush1.msra.mxu0 0.0
        %2459 = vmatprep.subr.mxu0 0.0
        %2460 = vmatpush1.msra.mxu0 0.0
        %2461 = vmatprep.subr.mxu0 0.0
        %2462 = vmatpush1.msra.mxu0 0.0
        %2463 = vmatprep.subr.mxu0 0.0
        %2464 = vmatpush1.msra.mxu0 0.0
        %2465 = vmatprep.subr.mxu0 0.0
        %2466 = vmatpush1.msra.mxu0 0.0
        %2467 = vmatprep.subr.mxu0 0.0
        %2468 = vmatpush1.msra.mxu0 0.0
        %2469 = vmatprep.subr.mxu0 0.0
        %2470 = vmatpush1.msra.mxu0 0.0
        %2471 = vmatprep.subr.mxu0 0.0
        %2472 = vmatpush1.msra.mxu0 0.0
        %2473 = vmatprep.subr.mxu0 0.0
        %2474 = vmatpush1.msra.mxu0 0.0
        %2475 = vmatprep.subr.mxu0 0.0
        %2476 = vmatpush1.msra.mxu0 0.0
        %2477 = vmatprep.subr.mxu0 0.0
        %2478 = vmatpush1.msra.mxu0 0.0
        %2479 = vmatprep.subr.mxu0 0.0
        %2480 = vmatpush1.msra.mxu0 0.0
        %2481 = vmatprep.subr.mxu0 0.0
        %2482 = vmatpush1.msra.mxu0 0.0
        %2483 = vmatprep.subr.mxu0 0.0
        %2484 = vmatpush1.msra.mxu0 0.0
        %2485 = vmatprep.subr.mxu0 0.0
        %2486 = vmatpush1.msra.mxu0 0.0
        %2487 = vmatprep.subr.mxu0 0.0
        %2488 = vmatpush1.msra.mxu0 0.0
        %2489 = vmatprep.subr.mxu0 0.0
        %2490 = vmatpush1.msra.mxu0 0.0
        %2491 = vmatprep.subr.mxu0 0.0
        %2492 = vmatpush1.msra.mxu0 0.0
        %2493 = vmatprep.subr.mxu0 0.0
        %2494 = vmatpush1.msra.mxu0 0.0
        %2495 = vmatprep.mubr.f32.mxu0 0.0
        %v2496 = vand.u32 %v2335, 4294901760
        %2497 = vmatmul.mubr.f32.gmra.mrb[0].mxu0 %v2496
        %v2498 = vpop.f32.mrb[0].mxu0
        %v2499 = vadd.f32 %v2417, %v2498
        %v2500 = vpop.f32.mrb[0].mxu0
        %v2501 = vadd.f32 %v2419, %v2500
        %2502 = vdwg.mxu0
        %v2503 = vand.u32 %v2341, 4294901760
        %v2504 = vsub.f32 %v2341, %v2503
        %2505 = vmatprep.subr.mxu0 %v2504
        %v2506 = vand.u32 %v2338, 4294901760
        %v2507 = vsub.f32 %v2338, %v2506
        %2508 = vmatpush1.msra.mxu0 %v2507
        %2509 = vmatprep.subr.mxu0 0.0
        %2510 = vmatpush1.msra.mxu0 0.0
        %2511 = vmatprep.subr.mxu0 0.0
        %2512 = vmatpush1.msra.mxu0 0.0
        %2513 = vmatprep.subr.mxu0 0.0
        %2514 = vmatpush1.msra.mxu0 0.0
        %2515 = vmatprep.subr.mxu0 0.0
        %2516 = vmatpush1.msra.mxu0 0.0
        %2517 = vmatprep.subr.mxu0 0.0
        %2518 = vmatpush1.msra.mxu0 0.0
        %2519 = vmatprep.subr.mxu0 0.0
        %2520 = vmatpush1.msra.mxu0 0.0
        %2521 = vmatprep.subr.mxu0 0.0
        %2522 = vmatpush1.msra.mxu0 0.0
        %2523 = vmatprep.subr.mxu0 0.0
        %2524 = vmatpush1.msra.mxu0 0.0
        %2525 = vmatprep.subr.mxu0 0.0
        %2526 = vmatpush1.msra.mxu0 0.0
        %2527 = vmatprep.subr.mxu0 0.0
        %2528 = vmatpush1.msra.mxu0 0.0
        %2529 = vmatprep.subr.mxu0 0.0
        %2530 = vmatpush1.msra.mxu0 0.0
        %2531 = vmatprep.subr.mxu0 0.0
        %2532 = vmatpush1.msra.mxu0 0.0
        %2533 = vmatprep.subr.mxu0 0.0
        %2534 = vmatpush1.msra.mxu0 0.0
        %2535 = vmatprep.subr.mxu0 0.0
        %2536 = vmatpush1.msra.mxu0 0.0
        %2537 = vmatprep.subr.mxu0 0.0
        %2538 = vmatpush1.msra.mxu0 0.0
        %2539 = vmatprep.subr.mxu0 0.0
        %2540 = vmatpush1.msra.mxu0 0.0
        %2541 = vmatprep.subr.mxu0 0.0
        %2542 = vmatpush1.msra.mxu0 0.0
        %2543 = vmatprep.subr.mxu0 0.0
        %2544 = vmatpush1.msra.mxu0 0.0
        %2545 = vmatprep.subr.mxu0 0.0
        %2546 = vmatpush1.msra.mxu0 0.0
        %2547 = vmatprep.subr.mxu0 0.0
        %2548 = vmatpush1.msra.mxu0 0.0
        %2549 = vmatprep.subr.mxu0 0.0
        %2550 = vmatpush1.msra.mxu0 0.0
        %2551 = vmatprep.subr.mxu0 0.0
        %2552 = vmatpush1.msra.mxu0 0.0
        %2553 = vmatprep.subr.mxu0 0.0
        %2554 = vmatpush1.msra.mxu0 0.0
        %2555 = vmatprep.subr.mxu0 0.0
        %2556 = vmatpush1.msra.mxu0 0.0
        %2557 = vmatprep.subr.mxu0 0.0
        %2558 = vmatpush1.msra.mxu0 0.0
        %2559 = vmatprep.subr.mxu0 0.0
        %2560 = vmatpush1.msra.mxu0 0.0
        %2561 = vmatprep.subr.mxu0 0.0
        %2562 = vmatpush1.msra.mxu0 0.0
        %2563 = vmatprep.subr.mxu0 0.0
        %2564 = vmatpush1.msra.mxu0 0.0
        %2565 = vmatprep.subr.mxu0 0.0
        %2566 = vmatpush1.msra.mxu0 0.0
        %2567 = vmatprep.subr.mxu0 0.0
        %2568 = vmatpush1.msra.mxu0 0.0
        %2569 = vmatprep.subr.mxu0 0.0
        %2570 = vmatpush1.msra.mxu0 0.0
        %2571 = vmatprep.mubr.f32.mxu0 0.0
        %v2572 = vand.u32 %v2335, 4294901760
        %v2573 = vsub.f32 %v2335, %v2572
        %2574 = vmatmul.mubr.f32.gmra.mrb[0].mxu0 %v2573
        %v2575 = vpop.f32.mrb[0].mxu0
        %v2576 = vadd.f32 %v2499, %v2575
        %v2577 = vpop.f32.mrb[0].mxu0
        %v2578 = vadd.f32 %v2501, %v2577
        %2579 = vdwg.mxu0
        %v2580 = vand.u32 %v2341, 4294901760
        %2581 = vmatprep.subr.mxu0 %v2580
        %v2582 = vand.u32 %v2338, 4294901760
        %2583 = vmatpush1.msra.mxu0 %v2582
        %2584 = vmatprep.subr.mxu0 0.0
        %2585 = vmatpush1.msra.mxu0 0.0
        %2586 = vmatprep.subr.mxu0 0.0
        %2587 = vmatpush1.msra.mxu0 0.0
        %2588 = vmatprep.subr.mxu0 0.0
        %2589 = vmatpush1.msra.mxu0 0.0
        %2590 = vmatprep.subr.mxu0 0.0
        %2591 = vmatpush1.msra.mxu0 0.0
        %2592 = vmatprep.subr.mxu0 0.0
        %2593 = vmatpush1.msra.mxu0 0.0
        %2594 = vmatprep.subr.mxu0 0.0
        %2595 = vmatpush1.msra.mxu0 0.0
        %2596 = vmatprep.subr.mxu0 0.0
        %2597 = vmatpush1.msra.mxu0 0.0
        %2598 = vmatprep.subr.mxu0 0.0
        %2599 = vmatpush1.msra.mxu0 0.0
        %2600 = vmatprep.subr.mxu0 0.0
        %2601 = vmatpush1.msra.mxu0 0.0
        %2602 = vmatprep.subr.mxu0 0.0
        %2603 = vmatpush1.msra.mxu0 0.0
        %2604 = vmatprep.subr.mxu0 0.0
        %2605 = vmatpush1.msra.mxu0 0.0
        %2606 = vmatprep.subr.mxu0 0.0
        %2607 = vmatpush1.msra.mxu0 0.0
        %2608 = vmatprep.subr.mxu0 0.0
        %2609 = vmatpush1.msra.mxu0 0.0
        %2610 = vmatprep.subr.mxu0 0.0
        %2611 = vmatpush1.msra.mxu0 0.0
        %2612 = vmatprep.subr.mxu0 0.0
        %2613 = vmatpush1.msra.mxu0 0.0
        %2614 = vmatprep.subr.mxu0 0.0
        %2615 = vmatpush1.msra.mxu0 0.0
        %2616 = vmatprep.subr.mxu0 0.0
        %2617 = vmatpush1.msra.mxu0 0.0
        %2618 = vmatprep.subr.mxu0 0.0
        %2619 = vmatpush1.msra.mxu0 0.0
        %2620 = vmatprep.subr.mxu0 0.0
        %2621 = vmatpush1.msra.mxu0 0.0
        %2622 = vmatprep.subr.mxu0 0.0
        %2623 = vmatpush1.msra.mxu0 0.0
        %2624 = vmatprep.subr.mxu0 0.0
        %2625 = vmatpush1.msra.mxu0 0.0
        %2626 = vmatprep.subr.mxu0 0.0
        %2627 = vmatpush1.msra.mxu0 0.0
        %2628 = vmatprep.subr.mxu0 0.0
        %2629 = vmatpush1.msra.mxu0 0.0
        %2630 = vmatprep.subr.mxu0 0.0
        %2631 = vmatpush1.msra.mxu0 0.0
        %2632 = vmatprep.subr.mxu0 0.0
        %2633 = vmatpush1.msra.mxu0 0.0
        %2634 = vmatprep.subr.mxu0 0.0
        %2635 = vmatpush1.msra.mxu0 0.0
        %2636 = vmatprep.subr.mxu0 0.0
        %2637 = vmatpush1.msra.mxu0 0.0
        %2638 = vmatprep.subr.mxu0 0.0
        %2639 = vmatpush1.msra.mxu0 0.0
        %2640 = vmatprep.subr.mxu0 0.0
        %2641 = vmatpush1.msra.mxu0 0.0
        %2642 = vmatprep.subr.mxu0 0.0
        %2643 = vmatpush1.msra.mxu0 0.0
        %2644 = vmatprep.subr.mxu0 0.0
        %2645 = vmatpush1.msra.mxu0 0.0
        %2646 = vmatprep.mubr.f32.mxu0 0.0
        %v2647 = vand.u32 %v2335, 4294901760
        %v2648 = vsub.f32 %v2335, %v2647
        %v2649 = vand.u32 %v2648, 4294901760
        %2650 = vmatmul.mubr.f32.gmra.mrb[0].mxu0 %v2649
        %v2651 = vpop.f32.mrb[0].mxu0
        %v2652 = vadd.f32 %v2576, %v2651
        %v2653 = vpop.f32.mrb[0].mxu0
        %v2654 = vadd.f32 %v2578, %v2653
        %2655 = vdwg.mxu0
        %v2656 = vand.u32 %v2341, 4294901760
        %v2657 = vsub.f32 %v2341, %v2656
        %v2658 = vand.u32 %v2657, 4294901760
        %2659 = vmatprep.subr.mxu0 %v2658
        %v2660 = vand.u32 %v2338, 4294901760
        %v2661 = vsub.f32 %v2338, %v2660
        %v2662 = vand.u32 %v2661, 4294901760
        %2663 = vmatpush1.msra.mxu0 %v2662
        %2664 = vmatprep.subr.mxu0 0.0
        %2665 = vmatpush1.msra.mxu0 0.0
        %2666 = vmatprep.subr.mxu0 0.0
        %2667 = vmatpush1.msra.mxu0 0.0
        %2668 = vmatprep.subr.mxu0 0.0
        %2669 = vmatpush1.msra.mxu0 0.0
        %2670 = vmatprep.subr.mxu0 0.0
        %2671 = vmatpush1.msra.mxu0 0.0
        %2672 = vmatprep.subr.mxu0 0.0
        %2673 = vmatpush1.msra.mxu0 0.0
        %2674 = vmatprep.subr.mxu0 0.0
        %2675 = vmatpush1.msra.mxu0 0.0
        %2676 = vmatprep.subr.mxu0 0.0
        %2677 = vmatpush1.msra.mxu0 0.0
        %2678 = vmatprep.subr.mxu0 0.0
        %2679 = vmatpush1.msra.mxu0 0.0
        %2680 = vmatprep.subr.mxu0 0.0
        %2681 = vmatpush1.msra.mxu0 0.0
        %2682 = vmatprep.subr.mxu0 0.0
        %2683 = vmatpush1.msra.mxu0 0.0
        %2684 = vmatprep.subr.mxu0 0.0
        %2685 = vmatpush1.msra.mxu0 0.0
        %2686 = vmatprep.subr.mxu0 0.0
        %2687 = vmatpush1.msra.mxu0 0.0
        %2688 = vmatprep.subr.mxu0 0.0
        %2689 = vmatpush1.msra.mxu0 0.0
        %2690 = vmatprep.subr.mxu0 0.0
        %2691 = vmatpush1.msra.mxu0 0.0
        %2692 = vmatprep.subr.mxu0 0.0
        %2693 = vmatpush1.msra.mxu0 0.0
        %2694 = vmatprep.subr.mxu0 0.0
        %2695 = vmatpush1.msra.mxu0 0.0
        %2696 = vmatprep.subr.mxu0 0.0
        %2697 = vmatpush1.msra.mxu0 0.0
        %2698 = vmatprep.subr.mxu0 0.0
        %2699 = vmatpush1.msra.mxu0 0.0
        %2700 = vmatprep.subr.mxu0 0.0
        %2701 = vmatpush1.msra.mxu0 0.0
        %2702 = vmatprep.subr.mxu0 0.0
        %2703 = vmatpush1.msra.mxu0 0.0
        %2704 = vmatprep.subr.mxu0 0.0
        %2705 = vmatpush1.msra.mxu0 0.0
        %2706 = vmatprep.subr.mxu0 0.0
        %2707 = vmatpush1.msra.mxu0 0.0
        %2708 = vmatprep.subr.mxu0 0.0
        %2709 = vmatpush1.msra.mxu0 0.0
        %2710 = vmatprep.subr.mxu0 0.0
        %2711 = vmatpush1.msra.mxu0 0.0
        %2712 = vmatprep.subr.mxu0 0.0
        %2713 = vmatpush1.msra.mxu0 0.0
        %2714 = vmatprep.subr.mxu0 0.0
        %2715 = vmatpush1.msra.mxu0 0.0
        %2716 = vmatprep.subr.mxu0 0.0
        %2717 = vmatpush1.msra.mxu0 0.0
        %2718 = vmatprep.subr.mxu0 0.0
        %2719 = vmatpush1.msra.mxu0 0.0
        %2720 = vmatprep.subr.mxu0 0.0
        %2721 = vmatpush1.msra.mxu0 0.0
        %2722 = vmatprep.subr.mxu0 0.0
        %2723 = vmatpush1.msra.mxu0 0.0
        %2724 = vmatprep.subr.mxu0 0.0
        %2725 = vmatpush1.msra.mxu0 0.0
        %2726 = vmatprep.mubr.f32.mxu0 0.0
        %v2727 = vand.u32 %v2335, 4294901760
        %2728 = vmatmul.mubr.f32.gmra.mrb[0].mxu0 %v2727
        %v2729 = vpop.f32.mrb[0].mxu0
        %v2730 = vadd.f32 %v2652, %v2729
        %v2731 = vpop.f32.mrb[0].mxu0
        %v2732 = vadd.f32 %v2654, %v2731
        %2733 = vdwg.mxu0
        %v2734 = vand.u32 %v2341, 4294901760
        %2735 = vmatprep.subr.mxu0 %v2734
        %v2736 = vand.u32 %v2338, 4294901760
        %2737 = vmatpush1.msra.mxu0 %v2736
        %2738 = vmatprep.subr.mxu0 0.0
        %2739 = vmatpush1.msra.mxu0 0.0
        %2740 = vmatprep.subr.mxu0 0.0
        %2741 = vmatpush1.msra.mxu0 0.0
        %2742 = vmatprep.subr.mxu0 0.0
        %2743 = vmatpush1.msra.mxu0 0.0
        %2744 = vmatprep.subr.mxu0 0.0
        %2745 = vmatpush1.msra.mxu0 0.0
        %2746 = vmatprep.subr.mxu0 0.0
        %2747 = vmatpush1.msra.mxu0 0.0
        %2748 = vmatprep.subr.mxu0 0.0
        %2749 = vmatpush1.msra.mxu0 0.0
        %2750 = vmatprep.subr.mxu0 0.0
        %2751 = vmatpush1.msra.mxu0 0.0
        %2752 = vmatprep.subr.mxu0 0.0
        %2753 = vmatpush1.msra.mxu0 0.0
        %2754 = vmatprep.subr.mxu0 0.0
        %2755 = vmatpush1.msra.mxu0 0.0
        %2756 = vmatprep.subr.mxu0 0.0
        %2757 = vmatpush1.msra.mxu0 0.0
        %2758 = vmatprep.subr.mxu0 0.0
        %2759 = vmatpush1.msra.mxu0 0.0
        %2760 = vmatprep.subr.mxu0 0.0
        %2761 = vmatpush1.msra.mxu0 0.0
        %2762 = vmatprep.subr.mxu0 0.0
        %2763 = vmatpush1.msra.mxu0 0.0
        %2764 = vmatprep.subr.mxu0 0.0
        %2765 = vmatpush1.msra.mxu0 0.0
        %2766 = vmatprep.subr.mxu0 0.0
        %2767 = vmatpush1.msra.mxu0 0.0
        %2768 = vmatprep.subr.mxu0 0.0
        %2769 = vmatpush1.msra.mxu0 0.0
        %2770 = vmatprep.subr.mxu0 0.0
        %2771 = vmatpush1.msra.mxu0 0.0
        %2772 = vmatprep.subr.mxu0 0.0
        %2773 = vmatpush1.msra.mxu0 0.0
        %2774 = vmatprep.subr.mxu0 0.0
        %2775 = vmatpush1.msra.mxu0 0.0
        %2776 = vmatprep.subr.mxu0 0.0
        %2777 = vmatpush1.msra.mxu0 0.0
        %2778 = vmatprep.subr.mxu0 0.0
        %2779 = vmatpush1.msra.mxu0 0.0
        %2780 = vmatprep.subr.mxu0 0.0
        %2781 = vmatpush1.msra.mxu0 0.0
        %2782 = vmatprep.subr.mxu0 0.0
        %2783 = vmatpush1.msra.mxu0 0.0
        %2784 = vmatprep.subr.mxu0 0.0
        %2785 = vmatpush1.msra.mxu0 0.0
        %2786 = vmatprep.subr.mxu0 0.0
        %2787 = vmatpush1.msra.mxu0 0.0
        %2788 = vmatprep.subr.mxu0 0.0
        %2789 = vmatpush1.msra.mxu0 0.0
        %2790 = vmatprep.subr.mxu0 0.0
        %2791 = vmatpush1.msra.mxu0 0.0
        %2792 = vmatprep.subr.mxu0 0.0
        %2793 = vmatpush1.msra.mxu0 0.0
        %2794 = vmatprep.subr.mxu0 0.0
        %2795 = vmatpush1.msra.mxu0 0.0
        %2796 = vmatprep.subr.mxu0 0.0
        %2797 = vmatpush1.msra.mxu0 0.0
        %2798 = vmatprep.subr.mxu0 0.0
        %2799 = vmatpush1.msra.mxu0 0.0
        %2800 = vmatprep.mubr.f32.mxu0 0.0
        %v2801 = vand.u32 %v2335, 4294901760
        %2802 = vmatmul.mubr.f32.gmra.mrb[0].mxu0 %v2801
        %v2803 = vpop.f32.mrb[0].mxu0
        %v2804 = vadd.f32 %v2730, %v2803
        %v2805 = vpop.f32.mrb[0].mxu0
        %v2806 = vadd.f32 %v2732, %v2805
        %2807 = vdwg.mxu0
        %v2808 = vadd.f32 %v2300, %v2804
        %v2809 = vadd.f32 %v2301, %v2806
        %s2810 = scalar_lea.vmem %s2, 8
        %v2811 = vld [vmem:[%s2810] sm:$0xf]
        %v2813 = vsel %vm366, %v2811, 0
        %v2816 = vsel %vm370, %v2330, 0
        %v2819 = vsel %vm370, %v2331, 0
        %v2821 = vand.u32 %v2819, 4294901760
        %2822 = vmatprep.subr.mxu0 %v2821
        %v2823 = vand.u32 %v2816, 4294901760
        %2824 = vmatpush1.msra.mxu0 %v2823
        %2825 = vmatprep.subr.mxu0 0.0
        %2826 = vmatpush1.msra.mxu0 0.0
        %2827 = vmatprep.subr.mxu0 0.0
        %2828 = vmatpush1.msra.mxu0 0.0
        %2829 = vmatprep.subr.mxu0 0.0
        %2830 = vmatpush1.msra.mxu0 0.0
        %2831 = vmatprep.subr.mxu0 0.0
        %2832 = vmatpush1.msra.mxu0 0.0
        %2833 = vmatprep.subr.mxu0 0.0
        %2834 = vmatpush1.msra.mxu0 0.0
        %2835 = vmatprep.subr.mxu0 0.0
        %2836 = vmatpush1.msra.mxu0 0.0
        %2837 = vmatprep.subr.mxu0 0.0
        %2838 = vmatpush1.msra.mxu0 0.0
        %2839 = vmatprep.subr.mxu0 0.0
        %2840 = vmatpush1.msra.mxu0 0.0
        %2841 = vmatprep.subr.mxu0 0.0
        %2842 = vmatpush1.msra.mxu0 0.0
        %2843 = vmatprep.subr.mxu0 0.0
        %2844 = vmatpush1.msra.mxu0 0.0
        %2845 = vmatprep.subr.mxu0 0.0
        %2846 = vmatpush1.msra.mxu0 0.0
        %2847 = vmatprep.subr.mxu0 0.0
        %2848 = vmatpush1.msra.mxu0 0.0
        %2849 = vmatprep.subr.mxu0 0.0
        %2850 = vmatpush1.msra.mxu0 0.0
        %2851 = vmatprep.subr.mxu0 0.0
        %2852 = vmatpush1.msra.mxu0 0.0
        %2853 = vmatprep.subr.mxu0 0.0
        %2854 = vmatpush1.msra.mxu0 0.0
        %2855 = vmatprep.subr.mxu0 0.0
        %2856 = vmatpush1.msra.mxu0 0.0
        %2857 = vmatprep.subr.mxu0 0.0
        %2858 = vmatpush1.msra.mxu0 0.0
        %2859 = vmatprep.subr.mxu0 0.0
        %2860 = vmatpush1.msra.mxu0 0.0
        %2861 = vmatprep.subr.mxu0 0.0
        %2862 = vmatpush1.msra.mxu0 0.0
        %2863 = vmatprep.subr.mxu0 0.0
        %2864 = vmatpush1.msra.mxu0 0.0
        %2865 = vmatprep.subr.mxu0 0.0
        %2866 = vmatpush1.msra.mxu0 0.0
        %2867 = vmatprep.subr.mxu0 0.0
        %2868 = vmatpush1.msra.mxu0 0.0
        %2869 = vmatprep.subr.mxu0 0.0
        %2870 = vmatpush1.msra.mxu0 0.0
        %2871 = vmatprep.subr.mxu0 0.0
        %2872 = vmatpush1.msra.mxu0 0.0
        %2873 = vmatprep.subr.mxu0 0.0
        %2874 = vmatpush1.msra.mxu0 0.0
        %2875 = vmatprep.subr.mxu0 0.0
        %2876 = vmatpush1.msra.mxu0 0.0
        %2877 = vmatprep.subr.mxu0 0.0
        %2878 = vmatpush1.msra.mxu0 0.0
        %2879 = vmatprep.subr.mxu0 0.0
        %2880 = vmatpush1.msra.mxu0 0.0
        %2881 = vmatprep.subr.mxu0 0.0
        %2882 = vmatpush1.msra.mxu0 0.0
        %2883 = vmatprep.subr.mxu0 0.0
        %2884 = vmatpush1.msra.mxu0 0.0
        %2885 = vmatprep.subr.mxu0 0.0
        %2886 = vmatpush1.msra.mxu0 0.0
        %2887 = vmatprep.mubr.f32.mxu0 0.0
        %v2888 = vand.u32 %v2813, 4294901760
        %v2889 = vsub.f32 %v2813, %v2888
        %v2890 = vand.u32 %v2889, 4294901760
        %v2891 = vsub.f32 %v2889, %v2890
        %v2892 = vand.u32 %v2891, 4294901760
        %2893 = vmatmul.mubr.f32.gmra.mrb[0].mxu0 %v2892
        %v2894 = vpop.f32.mrb[0].mxu0
        %v2895 = vadd.f32 0.0, %v2894
        %v2896 = vpop.f32.mrb[0].mxu0
        %v2897 = vadd.f32 0.0, %v2896
        %2898 = vdwg.mxu0
        %v2899 = vand.u32 %v2819, 4294901760
        %v2900 = vsub.f32 %v2819, %v2899
        %v2901 = vand.u32 %v2900, 4294901760
        %v2902 = vsub.f32 %v2900, %v2901
        %v2903 = vand.u32 %v2902, 4294901760
        %2904 = vmatprep.subr.mxu0 %v2903
        %v2905 = vand.u32 %v2816, 4294901760
        %v2906 = vsub.f32 %v2816, %v2905
        %v2907 = vand.u32 %v2906, 4294901760
        %v2908 = vsub.f32 %v2906, %v2907
        %v2909 = vand.u32 %v2908, 4294901760
        %2910 = vmatpush1.msra.mxu0 %v2909
        %2911 = vmatprep.subr.mxu0 0.0
        %2912 = vmatpush1.msra.mxu0 0.0
        %2913 = vmatprep.subr.mxu0 0.0
        %2914 = vmatpush1.msra.mxu0 0.0
        %2915 = vmatprep.subr.mxu0 0.0
        %2916 = vmatpush1.msra.mxu0 0.0
        %2917 = vmatprep.subr.mxu0 0.0
        %2918 = vmatpush1.msra.mxu0 0.0
        %2919 = vmatprep.subr.mxu0 0.0
        %2920 = vmatpush1.msra.mxu0 0.0
        %2921 = vmatprep.subr.mxu0 0.0
        %2922 = vmatpush1.msra.mxu0 0.0
        %2923 = vmatprep.subr.mxu0 0.0
        %2924 = vmatpush1.msra.mxu0 0.0
        %2925 = vmatprep.subr.mxu0 0.0
        %2926 = vmatpush1.msra.mxu0 0.0
        %2927 = vmatprep.subr.mxu0 0.0
        %2928 = vmatpush1.msra.mxu0 0.0
        %2929 = vmatprep.subr.mxu0 0.0
        %2930 = vmatpush1.msra.mxu0 0.0
        %2931 = vmatprep.subr.mxu0 0.0
        %2932 = vmatpush1.msra.mxu0 0.0
        %2933 = vmatprep.subr.mxu0 0.0
        %2934 = vmatpush1.msra.mxu0 0.0
        %2935 = vmatprep.subr.mxu0 0.0
        %2936 = vmatpush1.msra.mxu0 0.0
        %2937 = vmatprep.subr.mxu0 0.0
        %2938 = vmatpush1.msra.mxu0 0.0
        %2939 = vmatprep.subr.mxu0 0.0
        %2940 = vmatpush1.msra.mxu0 0.0
        %2941 = vmatprep.subr.mxu0 0.0
        %2942 = vmatpush1.msra.mxu0 0.0
        %2943 = vmatprep.subr.mxu0 0.0
        %2944 = vmatpush1.msra.mxu0 0.0
        %2945 = vmatprep.subr.mxu0 0.0
        %2946 = vmatpush1.msra.mxu0 0.0
        %2947 = vmatprep.subr.mxu0 0.0
        %2948 = vmatpush1.msra.mxu0 0.0
        %2949 = vmatprep.subr.mxu0 0.0
        %2950 = vmatpush1.msra.mxu0 0.0
        %2951 = vmatprep.subr.mxu0 0.0
        %2952 = vmatpush1.msra.mxu0 0.0
        %2953 = vmatprep.subr.mxu0 0.0
        %2954 = vmatpush1.msra.mxu0 0.0
        %2955 = vmatprep.subr.mxu0 0.0
        %2956 = vmatpush1.msra.mxu0 0.0
        %2957 = vmatprep.subr.mxu0 0.0
        %2958 = vmatpush1.msra.mxu0 0.0
        %2959 = vmatprep.subr.mxu0 0.0
        %2960 = vmatpush1.msra.mxu0 0.0
        %2961 = vmatprep.subr.mxu0 0.0
        %2962 = vmatpush1.msra.mxu0 0.0
        %2963 = vmatprep.subr.mxu0 0.0
        %2964 = vmatpush1.msra.mxu0 0.0
        %2965 = vmatprep.subr.mxu0 0.0
        %2966 = vmatpush1.msra.mxu0 0.0
        %2967 = vmatprep.subr.mxu0 0.0
        %2968 = vmatpush1.msra.mxu0 0.0
        %2969 = vmatprep.subr.mxu0 0.0
        %2970 = vmatpush1.msra.mxu0 0.0
        %2971 = vmatprep.subr.mxu0 0.0
        %2972 = vmatpush1.msra.mxu0 0.0
        %2973 = vmatprep.mubr.f32.mxu0 0.0
        %v2974 = vand.u32 %v2813, 4294901760
        %2975 = vmatmul.mubr.f32.gmra.mrb[0].mxu0 %v2974
        %v2976 = vpop.f32.mrb[0].mxu0
        %v2977 = vadd.f32 %v2895, %v2976
        %v2978 = vpop.f32.mrb[0].mxu0
        %v2979 = vadd.f32 %v2897, %v2978
        %2980 = vdwg.mxu0
        %v2981 = vand.u32 %v2819, 4294901760
        %v2982 = vsub.f32 %v2819, %v2981
        %2983 = vmatprep.subr.mxu0 %v2982
        %v2984 = vand.u32 %v2816, 4294901760
        %v2985 = vsub.f32 %v2816, %v2984
        %2986 = vmatpush1.msra.mxu0 %v2985
        %2987 = vmatprep.subr.mxu0 0.0
        %2988 = vmatpush1.msra.mxu0 0.0
        %2989 = vmatprep.subr.mxu0 0.0
        %2990 = vmatpush1.msra.mxu0 0.0
        %2991 = vmatprep.subr.mxu0 0.0
        %2992 = vmatpush1.msra.mxu0 0.0
        %2993 = vmatprep.subr.mxu0 0.0
        %2994 = vmatpush1.msra.mxu0 0.0
        %2995 = vmatprep.subr.mxu0 0.0
        %2996 = vmatpush1.msra.mxu0 0.0
        %2997 = vmatprep.subr.mxu0 0.0
        %2998 = vmatpush1.msra.mxu0 0.0
        %2999 = vmatprep.subr.mxu0 0.0
        %3000 = vmatpush1.msra.mxu0 0.0
        %3001 = vmatprep.subr.mxu0 0.0
        %3002 = vmatpush1.msra.mxu0 0.0
        %3003 = vmatprep.subr.mxu0 0.0
        %3004 = vmatpush1.msra.mxu0 0.0
        %3005 = vmatprep.subr.mxu0 0.0
        %3006 = vmatpush1.msra.mxu0 0.0
        %3007 = vmatprep.subr.mxu0 0.0
        %3008 = vmatpush1.msra.mxu0 0.0
        %3009 = vmatprep.subr.mxu0 0.0
        %3010 = vmatpush1.msra.mxu0 0.0
        %3011 = vmatprep.subr.mxu0 0.0
        %3012 = vmatpush1.msra.mxu0 0.0
        %3013 = vmatprep.subr.mxu0 0.0
        %3014 = vmatpush1.msra.mxu0 0.0
        %3015 = vmatprep.subr.mxu0 0.0
        %3016 = vmatpush1.msra.mxu0 0.0
        %3017 = vmatprep.subr.mxu0 0.0
        %3018 = vmatpush1.msra.mxu0 0.0
        %3019 = vmatprep.subr.mxu0 0.0
        %3020 = vmatpush1.msra.mxu0 0.0
        %3021 = vmatprep.subr.mxu0 0.0
        %3022 = vmatpush1.msra.mxu0 0.0
        %3023 = vmatprep.subr.mxu0 0.0
        %3024 = vmatpush1.msra.mxu0 0.0
        %3025 = vmatprep.subr.mxu0 0.0
        %3026 = vmatpush1.msra.mxu0 0.0
        %3027 = vmatprep.subr.mxu0 0.0
        %3028 = vmatpush1.msra.mxu0 0.0
        %3029 = vmatprep.subr.mxu0 0.0
        %3030 = vmatpush1.msra.mxu0 0.0
        %3031 = vmatprep.subr.mxu0 0.0
        %3032 = vmatpush1.msra.mxu0 0.0
        %3033 = vmatprep.subr.mxu0 0.0
        %3034 = vmatpush1.msra.mxu0 0.0
        %3035 = vmatprep.subr.mxu0 0.0
        %3036 = vmatpush1.msra.mxu0 0.0
        %3037 = vmatprep.subr.mxu0 0.0
        %3038 = vmatpush1.msra.mxu0 0.0
        %3039 = vmatprep.subr.mxu0 0.0
        %3040 = vmatpush1.msra.mxu0 0.0
        %3041 = vmatprep.subr.mxu0 0.0
        %3042 = vmatpush1.msra.mxu0 0.0
        %3043 = vmatprep.subr.mxu0 0.0
        %3044 = vmatpush1.msra.mxu0 0.0
        %3045 = vmatprep.subr.mxu0 0.0
        %3046 = vmatpush1.msra.mxu0 0.0
        %3047 = vmatprep.subr.mxu0 0.0
        %3048 = vmatpush1.msra.mxu0 0.0
        %3049 = vmatprep.mubr.f32.mxu0 0.0
        %v3050 = vand.u32 %v2813, 4294901760
        %v3051 = vsub.f32 %v2813, %v3050
        %3052 = vmatmul.mubr.f32.gmra.mrb[0].mxu0 %v3051
        %v3053 = vpop.f32.mrb[0].mxu0
        %v3054 = vadd.f32 %v2977, %v3053
        %v3055 = vpop.f32.mrb[0].mxu0
        %v3056 = vadd.f32 %v2979, %v3055
        %3057 = vdwg.mxu0
        %v3058 = vand.u32 %v2819, 4294901760
        %3059 = vmatprep.subr.mxu0 %v3058
        %v3060 = vand.u32 %v2816, 4294901760
        %3061 = vmatpush1.msra.mxu0 %v3060
        %3062 = vmatprep.subr.mxu0 0.0
        %3063 = vmatpush1.msra.mxu0 0.0
        %3064 = vmatprep.subr.mxu0 0.0
        %3065 = vmatpush1.msra.mxu0 0.0
        %3066 = vmatprep.subr.mxu0 0.0
        %3067 = vmatpush1.msra.mxu0 0.0
        %3068 = vmatprep.subr.mxu0 0.0
        %3069 = vmatpush1.msra.mxu0 0.0
        %3070 = vmatprep.subr.mxu0 0.0
        %3071 = vmatpush1.msra.mxu0 0.0
        %3072 = vmatprep.subr.mxu0 0.0
        %3073 = vmatpush1.msra.mxu0 0.0
        %3074 = vmatprep.subr.mxu0 0.0
        %3075 = vmatpush1.msra.mxu0 0.0
        %3076 = vmatprep.subr.mxu0 0.0
        %3077 = vmatpush1.msra.mxu0 0.0
        %3078 = vmatprep.subr.mxu0 0.0
        %3079 = vmatpush1.msra.mxu0 0.0
        %3080 = vmatprep.subr.mxu0 0.0
        %3081 = vmatpush1.msra.mxu0 0.0
        %3082 = vmatprep.subr.mxu0 0.0
        %3083 = vmatpush1.msra.mxu0 0.0
        %3084 = vmatprep.subr.mxu0 0.0
        %3085 = vmatpush1.msra.mxu0 0.0
        %3086 = vmatprep.subr.mxu0 0.0
        %3087 = vmatpush1.msra.mxu0 0.0
        %3088 = vmatprep.subr.mxu0 0.0
        %3089 = vmatpush1.msra.mxu0 0.0
        %3090 = vmatprep.subr.mxu0 0.0
        %3091 = vmatpush1.msra.mxu0 0.0
        %3092 = vmatprep.subr.mxu0 0.0
        %3093 = vmatpush1.msra.mxu0 0.0
        %3094 = vmatprep.subr.mxu0 0.0
        %3095 = vmatpush1.msra.mxu0 0.0
        %3096 = vmatprep.subr.mxu0 0.0
        %3097 = vmatpush1.msra.mxu0 0.0
        %3098 = vmatprep.subr.mxu0 0.0
        %3099 = vmatpush1.msra.mxu0 0.0
        %3100 = vmatprep.subr.mxu0 0.0
        %3101 = vmatpush1.msra.mxu0 0.0
        %3102 = vmatprep.subr.mxu0 0.0
        %3103 = vmatpush1.msra.mxu0 0.0
        %3104 = vmatprep.subr.mxu0 0.0
        %3105 = vmatpush1.msra.mxu0 0.0
        %3106 = vmatprep.subr.mxu0 0.0
        %3107 = vmatpush1.msra.mxu0 0.0
        %3108 = vmatprep.subr.mxu0 0.0
        %3109 = vmatpush1.msra.mxu0 0.0
        %3110 = vmatprep.subr.mxu0 0.0
        %3111 = vmatpush1.msra.mxu0 0.0
        %3112 = vmatprep.subr.mxu0 0.0
        %3113 = vmatpush1.msra.mxu0 0.0
        %3114 = vmatprep.subr.mxu0 0.0
        %3115 = vmatpush1.msra.mxu0 0.0
        %3116 = vmatprep.subr.mxu0 0.0
        %3117 = vmatpush1.msra.mxu0 0.0
        %3118 = vmatprep.subr.mxu0 0.0
        %3119 = vmatpush1.msra.mxu0 0.0
        %3120 = vmatprep.subr.mxu0 0.0
        %3121 = vmatpush1.msra.mxu0 0.0
        %3122 = vmatprep.subr.mxu0 0.0
        %3123 = vmatpush1.msra.mxu0 0.0
        %3124 = vmatprep.mubr.f32.mxu0 0.0
        %v3125 = vand.u32 %v2813, 4294901760
        %v3126 = vsub.f32 %v2813, %v3125
        %v3127 = vand.u32 %v3126, 4294901760
        %3128 = vmatmul.mubr.f32.gmra.mrb[0].mxu0 %v3127
        %v3129 = vpop.f32.mrb[0].mxu0
        %v3130 = vadd.f32 %v3054, %v3129
        %v3131 = vpop.f32.mrb[0].mxu0
        %v3132 = vadd.f32 %v3056, %v3131
        %3133 = vdwg.mxu0
        %v3134 = vand.u32 %v2819, 4294901760
        %v3135 = vsub.f32 %v2819, %v3134
        %v3136 = vand.u32 %v3135, 4294901760
        %3137 = vmatprep.subr.mxu0 %v3136
        %v3138 = vand.u32 %v2816, 4294901760
        %v3139 = vsub.f32 %v2816, %v3138
        %v3140 = vand.u32 %v3139, 4294901760
        %3141 = vmatpush1.msra.mxu0 %v3140
        %3142 = vmatprep.subr.mxu0 0.0
        %3143 = vmatpush1.msra.mxu0 0.0
        %3144 = vmatprep.subr.mxu0 0.0
        %3145 = vmatpush1.msra.mxu0 0.0
        %3146 = vmatprep.subr.mxu0 0.0
        %3147 = vmatpush1.msra.mxu0 0.0
        %3148 = vmatprep.subr.mxu0 0.0
        %3149 = vmatpush1.msra.mxu0 0.0
        %3150 = vmatprep.subr.mxu0 0.0
        %3151 = vmatpush1.msra.mxu0 0.0
        %3152 = vmatprep.subr.mxu0 0.0
        %3153 = vmatpush1.msra.mxu0 0.0
        %3154 = vmatprep.subr.mxu0 0.0
        %3155 = vmatpush1.msra.mxu0 0.0
        %3156 = vmatprep.subr.mxu0 0.0
        %3157 = vmatpush1.msra.mxu0 0.0
        %3158 = vmatprep.subr.mxu0 0.0
        %3159 = vmatpush1.msra.mxu0 0.0
        %3160 = vmatprep.subr.mxu0 0.0
        %3161 = vmatpush1.msra.mxu0 0.0
        %3162 = vmatprep.subr.mxu0 0.0
        %3163 = vmatpush1.msra.mxu0 0.0
        %3164 = vmatprep.subr.mxu0 0.0
        %3165 = vmatpush1.msra.mxu0 0.0
        %3166 = vmatprep.subr.mxu0 0.0
        %3167 = vmatpush1.msra.mxu0 0.0
        %3168 = vmatprep.subr.mxu0 0.0
        %3169 = vmatpush1.msra.mxu0 0.0
        %3170 = vmatprep.subr.mxu0 0.0
        %3171 = vmatpush1.msra.mxu0 0.0
        %3172 = vmatprep.subr.mxu0 0.0
        %3173 = vmatpush1.msra.mxu0 0.0
        %3174 = vmatprep.subr.mxu0 0.0
        %3175 = vmatpush1.msra.mxu0 0.0
        %3176 = vmatprep.subr.mxu0 0.0
        %3177 = vmatpush1.msra.mxu0 0.0
        %3178 = vmatprep.subr.mxu0 0.0
        %3179 = vmatpush1.msra.mxu0 0.0
        %3180 = vmatprep.subr.mxu0 0.0
        %3181 = vmatpush1.msra.mxu0 0.0
        %3182 = vmatprep.subr.mxu0 0.0
        %3183 = vmatpush1.msra.mxu0 0.0
        %3184 = vmatprep.subr.mxu0 0.0
        %3185 = vmatpush1.msra.mxu0 0.0
        %3186 = vmatprep.subr.mxu0 0.0
        %3187 = vmatpush1.msra.mxu0 0.0
        %3188 = vmatprep.subr.mxu0 0.0
        %3189 = vmatpush1.msra.mxu0 0.0
        %3190 = vmatprep.subr.mxu0 0.0
        %3191 = vmatpush1.msra.mxu0 0.0
        %3192 = vmatprep.subr.mxu0 0.0
        %3193 = vmatpush1.msra.mxu0 0.0
        %3194 = vmatprep.subr.mxu0 0.0
        %3195 = vmatpush1.msra.mxu0 0.0
        %3196 = vmatprep.subr.mxu0 0.0
        %3197 = vmatpush1.msra.mxu0 0.0
        %3198 = vmatprep.subr.mxu0 0.0
        %3199 = vmatpush1.msra.mxu0 0.0
        %3200 = vmatprep.subr.mxu0 0.0
        %3201 = vmatpush1.msra.mxu0 0.0
        %3202 = vmatprep.subr.mxu0 0.0
        %3203 = vmatpush1.msra.mxu0 0.0
        %3204 = vmatprep.mubr.f32.mxu0 0.0
        %v3205 = vand.u32 %v2813, 4294901760
        %3206 = vmatmul.mubr.f32.gmra.mrb[0].mxu0 %v3205
        %v3207 = vpop.f32.mrb[0].mxu0
        %v3208 = vadd.f32 %v3130, %v3207
        %v3209 = vpop.f32.mrb[0].mxu0
        %v3210 = vadd.f32 %v3132, %v3209
        %3211 = vdwg.mxu0
        %v3212 = vand.u32 %v2819, 4294901760
        %3213 = vmatprep.subr.mxu0 %v3212
        %v3214 = vand.u32 %v2816, 4294901760
        %3215 = vmatpush1.msra.mxu0 %v3214
        %3216 = vmatprep.subr.mxu0 0.0
        %3217 = vmatpush1.msra.mxu0 0.0
        %3218 = vmatprep.subr.mxu0 0.0
        %3219 = vmatpush1.msra.mxu0 0.0
        %3220 = vmatprep.subr.mxu0 0.0
        %3221 = vmatpush1.msra.mxu0 0.0
        %3222 = vmatprep.subr.mxu0 0.0
        %3223 = vmatpush1.msra.mxu0 0.0
        %3224 = vmatprep.subr.mxu0 0.0
        %3225 = vmatpush1.msra.mxu0 0.0
        %3226 = vmatprep.subr.mxu0 0.0
        %3227 = vmatpush1.msra.mxu0 0.0
        %3228 = vmatprep.subr.mxu0 0.0
        %3229 = vmatpush1.msra.mxu0 0.0
        %3230 = vmatprep.subr.mxu0 0.0
        %3231 = vmatpush1.msra.mxu0 0.0
        %3232 = vmatprep.subr.mxu0 0.0
        %3233 = vmatpush1.msra.mxu0 0.0
        %3234 = vmatprep.subr.mxu0 0.0
        %3235 = vmatpush1.msra.mxu0 0.0
        %3236 = vmatprep.subr.mxu0 0.0
        %3237 = vmatpush1.msra.mxu0 0.0
        %3238 = vmatprep.subr.mxu0 0.0
        %3239 = vmatpush1.msra.mxu0 0.0
        %3240 = vmatprep.subr.mxu0 0.0
        %3241 = vmatpush1.msra.mxu0 0.0
        %3242 = vmatprep.subr.mxu0 0.0
        %3243 = vmatpush1.msra.mxu0 0.0
        %3244 = vmatprep.subr.mxu0 0.0
        %3245 = vmatpush1.msra.mxu0 0.0
        %3246 = vmatprep.subr.mxu0 0.0
        %3247 = vmatpush1.msra.mxu0 0.0
        %3248 = vmatprep.subr.mxu0 0.0
        %3249 = vmatpush1.msra.mxu0 0.0
        %3250 = vmatprep.subr.mxu0 0.0
        %3251 = vmatpush1.msra.mxu0 0.0
        %3252 = vmatprep.subr.mxu0 0.0
        %3253 = vmatpush1.msra.mxu0 0.0
        %3254 = vmatprep.subr.mxu0 0.0
        %3255 = vmatpush1.msra.mxu0 0.0
        %3256 = vmatprep.subr.mxu0 0.0
        %3257 = vmatpush1.msra.mxu0 0.0
        %3258 = vmatprep.subr.mxu0 0.0
        %3259 = vmatpush1.msra.mxu0 0.0
        %3260 = vmatprep.subr.mxu0 0.0
        %3261 = vmatpush1.msra.mxu0 0.0
        %3262 = vmatprep.subr.mxu0 0.0
        %3263 = vmatpush1.msra.mxu0 0.0
        %3264 = vmatprep.subr.mxu0 0.0
        %3265 = vmatpush1.msra.mxu0 0.0
        %3266 = vmatprep.subr.mxu0 0.0
        %3267 = vmatpush1.msra.mxu0 0.0
        %3268 = vmatprep.subr.mxu0 0.0
        %3269 = vmatpush1.msra.mxu0 0.0
        %3270 = vmatprep.subr.mxu0 0.0
        %3271 = vmatpush1.msra.mxu0 0.0
        %3272 = vmatprep.subr.mxu0 0.0
        %3273 = vmatpush1.msra.mxu0 0.0
        %3274 = vmatprep.subr.mxu0 0.0
        %3275 = vmatpush1.msra.mxu0 0.0
        %3276 = vmatprep.subr.mxu0 0.0
        %3277 = vmatpush1.msra.mxu0 0.0
        %3278 = vmatprep.mubr.f32.mxu0 0.0
        %v3279 = vand.u32 %v2813, 4294901760
        %3280 = vmatmul.mubr.f32.gmra.mrb[0].mxu0 %v3279
        %v3281 = vpop.f32.mrb[0].mxu0
        %v3282 = vadd.f32 %v3208, %v3281
        %v3283 = vpop.f32.mrb[0].mxu0
        %v3284 = vadd.f32 %v3210, %v3283
        %3285 = vdwg.mxu0
        %v3286 = vadd.f32 %v2808, %v3282
        %v3287 = vadd.f32 %v2809, %v3284
        %s3288 = scalar_lea.vmem %s3, 6
        %v3289 = vld [vmem:[%s3288] sm:$0x3]
        %3290 = vrot.lane.b32.xlu0 %v325, 1
        %v3291 = vpop.permute.xlu0 %3290
        %3292 = vrot.lane.b32.xlu0 %v329, 1
        %v3293 = vpop.permute.xlu0 %3292
        %vm3294 = vcmp.lt.s32.totalorder %v336, 1
        %v3295 = vsel %vm3294, %v3291, %v3293
        %v3296 = vsel %vm3294, %v3293, %v3291
        %v3298 = vlaneseq
        %v3299 = vshrl.u32 %v3298, 7
        %v3300 = vsub.s32 0, %v3299
        %v3301 = vrot.slane %v3289, %v3300
        %v3302 = vlaneseq
        %v3303 = vshrl.u32 %v3302, 7
        %v3304 = vsub.s32 1, %v3303
        %v3305 = vrot.slane %v3289, %v3304
        %v3308 = vmul.f32 %v3296, %v3301
        %v3309 = vmul.f32 %v3295, %v3305
        %3310 = vrot.lane.b32.xlu0 %v326, 1
        %v3311 = vpop.permute.xlu0 %3310
        %3312 = vrot.lane.b32.xlu0 %v354, 1
        %v3313 = vpop.permute.xlu0 %3312
        %v3314 = vsel %vm3294, %v3311, %v3313
        %v3315 = vsel %vm3294, %v3313, %v3311
        %v3316 = vmul.f32 %v3315, %v3301
        %v3317 = vmul.f32 %v3314, %v3305
        %s3318 = scalar_lea.vmem %s1, 12
        %v3319 = vld [vmem:[%s3318] sm:$0xf]
        %v3321 = vsel %vm366, %v3319, 0
        %v3324 = vsel %vm370, %v3308, 0
        %v3327 = vsel %vm370, %v3309, 0
        %v3329 = vand.u32 %v3327, 4294901760
        %3330 = vmatprep.subr.mxu0 %v3329
        %v3331 = vand.u32 %v3324, 4294901760
        %3332 = vmatpush1.msra.mxu0 %v3331
        %3333 = vmatprep.subr.mxu0 0.0
        %3334 = vmatpush1.msra.mxu0 0.0
        %3335 = vmatprep.subr.mxu0 0.0
        %3336 = vmatpush1.msra.mxu0 0.0
        %3337 = vmatprep.subr.mxu0 0.0
        %3338 = vmatpush1.msra.mxu0 0.0
        %3339 = vmatprep.subr.mxu0 0.0
        %3340 = vmatpush1.msra.mxu0 0.0
        %3341 = vmatprep.subr.mxu0 0.0
        %3342 = vmatpush1.msra.mxu0 0.0
        %3343 = vmatprep.subr.mxu0 0.0
        %3344 = vmatpush1.msra.mxu0 0.0
        %3345 = vmatprep.subr.mxu0 0.0
        %3346 = vmatpush1.msra.mxu0 0.0
        %3347 = vmatprep.subr.mxu0 0.0
        %3348 = vmatpush1.msra.mxu0 0.0
        %3349 = vmatprep.subr.mxu0 0.0
        %3350 = vmatpush1.msra.mxu0 0.0
        %3351 = vmatprep.subr.mxu0 0.0
        %3352 = vmatpush1.msra.mxu0 0.0
        %3353 = vmatprep.subr.mxu0 0.0
        %3354 = vmatpush1.msra.mxu0 0.0
        %3355 = vmatprep.subr.mxu0 0.0
        %3356 = vmatpush1.msra.mxu0 0.0
        %3357 = vmatprep.subr.mxu0 0.0
        %3358 = vmatpush1.msra.mxu0 0.0
        %3359 = vmatprep.subr.mxu0 0.0
        %3360 = vmatpush1.msra.mxu0 0.0
        %3361 = vmatprep.subr.mxu0 0.0
        %3362 = vmatpush1.msra.mxu0 0.0
        %3363 = vmatprep.subr.mxu0 0.0
        %3364 = vmatpush1.msra.mxu0 0.0
        %3365 = vmatprep.subr.mxu0 0.0
        %3366 = vmatpush1.msra.mxu0 0.0
        %3367 = vmatprep.subr.mxu0 0.0
        %3368 = vmatpush1.msra.mxu0 0.0
        %3369 = vmatprep.subr.mxu0 0.0
        %3370 = vmatpush1.msra.mxu0 0.0
        %3371 = vmatprep.subr.mxu0 0.0
        %3372 = vmatpush1.msra.mxu0 0.0
        %3373 = vmatprep.subr.mxu0 0.0
        %3374 = vmatpush1.msra.mxu0 0.0
        %3375 = vmatprep.subr.mxu0 0.0
        %3376 = vmatpush1.msra.mxu0 0.0
        %3377 = vmatprep.subr.mxu0 0.0
        %3378 = vmatpush1.msra.mxu0 0.0
        %3379 = vmatprep.subr.mxu0 0.0
        %3380 = vmatpush1.msra.mxu0 0.0
        %3381 = vmatprep.subr.mxu0 0.0
        %3382 = vmatpush1.msra.mxu0 0.0
        %3383 = vmatprep.subr.mxu0 0.0
        %3384 = vmatpush1.msra.mxu0 0.0
        %3385 = vmatprep.subr.mxu0 0.0
        %3386 = vmatpush1.msra.mxu0 0.0
        %3387 = vmatprep.subr.mxu0 0.0
        %3388 = vmatpush1.msra.mxu0 0.0
        %3389 = vmatprep.subr.mxu0 0.0
        %3390 = vmatpush1.msra.mxu0 0.0
        %3391 = vmatprep.subr.mxu0 0.0
        %3392 = vmatpush1.msra.mxu0 0.0
        %3393 = vmatprep.subr.mxu0 0.0
        %3394 = vmatpush1.msra.mxu0 0.0
        %3395 = vmatprep.mubr.f32.mxu0 0.0
        %v3396 = vand.u32 %v3321, 4294901760
        %v3397 = vsub.f32 %v3321, %v3396
        %v3398 = vand.u32 %v3397, 4294901760
        %v3399 = vsub.f32 %v3397, %v3398
        %v3400 = vand.u32 %v3399, 4294901760
        %3401 = vmatmul.mubr.f32.gmra.mrb[0].mxu0 %v3400
        %v3402 = vpop.f32.mrb[0].mxu0
        %v3403 = vadd.f32 0.0, %v3402
        %v3404 = vpop.f32.mrb[0].mxu0
        %v3405 = vadd.f32 0.0, %v3404
        %3406 = vdwg.mxu0
        %v3407 = vand.u32 %v3327, 4294901760
        %v3408 = vsub.f32 %v3327, %v3407
        %v3409 = vand.u32 %v3408, 4294901760
        %v3410 = vsub.f32 %v3408, %v3409
        %v3411 = vand.u32 %v3410, 4294901760
        %3412 = vmatprep.subr.mxu0 %v3411
        %v3413 = vand.u32 %v3324, 4294901760
        %v3414 = vsub.f32 %v3324, %v3413
        %v3415 = vand.u32 %v3414, 4294901760
        %v3416 = vsub.f32 %v3414, %v3415
        %v3417 = vand.u32 %v3416, 4294901760
        %3418 = vmatpush1.msra.mxu0 %v3417
        %3419 = vmatprep.subr.mxu0 0.0
        %3420 = vmatpush1.msra.mxu0 0.0
        %3421 = vmatprep.subr.mxu0 0.0
        %3422 = vmatpush1.msra.mxu0 0.0
        %3423 = vmatprep.subr.mxu0 0.0
        %3424 = vmatpush1.msra.mxu0 0.0
        %3425 = vmatprep.subr.mxu0 0.0
        %3426 = vmatpush1.msra.mxu0 0.0
        %3427 = vmatprep.subr.mxu0 0.0
        %3428 = vmatpush1.msra.mxu0 0.0
        %3429 = vmatprep.subr.mxu0 0.0
        %3430 = vmatpush1.msra.mxu0 0.0
        %3431 = vmatprep.subr.mxu0 0.0
        %3432 = vmatpush1.msra.mxu0 0.0
        %3433 = vmatprep.subr.mxu0 0.0
        %3434 = vmatpush1.msra.mxu0 0.0
        %3435 = vmatprep.subr.mxu0 0.0
        %3436 = vmatpush1.msra.mxu0 0.0
        %3437 = vmatprep.subr.mxu0 0.0
        %3438 = vmatpush1.msra.mxu0 0.0
        %3439 = vmatprep.subr.mxu0 0.0
        %3440 = vmatpush1.msra.mxu0 0.0
        %3441 = vmatprep.subr.mxu0 0.0
        %3442 = vmatpush1.msra.mxu0 0.0
        %3443 = vmatprep.subr.mxu0 0.0
        %3444 = vmatpush1.msra.mxu0 0.0
        %3445 = vmatprep.subr.mxu0 0.0
        %3446 = vmatpush1.msra.mxu0 0.0
        %3447 = vmatprep.subr.mxu0 0.0
        %3448 = vmatpush1.msra.mxu0 0.0
        %3449 = vmatprep.subr.mxu0 0.0
        %3450 = vmatpush1.msra.mxu0 0.0
        %3451 = vmatprep.subr.mxu0 0.0
        %3452 = vmatpush1.msra.mxu0 0.0
        %3453 = vmatprep.subr.mxu0 0.0
        %3454 = vmatpush1.msra.mxu0 0.0
        %3455 = vmatprep.subr.mxu0 0.0
        %3456 = vmatpush1.msra.mxu0 0.0
        %3457 = vmatprep.subr.mxu0 0.0
        %3458 = vmatpush1.msra.mxu0 0.0
        %3459 = vmatprep.subr.mxu0 0.0
        %3460 = vmatpush1.msra.mxu0 0.0
        %3461 = vmatprep.subr.mxu0 0.0
        %3462 = vmatpush1.msra.mxu0 0.0
        %3463 = vmatprep.subr.mxu0 0.0
        %3464 = vmatpush1.msra.mxu0 0.0
        %3465 = vmatprep.subr.mxu0 0.0
        %3466 = vmatpush1.msra.mxu0 0.0
        %3467 = vmatprep.subr.mxu0 0.0
        %3468 = vmatpush1.msra.mxu0 0.0
        %3469 = vmatprep.subr.mxu0 0.0
        %3470 = vmatpush1.msra.mxu0 0.0
        %3471 = vmatprep.subr.mxu0 0.0
        %3472 = vmatpush1.msra.mxu0 0.0
        %3473 = vmatprep.subr.mxu0 0.0
        %3474 = vmatpush1.msra.mxu0 0.0
        %3475 = vmatprep.subr.mxu0 0.0
        %3476 = vmatpush1.msra.mxu0 0.0
        %3477 = vmatprep.subr.mxu0 0.0
        %3478 = vmatpush1.msra.mxu0 0.0
        %3479 = vmatprep.subr.mxu0 0.0
        %3480 = vmatpush1.msra.mxu0 0.0
        %3481 = vmatprep.mubr.f32.mxu0 0.0
        %v3482 = vand.u32 %v3321, 4294901760
        %3483 = vmatmul.mubr.f32.gmra.mrb[0].mxu0 %v3482
        %v3484 = vpop.f32.mrb[0].mxu0
        %v3485 = vadd.f32 %v3403, %v3484
        %v3486 = vpop.f32.mrb[0].mxu0
        %v3487 = vadd.f32 %v3405, %v3486
        %3488 = vdwg.mxu0
        %v3489 = vand.u32 %v3327, 4294901760
        %v3490 = vsub.f32 %v3327, %v3489
        %3491 = vmatprep.subr.mxu0 %v3490
        %v3492 = vand.u32 %v3324, 4294901760
        %v3493 = vsub.f32 %v3324, %v3492
        %3494 = vmatpush1.msra.mxu0 %v3493
        %3495 = vmatprep.subr.mxu0 0.0
        %3496 = vmatpush1.msra.mxu0 0.0
        %3497 = vmatprep.subr.mxu0 0.0
        %3498 = vmatpush1.msra.mxu0 0.0
        %3499 = vmatprep.subr.mxu0 0.0
        %3500 = vmatpush1.msra.mxu0 0.0
        %3501 = vmatprep.subr.mxu0 0.0
        %3502 = vmatpush1.msra.mxu0 0.0
        %3503 = vmatprep.subr.mxu0 0.0
        %3504 = vmatpush1.msra.mxu0 0.0
        %3505 = vmatprep.subr.mxu0 0.0
        %3506 = vmatpush1.msra.mxu0 0.0
        %3507 = vmatprep.subr.mxu0 0.0
        %3508 = vmatpush1.msra.mxu0 0.0
        %3509 = vmatprep.subr.mxu0 0.0
        %3510 = vmatpush1.msra.mxu0 0.0
        %3511 = vmatprep.subr.mxu0 0.0
        %3512 = vmatpush1.msra.mxu0 0.0
        %3513 = vmatprep.subr.mxu0 0.0
        %3514 = vmatpush1.msra.mxu0 0.0
        %3515 = vmatprep.subr.mxu0 0.0
        %3516 = vmatpush1.msra.mxu0 0.0
        %3517 = vmatprep.subr.mxu0 0.0
        %3518 = vmatpush1.msra.mxu0 0.0
        %3519 = vmatprep.subr.mxu0 0.0
        %3520 = vmatpush1.msra.mxu0 0.0
        %3521 = vmatprep.subr.mxu0 0.0
        %3522 = vmatpush1.msra.mxu0 0.0
        %3523 = vmatprep.subr.mxu0 0.0
        %3524 = vmatpush1.msra.mxu0 0.0
        %3525 = vmatprep.subr.mxu0 0.0
        %3526 = vmatpush1.msra.mxu0 0.0
        %3527 = vmatprep.subr.mxu0 0.0
        %3528 = vmatpush1.msra.mxu0 0.0
        %3529 = vmatprep.subr.mxu0 0.0
        %3530 = vmatpush1.msra.mxu0 0.0
        %3531 = vmatprep.subr.mxu0 0.0
        %3532 = vmatpush1.msra.mxu0 0.0
        %3533 = vmatprep.subr.mxu0 0.0
        %3534 = vmatpush1.msra.mxu0 0.0
        %3535 = vmatprep.subr.mxu0 0.0
        %3536 = vmatpush1.msra.mxu0 0.0
        %3537 = vmatprep.subr.mxu0 0.0
        %3538 = vmatpush1.msra.mxu0 0.0
        %3539 = vmatprep.subr.mxu0 0.0
        %3540 = vmatpush1.msra.mxu0 0.0
        %3541 = vmatprep.subr.mxu0 0.0
        %3542 = vmatpush1.msra.mxu0 0.0
        %3543 = vmatprep.subr.mxu0 0.0
        %3544 = vmatpush1.msra.mxu0 0.0
        %3545 = vmatprep.subr.mxu0 0.0
        %3546 = vmatpush1.msra.mxu0 0.0
        %3547 = vmatprep.subr.mxu0 0.0
        %3548 = vmatpush1.msra.mxu0 0.0
        %3549 = vmatprep.subr.mxu0 0.0
        %3550 = vmatpush1.msra.mxu0 0.0
        %3551 = vmatprep.subr.mxu0 0.0
        %3552 = vmatpush1.msra.mxu0 0.0
        %3553 = vmatprep.subr.mxu0 0.0
        %3554 = vmatpush1.msra.mxu0 0.0
        %3555 = vmatprep.subr.mxu0 0.0
        %3556 = vmatpush1.msra.mxu0 0.0
        %3557 = vmatprep.mubr.f32.mxu0 0.0
        %v3558 = vand.u32 %v3321, 4294901760
        %v3559 = vsub.f32 %v3321, %v3558
        %3560 = vmatmul.mubr.f32.gmra.mrb[0].mxu0 %v3559
        %v3561 = vpop.f32.mrb[0].mxu0
        %v3562 = vadd.f32 %v3485, %v3561
        %v3563 = vpop.f32.mrb[0].mxu0
        %v3564 = vadd.f32 %v3487, %v3563
        %3565 = vdwg.mxu0
        %v3566 = vand.u32 %v3327, 4294901760
        %3567 = vmatprep.subr.mxu0 %v3566
        %v3568 = vand.u32 %v3324, 4294901760
        %3569 = vmatpush1.msra.mxu0 %v3568
        %3570 = vmatprep.subr.mxu0 0.0
        %3571 = vmatpush1.msra.mxu0 0.0
        %3572 = vmatprep.subr.mxu0 0.0
        %3573 = vmatpush1.msra.mxu0 0.0
        %3574 = vmatprep.subr.mxu0 0.0
        %3575 = vmatpush1.msra.mxu0 0.0
        %3576 = vmatprep.subr.mxu0 0.0
        %3577 = vmatpush1.msra.mxu0 0.0
        %3578 = vmatprep.subr.mxu0 0.0
        %3579 = vmatpush1.msra.mxu0 0.0
        %3580 = vmatprep.subr.mxu0 0.0
        %3581 = vmatpush1.msra.mxu0 0.0
        %3582 = vmatprep.subr.mxu0 0.0
        %3583 = vmatpush1.msra.mxu0 0.0
        %3584 = vmatprep.subr.mxu0 0.0
        %3585 = vmatpush1.msra.mxu0 0.0
        %3586 = vmatprep.subr.mxu0 0.0
        %3587 = vmatpush1.msra.mxu0 0.0
        %3588 = vmatprep.subr.mxu0 0.0
        %3589 = vmatpush1.msra.mxu0 0.0
        %3590 = vmatprep.subr.mxu0 0.0
        %3591 = vmatpush1.msra.mxu0 0.0
        %3592 = vmatprep.subr.mxu0 0.0
        %3593 = vmatpush1.msra.mxu0 0.0
        %3594 = vmatprep.subr.mxu0 0.0
        %3595 = vmatpush1.msra.mxu0 0.0
        %3596 = vmatprep.subr.mxu0 0.0
        %3597 = vmatpush1.msra.mxu0 0.0
        %3598 = vmatprep.subr.mxu0 0.0
        %3599 = vmatpush1.msra.mxu0 0.0
        %3600 = vmatprep.subr.mxu0 0.0
        %3601 = vmatpush1.msra.mxu0 0.0
        %3602 = vmatprep.subr.mxu0 0.0
        %3603 = vmatpush1.msra.mxu0 0.0
        %3604 = vmatprep.subr.mxu0 0.0
        %3605 = vmatpush1.msra.mxu0 0.0
        %3606 = vmatprep.subr.mxu0 0.0
        %3607 = vmatpush1.msra.mxu0 0.0
        %3608 = vmatprep.subr.mxu0 0.0
        %3609 = vmatpush1.msra.mxu0 0.0
        %3610 = vmatprep.subr.mxu0 0.0
        %3611 = vmatpush1.msra.mxu0 0.0
        %3612 = vmatprep.subr.mxu0 0.0
        %3613 = vmatpush1.msra.mxu0 0.0
        %3614 = vmatprep.subr.mxu0 0.0
        %3615 = vmatpush1.msra.mxu0 0.0
        %3616 = vmatprep.subr.mxu0 0.0
        %3617 = vmatpush1.msra.mxu0 0.0
        %3618 = vmatprep.subr.mxu0 0.0
        %3619 = vmatpush1.msra.mxu0 0.0
        %3620 = vmatprep.subr.mxu0 0.0
        %3621 = vmatpush1.msra.mxu0 0.0
        %3622 = vmatprep.subr.mxu0 0.0
        %3623 = vmatpush1.msra.mxu0 0.0
        %3624 = vmatprep.subr.mxu0 0.0
        %3625 = vmatpush1.msra.mxu0 0.0
        %3626 = vmatprep.subr.mxu0 0.0
        %3627 = vmatpush1.msra.mxu0 0.0
        %3628 = vmatprep.subr.mxu0 0.0
        %3629 = vmatpush1.msra.mxu0 0.0
        %3630 = vmatprep.subr.mxu0 0.0
        %3631 = vmatpush1.msra.mxu0 0.0
        %3632 = vmatprep.mubr.f32.mxu0 0.0
        %v3633 = vand.u32 %v3321, 4294901760
        %v3634 = vsub.f32 %v3321, %v3633
        %v3635 = vand.u32 %v3634, 4294901760
        %3636 = vmatmul.mubr.f32.gmra.mrb[0].mxu0 %v3635
        %v3637 = vpop.f32.mrb[0].mxu0
        %v3638 = vadd.f32 %v3562, %v3637
        %v3639 = vpop.f32.mrb[0].mxu0
        %v3640 = vadd.f32 %v3564, %v3639
        %3641 = vdwg.mxu0
        %v3642 = vand.u32 %v3327, 4294901760
        %v3643 = vsub.f32 %v3327, %v3642
        %v3644 = vand.u32 %v3643, 4294901760
        %3645 = vmatprep.subr.mxu0 %v3644
        %v3646 = vand.u32 %v3324, 4294901760
        %v3647 = vsub.f32 %v3324, %v3646
        %v3648 = vand.u32 %v3647, 4294901760
        %3649 = vmatpush1.msra.mxu0 %v3648
        %3650 = vmatprep.subr.mxu0 0.0
        %3651 = vmatpush1.msra.mxu0 0.0
        %3652 = vmatprep.subr.mxu0 0.0
        %3653 = vmatpush1.msra.mxu0 0.0
        %3654 = vmatprep.subr.mxu0 0.0
        %3655 = vmatpush1.msra.mxu0 0.0
        %3656 = vmatprep.subr.mxu0 0.0
        %3657 = vmatpush1.msra.mxu0 0.0
        %3658 = vmatprep.subr.mxu0 0.0
        %3659 = vmatpush1.msra.mxu0 0.0
        %3660 = vmatprep.subr.mxu0 0.0
        %3661 = vmatpush1.msra.mxu0 0.0
        %3662 = vmatprep.subr.mxu0 0.0
        %3663 = vmatpush1.msra.mxu0 0.0
        %3664 = vmatprep.subr.mxu0 0.0
        %3665 = vmatpush1.msra.mxu0 0.0
        %3666 = vmatprep.subr.mxu0 0.0
        %3667 = vmatpush1.msra.mxu0 0.0
        %3668 = vmatprep.subr.mxu0 0.0
        %3669 = vmatpush1.msra.mxu0 0.0
        %3670 = vmatprep.subr.mxu0 0.0
        %3671 = vmatpush1.msra.mxu0 0.0
        %3672 = vmatprep.subr.mxu0 0.0
        %3673 = vmatpush1.msra.mxu0 0.0
        %3674 = vmatprep.subr.mxu0 0.0
        %3675 = vmatpush1.msra.mxu0 0.0
        %3676 = vmatprep.subr.mxu0 0.0
        %3677 = vmatpush1.msra.mxu0 0.0
        %3678 = vmatprep.subr.mxu0 0.0
        %3679 = vmatpush1.msra.mxu0 0.0
        %3680 = vmatprep.subr.mxu0 0.0
        %3681 = vmatpush1.msra.mxu0 0.0
        %3682 = vmatprep.subr.mxu0 0.0
        %3683 = vmatpush1.msra.mxu0 0.0
        %3684 = vmatprep.subr.mxu0 0.0
        %3685 = vmatpush1.msra.mxu0 0.0
        %3686 = vmatprep.subr.mxu0 0.0
        %3687 = vmatpush1.msra.mxu0 0.0
        %3688 = vmatprep.subr.mxu0 0.0
        %3689 = vmatpush1.msra.mxu0 0.0
        %3690 = vmatprep.subr.mxu0 0.0
        %3691 = vmatpush1.msra.mxu0 0.0
        %3692 = vmatprep.subr.mxu0 0.0
        %3693 = vmatpush1.msra.mxu0 0.0
        %3694 = vmatprep.subr.mxu0 0.0
        %3695 = vmatpush1.msra.mxu0 0.0
        %3696 = vmatprep.subr.mxu0 0.0
        %3697 = vmatpush1.msra.mxu0 0.0
        %3698 = vmatprep.subr.mxu0 0.0
        %3699 = vmatpush1.msra.mxu0 0.0
        %3700 = vmatprep.subr.mxu0 0.0
        %3701 = vmatpush1.msra.mxu0 0.0
        %3702 = vmatprep.subr.mxu0 0.0
        %3703 = vmatpush1.msra.mxu0 0.0
        %3704 = vmatprep.subr.mxu0 0.0
        %3705 = vmatpush1.msra.mxu0 0.0
        %3706 = vmatprep.subr.mxu0 0.0
        %3707 = vmatpush1.msra.mxu0 0.0
        %3708 = vmatprep.subr.mxu0 0.0
        %3709 = vmatpush1.msra.mxu0 0.0
        %3710 = vmatprep.subr.mxu0 0.0
        %3711 = vmatpush1.msra.mxu0 0.0
        %3712 = vmatprep.mubr.f32.mxu0 0.0
        %v3713 = vand.u32 %v3321, 4294901760
        %3714 = vmatmul.mubr.f32.gmra.mrb[0].mxu0 %v3713
        %v3715 = vpop.f32.mrb[0].mxu0
        %v3716 = vadd.f32 %v3638, %v3715
        %v3717 = vpop.f32.mrb[0].mxu0
        %v3718 = vadd.f32 %v3640, %v3717
        %3719 = vdwg.mxu0
        %v3720 = vand.u32 %v3327, 4294901760
        %3721 = vmatprep.subr.mxu0 %v3720
        %v3722 = vand.u32 %v3324, 4294901760
        %3723 = vmatpush1.msra.mxu0 %v3722
        %3724 = vmatprep.subr.mxu0 0.0
        %3725 = vmatpush1.msra.mxu0 0.0
        %3726 = vmatprep.subr.mxu0 0.0
        %3727 = vmatpush1.msra.mxu0 0.0
        %3728 = vmatprep.subr.mxu0 0.0
        %3729 = vmatpush1.msra.mxu0 0.0
        %3730 = vmatprep.subr.mxu0 0.0
        %3731 = vmatpush1.msra.mxu0 0.0
        %3732 = vmatprep.subr.mxu0 0.0
        %3733 = vmatpush1.msra.mxu0 0.0
        %3734 = vmatprep.subr.mxu0 0.0
        %3735 = vmatpush1.msra.mxu0 0.0
        %3736 = vmatprep.subr.mxu0 0.0
        %3737 = vmatpush1.msra.mxu0 0.0
        %3738 = vmatprep.subr.mxu0 0.0
        %3739 = vmatpush1.msra.mxu0 0.0
        %3740 = vmatprep.subr.mxu0 0.0
        %3741 = vmatpush1.msra.mxu0 0.0
        %3742 = vmatprep.subr.mxu0 0.0
        %3743 = vmatpush1.msra.mxu0 0.0
        %3744 = vmatprep.subr.mxu0 0.0
        %3745 = vmatpush1.msra.mxu0 0.0
        %3746 = vmatprep.subr.mxu0 0.0
        %3747 = vmatpush1.msra.mxu0 0.0
        %3748 = vmatprep.subr.mxu0 0.0
        %3749 = vmatpush1.msra.mxu0 0.0
        %3750 = vmatprep.subr.mxu0 0.0
        %3751 = vmatpush1.msra.mxu0 0.0
        %3752 = vmatprep.subr.mxu0 0.0
        %3753 = vmatpush1.msra.mxu0 0.0
        %3754 = vmatprep.subr.mxu0 0.0
        %3755 = vmatpush1.msra.mxu0 0.0
        %3756 = vmatprep.subr.mxu0 0.0
        %3757 = vmatpush1.msra.mxu0 0.0
        %3758 = vmatprep.subr.mxu0 0.0
        %3759 = vmatpush1.msra.mxu0 0.0
        %3760 = vmatprep.subr.mxu0 0.0
        %3761 = vmatpush1.msra.mxu0 0.0
        %3762 = vmatprep.subr.mxu0 0.0
        %3763 = vmatpush1.msra.mxu0 0.0
        %3764 = vmatprep.subr.mxu0 0.0
        %3765 = vmatpush1.msra.mxu0 0.0
        %3766 = vmatprep.subr.mxu0 0.0
        %3767 = vmatpush1.msra.mxu0 0.0
        %3768 = vmatprep.subr.mxu0 0.0
        %3769 = vmatpush1.msra.mxu0 0.0
        %3770 = vmatprep.subr.mxu0 0.0
        %3771 = vmatpush1.msra.mxu0 0.0
        %3772 = vmatprep.subr.mxu0 0.0
        %3773 = vmatpush1.msra.mxu0 0.0
        %3774 = vmatprep.subr.mxu0 0.0
        %3775 = vmatpush1.msra.mxu0 0.0
        %3776 = vmatprep.subr.mxu0 0.0
        %3777 = vmatpush1.msra.mxu0 0.0
        %3778 = vmatprep.subr.mxu0 0.0
        %3779 = vmatpush1.msra.mxu0 0.0
        %3780 = vmatprep.subr.mxu0 0.0
        %3781 = vmatpush1.msra.mxu0 0.0
        %3782 = vmatprep.subr.mxu0 0.0
        %3783 = vmatpush1.msra.mxu0 0.0
        %3784 = vmatprep.subr.mxu0 0.0
        %3785 = vmatpush1.msra.mxu0 0.0
        %3786 = vmatprep.mubr.f32.mxu0 0.0
        %v3787 = vand.u32 %v3321, 4294901760
        %3788 = vmatmul.mubr.f32.gmra.mrb[0].mxu0 %v3787
        %v3789 = vpop.f32.mrb[0].mxu0
        %v3790 = vadd.f32 %v3716, %v3789
        %v3791 = vpop.f32.mrb[0].mxu0
        %v3792 = vadd.f32 %v3718, %v3791
        %3793 = vdwg.mxu0
        %v3794 = vadd.f32 %v3286, %v3790
        %v3795 = vadd.f32 %v3287, %v3792
        %s3796 = scalar_lea.vmem %s2, 12
        %v3797 = vld [vmem:[%s3796] sm:$0xf]
        %v3799 = vsel %vm366, %v3797, 0
        %v3802 = vsel %vm370, %v3316, 0
        %v3805 = vsel %vm370, %v3317, 0
        %v3807 = vand.u32 %v3805, 4294901760
        %3808 = vmatprep.subr.mxu0 %v3807
        %v3809 = vand.u32 %v3802, 4294901760
        %3810 = vmatpush1.msra.mxu0 %v3809
        %3811 = vmatprep.subr.mxu0 0.0
        %3812 = vmatpush1.msra.mxu0 0.0
        %3813 = vmatprep.subr.mxu0 0.0
        %3814 = vmatpush1.msra.mxu0 0.0
        %3815 = vmatprep.subr.mxu0 0.0
        %3816 = vmatpush1.msra.mxu0 0.0
        %3817 = vmatprep.subr.mxu0 0.0
        %3818 = vmatpush1.msra.mxu0 0.0
        %3819 = vmatprep.subr.mxu0 0.0
        %3820 = vmatpush1.msra.mxu0 0.0
        %3821 = vmatprep.subr.mxu0 0.0
        %3822 = vmatpush1.msra.mxu0 0.0
        %3823 = vmatprep.subr.mxu0 0.0
        %3824 = vmatpush1.msra.mxu0 0.0
        %3825 = vmatprep.subr.mxu0 0.0
        %3826 = vmatpush1.msra.mxu0 0.0
        %3827 = vmatprep.subr.mxu0 0.0
        %3828 = vmatpush1.msra.mxu0 0.0
        %3829 = vmatprep.subr.mxu0 0.0
        %3830 = vmatpush1.msra.mxu0 0.0
        %3831 = vmatprep.subr.mxu0 0.0
        %3832 = vmatpush1.msra.mxu0 0.0
        %3833 = vmatprep.subr.mxu0 0.0
        %3834 = vmatpush1.msra.mxu0 0.0
        %3835 = vmatprep.subr.mxu0 0.0
        %3836 = vmatpush1.msra.mxu0 0.0
        %3837 = vmatprep.subr.mxu0 0.0
        %3838 = vmatpush1.msra.mxu0 0.0
        %3839 = vmatprep.subr.mxu0 0.0
        %3840 = vmatpush1.msra.mxu0 0.0
        %3841 = vmatprep.subr.mxu0 0.0
        %3842 = vmatpush1.msra.mxu0 0.0
        %3843 = vmatprep.subr.mxu0 0.0
        %3844 = vmatpush1.msra.mxu0 0.0
        %3845 = vmatprep.subr.mxu0 0.0
        %3846 = vmatpush1.msra.mxu0 0.0
        %3847 = vmatprep.subr.mxu0 0.0
        %3848 = vmatpush1.msra.mxu0 0.0
        %3849 = vmatprep.subr.mxu0 0.0
        %3850 = vmatpush1.msra.mxu0 0.0
        %3851 = vmatprep.subr.mxu0 0.0
        %3852 = vmatpush1.msra.mxu0 0.0
        %3853 = vmatprep.subr.mxu0 0.0
        %3854 = vmatpush1.msra.mxu0 0.0
        %3855 = vmatprep.subr.mxu0 0.0
        %3856 = vmatpush1.msra.mxu0 0.0
        %3857 = vmatprep.subr.mxu0 0.0
        %3858 = vmatpush1.msra.mxu0 0.0
        %3859 = vmatprep.subr.mxu0 0.0
        %3860 = vmatpush1.msra.mxu0 0.0
        %3861 = vmatprep.subr.mxu0 0.0
        %3862 = vmatpush1.msra.mxu0 0.0
        %3863 = vmatprep.subr.mxu0 0.0
        %3864 = vmatpush1.msra.mxu0 0.0
        %3865 = vmatprep.subr.mxu0 0.0
        %3866 = vmatpush1.msra.mxu0 0.0
        %3867 = vmatprep.subr.mxu0 0.0
        %3868 = vmatpush1.msra.mxu0 0.0
        %3869 = vmatprep.subr.mxu0 0.0
        %3870 = vmatpush1.msra.mxu0 0.0
        %3871 = vmatprep.subr.mxu0 0.0
        %3872 = vmatpush1.msra.mxu0 0.0
        %3873 = vmatprep.mubr.f32.mxu0 0.0
        %v3874 = vand.u32 %v3799, 4294901760
        %v3875 = vsub.f32 %v3799, %v3874
        %v3876 = vand.u32 %v3875, 4294901760
        %v3877 = vsub.f32 %v3875, %v3876
        %v3878 = vand.u32 %v3877, 4294901760
        %3879 = vmatmul.mubr.f32.gmra.mrb[0].mxu0 %v3878
        %v3880 = vpop.f32.mrb[0].mxu0
        %v3881 = vadd.f32 0.0, %v3880
        %v3882 = vpop.f32.mrb[0].mxu0
        %v3883 = vadd.f32 0.0, %v3882
        %3884 = vdwg.mxu0
        %v3885 = vand.u32 %v3805, 4294901760
        %v3886 = vsub.f32 %v3805, %v3885
        %v3887 = vand.u32 %v3886, 4294901760
        %v3888 = vsub.f32 %v3886, %v3887
        %v3889 = vand.u32 %v3888, 4294901760
        %3890 = vmatprep.subr.mxu0 %v3889
        %v3891 = vand.u32 %v3802, 4294901760
        %v3892 = vsub.f32 %v3802, %v3891
        %v3893 = vand.u32 %v3892, 4294901760
        %v3894 = vsub.f32 %v3892, %v3893
        %v3895 = vand.u32 %v3894, 4294901760
        %3896 = vmatpush1.msra.mxu0 %v3895
        %3897 = vmatprep.subr.mxu0 0.0
        %3898 = vmatpush1.msra.mxu0 0.0
        %3899 = vmatprep.subr.mxu0 0.0
        %3900 = vmatpush1.msra.mxu0 0.0
        %3901 = vmatprep.subr.mxu0 0.0
        %3902 = vmatpush1.msra.mxu0 0.0
        %3903 = vmatprep.subr.mxu0 0.0
        %3904 = vmatpush1.msra.mxu0 0.0
        %3905 = vmatprep.subr.mxu0 0.0
        %3906 = vmatpush1.msra.mxu0 0.0
        %3907 = vmatprep.subr.mxu0 0.0
        %3908 = vmatpush1.msra.mxu0 0.0
        %3909 = vmatprep.subr.mxu0 0.0
        %3910 = vmatpush1.msra.mxu0 0.0
        %3911 = vmatprep.subr.mxu0 0.0
        %3912 = vmatpush1.msra.mxu0 0.0
        %3913 = vmatprep.subr.mxu0 0.0
        %3914 = vmatpush1.msra.mxu0 0.0
        %3915 = vmatprep.subr.mxu0 0.0
        %3916 = vmatpush1.msra.mxu0 0.0
        %3917 = vmatprep.subr.mxu0 0.0
        %3918 = vmatpush1.msra.mxu0 0.0
        %3919 = vmatprep.subr.mxu0 0.0
        %3920 = vmatpush1.msra.mxu0 0.0
        %3921 = vmatprep.subr.mxu0 0.0
        %3922 = vmatpush1.msra.mxu0 0.0
        %3923 = vmatprep.subr.mxu0 0.0
        %3924 = vmatpush1.msra.mxu0 0.0
        %3925 = vmatprep.subr.mxu0 0.0
        %3926 = vmatpush1.msra.mxu0 0.0
        %3927 = vmatprep.subr.mxu0 0.0
        %3928 = vmatpush1.msra.mxu0 0.0
        %3929 = vmatprep.subr.mxu0 0.0
        %3930 = vmatpush1.msra.mxu0 0.0
        %3931 = vmatprep.subr.mxu0 0.0
        %3932 = vmatpush1.msra.mxu0 0.0
        %3933 = vmatprep.subr.mxu0 0.0
        %3934 = vmatpush1.msra.mxu0 0.0
        %3935 = vmatprep.subr.mxu0 0.0
        %3936 = vmatpush1.msra.mxu0 0.0
        %3937 = vmatprep.subr.mxu0 0.0
        %3938 = vmatpush1.msra.mxu0 0.0
        %3939 = vmatprep.subr.mxu0 0.0
        %3940 = vmatpush1.msra.mxu0 0.0
        %3941 = vmatprep.subr.mxu0 0.0
        %3942 = vmatpush1.msra.mxu0 0.0
        %3943 = vmatprep.subr.mxu0 0.0
        %3944 = vmatpush1.msra.mxu0 0.0
        %3945 = vmatprep.subr.mxu0 0.0
        %3946 = vmatpush1.msra.mxu0 0.0
        %3947 = vmatprep.subr.mxu0 0.0
        %3948 = vmatpush1.msra.mxu0 0.0
        %3949 = vmatprep.subr.mxu0 0.0
        %3950 = vmatpush1.msra.mxu0 0.0
        %3951 = vmatprep.subr.mxu0 0.0
        %3952 = vmatpush1.msra.mxu0 0.0
        %3953 = vmatprep.subr.mxu0 0.0
        %3954 = vmatpush1.msra.mxu0 0.0
        %3955 = vmatprep.subr.mxu0 0.0
        %3956 = vmatpush1.msra.mxu0 0.0
        %3957 = vmatprep.subr.mxu0 0.0
        %3958 = vmatpush1.msra.mxu0 0.0
        %3959 = vmatprep.mubr.f32.mxu0 0.0
        %v3960 = vand.u32 %v3799, 4294901760
        %3961 = vmatmul.mubr.f32.gmra.mrb[0].mxu0 %v3960
        %v3962 = vpop.f32.mrb[0].mxu0
        %v3963 = vadd.f32 %v3881, %v3962
        %v3964 = vpop.f32.mrb[0].mxu0
        %v3965 = vadd.f32 %v3883, %v3964
        %3966 = vdwg.mxu0
        %v3967 = vand.u32 %v3805, 4294901760
        %v3968 = vsub.f32 %v3805, %v3967
        %3969 = vmatprep.subr.mxu0 %v3968
        %v3970 = vand.u32 %v3802, 4294901760
        %v3971 = vsub.f32 %v3802, %v3970
        %3972 = vmatpush1.msra.mxu0 %v3971
        %3973 = vmatprep.subr.mxu0 0.0
        %3974 = vmatpush1.msra.mxu0 0.0
        %3975 = vmatprep.subr.mxu0 0.0
        %3976 = vmatpush1.msra.mxu0 0.0
        %3977 = vmatprep.subr.mxu0 0.0
        %3978 = vmatpush1.msra.mxu0 0.0
        %3979 = vmatprep.subr.mxu0 0.0
        %3980 = vmatpush1.msra.mxu0 0.0
        %3981 = vmatprep.subr.mxu0 0.0
        %3982 = vmatpush1.msra.mxu0 0.0
        %3983 = vmatprep.subr.mxu0 0.0
        %3984 = vmatpush1.msra.mxu0 0.0
        %3985 = vmatprep.subr.mxu0 0.0
        %3986 = vmatpush1.msra.mxu0 0.0
        %3987 = vmatprep.subr.mxu0 0.0
        %3988 = vmatpush1.msra.mxu0 0.0
        %3989 = vmatprep.subr.mxu0 0.0
        %3990 = vmatpush1.msra.mxu0 0.0
        %3991 = vmatprep.subr.mxu0 0.0
        %3992 = vmatpush1.msra.mxu0 0.0
        %3993 = vmatprep.subr.mxu0 0.0
        %3994 = vmatpush1.msra.mxu0 0.0
        %3995 = vmatprep.subr.mxu0 0.0
        %3996 = vmatpush1.msra.mxu0 0.0
        %3997 = vmatprep.subr.mxu0 0.0
        %3998 = vmatpush1.msra.mxu0 0.0
        %3999 = vmatprep.subr.mxu0 0.0
        %4000 = vmatpush1.msra.mxu0 0.0
        %4001 = vmatprep.subr.mxu0 0.0
        %4002 = vmatpush1.msra.mxu0 0.0
        %4003 = vmatprep.subr.mxu0 0.0
        %4004 = vmatpush1.msra.mxu0 0.0
        %4005 = vmatprep.subr.mxu0 0.0
        %4006 = vmatpush1.msra.mxu0 0.0
        %4007 = vmatprep.subr.mxu0 0.0
        %4008 = vmatpush1.msra.mxu0 0.0
        %4009 = vmatprep.subr.mxu0 0.0
        %4010 = vmatpush1.msra.mxu0 0.0
        %4011 = vmatprep.subr.mxu0 0.0
        %4012 = vmatpush1.msra.mxu0 0.0
        %4013 = vmatprep.subr.mxu0 0.0
        %4014 = vmatpush1.msra.mxu0 0.0
        %4015 = vmatprep.subr.mxu0 0.0
        %4016 = vmatpush1.msra.mxu0 0.0
        %4017 = vmatprep.subr.mxu0 0.0
        %4018 = vmatpush1.msra.mxu0 0.0
        %4019 = vmatprep.subr.mxu0 0.0
        %4020 = vmatpush1.msra.mxu0 0.0
        %4021 = vmatprep.subr.mxu0 0.0
        %4022 = vmatpush1.msra.mxu0 0.0
        %4023 = vmatprep.subr.mxu0 0.0
        %4024 = vmatpush1.msra.mxu0 0.0
        %4025 = vmatprep.subr.mxu0 0.0
        %4026 = vmatpush1.msra.mxu0 0.0
        %4027 = vmatprep.subr.mxu0 0.0
        %4028 = vmatpush1.msra.mxu0 0.0
        %4029 = vmatprep.subr.mxu0 0.0
        %4030 = vmatpush1.msra.mxu0 0.0
        %4031 = vmatprep.subr.mxu0 0.0
        %4032 = vmatpush1.msra.mxu0 0.0
        %4033 = vmatprep.subr.mxu0 0.0
        %4034 = vmatpush1.msra.mxu0 0.0
        %4035 = vmatprep.mubr.f32.mxu0 0.0
        %v4036 = vand.u32 %v3799, 4294901760
        %v4037 = vsub.f32 %v3799, %v4036
        %4038 = vmatmul.mubr.f32.gmra.mrb[0].mxu0 %v4037
        %v4039 = vpop.f32.mrb[0].mxu0
        %v4040 = vadd.f32 %v3963, %v4039
        %v4041 = vpop.f32.mrb[0].mxu0
        %v4042 = vadd.f32 %v3965, %v4041
        %4043 = vdwg.mxu0
        %v4044 = vand.u32 %v3805, 4294901760
        %4045 = vmatprep.subr.mxu0 %v4044
        %v4046 = vand.u32 %v3802, 4294901760
        %4047 = vmatpush1.msra.mxu0 %v4046
        %4048 = vmatprep.subr.mxu0 0.0
        %4049 = vmatpush1.msra.mxu0 0.0
        %4050 = vmatprep.subr.mxu0 0.0
        %4051 = vmatpush1.msra.mxu0 0.0
        %4052 = vmatprep.subr.mxu0 0.0
        %4053 = vmatpush1.msra.mxu0 0.0
        %4054 = vmatprep.subr.mxu0 0.0
        %4055 = vmatpush1.msra.mxu0 0.0
        %4056 = vmatprep.subr.mxu0 0.0
        %4057 = vmatpush1.msra.mxu0 0.0
        %4058 = vmatprep.subr.mxu0 0.0
        %4059 = vmatpush1.msra.mxu0 0.0
        %4060 = vmatprep.subr.mxu0 0.0
        %4061 = vmatpush1.msra.mxu0 0.0
        %4062 = vmatprep.subr.mxu0 0.0
        %4063 = vmatpush1.msra.mxu0 0.0
        %4064 = vmatprep.subr.mxu0 0.0
        %4065 = vmatpush1.msra.mxu0 0.0
        %4066 = vmatprep.subr.mxu0 0.0
        %4067 = vmatpush1.msra.mxu0 0.0
        %4068 = vmatprep.subr.mxu0 0.0
        %4069 = vmatpush1.msra.mxu0 0.0
        %4070 = vmatprep.subr.mxu0 0.0
        %4071 = vmatpush1.msra.mxu0 0.0
        %4072 = vmatprep.subr.mxu0 0.0
        %4073 = vmatpush1.msra.mxu0 0.0
        %4074 = vmatprep.subr.mxu0 0.0
        %4075 = vmatpush1.msra.mxu0 0.0
        %4076 = vmatprep.subr.mxu0 0.0
        %4077 = vmatpush1.msra.mxu0 0.0
        %4078 = vmatprep.subr.mxu0 0.0
        %4079 = vmatpush1.msra.mxu0 0.0
        %4080 = vmatprep.subr.mxu0 0.0
        %4081 = vmatpush1.msra.mxu0 0.0
        %4082 = vmatprep.subr.mxu0 0.0
        %4083 = vmatpush1.msra.mxu0 0.0
        %4084 = vmatprep.subr.mxu0 0.0
        %4085 = vmatpush1.msra.mxu0 0.0
        %4086 = vmatprep.subr.mxu0 0.0
        %4087 = vmatpush1.msra.mxu0 0.0
        %4088 = vmatprep.subr.mxu0 0.0
        %4089 = vmatpush1.msra.mxu0 0.0
        %4090 = vmatprep.subr.mxu0 0.0
        %4091 = vmatpush1.msra.mxu0 0.0
        %4092 = vmatprep.subr.mxu0 0.0
        %4093 = vmatpush1.msra.mxu0 0.0
        %4094 = vmatprep.subr.mxu0 0.0
        %4095 = vmatpush1.msra.mxu0 0.0
        %4096 = vmatprep.subr.mxu0 0.0
        %4097 = vmatpush1.msra.mxu0 0.0
        %4098 = vmatprep.subr.mxu0 0.0
        %4099 = vmatpush1.msra.mxu0 0.0
        %4100 = vmatprep.subr.mxu0 0.0
        %4101 = vmatpush1.msra.mxu0 0.0
        %4102 = vmatprep.subr.mxu0 0.0
        %4103 = vmatpush1.msra.mxu0 0.0
        %4104 = vmatprep.subr.mxu0 0.0
        %4105 = vmatpush1.msra.mxu0 0.0
        %4106 = vmatprep.subr.mxu0 0.0
        %4107 = vmatpush1.msra.mxu0 0.0
        %4108 = vmatprep.subr.mxu0 0.0
        %4109 = vmatpush1.msra.mxu0 0.0
        %4110 = vmatprep.mubr.f32.mxu0 0.0
        %v4111 = vand.u32 %v3799, 4294901760
        %v4112 = vsub.f32 %v3799, %v4111
        %v4113 = vand.u32 %v4112, 4294901760
        %4114 = vmatmul.mubr.f32.gmra.mrb[0].mxu0 %v4113
        %v4115 = vpop.f32.mrb[0].mxu0
        %v4116 = vadd.f32 %v4040, %v4115
        %v4117 = vpop.f32.mrb[0].mxu0
        %v4118 = vadd.f32 %v4042, %v4117
        %4119 = vdwg.mxu0
        %v4120 = vand.u32 %v3805, 4294901760
        %v4121 = vsub.f32 %v3805, %v4120
        %v4122 = vand.u32 %v4121, 4294901760
        %4123 = vmatprep.subr.mxu0 %v4122
        %v4124 = vand.u32 %v3802, 4294901760
        %v4125 = vsub.f32 %v3802, %v4124
        %v4126 = vand.u32 %v4125, 4294901760
        %4127 = vmatpush1.msra.mxu0 %v4126
        %4128 = vmatprep.subr.mxu0 0.0
        %4129 = vmatpush1.msra.mxu0 0.0
        %4130 = vmatprep.subr.mxu0 0.0
        %4131 = vmatpush1.msra.mxu0 0.0
        %4132 = vmatprep.subr.mxu0 0.0
        %4133 = vmatpush1.msra.mxu0 0.0
        %4134 = vmatprep.subr.mxu0 0.0
        %4135 = vmatpush1.msra.mxu0 0.0
        %4136 = vmatprep.subr.mxu0 0.0
        %4137 = vmatpush1.msra.mxu0 0.0
        %4138 = vmatprep.subr.mxu0 0.0
        %4139 = vmatpush1.msra.mxu0 0.0
        %4140 = vmatprep.subr.mxu0 0.0
        %4141 = vmatpush1.msra.mxu0 0.0
        %4142 = vmatprep.subr.mxu0 0.0
        %4143 = vmatpush1.msra.mxu0 0.0
        %4144 = vmatprep.subr.mxu0 0.0
        %4145 = vmatpush1.msra.mxu0 0.0
        %4146 = vmatprep.subr.mxu0 0.0
        %4147 = vmatpush1.msra.mxu0 0.0
        %4148 = vmatprep.subr.mxu0 0.0
        %4149 = vmatpush1.msra.mxu0 0.0
        %4150 = vmatprep.subr.mxu0 0.0
        %4151 = vmatpush1.msra.mxu0 0.0
        %4152 = vmatprep.subr.mxu0 0.0
        %4153 = vmatpush1.msra.mxu0 0.0
        %4154 = vmatprep.subr.mxu0 0.0
        %4155 = vmatpush1.msra.mxu0 0.0
        %4156 = vmatprep.subr.mxu0 0.0
        %4157 = vmatpush1.msra.mxu0 0.0
        %4158 = vmatprep.subr.mxu0 0.0
        %4159 = vmatpush1.msra.mxu0 0.0
        %4160 = vmatprep.subr.mxu0 0.0
        %4161 = vmatpush1.msra.mxu0 0.0
        %4162 = vmatprep.subr.mxu0 0.0
        %4163 = vmatpush1.msra.mxu0 0.0
        %4164 = vmatprep.subr.mxu0 0.0
        %4165 = vmatpush1.msra.mxu0 0.0
        %4166 = vmatprep.subr.mxu0 0.0
        %4167 = vmatpush1.msra.mxu0 0.0
        %4168 = vmatprep.subr.mxu0 0.0
        %4169 = vmatpush1.msra.mxu0 0.0
        %4170 = vmatprep.subr.mxu0 0.0
        %4171 = vmatpush1.msra.mxu0 0.0
        %4172 = vmatprep.subr.mxu0 0.0
        %4173 = vmatpush1.msra.mxu0 0.0
        %4174 = vmatprep.subr.mxu0 0.0
        %4175 = vmatpush1.msra.mxu0 0.0
        %4176 = vmatprep.subr.mxu0 0.0
        %4177 = vmatpush1.msra.mxu0 0.0
        %4178 = vmatprep.subr.mxu0 0.0
        %4179 = vmatpush1.msra.mxu0 0.0
        %4180 = vmatprep.subr.mxu0 0.0
        %4181 = vmatpush1.msra.mxu0 0.0
        %4182 = vmatprep.subr.mxu0 0.0
        %4183 = vmatpush1.msra.mxu0 0.0
        %4184 = vmatprep.subr.mxu0 0.0
        %4185 = vmatpush1.msra.mxu0 0.0
        %4186 = vmatprep.subr.mxu0 0.0
        %4187 = vmatpush1.msra.mxu0 0.0
        %4188 = vmatprep.subr.mxu0 0.0
        %4189 = vmatpush1.msra.mxu0 0.0
        %4190 = vmatprep.mubr.f32.mxu0 0.0
        %v4191 = vand.u32 %v3799, 4294901760
        %4192 = vmatmul.mubr.f32.gmra.mrb[0].mxu0 %v4191
        %v4193 = vpop.f32.mrb[0].mxu0
        %v4194 = vadd.f32 %v4116, %v4193
        %v4195 = vpop.f32.mrb[0].mxu0
        %v4196 = vadd.f32 %v4118, %v4195
        %4197 = vdwg.mxu0
        %v4198 = vand.u32 %v3805, 4294901760
        %4199 = vmatprep.subr.mxu0 %v4198
        %v4200 = vand.u32 %v3802, 4294901760
        %4201 = vmatpush1.msra.mxu0 %v4200
        %4202 = vmatprep.subr.mxu0 0.0
        %4203 = vmatpush1.msra.mxu0 0.0
        %4204 = vmatprep.subr.mxu0 0.0
        %4205 = vmatpush1.msra.mxu0 0.0
        %4206 = vmatprep.subr.mxu0 0.0
        %4207 = vmatpush1.msra.mxu0 0.0
        %4208 = vmatprep.subr.mxu0 0.0
        %4209 = vmatpush1.msra.mxu0 0.0
        %4210 = vmatprep.subr.mxu0 0.0
        %4211 = vmatpush1.msra.mxu0 0.0
        %4212 = vmatprep.subr.mxu0 0.0
        %4213 = vmatpush1.msra.mxu0 0.0
        %4214 = vmatprep.subr.mxu0 0.0
        %4215 = vmatpush1.msra.mxu0 0.0
        %4216 = vmatprep.subr.mxu0 0.0
        %4217 = vmatpush1.msra.mxu0 0.0
        %4218 = vmatprep.subr.mxu0 0.0
        %4219 = vmatpush1.msra.mxu0 0.0
        %4220 = vmatprep.subr.mxu0 0.0
        %4221 = vmatpush1.msra.mxu0 0.0
        %4222 = vmatprep.subr.mxu0 0.0
        %4223 = vmatpush1.msra.mxu0 0.0
        %4224 = vmatprep.subr.mxu0 0.0
        %4225 = vmatpush1.msra.mxu0 0.0
        %4226 = vmatprep.subr.mxu0 0.0
        %4227 = vmatpush1.msra.mxu0 0.0
        %4228 = vmatprep.subr.mxu0 0.0
        %4229 = vmatpush1.msra.mxu0 0.0
        %4230 = vmatprep.subr.mxu0 0.0
        %4231 = vmatpush1.msra.mxu0 0.0
        %4232 = vmatprep.subr.mxu0 0.0
        %4233 = vmatpush1.msra.mxu0 0.0
        %4234 = vmatprep.subr.mxu0 0.0
        %4235 = vmatpush1.msra.mxu0 0.0
        %4236 = vmatprep.subr.mxu0 0.0
        %4237 = vmatpush1.msra.mxu0 0.0
        %4238 = vmatprep.subr.mxu0 0.0
        %4239 = vmatpush1.msra.mxu0 0.0
        %4240 = vmatprep.subr.mxu0 0.0
        %4241 = vmatpush1.msra.mxu0 0.0
        %4242 = vmatprep.subr.mxu0 0.0
        %4243 = vmatpush1.msra.mxu0 0.0
        %4244 = vmatprep.subr.mxu0 0.0
        %4245 = vmatpush1.msra.mxu0 0.0
        %4246 = vmatprep.subr.mxu0 0.0
        %4247 = vmatpush1.msra.mxu0 0.0
        %4248 = vmatprep.subr.mxu0 0.0
        %4249 = vmatpush1.msra.mxu0 0.0
        %4250 = vmatprep.subr.mxu0 0.0
        %4251 = vmatpush1.msra.mxu0 0.0
        %4252 = vmatprep.subr.mxu0 0.0
        %4253 = vmatpush1.msra.mxu0 0.0
        %4254 = vmatprep.subr.mxu0 0.0
        %4255 = vmatpush1.msra.mxu0 0.0
        %4256 = vmatprep.subr.mxu0 0.0
        %4257 = vmatpush1.msra.mxu0 0.0
        %4258 = vmatprep.subr.mxu0 0.0
        %4259 = vmatpush1.msra.mxu0 0.0
        %4260 = vmatprep.subr.mxu0 0.0
        %4261 = vmatpush1.msra.mxu0 0.0
        %4262 = vmatprep.subr.mxu0 0.0
        %4263 = vmatpush1.msra.mxu0 0.0
        %4264 = vmatprep.mubr.f32.mxu0 0.0
        %v4265 = vand.u32 %v3799, 4294901760
        %4266 = vmatmul.mubr.f32.gmra.mrb[0].mxu0 %v4265
        %v4267 = vpop.f32.mrb[0].mxu0
        %v4268 = vadd.f32 %v4194, %v4267
        %v4269 = vpop.f32.mrb[0].mxu0
        %v4270 = vadd.f32 %v4196, %v4269
        %4271 = vdwg.mxu0
        %v4272 = vadd.f32 %v3794, %v4268
        %v4273 = vadd.f32 %v3795, %v4270
        %s4274 = scalar_lea.vmem %s1, 16
        %v4275 = vld [vmem:[%s4274] sm:$0xf]
        %v4277 = vsel %vm366, %v4275, 0
        %v4279 = vsel %vm370, %v325, 0
        %v4281 = vsel %vm370, %v329, 0
        %v4283 = vand.u32 %v4281, 4294901760
        %4284 = vmatprep.subr.mxu0 %v4283
        %v4285 = vand.u32 %v4279, 4294901760
        %4286 = vmatpush1.msra.mxu0 %v4285
        %4287 = vmatprep.subr.mxu0 0.0
        %4288 = vmatpush1.msra.mxu0 0.0
        %4289 = vmatprep.subr.mxu0 0.0
        %4290 = vmatpush1.msra.mxu0 0.0
        %4291 = vmatprep.subr.mxu0 0.0
        %4292 = vmatpush1.msra.mxu0 0.0
        %4293 = vmatprep.subr.mxu0 0.0
        %4294 = vmatpush1.msra.mxu0 0.0
        %4295 = vmatprep.subr.mxu0 0.0
        %4296 = vmatpush1.msra.mxu0 0.0
        %4297 = vmatprep.subr.mxu0 0.0
        %4298 = vmatpush1.msra.mxu0 0.0
        %4299 = vmatprep.subr.mxu0 0.0
        %4300 = vmatpush1.msra.mxu0 0.0
        %4301 = vmatprep.subr.mxu0 0.0
        %4302 = vmatpush1.msra.mxu0 0.0
        %4303 = vmatprep.subr.mxu0 0.0
        %4304 = vmatpush1.msra.mxu0 0.0
        %4305 = vmatprep.subr.mxu0 0.0
        %4306 = vmatpush1.msra.mxu0 0.0
        %4307 = vmatprep.subr.mxu0 0.0
        %4308 = vmatpush1.msra.mxu0 0.0
        %4309 = vmatprep.subr.mxu0 0.0
        %4310 = vmatpush1.msra.mxu0 0.0
        %4311 = vmatprep.subr.mxu0 0.0
        %4312 = vmatpush1.msra.mxu0 0.0
        %4313 = vmatprep.subr.mxu0 0.0
        %4314 = vmatpush1.msra.mxu0 0.0
        %4315 = vmatprep.subr.mxu0 0.0
        %4316 = vmatpush1.msra.mxu0 0.0
        %4317 = vmatprep.subr.mxu0 0.0
        %4318 = vmatpush1.msra.mxu0 0.0
        %4319 = vmatprep.subr.mxu0 0.0
        %4320 = vmatpush1.msra.mxu0 0.0
        %4321 = vmatprep.subr.mxu0 0.0
        %4322 = vmatpush1.msra.mxu0 0.0
        %4323 = vmatprep.subr.mxu0 0.0
        %4324 = vmatpush1.msra.mxu0 0.0
        %4325 = vmatprep.subr.mxu0 0.0
        %4326 = vmatpush1.msra.mxu0 0.0
        %4327 = vmatprep.subr.mxu0 0.0
        %4328 = vmatpush1.msra.mxu0 0.0
        %4329 = vmatprep.subr.mxu0 0.0
        %4330 = vmatpush1.msra.mxu0 0.0
        %4331 = vmatprep.subr.mxu0 0.0
        %4332 = vmatpush1.msra.mxu0 0.0
        %4333 = vmatprep.subr.mxu0 0.0
        %4334 = vmatpush1.msra.mxu0 0.0
        %4335 = vmatprep.subr.mxu0 0.0
        %4336 = vmatpush1.msra.mxu0 0.0
        %4337 = vmatprep.subr.mxu0 0.0
        %4338 = vmatpush1.msra.mxu0 0.0
        %4339 = vmatprep.subr.mxu0 0.0
        %4340 = vmatpush1.msra.mxu0 0.0
        %4341 = vmatprep.subr.mxu0 0.0
        %4342 = vmatpush1.msra.mxu0 0.0
        %4343 = vmatprep.subr.mxu0 0.0
        %4344 = vmatpush1.msra.mxu0 0.0
        %4345 = vmatprep.subr.mxu0 0.0
        %4346 = vmatpush1.msra.mxu0 0.0
        %4347 = vmatprep.subr.mxu0 0.0
        %4348 = vmatpush1.msra.mxu0 0.0
        %4349 = vmatprep.mubr.f32.mxu0 0.0
        %v4350 = vand.u32 %v4277, 4294901760
        %v4351 = vsub.f32 %v4277, %v4350
        %v4352 = vand.u32 %v4351, 4294901760
        %v4353 = vsub.f32 %v4351, %v4352
        %v4354 = vand.u32 %v4353, 4294901760
        %4355 = vmatmul.mubr.f32.gmra.mrb[0].mxu0 %v4354
        %v4356 = vpop.f32.mrb[0].mxu0
        %v4357 = vadd.f32 0.0, %v4356
        %v4358 = vpop.f32.mrb[0].mxu0
        %v4359 = vadd.f32 0.0, %v4358
        %4360 = vdwg.mxu0
        %v4361 = vand.u32 %v4281, 4294901760
        %v4362 = vsub.f32 %v4281, %v4361
        %v4363 = vand.u32 %v4362, 4294901760
        %v4364 = vsub.f32 %v4362, %v4363
        %v4365 = vand.u32 %v4364, 4294901760
        %4366 = vmatprep.subr.mxu0 %v4365
        %v4367 = vand.u32 %v4279, 4294901760
        %v4368 = vsub.f32 %v4279, %v4367
        %v4369 = vand.u32 %v4368, 4294901760
        %v4370 = vsub.f32 %v4368, %v4369
        %v4371 = vand.u32 %v4370, 4294901760
        %4372 = vmatpush1.msra.mxu0 %v4371
        %4373 = vmatprep.subr.mxu0 0.0
        %4374 = vmatpush1.msra.mxu0 0.0
        %4375 = vmatprep.subr.mxu0 0.0
        %4376 = vmatpush1.msra.mxu0 0.0
        %4377 = vmatprep.subr.mxu0 0.0
        %4378 = vmatpush1.msra.mxu0 0.0
        %4379 = vmatprep.subr.mxu0 0.0
        %4380 = vmatpush1.msra.mxu0 0.0
        %4381 = vmatprep.subr.mxu0 0.0
        %4382 = vmatpush1.msra.mxu0 0.0
        %4383 = vmatprep.subr.mxu0 0.0
        %4384 = vmatpush1.msra.mxu0 0.0
        %4385 = vmatprep.subr.mxu0 0.0
        %4386 = vmatpush1.msra.mxu0 0.0
        %4387 = vmatprep.subr.mxu0 0.0
        %4388 = vmatpush1.msra.mxu0 0.0
        %4389 = vmatprep.subr.mxu0 0.0
        %4390 = vmatpush1.msra.mxu0 0.0
        %4391 = vmatprep.subr.mxu0 0.0
        %4392 = vmatpush1.msra.mxu0 0.0
        %4393 = vmatprep.subr.mxu0 0.0
        %4394 = vmatpush1.msra.mxu0 0.0
        %4395 = vmatprep.subr.mxu0 0.0
        %4396 = vmatpush1.msra.mxu0 0.0
        %4397 = vmatprep.subr.mxu0 0.0
        %4398 = vmatpush1.msra.mxu0 0.0
        %4399 = vmatprep.subr.mxu0 0.0
        %4400 = vmatpush1.msra.mxu0 0.0
        %4401 = vmatprep.subr.mxu0 0.0
        %4402 = vmatpush1.msra.mxu0 0.0
        %4403 = vmatprep.subr.mxu0 0.0
        %4404 = vmatpush1.msra.mxu0 0.0
        %4405 = vmatprep.subr.mxu0 0.0
        %4406 = vmatpush1.msra.mxu0 0.0
        %4407 = vmatprep.subr.mxu0 0.0
        %4408 = vmatpush1.msra.mxu0 0.0
        %4409 = vmatprep.subr.mxu0 0.0
        %4410 = vmatpush1.msra.mxu0 0.0
        %4411 = vmatprep.subr.mxu0 0.0
        %4412 = vmatpush1.msra.mxu0 0.0
        %4413 = vmatprep.subr.mxu0 0.0
        %4414 = vmatpush1.msra.mxu0 0.0
        %4415 = vmatprep.subr.mxu0 0.0
        %4416 = vmatpush1.msra.mxu0 0.0
        %4417 = vmatprep.subr.mxu0 0.0
        %4418 = vmatpush1.msra.mxu0 0.0
        %4419 = vmatprep.subr.mxu0 0.0
        %4420 = vmatpush1.msra.mxu0 0.0
        %4421 = vmatprep.subr.mxu0 0.0
        %4422 = vmatpush1.msra.mxu0 0.0
        %4423 = vmatprep.subr.mxu0 0.0
        %4424 = vmatpush1.msra.mxu0 0.0
        %4425 = vmatprep.subr.mxu0 0.0
        %4426 = vmatpush1.msra.mxu0 0.0
        %4427 = vmatprep.subr.mxu0 0.0
        %4428 = vmatpush1.msra.mxu0 0.0
        %4429 = vmatprep.subr.mxu0 0.0
        %4430 = vmatpush1.msra.mxu0 0.0
        %4431 = vmatprep.subr.mxu0 0.0
        %4432 = vmatpush1.msra.mxu0 0.0
        %4433 = vmatprep.subr.mxu0 0.0
        %4434 = vmatpush1.msra.mxu0 0.0
        %4435 = vmatprep.mubr.f32.mxu0 0.0
        %v4436 = vand.u32 %v4277, 4294901760
        %4437 = vmatmul.mubr.f32.gmra.mrb[0].mxu0 %v4436
        %v4438 = vpop.f32.mrb[0].mxu0
        %v4439 = vadd.f32 %v4357, %v4438
        %v4440 = vpop.f32.mrb[0].mxu0
        %v4441 = vadd.f32 %v4359, %v4440
        %4442 = vdwg.mxu0
        %v4443 = vand.u32 %v4281, 4294901760
        %v4444 = vsub.f32 %v4281, %v4443
        %4445 = vmatprep.subr.mxu0 %v4444
        %v4446 = vand.u32 %v4279, 4294901760
        %v4447 = vsub.f32 %v4279, %v4446
        %4448 = vmatpush1.msra.mxu0 %v4447
        %4449 = vmatprep.subr.mxu0 0.0
        %4450 = vmatpush1.msra.mxu0 0.0
        %4451 = vmatprep.subr.mxu0 0.0
        %4452 = vmatpush1.msra.mxu0 0.0
        %4453 = vmatprep.subr.mxu0 0.0
        %4454 = vmatpush1.msra.mxu0 0.0
        %4455 = vmatprep.subr.mxu0 0.0
        %4456 = vmatpush1.msra.mxu0 0.0
        %4457 = vmatprep.subr.mxu0 0.0
        %4458 = vmatpush1.msra.mxu0 0.0
        %4459 = vmatprep.subr.mxu0 0.0
        %4460 = vmatpush1.msra.mxu0 0.0
        %4461 = vmatprep.subr.mxu0 0.0
        %4462 = vmatpush1.msra.mxu0 0.0
        %4463 = vmatprep.subr.mxu0 0.0
        %4464 = vmatpush1.msra.mxu0 0.0
        %4465 = vmatprep.subr.mxu0 0.0
        %4466 = vmatpush1.msra.mxu0 0.0
        %4467 = vmatprep.subr.mxu0 0.0
        %4468 = vmatpush1.msra.mxu0 0.0
        %4469 = vmatprep.subr.mxu0 0.0
        %4470 = vmatpush1.msra.mxu0 0.0
        %4471 = vmatprep.subr.mxu0 0.0
        %4472 = vmatpush1.msra.mxu0 0.0
        %4473 = vmatprep.subr.mxu0 0.0
        %4474 = vmatpush1.msra.mxu0 0.0
        %4475 = vmatprep.subr.mxu0 0.0
        %4476 = vmatpush1.msra.mxu0 0.0
        %4477 = vmatprep.subr.mxu0 0.0
        %4478 = vmatpush1.msra.mxu0 0.0
        %4479 = vmatprep.subr.mxu0 0.0
        %4480 = vmatpush1.msra.mxu0 0.0
        %4481 = vmatprep.subr.mxu0 0.0
        %4482 = vmatpush1.msra.mxu0 0.0
        %4483 = vmatprep.subr.mxu0 0.0
        %4484 = vmatpush1.msra.mxu0 0.0
        %4485 = vmatprep.subr.mxu0 0.0
        %4486 = vmatpush1.msra.mxu0 0.0
        %4487 = vmatprep.subr.mxu0 0.0
        %4488 = vmatpush1.msra.mxu0 0.0
        %4489 = vmatprep.subr.mxu0 0.0
        %4490 = vmatpush1.msra.mxu0 0.0
        %4491 = vmatprep.subr.mxu0 0.0
        %4492 = vmatpush1.msra.mxu0 0.0
        %4493 = vmatprep.subr.mxu0 0.0
        %4494 = vmatpush1.msra.mxu0 0.0
        %4495 = vmatprep.subr.mxu0 0.0
        %4496 = vmatpush1.msra.mxu0 0.0
        %4497 = vmatprep.subr.mxu0 0.0
        %4498 = vmatpush1.msra.mxu0 0.0
        %4499 = vmatprep.subr.mxu0 0.0
        %4500 = vmatpush1.msra.mxu0 0.0
        %4501 = vmatprep.subr.mxu0 0.0
        %4502 = vmatpush1.msra.mxu0 0.0
        %4503 = vmatprep.subr.mxu0 0.0
        %4504 = vmatpush1.msra.mxu0 0.0
        %4505 = vmatprep.subr.mxu0 0.0
        %4506 = vmatpush1.msra.mxu0 0.0
        %4507 = vmatprep.subr.mxu0 0.0
        %4508 = vmatpush1.msra.mxu0 0.0
        %4509 = vmatprep.subr.mxu0 0.0
        %4510 = vmatpush1.msra.mxu0 0.0
        %4511 = vmatprep.mubr.f32.mxu0 0.0
        %v4512 = vand.u32 %v4277, 4294901760
        %v4513 = vsub.f32 %v4277, %v4512
        %4514 = vmatmul.mubr.f32.gmra.mrb[0].mxu0 %v4513
        %v4515 = vpop.f32.mrb[0].mxu0
        %v4516 = vadd.f32 %v4439, %v4515
        %v4517 = vpop.f32.mrb[0].mxu0
        %v4518 = vadd.f32 %v4441, %v4517
        %4519 = vdwg.mxu0
        %v4520 = vand.u32 %v4281, 4294901760
        %4521 = vmatprep.subr.mxu0 %v4520
        %v4522 = vand.u32 %v4279, 4294901760
        %4523 = vmatpush1.msra.mxu0 %v4522
        %4524 = vmatprep.subr.mxu0 0.0
        %4525 = vmatpush1.msra.mxu0 0.0
        %4526 = vmatprep.subr.mxu0 0.0
        %4527 = vmatpush1.msra.mxu0 0.0
        %4528 = vmatprep.subr.mxu0 0.0
        %4529 = vmatpush1.msra.mxu0 0.0
        %4530 = vmatprep.subr.mxu0 0.0
        %4531 = vmatpush1.msra.mxu0 0.0
        %4532 = vmatprep.subr.mxu0 0.0
        %4533 = vmatpush1.msra.mxu0 0.0
        %4534 = vmatprep.subr.mxu0 0.0
        %4535 = vmatpush1.msra.mxu0 0.0
        %4536 = vmatprep.subr.mxu0 0.0
        %4537 = vmatpush1.msra.mxu0 0.0
        %4538 = vmatprep.subr.mxu0 0.0
        %4539 = vmatpush1.msra.mxu0 0.0
        %4540 = vmatprep.subr.mxu0 0.0
        %4541 = vmatpush1.msra.mxu0 0.0
        %4542 = vmatprep.subr.mxu0 0.0
        %4543 = vmatpush1.msra.mxu0 0.0
        %4544 = vmatprep.subr.mxu0 0.0
        %4545 = vmatpush1.msra.mxu0 0.0
        %4546 = vmatprep.subr.mxu0 0.0
        %4547 = vmatpush1.msra.mxu0 0.0
        %4548 = vmatprep.subr.mxu0 0.0
        %4549 = vmatpush1.msra.mxu0 0.0
        %4550 = vmatprep.subr.mxu0 0.0
        %4551 = vmatpush1.msra.mxu0 0.0
        %4552 = vmatprep.subr.mxu0 0.0
        %4553 = vmatpush1.msra.mxu0 0.0
        %4554 = vmatprep.subr.mxu0 0.0
        %4555 = vmatpush1.msra.mxu0 0.0
        %4556 = vmatprep.subr.mxu0 0.0
        %4557 = vmatpush1.msra.mxu0 0.0
        %4558 = vmatprep.subr.mxu0 0.0
        %4559 = vmatpush1.msra.mxu0 0.0
        %4560 = vmatprep.subr.mxu0 0.0
        %4561 = vmatpush1.msra.mxu0 0.0
        %4562 = vmatprep.subr.mxu0 0.0
        %4563 = vmatpush1.msra.mxu0 0.0
        %4564 = vmatprep.subr.mxu0 0.0
        %4565 = vmatpush1.msra.mxu0 0.0
        %4566 = vmatprep.subr.mxu0 0.0
        %4567 = vmatpush1.msra.mxu0 0.0
        %4568 = vmatprep.subr.mxu0 0.0
        %4569 = vmatpush1.msra.mxu0 0.0
        %4570 = vmatprep.subr.mxu0 0.0
        %4571 = vmatpush1.msra.mxu0 0.0
        %4572 = vmatprep.subr.mxu0 0.0
        %4573 = vmatpush1.msra.mxu0 0.0
        %4574 = vmatprep.subr.mxu0 0.0
        %4575 = vmatpush1.msra.mxu0 0.0
        %4576 = vmatprep.subr.mxu0 0.0
        %4577 = vmatpush1.msra.mxu0 0.0
        %4578 = vmatprep.subr.mxu0 0.0
        %4579 = vmatpush1.msra.mxu0 0.0
        %4580 = vmatprep.subr.mxu0 0.0
        %4581 = vmatpush1.msra.mxu0 0.0
        %4582 = vmatprep.subr.mxu0 0.0
        %4583 = vmatpush1.msra.mxu0 0.0
        %4584 = vmatprep.subr.mxu0 0.0
        %4585 = vmatpush1.msra.mxu0 0.0
        %4586 = vmatprep.mubr.f32.mxu0 0.0
        %v4587 = vand.u32 %v4277, 4294901760
        %v4588 = vsub.f32 %v4277, %v4587
        %v4589 = vand.u32 %v4588, 4294901760
        %4590 = vmatmul.mubr.f32.gmra.mrb[0].mxu0 %v4589
        %v4591 = vpop.f32.mrb[0].mxu0
        %v4592 = vadd.f32 %v4516, %v4591
        %v4593 = vpop.f32.mrb[0].mxu0
        %v4594 = vadd.f32 %v4518, %v4593
        %4595 = vdwg.mxu0
        %v4596 = vand.u32 %v4281, 4294901760
        %v4597 = vsub.f32 %v4281, %v4596
        %v4598 = vand.u32 %v4597, 4294901760
        %4599 = vmatprep.subr.mxu0 %v4598
        %v4600 = vand.u32 %v4279, 4294901760
        %v4601 = vsub.f32 %v4279, %v4600
        %v4602 = vand.u32 %v4601, 4294901760
        %4603 = vmatpush1.msra.mxu0 %v4602
        %4604 = vmatprep.subr.mxu0 0.0
        %4605 = vmatpush1.msra.mxu0 0.0
        %4606 = vmatprep.subr.mxu0 0.0
        %4607 = vmatpush1.msra.mxu0 0.0
        %4608 = vmatprep.subr.mxu0 0.0
        %4609 = vmatpush1.msra.mxu0 0.0
        %4610 = vmatprep.subr.mxu0 0.0
        %4611 = vmatpush1.msra.mxu0 0.0
        %4612 = vmatprep.subr.mxu0 0.0
        %4613 = vmatpush1.msra.mxu0 0.0
        %4614 = vmatprep.subr.mxu0 0.0
        %4615 = vmatpush1.msra.mxu0 0.0
        %4616 = vmatprep.subr.mxu0 0.0
        %4617 = vmatpush1.msra.mxu0 0.0
        %4618 = vmatprep.subr.mxu0 0.0
        %4619 = vmatpush1.msra.mxu0 0.0
        %4620 = vmatprep.subr.mxu0 0.0
        %4621 = vmatpush1.msra.mxu0 0.0
        %4622 = vmatprep.subr.mxu0 0.0
        %4623 = vmatpush1.msra.mxu0 0.0
        %4624 = vmatprep.subr.mxu0 0.0
        %4625 = vmatpush1.msra.mxu0 0.0
        %4626 = vmatprep.subr.mxu0 0.0
        %4627 = vmatpush1.msra.mxu0 0.0
        %4628 = vmatprep.subr.mxu0 0.0
        %4629 = vmatpush1.msra.mxu0 0.0
        %4630 = vmatprep.subr.mxu0 0.0
        %4631 = vmatpush1.msra.mxu0 0.0
        %4632 = vmatprep.subr.mxu0 0.0
        %4633 = vmatpush1.msra.mxu0 0.0
        %4634 = vmatprep.subr.mxu0 0.0
        %4635 = vmatpush1.msra.mxu0 0.0
        %4636 = vmatprep.subr.mxu0 0.0
        %4637 = vmatpush1.msra.mxu0 0.0
        %4638 = vmatprep.subr.mxu0 0.0
        %4639 = vmatpush1.msra.mxu0 0.0
        %4640 = vmatprep.subr.mxu0 0.0
        %4641 = vmatpush1.msra.mxu0 0.0
        %4642 = vmatprep.subr.mxu0 0.0
        %4643 = vmatpush1.msra.mxu0 0.0
        %4644 = vmatprep.subr.mxu0 0.0
        %4645 = vmatpush1.msra.mxu0 0.0
        %4646 = vmatprep.subr.mxu0 0.0
        %4647 = vmatpush1.msra.mxu0 0.0
        %4648 = vmatprep.subr.mxu0 0.0
        %4649 = vmatpush1.msra.mxu0 0.0
        %4650 = vmatprep.subr.mxu0 0.0
        %4651 = vmatpush1.msra.mxu0 0.0
        %4652 = vmatprep.subr.mxu0 0.0
        %4653 = vmatpush1.msra.mxu0 0.0
        %4654 = vmatprep.subr.mxu0 0.0
        %4655 = vmatpush1.msra.mxu0 0.0
        %4656 = vmatprep.subr.mxu0 0.0
        %4657 = vmatpush1.msra.mxu0 0.0
        %4658 = vmatprep.subr.mxu0 0.0
        %4659 = vmatpush1.msra.mxu0 0.0
        %4660 = vmatprep.subr.mxu0 0.0
        %4661 = vmatpush1.msra.mxu0 0.0
        %4662 = vmatprep.subr.mxu0 0.0
        %4663 = vmatpush1.msra.mxu0 0.0
        %4664 = vmatprep.subr.mxu0 0.0
        %4665 = vmatpush1.msra.mxu0 0.0
        %4666 = vmatprep.mubr.f32.mxu0 0.0
        %v4667 = vand.u32 %v4277, 4294901760
        %4668 = vmatmul.mubr.f32.gmra.mrb[0].mxu0 %v4667
        %v4669 = vpop.f32.mrb[0].mxu0
        %v4670 = vadd.f32 %v4592, %v4669
        %v4671 = vpop.f32.mrb[0].mxu0
        %v4672 = vadd.f32 %v4594, %v4671
        %4673 = vdwg.mxu0
        %v4674 = vand.u32 %v4281, 4294901760
        %4675 = vmatprep.subr.mxu0 %v4674
        %v4676 = vand.u32 %v4279, 4294901760
        %4677 = vmatpush1.msra.mxu0 %v4676
        %4678 = vmatprep.subr.mxu0 0.0
        %4679 = vmatpush1.msra.mxu0 0.0
        %4680 = vmatprep.subr.mxu0 0.0
        %4681 = vmatpush1.msra.mxu0 0.0
        %4682 = vmatprep.subr.mxu0 0.0
        %4683 = vmatpush1.msra.mxu0 0.0
        %4684 = vmatprep.subr.mxu0 0.0
        %4685 = vmatpush1.msra.mxu0 0.0
        %4686 = vmatprep.subr.mxu0 0.0
        %4687 = vmatpush1.msra.mxu0 0.0
        %4688 = vmatprep.subr.mxu0 0.0
        %4689 = vmatpush1.msra.mxu0 0.0
        %4690 = vmatprep.subr.mxu0 0.0
        %4691 = vmatpush1.msra.mxu0 0.0
        %4692 = vmatprep.subr.mxu0 0.0
        %4693 = vmatpush1.msra.mxu0 0.0
        %4694 = vmatprep.subr.mxu0 0.0
        %4695 = vmatpush1.msra.mxu0 0.0
        %4696 = vmatprep.subr.mxu0 0.0
        %4697 = vmatpush1.msra.mxu0 0.0
        %4698 = vmatprep.subr.mxu0 0.0
        %4699 = vmatpush1.msra.mxu0 0.0
        %4700 = vmatprep.subr.mxu0 0.0
        %4701 = vmatpush1.msra.mxu0 0.0
        %4702 = vmatprep.subr.mxu0 0.0
        %4703 = vmatpush1.msra.mxu0 0.0
        %4704 = vmatprep.subr.mxu0 0.0
        %4705 = vmatpush1.msra.mxu0 0.0
        %4706 = vmatprep.subr.mxu0 0.0
        %4707 = vmatpush1.msra.mxu0 0.0
        %4708 = vmatprep.subr.mxu0 0.0
        %4709 = vmatpush1.msra.mxu0 0.0
        %4710 = vmatprep.subr.mxu0 0.0
        %4711 = vmatpush1.msra.mxu0 0.0
        %4712 = vmatprep.subr.mxu0 0.0
        %4713 = vmatpush1.msra.mxu0 0.0
        %4714 = vmatprep.subr.mxu0 0.0
        %4715 = vmatpush1.msra.mxu0 0.0
        %4716 = vmatprep.subr.mxu0 0.0
        %4717 = vmatpush1.msra.mxu0 0.0
        %4718 = vmatprep.subr.mxu0 0.0
        %4719 = vmatpush1.msra.mxu0 0.0
        %4720 = vmatprep.subr.mxu0 0.0
        %4721 = vmatpush1.msra.mxu0 0.0
        %4722 = vmatprep.subr.mxu0 0.0
        %4723 = vmatpush1.msra.mxu0 0.0
        %4724 = vmatprep.subr.mxu0 0.0
        %4725 = vmatpush1.msra.mxu0 0.0
        %4726 = vmatprep.subr.mxu0 0.0
        %4727 = vmatpush1.msra.mxu0 0.0
        %4728 = vmatprep.subr.mxu0 0.0
        %4729 = vmatpush1.msra.mxu0 0.0
        %4730 = vmatprep.subr.mxu0 0.0
        %4731 = vmatpush1.msra.mxu0 0.0
        %4732 = vmatprep.subr.mxu0 0.0
        %4733 = vmatpush1.msra.mxu0 0.0
        %4734 = vmatprep.subr.mxu0 0.0
        %4735 = vmatpush1.msra.mxu0 0.0
        %4736 = vmatprep.subr.mxu0 0.0
        %4737 = vmatpush1.msra.mxu0 0.0
        %4738 = vmatprep.subr.mxu0 0.0
        %4739 = vmatpush1.msra.mxu0 0.0
        %4740 = vmatprep.mubr.f32.mxu0 0.0
        %v4741 = vand.u32 %v4277, 4294901760
        %4742 = vmatmul.mubr.f32.gmra.mrb[0].mxu0 %v4741
        %v4743 = vpop.f32.mrb[0].mxu0
        %v4744 = vadd.f32 %v4670, %v4743
        %v4745 = vpop.f32.mrb[0].mxu0
        %v4746 = vadd.f32 %v4672, %v4745
        %4747 = vdwg.mxu0
        %v4748 = vadd.f32 %v4272, %v4744
        %v4749 = vadd.f32 %v4273, %v4746
        %s4750 = scalar_lea.vmem %s2, 16
        %v4751 = vld [vmem:[%s4750] sm:$0xf]
        %v4753 = vsel %vm366, %v4751, 0
        %v4755 = vsel %vm370, %v326, 0
        %v4757 = vsel %vm370, %v354, 0
        %v4759 = vand.u32 %v4757, 4294901760
        %4760 = vmatprep.subr.mxu0 %v4759
        %v4761 = vand.u32 %v4755, 4294901760
        %4762 = vmatpush1.msra.mxu0 %v4761
        %4763 = vmatprep.subr.mxu0 0.0
        %4764 = vmatpush1.msra.mxu0 0.0
        %4765 = vmatprep.subr.mxu0 0.0
        %4766 = vmatpush1.msra.mxu0 0.0
        %4767 = vmatprep.subr.mxu0 0.0
        %4768 = vmatpush1.msra.mxu0 0.0
        %4769 = vmatprep.subr.mxu0 0.0
        %4770 = vmatpush1.msra.mxu0 0.0
        %4771 = vmatprep.subr.mxu0 0.0
        %4772 = vmatpush1.msra.mxu0 0.0
        %4773 = vmatprep.subr.mxu0 0.0
        %4774 = vmatpush1.msra.mxu0 0.0
        %4775 = vmatprep.subr.mxu0 0.0
        %4776 = vmatpush1.msra.mxu0 0.0
        %4777 = vmatprep.subr.mxu0 0.0
        %4778 = vmatpush1.msra.mxu0 0.0
        %4779 = vmatprep.subr.mxu0 0.0
        %4780 = vmatpush1.msra.mxu0 0.0
        %4781 = vmatprep.subr.mxu0 0.0
        %4782 = vmatpush1.msra.mxu0 0.0
        %4783 = vmatprep.subr.mxu0 0.0
        %4784 = vmatpush1.msra.mxu0 0.0
        %4785 = vmatprep.subr.mxu0 0.0
        %4786 = vmatpush1.msra.mxu0 0.0
        %4787 = vmatprep.subr.mxu0 0.0
        %4788 = vmatpush1.msra.mxu0 0.0
        %4789 = vmatprep.subr.mxu0 0.0
        %4790 = vmatpush1.msra.mxu0 0.0
        %4791 = vmatprep.subr.mxu0 0.0
        %4792 = vmatpush1.msra.mxu0 0.0
        %4793 = vmatprep.subr.mxu0 0.0
        %4794 = vmatpush1.msra.mxu0 0.0
        %4795 = vmatprep.subr.mxu0 0.0
        %4796 = vmatpush1.msra.mxu0 0.0
        %4797 = vmatprep.subr.mxu0 0.0
        %4798 = vmatpush1.msra.mxu0 0.0
        %4799 = vmatprep.subr.mxu0 0.0
        %4800 = vmatpush1.msra.mxu0 0.0
        %4801 = vmatprep.subr.mxu0 0.0
        %4802 = vmatpush1.msra.mxu0 0.0
        %4803 = vmatprep.subr.mxu0 0.0
        %4804 = vmatpush1.msra.mxu0 0.0
        %4805 = vmatprep.subr.mxu0 0.0
        %4806 = vmatpush1.msra.mxu0 0.0
        %4807 = vmatprep.subr.mxu0 0.0
        %4808 = vmatpush1.msra.mxu0 0.0
        %4809 = vmatprep.subr.mxu0 0.0
        %4810 = vmatpush1.msra.mxu0 0.0
        %4811 = vmatprep.subr.mxu0 0.0
        %4812 = vmatpush1.msra.mxu0 0.0
        %4813 = vmatprep.subr.mxu0 0.0
        %4814 = vmatpush1.msra.mxu0 0.0
        %4815 = vmatprep.subr.mxu0 0.0
        %4816 = vmatpush1.msra.mxu0 0.0
        %4817 = vmatprep.subr.mxu0 0.0
        %4818 = vmatpush1.msra.mxu0 0.0
        %4819 = vmatprep.subr.mxu0 0.0
        %4820 = vmatpush1.msra.mxu0 0.0
        %4821 = vmatprep.subr.mxu0 0.0
        %4822 = vmatpush1.msra.mxu0 0.0
        %4823 = vmatprep.subr.mxu0 0.0
        %4824 = vmatpush1.msra.mxu0 0.0
        %4825 = vmatprep.mubr.f32.mxu0 0.0
        %v4826 = vand.u32 %v4753, 4294901760
        %v4827 = vsub.f32 %v4753, %v4826
        %v4828 = vand.u32 %v4827, 4294901760
        %v4829 = vsub.f32 %v4827, %v4828
        %v4830 = vand.u32 %v4829, 4294901760
        %4831 = vmatmul.mubr.f32.gmra.mrb[0].mxu0 %v4830
        %v4832 = vpop.f32.mrb[0].mxu0
        %v4833 = vadd.f32 0.0, %v4832
        %v4834 = vpop.f32.mrb[0].mxu0
        %v4835 = vadd.f32 0.0, %v4834
        %4836 = vdwg.mxu0
        %v4837 = vand.u32 %v4757, 4294901760
        %v4838 = vsub.f32 %v4757, %v4837
        %v4839 = vand.u32 %v4838, 4294901760
        %v4840 = vsub.f32 %v4838, %v4839
        %v4841 = vand.u32 %v4840, 4294901760
        %4842 = vmatprep.subr.mxu0 %v4841
        %v4843 = vand.u32 %v4755, 4294901760
        %v4844 = vsub.f32 %v4755, %v4843
        %v4845 = vand.u32 %v4844, 4294901760
        %v4846 = vsub.f32 %v4844, %v4845
        %v4847 = vand.u32 %v4846, 4294901760
        %4848 = vmatpush1.msra.mxu0 %v4847
        %4849 = vmatprep.subr.mxu0 0.0
        %4850 = vmatpush1.msra.mxu0 0.0
        %4851 = vmatprep.subr.mxu0 0.0
        %4852 = vmatpush1.msra.mxu0 0.0
        %4853 = vmatprep.subr.mxu0 0.0
        %4854 = vmatpush1.msra.mxu0 0.0
        %4855 = vmatprep.subr.mxu0 0.0
        %4856 = vmatpush1.msra.mxu0 0.0
        %4857 = vmatprep.subr.mxu0 0.0
        %4858 = vmatpush1.msra.mxu0 0.0
        %4859 = vmatprep.subr.mxu0 0.0
        %4860 = vmatpush1.msra.mxu0 0.0
        %4861 = vmatprep.subr.mxu0 0.0
        %4862 = vmatpush1.msra.mxu0 0.0
        %4863 = vmatprep.subr.mxu0 0.0
        %4864 = vmatpush1.msra.mxu0 0.0
        %4865 = vmatprep.subr.mxu0 0.0
        %4866 = vmatpush1.msra.mxu0 0.0
        %4867 = vmatprep.subr.mxu0 0.0
        %4868 = vmatpush1.msra.mxu0 0.0
        %4869 = vmatprep.subr.mxu0 0.0
        %4870 = vmatpush1.msra.mxu0 0.0
        %4871 = vmatprep.subr.mxu0 0.0
        %4872 = vmatpush1.msra.mxu0 0.0
        %4873 = vmatprep.subr.mxu0 0.0
        %4874 = vmatpush1.msra.mxu0 0.0
        %4875 = vmatprep.subr.mxu0 0.0
        %4876 = vmatpush1.msra.mxu0 0.0
        %4877 = vmatprep.subr.mxu0 0.0
        %4878 = vmatpush1.msra.mxu0 0.0
        %4879 = vmatprep.subr.mxu0 0.0
        %4880 = vmatpush1.msra.mxu0 0.0
        %4881 = vmatprep.subr.mxu0 0.0
        %4882 = vmatpush1.msra.mxu0 0.0
        %4883 = vmatprep.subr.mxu0 0.0
        %4884 = vmatpush1.msra.mxu0 0.0
        %4885 = vmatprep.subr.mxu0 0.0
        %4886 = vmatpush1.msra.mxu0 0.0
        %4887 = vmatprep.subr.mxu0 0.0
        %4888 = vmatpush1.msra.mxu0 0.0
        %4889 = vmatprep.subr.mxu0 0.0
        %4890 = vmatpush1.msra.mxu0 0.0
        %4891 = vmatprep.subr.mxu0 0.0
        %4892 = vmatpush1.msra.mxu0 0.0
        %4893 = vmatprep.subr.mxu0 0.0
        %4894 = vmatpush1.msra.mxu0 0.0
        %4895 = vmatprep.subr.mxu0 0.0
        %4896 = vmatpush1.msra.mxu0 0.0
        %4897 = vmatprep.subr.mxu0 0.0
        %4898 = vmatpush1.msra.mxu0 0.0
        %4899 = vmatprep.subr.mxu0 0.0
        %4900 = vmatpush1.msra.mxu0 0.0
        %4901 = vmatprep.subr.mxu0 0.0
        %4902 = vmatpush1.msra.mxu0 0.0
        %4903 = vmatprep.subr.mxu0 0.0
        %4904 = vmatpush1.msra.mxu0 0.0
        %4905 = vmatprep.subr.mxu0 0.0
        %4906 = vmatpush1.msra.mxu0 0.0
        %4907 = vmatprep.subr.mxu0 0.0
        %4908 = vmatpush1.msra.mxu0 0.0
        %4909 = vmatprep.subr.mxu0 0.0
        %4910 = vmatpush1.msra.mxu0 0.0
        %4911 = vmatprep.mubr.f32.mxu0 0.0
        %v4912 = vand.u32 %v4753, 4294901760
        %4913 = vmatmul.mubr.f32.gmra.mrb[0].mxu0 %v4912
        %v4914 = vpop.f32.mrb[0].mxu0
        %v4915 = vadd.f32 %v4833, %v4914
        %v4916 = vpop.f32.mrb[0].mxu0
        %v4917 = vadd.f32 %v4835, %v4916
        %4918 = vdwg.mxu0
        %v4919 = vand.u32 %v4757, 4294901760
        %v4920 = vsub.f32 %v4757, %v4919
        %4921 = vmatprep.subr.mxu0 %v4920
        %v4922 = vand.u32 %v4755, 4294901760
        %v4923 = vsub.f32 %v4755, %v4922
        %4924 = vmatpush1.msra.mxu0 %v4923
        %4925 = vmatprep.subr.mxu0 0.0
        %4926 = vmatpush1.msra.mxu0 0.0
        %4927 = vmatprep.subr.mxu0 0.0
        %4928 = vmatpush1.msra.mxu0 0.0
        %4929 = vmatprep.subr.mxu0 0.0
        %4930 = vmatpush1.msra.mxu0 0.0
        %4931 = vmatprep.subr.mxu0 0.0
        %4932 = vmatpush1.msra.mxu0 0.0
        %4933 = vmatprep.subr.mxu0 0.0
        %4934 = vmatpush1.msra.mxu0 0.0
        %4935 = vmatprep.subr.mxu0 0.0
        %4936 = vmatpush1.msra.mxu0 0.0
        %4937 = vmatprep.subr.mxu0 0.0
        %4938 = vmatpush1.msra.mxu0 0.0
        %4939 = vmatprep.subr.mxu0 0.0
        %4940 = vmatpush1.msra.mxu0 0.0
        %4941 = vmatprep.subr.mxu0 0.0
        %4942 = vmatpush1.msra.mxu0 0.0
        %4943 = vmatprep.subr.mxu0 0.0
        %4944 = vmatpush1.msra.mxu0 0.0
        %4945 = vmatprep.subr.mxu0 0.0
        %4946 = vmatpush1.msra.mxu0 0.0
        %4947 = vmatprep.subr.mxu0 0.0
        %4948 = vmatpush1.msra.mxu0 0.0
        %4949 = vmatprep.subr.mxu0 0.0
        %4950 = vmatpush1.msra.mxu0 0.0
        %4951 = vmatprep.subr.mxu0 0.0
        %4952 = vmatpush1.msra.mxu0 0.0
        %4953 = vmatprep.subr.mxu0 0.0
        %4954 = vmatpush1.msra.mxu0 0.0
        %4955 = vmatprep.subr.mxu0 0.0
        %4956 = vmatpush1.msra.mxu0 0.0
        %4957 = vmatprep.subr.mxu0 0.0
        %4958 = vmatpush1.msra.mxu0 0.0
        %4959 = vmatprep.subr.mxu0 0.0
        %4960 = vmatpush1.msra.mxu0 0.0
        %4961 = vmatprep.subr.mxu0 0.0
        %4962 = vmatpush1.msra.mxu0 0.0
        %4963 = vmatprep.subr.mxu0 0.0
        %4964 = vmatpush1.msra.mxu0 0.0
        %4965 = vmatprep.subr.mxu0 0.0
        %4966 = vmatpush1.msra.mxu0 0.0
        %4967 = vmatprep.subr.mxu0 0.0
        %4968 = vmatpush1.msra.mxu0 0.0
        %4969 = vmatprep.subr.mxu0 0.0
        %4970 = vmatpush1.msra.mxu0 0.0
        %4971 = vmatprep.subr.mxu0 0.0
        %4972 = vmatpush1.msra.mxu0 0.0
        %4973 = vmatprep.subr.mxu0 0.0
        %4974 = vmatpush1.msra.mxu0 0.0
        %4975 = vmatprep.subr.mxu0 0.0
        %4976 = vmatpush1.msra.mxu0 0.0
        %4977 = vmatprep.subr.mxu0 0.0
        %4978 = vmatpush1.msra.mxu0 0.0
        %4979 = vmatprep.subr.mxu0 0.0
        %4980 = vmatpush1.msra.mxu0 0.0
        %4981 = vmatprep.subr.mxu0 0.0
        %4982 = vmatpush1.msra.mxu0 0.0
        %4983 = vmatprep.subr.mxu0 0.0
        %4984 = vmatpush1.msra.mxu0 0.0
        %4985 = vmatprep.subr.mxu0 0.0
        %4986 = vmatpush1.msra.mxu0 0.0
        %4987 = vmatprep.mubr.f32.mxu0 0.0
        %v4988 = vand.u32 %v4753, 4294901760
        %v4989 = vsub.f32 %v4753, %v4988
        %4990 = vmatmul.mubr.f32.gmra.mrb[0].mxu0 %v4989
        %v4991 = vpop.f32.mrb[0].mxu0
        %v4992 = vadd.f32 %v4915, %v4991
        %v4993 = vpop.f32.mrb[0].mxu0
        %v4994 = vadd.f32 %v4917, %v4993
        %4995 = vdwg.mxu0
        %v4996 = vand.u32 %v4757, 4294901760
        %4997 = vmatprep.subr.mxu0 %v4996
        %v4998 = vand.u32 %v4755, 4294901760
        %4999 = vmatpush1.msra.mxu0 %v4998
        %5000 = vmatprep.subr.mxu0 0.0
        %5001 = vmatpush1.msra.mxu0 0.0
        %5002 = vmatprep.subr.mxu0 0.0
        %5003 = vmatpush1.msra.mxu0 0.0
        %5004 = vmatprep.subr.mxu0 0.0
        %5005 = vmatpush1.msra.mxu0 0.0
        %5006 = vmatprep.subr.mxu0 0.0
        %5007 = vmatpush1.msra.mxu0 0.0
        %5008 = vmatprep.subr.mxu0 0.0
        %5009 = vmatpush1.msra.mxu0 0.0
        %5010 = vmatprep.subr.mxu0 0.0
        %5011 = vmatpush1.msra.mxu0 0.0
        %5012 = vmatprep.subr.mxu0 0.0
        %5013 = vmatpush1.msra.mxu0 0.0
        %5014 = vmatprep.subr.mxu0 0.0
        %5015 = vmatpush1.msra.mxu0 0.0
        %5016 = vmatprep.subr.mxu0 0.0
        %5017 = vmatpush1.msra.mxu0 0.0
        %5018 = vmatprep.subr.mxu0 0.0
        %5019 = vmatpush1.msra.mxu0 0.0
        %5020 = vmatprep.subr.mxu0 0.0
        %5021 = vmatpush1.msra.mxu0 0.0
        %5022 = vmatprep.subr.mxu0 0.0
        %5023 = vmatpush1.msra.mxu0 0.0
        %5024 = vmatprep.subr.mxu0 0.0
        %5025 = vmatpush1.msra.mxu0 0.0
        %5026 = vmatprep.subr.mxu0 0.0
        %5027 = vmatpush1.msra.mxu0 0.0
        %5028 = vmatprep.subr.mxu0 0.0
        %5029 = vmatpush1.msra.mxu0 0.0
        %5030 = vmatprep.subr.mxu0 0.0
        %5031 = vmatpush1.msra.mxu0 0.0
        %5032 = vmatprep.subr.mxu0 0.0
        %5033 = vmatpush1.msra.mxu0 0.0
        %5034 = vmatprep.subr.mxu0 0.0
        %5035 = vmatpush1.msra.mxu0 0.0
        %5036 = vmatprep.subr.mxu0 0.0
        %5037 = vmatpush1.msra.mxu0 0.0
        %5038 = vmatprep.subr.mxu0 0.0
        %5039 = vmatpush1.msra.mxu0 0.0
        %5040 = vmatprep.subr.mxu0 0.0
        %5041 = vmatpush1.msra.mxu0 0.0
        %5042 = vmatprep.subr.mxu0 0.0
        %5043 = vmatpush1.msra.mxu0 0.0
        %5044 = vmatprep.subr.mxu0 0.0
        %5045 = vmatpush1.msra.mxu0 0.0
        %5046 = vmatprep.subr.mxu0 0.0
        %5047 = vmatpush1.msra.mxu0 0.0
        %5048 = vmatprep.subr.mxu0 0.0
        %5049 = vmatpush1.msra.mxu0 0.0
        %5050 = vmatprep.subr.mxu0 0.0
        %5051 = vmatpush1.msra.mxu0 0.0
        %5052 = vmatprep.subr.mxu0 0.0
        %5053 = vmatpush1.msra.mxu0 0.0
        %5054 = vmatprep.subr.mxu0 0.0
        %5055 = vmatpush1.msra.mxu0 0.0
        %5056 = vmatprep.subr.mxu0 0.0
        %5057 = vmatpush1.msra.mxu0 0.0
        %5058 = vmatprep.subr.mxu0 0.0
        %5059 = vmatpush1.msra.mxu0 0.0
        %5060 = vmatprep.subr.mxu0 0.0
        %5061 = vmatpush1.msra.mxu0 0.0
        %5062 = vmatprep.mubr.f32.mxu0 0.0
        %v5063 = vand.u32 %v4753, 4294901760
        %v5064 = vsub.f32 %v4753, %v5063
        %v5065 = vand.u32 %v5064, 4294901760
        %5066 = vmatmul.mubr.f32.gmra.mrb[0].mxu0 %v5065
        %v5067 = vpop.f32.mrb[0].mxu0
        %v5068 = vadd.f32 %v4992, %v5067
        %v5069 = vpop.f32.mrb[0].mxu0
        %v5070 = vadd.f32 %v4994, %v5069
        %5071 = vdwg.mxu0
        %v5072 = vand.u32 %v4757, 4294901760
        %v5073 = vsub.f32 %v4757, %v5072
        %v5074 = vand.u32 %v5073, 4294901760
        %5075 = vmatprep.subr.mxu0 %v5074
        %v5076 = vand.u32 %v4755, 4294901760
        %v5077 = vsub.f32 %v4755, %v5076
        %v5078 = vand.u32 %v5077, 4294901760
        %5079 = vmatpush1.msra.mxu0 %v5078
        %5080 = vmatprep.subr.mxu0 0.0
        %5081 = vmatpush1.msra.mxu0 0.0
        %5082 = vmatprep.subr.mxu0 0.0
        %5083 = vmatpush1.msra.mxu0 0.0
        %5084 = vmatprep.subr.mxu0 0.0
        %5085 = vmatpush1.msra.mxu0 0.0
        %5086 = vmatprep.subr.mxu0 0.0
        %5087 = vmatpush1.msra.mxu0 0.0
        %5088 = vmatprep.subr.mxu0 0.0
        %5089 = vmatpush1.msra.mxu0 0.0
        %5090 = vmatprep.subr.mxu0 0.0
        %5091 = vmatpush1.msra.mxu0 0.0
        %5092 = vmatprep.subr.mxu0 0.0
        %5093 = vmatpush1.msra.mxu0 0.0
        %5094 = vmatprep.subr.mxu0 0.0
        %5095 = vmatpush1.msra.mxu0 0.0
        %5096 = vmatprep.subr.mxu0 0.0
        %5097 = vmatpush1.msra.mxu0 0.0
        %5098 = vmatprep.subr.mxu0 0.0
        %5099 = vmatpush1.msra.mxu0 0.0
        %5100 = vmatprep.subr.mxu0 0.0
        %5101 = vmatpush1.msra.mxu0 0.0
        %5102 = vmatprep.subr.mxu0 0.0
        %5103 = vmatpush1.msra.mxu0 0.0
        %5104 = vmatprep.subr.mxu0 0.0
        %5105 = vmatpush1.msra.mxu0 0.0
        %5106 = vmatprep.subr.mxu0 0.0
        %5107 = vmatpush1.msra.mxu0 0.0
        %5108 = vmatprep.subr.mxu0 0.0
        %5109 = vmatpush1.msra.mxu0 0.0
        %5110 = vmatprep.subr.mxu0 0.0
        %5111 = vmatpush1.msra.mxu0 0.0
        %5112 = vmatprep.subr.mxu0 0.0
        %5113 = vmatpush1.msra.mxu0 0.0
        %5114 = vmatprep.subr.mxu0 0.0
        %5115 = vmatpush1.msra.mxu0 0.0
        %5116 = vmatprep.subr.mxu0 0.0
        %5117 = vmatpush1.msra.mxu0 0.0
        %5118 = vmatprep.subr.mxu0 0.0
        %5119 = vmatpush1.msra.mxu0 0.0
        %5120 = vmatprep.subr.mxu0 0.0
        %5121 = vmatpush1.msra.mxu0 0.0
        %5122 = vmatprep.subr.mxu0 0.0
        %5123 = vmatpush1.msra.mxu0 0.0
        %5124 = vmatprep.subr.mxu0 0.0
        %5125 = vmatpush1.msra.mxu0 0.0
        %5126 = vmatprep.subr.mxu0 0.0
        %5127 = vmatpush1.msra.mxu0 0.0
        %5128 = vmatprep.subr.mxu0 0.0
        %5129 = vmatpush1.msra.mxu0 0.0
        %5130 = vmatprep.subr.mxu0 0.0
        %5131 = vmatpush1.msra.mxu0 0.0
        %5132 = vmatprep.subr.mxu0 0.0
        %5133 = vmatpush1.msra.mxu0 0.0
        %5134 = vmatprep.subr.mxu0 0.0
        %5135 = vmatpush1.msra.mxu0 0.0
        %5136 = vmatprep.subr.mxu0 0.0
        %5137 = vmatpush1.msra.mxu0 0.0
        %5138 = vmatprep.subr.mxu0 0.0
        %5139 = vmatpush1.msra.mxu0 0.0
        %5140 = vmatprep.subr.mxu0 0.0
        %5141 = vmatpush1.msra.mxu0 0.0
        %5142 = vmatprep.mubr.f32.mxu0 0.0
        %v5143 = vand.u32 %v4753, 4294901760
        %5144 = vmatmul.mubr.f32.gmra.mrb[0].mxu0 %v5143
        %v5145 = vpop.f32.mrb[0].mxu0
        %v5146 = vadd.f32 %v5068, %v5145
        %v5147 = vpop.f32.mrb[0].mxu0
        %v5148 = vadd.f32 %v5070, %v5147
        %5149 = vdwg.mxu0
        %v5150 = vand.u32 %v4757, 4294901760
        %5151 = vmatprep.subr.mxu0 %v5150
        %v5152 = vand.u32 %v4755, 4294901760
        %5153 = vmatpush1.msra.mxu0 %v5152
        %5154 = vmatprep.subr.mxu0 0.0
        %5155 = vmatpush1.msra.mxu0 0.0
        %5156 = vmatprep.subr.mxu0 0.0
        %5157 = vmatpush1.msra.mxu0 0.0
        %5158 = vmatprep.subr.mxu0 0.0
        %5159 = vmatpush1.msra.mxu0 0.0
        %5160 = vmatprep.subr.mxu0 0.0
        %5161 = vmatpush1.msra.mxu0 0.0
        %5162 = vmatprep.subr.mxu0 0.0
        %5163 = vmatpush1.msra.mxu0 0.0
        %5164 = vmatprep.subr.mxu0 0.0
        %5165 = vmatpush1.msra.mxu0 0.0
        %5166 = vmatprep.subr.mxu0 0.0
        %5167 = vmatpush1.msra.mxu0 0.0
        %5168 = vmatprep.subr.mxu0 0.0
        %5169 = vmatpush1.msra.mxu0 0.0
        %5170 = vmatprep.subr.mxu0 0.0
        %5171 = vmatpush1.msra.mxu0 0.0
        %5172 = vmatprep.subr.mxu0 0.0
        %5173 = vmatpush1.msra.mxu0 0.0
        %5174 = vmatprep.subr.mxu0 0.0
        %5175 = vmatpush1.msra.mxu0 0.0
        %5176 = vmatprep.subr.mxu0 0.0
        %5177 = vmatpush1.msra.mxu0 0.0
        %5178 = vmatprep.subr.mxu0 0.0
        %5179 = vmatpush1.msra.mxu0 0.0
        %5180 = vmatprep.subr.mxu0 0.0
        %5181 = vmatpush1.msra.mxu0 0.0
        %5182 = vmatprep.subr.mxu0 0.0
        %5183 = vmatpush1.msra.mxu0 0.0
        %5184 = vmatprep.subr.mxu0 0.0
        %5185 = vmatpush1.msra.mxu0 0.0
        %5186 = vmatprep.subr.mxu0 0.0
        %5187 = vmatpush1.msra.mxu0 0.0
        %5188 = vmatprep.subr.mxu0 0.0
        %5189 = vmatpush1.msra.mxu0 0.0
        %5190 = vmatprep.subr.mxu0 0.0
        %5191 = vmatpush1.msra.mxu0 0.0
        %5192 = vmatprep.subr.mxu0 0.0
        %5193 = vmatpush1.msra.mxu0 0.0
        %5194 = vmatprep.subr.mxu0 0.0
        %5195 = vmatpush1.msra.mxu0 0.0
        %5196 = vmatprep.subr.mxu0 0.0
        %5197 = vmatpush1.msra.mxu0 0.0
        %5198 = vmatprep.subr.mxu0 0.0
        %5199 = vmatpush1.msra.mxu0 0.0
        %5200 = vmatprep.subr.mxu0 0.0
        %5201 = vmatpush1.msra.mxu0 0.0
        %5202 = vmatprep.subr.mxu0 0.0
        %5203 = vmatpush1.msra.mxu0 0.0
        %5204 = vmatprep.subr.mxu0 0.0
        %5205 = vmatpush1.msra.mxu0 0.0
        %5206 = vmatprep.subr.mxu0 0.0
        %5207 = vmatpush1.msra.mxu0 0.0
        %5208 = vmatprep.subr.mxu0 0.0
        %5209 = vmatpush1.msra.mxu0 0.0
        %5210 = vmatprep.subr.mxu0 0.0
        %5211 = vmatpush1.msra.mxu0 0.0
        %5212 = vmatprep.subr.mxu0 0.0
        %5213 = vmatpush1.msra.mxu0 0.0
        %5214 = vmatprep.subr.mxu0 0.0
        %5215 = vmatpush1.msra.mxu0 0.0
        %5216 = vmatprep.mubr.f32.mxu0 0.0
        %v5217 = vand.u32 %v4753, 4294901760
        %5218 = vmatmul.mubr.f32.gmra.mrb[0].mxu0 %v5217
        %v5219 = vpop.f32.mrb[0].mxu0
        %v5220 = vadd.f32 %v5146, %v5219
        %v5221 = vpop.f32.mrb[0].mxu0
        %v5222 = vadd.f32 %v5148, %v5221
        %5223 = vdwg.mxu0
        %v5224 = vadd.f32 %v4748, %v5220
        %v5225 = vadd.f32 %v4749, %v5222
        %s5226 = scalar_lea.vmem %s3, 10
        %v5227 = vld [vmem:[%s5226] sm:$0x3]
        %5228 = vrot.lane.b32.xlu0 %v325, 127
        %v5229 = vpop.permute.xlu0 %5228
        %5230 = vrot.lane.b32.xlu0 %v329, 127
        %v5231 = vpop.permute.xlu0 %5230
        %vm5232 = vcmp.lt.s32.totalorder %v336, 127
        %v5233 = vsel %vm5232, %v5229, %v5231
        %v5234 = vsel %vm5232, %v5231, %v5229
        %v5236 = vlaneseq
        %v5237 = vshrl.u32 %v5236, 7
        %v5238 = vsub.s32 0, %v5237
        %v5239 = vrot.slane %v5227, %v5238
        %v5240 = vlaneseq
        %v5241 = vshrl.u32 %v5240, 7
        %v5242 = vsub.s32 1, %v5241
        %v5243 = vrot.slane %v5227, %v5242
        %v5246 = vmul.f32 %v5233, %v5239
        %v5247 = vmul.f32 %v5234, %v5243
        %5248 = vrot.lane.b32.xlu0 %v326, 127
        %v5249 = vpop.permute.xlu0 %5248
        %5250 = vrot.lane.b32.xlu0 %v354, 127
        %v5251 = vpop.permute.xlu0 %5250
        %v5252 = vsel %vm5232, %v5249, %v5251
        %v5253 = vsel %vm5232, %v5251, %v5249
        %v5254 = vmul.f32 %v5252, %v5239
        %v5255 = vmul.f32 %v5253, %v5243
        %s5256 = scalar_lea.vmem %s1, 20
        %v5257 = vld [vmem:[%s5256] sm:$0xf]
        %v5259 = vsel %vm366, %v5257, 0
        %v5262 = vsel %vm370, %v5246, 0
        %v5265 = vsel %vm370, %v5247, 0
        %v5267 = vand.u32 %v5265, 4294901760
        %5268 = vmatprep.subr.mxu0 %v5267
        %v5269 = vand.u32 %v5262, 4294901760
        %5270 = vmatpush1.msra.mxu0 %v5269
        %5271 = vmatprep.subr.mxu0 0.0
        %5272 = vmatpush1.msra.mxu0 0.0
        %5273 = vmatprep.subr.mxu0 0.0
        %5274 = vmatpush1.msra.mxu0 0.0
        %5275 = vmatprep.subr.mxu0 0.0
        %5276 = vmatpush1.msra.mxu0 0.0
        %5277 = vmatprep.subr.mxu0 0.0
        %5278 = vmatpush1.msra.mxu0 0.0
        %5279 = vmatprep.subr.mxu0 0.0
        %5280 = vmatpush1.msra.mxu0 0.0
        %5281 = vmatprep.subr.mxu0 0.0
        %5282 = vmatpush1.msra.mxu0 0.0
        %5283 = vmatprep.subr.mxu0 0.0
        %5284 = vmatpush1.msra.mxu0 0.0
        %5285 = vmatprep.subr.mxu0 0.0
        %5286 = vmatpush1.msra.mxu0 0.0
        %5287 = vmatprep.subr.mxu0 0.0
        %5288 = vmatpush1.msra.mxu0 0.0
        %5289 = vmatprep.subr.mxu0 0.0
        %5290 = vmatpush1.msra.mxu0 0.0
        %5291 = vmatprep.subr.mxu0 0.0
        %5292 = vmatpush1.msra.mxu0 0.0
        %5293 = vmatprep.subr.mxu0 0.0
        %5294 = vmatpush1.msra.mxu0 0.0
        %5295 = vmatprep.subr.mxu0 0.0
        %5296 = vmatpush1.msra.mxu0 0.0
        %5297 = vmatprep.subr.mxu0 0.0
        %5298 = vmatpush1.msra.mxu0 0.0
        %5299 = vmatprep.subr.mxu0 0.0
        %5300 = vmatpush1.msra.mxu0 0.0
        %5301 = vmatprep.subr.mxu0 0.0
        %5302 = vmatpush1.msra.mxu0 0.0
        %5303 = vmatprep.subr.mxu0 0.0
        %5304 = vmatpush1.msra.mxu0 0.0
        %5305 = vmatprep.subr.mxu0 0.0
        %5306 = vmatpush1.msra.mxu0 0.0
        %5307 = vmatprep.subr.mxu0 0.0
        %5308 = vmatpush1.msra.mxu0 0.0
        %5309 = vmatprep.subr.mxu0 0.0
        %5310 = vmatpush1.msra.mxu0 0.0
        %5311 = vmatprep.subr.mxu0 0.0
        %5312 = vmatpush1.msra.mxu0 0.0
        %5313 = vmatprep.subr.mxu0 0.0
        %5314 = vmatpush1.msra.mxu0 0.0
        %5315 = vmatprep.subr.mxu0 0.0
        %5316 = vmatpush1.msra.mxu0 0.0
        %5317 = vmatprep.subr.mxu0 0.0
        %5318 = vmatpush1.msra.mxu0 0.0
        %5319 = vmatprep.subr.mxu0 0.0
        %5320 = vmatpush1.msra.mxu0 0.0
        %5321 = vmatprep.subr.mxu0 0.0
        %5322 = vmatpush1.msra.mxu0 0.0
        %5323 = vmatprep.subr.mxu0 0.0
        %5324 = vmatpush1.msra.mxu0 0.0
        %5325 = vmatprep.subr.mxu0 0.0
        %5326 = vmatpush1.msra.mxu0 0.0
        %5327 = vmatprep.subr.mxu0 0.0
        %5328 = vmatpush1.msra.mxu0 0.0
        %5329 = vmatprep.subr.mxu0 0.0
        %5330 = vmatpush1.msra.mxu0 0.0
        %5331 = vmatprep.subr.mxu0 0.0
        %5332 = vmatpush1.msra.mxu0 0.0
        %5333 = vmatprep.mubr.f32.mxu0 0.0
        %v5334 = vand.u32 %v5259, 4294901760
        %v5335 = vsub.f32 %v5259, %v5334
        %v5336 = vand.u32 %v5335, 4294901760
        %v5337 = vsub.f32 %v5335, %v5336
        %v5338 = vand.u32 %v5337, 4294901760
        %5339 = vmatmul.mubr.f32.gmra.mrb[0].mxu0 %v5338
        %v5340 = vpop.f32.mrb[0].mxu0
        %v5341 = vadd.f32 0.0, %v5340
        %v5342 = vpop.f32.mrb[0].mxu0
        %v5343 = vadd.f32 0.0, %v5342
        %5344 = vdwg.mxu0
        %v5345 = vand.u32 %v5265, 4294901760
        %v5346 = vsub.f32 %v5265, %v5345
        %v5347 = vand.u32 %v5346, 4294901760
        %v5348 = vsub.f32 %v5346, %v5347
        %v5349 = vand.u32 %v5348, 4294901760
        %5350 = vmatprep.subr.mxu0 %v5349
        %v5351 = vand.u32 %v5262, 4294901760
        %v5352 = vsub.f32 %v5262, %v5351
        %v5353 = vand.u32 %v5352, 4294901760
        %v5354 = vsub.f32 %v5352, %v5353
        %v5355 = vand.u32 %v5354, 4294901760
        %5356 = vmatpush1.msra.mxu0 %v5355
        %5357 = vmatprep.subr.mxu0 0.0
        %5358 = vmatpush1.msra.mxu0 0.0
        %5359 = vmatprep.subr.mxu0 0.0
        %5360 = vmatpush1.msra.mxu0 0.0
        %5361 = vmatprep.subr.mxu0 0.0
        %5362 = vmatpush1.msra.mxu0 0.0
        %5363 = vmatprep.subr.mxu0 0.0
        %5364 = vmatpush1.msra.mxu0 0.0
        %5365 = vmatprep.subr.mxu0 0.0
        %5366 = vmatpush1.msra.mxu0 0.0
        %5367 = vmatprep.subr.mxu0 0.0
        %5368 = vmatpush1.msra.mxu0 0.0
        %5369 = vmatprep.subr.mxu0 0.0
        %5370 = vmatpush1.msra.mxu0 0.0
        %5371 = vmatprep.subr.mxu0 0.0
        %5372 = vmatpush1.msra.mxu0 0.0
        %5373 = vmatprep.subr.mxu0 0.0
        %5374 = vmatpush1.msra.mxu0 0.0
        %5375 = vmatprep.subr.mxu0 0.0
        %5376 = vmatpush1.msra.mxu0 0.0
        %5377 = vmatprep.subr.mxu0 0.0
        %5378 = vmatpush1.msra.mxu0 0.0
        %5379 = vmatprep.subr.mxu0 0.0
        %5380 = vmatpush1.msra.mxu0 0.0
        %5381 = vmatprep.subr.mxu0 0.0
        %5382 = vmatpush1.msra.mxu0 0.0
        %5383 = vmatprep.subr.mxu0 0.0
        %5384 = vmatpush1.msra.mxu0 0.0
        %5385 = vmatprep.subr.mxu0 0.0
        %5386 = vmatpush1.msra.mxu0 0.0
        %5387 = vmatprep.subr.mxu0 0.0
        %5388 = vmatpush1.msra.mxu0 0.0
        %5389 = vmatprep.subr.mxu0 0.0
        %5390 = vmatpush1.msra.mxu0 0.0
        %5391 = vmatprep.subr.mxu0 0.0
        %5392 = vmatpush1.msra.mxu0 0.0
        %5393 = vmatprep.subr.mxu0 0.0
        %5394 = vmatpush1.msra.mxu0 0.0
        %5395 = vmatprep.subr.mxu0 0.0
        %5396 = vmatpush1.msra.mxu0 0.0
        %5397 = vmatprep.subr.mxu0 0.0
        %5398 = vmatpush1.msra.mxu0 0.0
        %5399 = vmatprep.subr.mxu0 0.0
        %5400 = vmatpush1.msra.mxu0 0.0
        %5401 = vmatprep.subr.mxu0 0.0
        %5402 = vmatpush1.msra.mxu0 0.0
        %5403 = vmatprep.subr.mxu0 0.0
        %5404 = vmatpush1.msra.mxu0 0.0
        %5405 = vmatprep.subr.mxu0 0.0
        %5406 = vmatpush1.msra.mxu0 0.0
        %5407 = vmatprep.subr.mxu0 0.0
        %5408 = vmatpush1.msra.mxu0 0.0
        %5409 = vmatprep.subr.mxu0 0.0
        %5410 = vmatpush1.msra.mxu0 0.0
        %5411 = vmatprep.subr.mxu0 0.0
        %5412 = vmatpush1.msra.mxu0 0.0
        %5413 = vmatprep.subr.mxu0 0.0
        %5414 = vmatpush1.msra.mxu0 0.0
        %5415 = vmatprep.subr.mxu0 0.0
        %5416 = vmatpush1.msra.mxu0 0.0
        %5417 = vmatprep.subr.mxu0 0.0
        %5418 = vmatpush1.msra.mxu0 0.0
        %5419 = vmatprep.mubr.f32.mxu0 0.0
        %v5420 = vand.u32 %v5259, 4294901760
        %5421 = vmatmul.mubr.f32.gmra.mrb[0].mxu0 %v5420
        %v5422 = vpop.f32.mrb[0].mxu0
        %v5423 = vadd.f32 %v5341, %v5422
        %v5424 = vpop.f32.mrb[0].mxu0
        %v5425 = vadd.f32 %v5343, %v5424
        %5426 = vdwg.mxu0
        %v5427 = vand.u32 %v5265, 4294901760
        %v5428 = vsub.f32 %v5265, %v5427
        %5429 = vmatprep.subr.mxu0 %v5428
        %v5430 = vand.u32 %v5262, 4294901760
        %v5431 = vsub.f32 %v5262, %v5430
        %5432 = vmatpush1.msra.mxu0 %v5431
        %5433 = vmatprep.subr.mxu0 0.0
        %5434 = vmatpush1.msra.mxu0 0.0
        %5435 = vmatprep.subr.mxu0 0.0
        %5436 = vmatpush1.msra.mxu0 0.0
        %5437 = vmatprep.subr.mxu0 0.0
        %5438 = vmatpush1.msra.mxu0 0.0
        %5439 = vmatprep.subr.mxu0 0.0
        %5440 = vmatpush1.msra.mxu0 0.0
        %5441 = vmatprep.subr.mxu0 0.0
        %5442 = vmatpush1.msra.mxu0 0.0
        %5443 = vmatprep.subr.mxu0 0.0
        %5444 = vmatpush1.msra.mxu0 0.0
        %5445 = vmatprep.subr.mxu0 0.0
        %5446 = vmatpush1.msra.mxu0 0.0
        %5447 = vmatprep.subr.mxu0 0.0
        %5448 = vmatpush1.msra.mxu0 0.0
        %5449 = vmatprep.subr.mxu0 0.0
        %5450 = vmatpush1.msra.mxu0 0.0
        %5451 = vmatprep.subr.mxu0 0.0
        %5452 = vmatpush1.msra.mxu0 0.0
        %5453 = vmatprep.subr.mxu0 0.0
        %5454 = vmatpush1.msra.mxu0 0.0
        %5455 = vmatprep.subr.mxu0 0.0
        %5456 = vmatpush1.msra.mxu0 0.0
        %5457 = vmatprep.subr.mxu0 0.0
        %5458 = vmatpush1.msra.mxu0 0.0
        %5459 = vmatprep.subr.mxu0 0.0
        %5460 = vmatpush1.msra.mxu0 0.0
        %5461 = vmatprep.subr.mxu0 0.0
        %5462 = vmatpush1.msra.mxu0 0.0
        %5463 = vmatprep.subr.mxu0 0.0
        %5464 = vmatpush1.msra.mxu0 0.0
        %5465 = vmatprep.subr.mxu0 0.0
        %5466 = vmatpush1.msra.mxu0 0.0
        %5467 = vmatprep.subr.mxu0 0.0
        %5468 = vmatpush1.msra.mxu0 0.0
        %5469 = vmatprep.subr.mxu0 0.0
        %5470 = vmatpush1.msra.mxu0 0.0
        %5471 = vmatprep.subr.mxu0 0.0
        %5472 = vmatpush1.msra.mxu0 0.0
        %5473 = vmatprep.subr.mxu0 0.0
        %5474 = vmatpush1.msra.mxu0 0.0
        %5475 = vmatprep.subr.mxu0 0.0
        %5476 = vmatpush1.msra.mxu0 0.0
        %5477 = vmatprep.subr.mxu0 0.0
        %5478 = vmatpush1.msra.mxu0 0.0
        %5479 = vmatprep.subr.mxu0 0.0
        %5480 = vmatpush1.msra.mxu0 0.0
        %5481 = vmatprep.subr.mxu0 0.0
        %5482 = vmatpush1.msra.mxu0 0.0
        %5483 = vmatprep.subr.mxu0 0.0
        %5484 = vmatpush1.msra.mxu0 0.0
        %5485 = vmatprep.subr.mxu0 0.0
        %5486 = vmatpush1.msra.mxu0 0.0
        %5487 = vmatprep.subr.mxu0 0.0
        %5488 = vmatpush1.msra.mxu0 0.0
        %5489 = vmatprep.subr.mxu0 0.0
        %5490 = vmatpush1.msra.mxu0 0.0
        %5491 = vmatprep.subr.mxu0 0.0
        %5492 = vmatpush1.msra.mxu0 0.0
        %5493 = vmatprep.subr.mxu0 0.0
        %5494 = vmatpush1.msra.mxu0 0.0
        %5495 = vmatprep.mubr.f32.mxu0 0.0
        %v5496 = vand.u32 %v5259, 4294901760
        %v5497 = vsub.f32 %v5259, %v5496
        %5498 = vmatmul.mubr.f32.gmra.mrb[0].mxu0 %v5497
        %v5499 = vpop.f32.mrb[0].mxu0
        %v5500 = vadd.f32 %v5423, %v5499
        %v5501 = vpop.f32.mrb[0].mxu0
        %v5502 = vadd.f32 %v5425, %v5501
        %5503 = vdwg.mxu0
        %v5504 = vand.u32 %v5265, 4294901760
        %5505 = vmatprep.subr.mxu0 %v5504
        %v5506 = vand.u32 %v5262, 4294901760
        %5507 = vmatpush1.msra.mxu0 %v5506
        %5508 = vmatprep.subr.mxu0 0.0
        %5509 = vmatpush1.msra.mxu0 0.0
        %5510 = vmatprep.subr.mxu0 0.0
        %5511 = vmatpush1.msra.mxu0 0.0
        %5512 = vmatprep.subr.mxu0 0.0
        %5513 = vmatpush1.msra.mxu0 0.0
        %5514 = vmatprep.subr.mxu0 0.0
        %5515 = vmatpush1.msra.mxu0 0.0
        %5516 = vmatprep.subr.mxu0 0.0
        %5517 = vmatpush1.msra.mxu0 0.0
        %5518 = vmatprep.subr.mxu0 0.0
        %5519 = vmatpush1.msra.mxu0 0.0
        %5520 = vmatprep.subr.mxu0 0.0
        %5521 = vmatpush1.msra.mxu0 0.0
        %5522 = vmatprep.subr.mxu0 0.0
        %5523 = vmatpush1.msra.mxu0 0.0
        %5524 = vmatprep.subr.mxu0 0.0
        %5525 = vmatpush1.msra.mxu0 0.0
        %5526 = vmatprep.subr.mxu0 0.0
        %5527 = vmatpush1.msra.mxu0 0.0
        %5528 = vmatprep.subr.mxu0 0.0
        %5529 = vmatpush1.msra.mxu0 0.0
        %5530 = vmatprep.subr.mxu0 0.0
        %5531 = vmatpush1.msra.mxu0 0.0
        %5532 = vmatprep.subr.mxu0 0.0
        %5533 = vmatpush1.msra.mxu0 0.0
        %5534 = vmatprep.subr.mxu0 0.0
        %5535 = vmatpush1.msra.mxu0 0.0
        %5536 = vmatprep.subr.mxu0 0.0
        %5537 = vmatpush1.msra.mxu0 0.0
        %5538 = vmatprep.subr.mxu0 0.0
        %5539 = vmatpush1.msra.mxu0 0.0
        %5540 = vmatprep.subr.mxu0 0.0
        %5541 = vmatpush1.msra.mxu0 0.0
        %5542 = vmatprep.subr.mxu0 0.0
        %5543 = vmatpush1.msra.mxu0 0.0
        %5544 = vmatprep.subr.mxu0 0.0
        %5545 = vmatpush1.msra.mxu0 0.0
        %5546 = vmatprep.subr.mxu0 0.0
        %5547 = vmatpush1.msra.mxu0 0.0
        %5548 = vmatprep.subr.mxu0 0.0
        %5549 = vmatpush1.msra.mxu0 0.0
        %5550 = vmatprep.subr.mxu0 0.0
        %5551 = vmatpush1.msra.mxu0 0.0
        %5552 = vmatprep.subr.mxu0 0.0
        %5553 = vmatpush1.msra.mxu0 0.0
        %5554 = vmatprep.subr.mxu0 0.0
        %5555 = vmatpush1.msra.mxu0 0.0
        %5556 = vmatprep.subr.mxu0 0.0
        %5557 = vmatpush1.msra.mxu0 0.0
        %5558 = vmatprep.subr.mxu0 0.0
        %5559 = vmatpush1.msra.mxu0 0.0
        %5560 = vmatprep.subr.mxu0 0.0
        %5561 = vmatpush1.msra.mxu0 0.0
        %5562 = vmatprep.subr.mxu0 0.0
        %5563 = vmatpush1.msra.mxu0 0.0
        %5564 = vmatprep.subr.mxu0 0.0
        %5565 = vmatpush1.msra.mxu0 0.0
        %5566 = vmatprep.subr.mxu0 0.0
        %5567 = vmatpush1.msra.mxu0 0.0
        %5568 = vmatprep.subr.mxu0 0.0
        %5569 = vmatpush1.msra.mxu0 0.0
        %5570 = vmatprep.mubr.f32.mxu0 0.0
        %v5571 = vand.u32 %v5259, 4294901760
        %v5572 = vsub.f32 %v5259, %v5571
        %v5573 = vand.u32 %v5572, 4294901760
        %5574 = vmatmul.mubr.f32.gmra.mrb[0].mxu0 %v5573
        %v5575 = vpop.f32.mrb[0].mxu0
        %v5576 = vadd.f32 %v5500, %v5575
        %v5577 = vpop.f32.mrb[0].mxu0
        %v5578 = vadd.f32 %v5502, %v5577
        %5579 = vdwg.mxu0
        %v5580 = vand.u32 %v5265, 4294901760
        %v5581 = vsub.f32 %v5265, %v5580
        %v5582 = vand.u32 %v5581, 4294901760
        %5583 = vmatprep.subr.mxu0 %v5582
        %v5584 = vand.u32 %v5262, 4294901760
        %v5585 = vsub.f32 %v5262, %v5584
        %v5586 = vand.u32 %v5585, 4294901760
        %5587 = vmatpush1.msra.mxu0 %v5586
        %5588 = vmatprep.subr.mxu0 0.0
        %5589 = vmatpush1.msra.mxu0 0.0
        %5590 = vmatprep.subr.mxu0 0.0
        %5591 = vmatpush1.msra.mxu0 0.0
        %5592 = vmatprep.subr.mxu0 0.0
        %5593 = vmatpush1.msra.mxu0 0.0
        %5594 = vmatprep.subr.mxu0 0.0
        %5595 = vmatpush1.msra.mxu0 0.0
        %5596 = vmatprep.subr.mxu0 0.0
        %5597 = vmatpush1.msra.mxu0 0.0
        %5598 = vmatprep.subr.mxu0 0.0
        %5599 = vmatpush1.msra.mxu0 0.0
        %5600 = vmatprep.subr.mxu0 0.0
        %5601 = vmatpush1.msra.mxu0 0.0
        %5602 = vmatprep.subr.mxu0 0.0
        %5603 = vmatpush1.msra.mxu0 0.0
        %5604 = vmatprep.subr.mxu0 0.0
        %5605 = vmatpush1.msra.mxu0 0.0
        %5606 = vmatprep.subr.mxu0 0.0
        %5607 = vmatpush1.msra.mxu0 0.0
        %5608 = vmatprep.subr.mxu0 0.0
        %5609 = vmatpush1.msra.mxu0 0.0
        %5610 = vmatprep.subr.mxu0 0.0
        %5611 = vmatpush1.msra.mxu0 0.0
        %5612 = vmatprep.subr.mxu0 0.0
        %5613 = vmatpush1.msra.mxu0 0.0
        %5614 = vmatprep.subr.mxu0 0.0
        %5615 = vmatpush1.msra.mxu0 0.0
        %5616 = vmatprep.subr.mxu0 0.0
        %5617 = vmatpush1.msra.mxu0 0.0
        %5618 = vmatprep.subr.mxu0 0.0
        %5619 = vmatpush1.msra.mxu0 0.0
        %5620 = vmatprep.subr.mxu0 0.0
        %5621 = vmatpush1.msra.mxu0 0.0
        %5622 = vmatprep.subr.mxu0 0.0
        %5623 = vmatpush1.msra.mxu0 0.0
        %5624 = vmatprep.subr.mxu0 0.0
        %5625 = vmatpush1.msra.mxu0 0.0
        %5626 = vmatprep.subr.mxu0 0.0
        %5627 = vmatpush1.msra.mxu0 0.0
        %5628 = vmatprep.subr.mxu0 0.0
        %5629 = vmatpush1.msra.mxu0 0.0
        %5630 = vmatprep.subr.mxu0 0.0
        %5631 = vmatpush1.msra.mxu0 0.0
        %5632 = vmatprep.subr.mxu0 0.0
        %5633 = vmatpush1.msra.mxu0 0.0
        %5634 = vmatprep.subr.mxu0 0.0
        %5635 = vmatpush1.msra.mxu0 0.0
        %5636 = vmatprep.subr.mxu0 0.0
        %5637 = vmatpush1.msra.mxu0 0.0
        %5638 = vmatprep.subr.mxu0 0.0
        %5639 = vmatpush1.msra.mxu0 0.0
        %5640 = vmatprep.subr.mxu0 0.0
        %5641 = vmatpush1.msra.mxu0 0.0
        %5642 = vmatprep.subr.mxu0 0.0
        %5643 = vmatpush1.msra.mxu0 0.0
        %5644 = vmatprep.subr.mxu0 0.0
        %5645 = vmatpush1.msra.mxu0 0.0
        %5646 = vmatprep.subr.mxu0 0.0
        %5647 = vmatpush1.msra.mxu0 0.0
        %5648 = vmatprep.subr.mxu0 0.0
        %5649 = vmatpush1.msra.mxu0 0.0
        %5650 = vmatprep.mubr.f32.mxu0 0.0
        %v5651 = vand.u32 %v5259, 4294901760
        %5652 = vmatmul.mubr.f32.gmra.mrb[0].mxu0 %v5651
        %v5653 = vpop.f32.mrb[0].mxu0
        %v5654 = vadd.f32 %v5576, %v5653
        %v5655 = vpop.f32.mrb[0].mxu0
        %v5656 = vadd.f32 %v5578, %v5655
        %5657 = vdwg.mxu0
        %v5658 = vand.u32 %v5265, 4294901760
        %5659 = vmatprep.subr.mxu0 %v5658
        %v5660 = vand.u32 %v5262, 4294901760
        %5661 = vmatpush1.msra.mxu0 %v5660
        %5662 = vmatprep.subr.mxu0 0.0
        %5663 = vmatpush1.msra.mxu0 0.0
        %5664 = vmatprep.subr.mxu0 0.0
        %5665 = vmatpush1.msra.mxu0 0.0
        %5666 = vmatprep.subr.mxu0 0.0
        %5667 = vmatpush1.msra.mxu0 0.0
        %5668 = vmatprep.subr.mxu0 0.0
        %5669 = vmatpush1.msra.mxu0 0.0
        %5670 = vmatprep.subr.mxu0 0.0
        %5671 = vmatpush1.msra.mxu0 0.0
        %5672 = vmatprep.subr.mxu0 0.0
        %5673 = vmatpush1.msra.mxu0 0.0
        %5674 = vmatprep.subr.mxu0 0.0
        %5675 = vmatpush1.msra.mxu0 0.0
        %5676 = vmatprep.subr.mxu0 0.0
        %5677 = vmatpush1.msra.mxu0 0.0
        %5678 = vmatprep.subr.mxu0 0.0
        %5679 = vmatpush1.msra.mxu0 0.0
        %5680 = vmatprep.subr.mxu0 0.0
        %5681 = vmatpush1.msra.mxu0 0.0
        %5682 = vmatprep.subr.mxu0 0.0
        %5683 = vmatpush1.msra.mxu0 0.0
        %5684 = vmatprep.subr.mxu0 0.0
        %5685 = vmatpush1.msra.mxu0 0.0
        %5686 = vmatprep.subr.mxu0 0.0
        %5687 = vmatpush1.msra.mxu0 0.0
        %5688 = vmatprep.subr.mxu0 0.0
        %5689 = vmatpush1.msra.mxu0 0.0
        %5690 = vmatprep.subr.mxu0 0.0
        %5691 = vmatpush1.msra.mxu0 0.0
        %5692 = vmatprep.subr.mxu0 0.0
        %5693 = vmatpush1.msra.mxu0 0.0
        %5694 = vmatprep.subr.mxu0 0.0
        %5695 = vmatpush1.msra.mxu0 0.0
        %5696 = vmatprep.subr.mxu0 0.0
        %5697 = vmatpush1.msra.mxu0 0.0
        %5698 = vmatprep.subr.mxu0 0.0
        %5699 = vmatpush1.msra.mxu0 0.0
        %5700 = vmatprep.subr.mxu0 0.0
        %5701 = vmatpush1.msra.mxu0 0.0
        %5702 = vmatprep.subr.mxu0 0.0
        %5703 = vmatpush1.msra.mxu0 0.0
        %5704 = vmatprep.subr.mxu0 0.0
        %5705 = vmatpush1.msra.mxu0 0.0
        %5706 = vmatprep.subr.mxu0 0.0
        %5707 = vmatpush1.msra.mxu0 0.0
        %5708 = vmatprep.subr.mxu0 0.0
        %5709 = vmatpush1.msra.mxu0 0.0
        %5710 = vmatprep.subr.mxu0 0.0
        %5711 = vmatpush1.msra.mxu0 0.0
        %5712 = vmatprep.subr.mxu0 0.0
        %5713 = vmatpush1.msra.mxu0 0.0
        %5714 = vmatprep.subr.mxu0 0.0
        %5715 = vmatpush1.msra.mxu0 0.0
        %5716 = vmatprep.subr.mxu0 0.0
        %5717 = vmatpush1.msra.mxu0 0.0
        %5718 = vmatprep.subr.mxu0 0.0
        %5719 = vmatpush1.msra.mxu0 0.0
        %5720 = vmatprep.subr.mxu0 0.0
        %5721 = vmatpush1.msra.mxu0 0.0
        %5722 = vmatprep.subr.mxu0 0.0
        %5723 = vmatpush1.msra.mxu0 0.0
        %5724 = vmatprep.mubr.f32.mxu0 0.0
        %v5725 = vand.u32 %v5259, 4294901760
        %5726 = vmatmul.mubr.f32.gmra.mrb[0].mxu0 %v5725
        %v5727 = vpop.f32.mrb[0].mxu0
        %v5728 = vadd.f32 %v5654, %v5727
        %v5729 = vpop.f32.mrb[0].mxu0
        %v5730 = vadd.f32 %v5656, %v5729
        %5731 = vdwg.mxu0
        %v5732 = vadd.f32 %v5224, %v5728
        %v5733 = vadd.f32 %v5225, %v5730
        %s5734 = scalar_lea.vmem %s2, 20
        %v5735 = vld [vmem:[%s5734] sm:$0xf]
        %v5737 = vsel %vm366, %v5735, 0
        %v5740 = vsel %vm370, %v5254, 0
        %v5743 = vsel %vm370, %v5255, 0
        %v5745 = vand.u32 %v5743, 4294901760
        %5746 = vmatprep.subr.mxu0 %v5745
        %v5747 = vand.u32 %v5740, 4294901760
        %5748 = vmatpush1.msra.mxu0 %v5747
        %5749 = vmatprep.subr.mxu0 0.0
        %5750 = vmatpush1.msra.mxu0 0.0
        %5751 = vmatprep.subr.mxu0 0.0
        %5752 = vmatpush1.msra.mxu0 0.0
        %5753 = vmatprep.subr.mxu0 0.0
        %5754 = vmatpush1.msra.mxu0 0.0
        %5755 = vmatprep.subr.mxu0 0.0
        %5756 = vmatpush1.msra.mxu0 0.0
        %5757 = vmatprep.subr.mxu0 0.0
        %5758 = vmatpush1.msra.mxu0 0.0
        %5759 = vmatprep.subr.mxu0 0.0
        %5760 = vmatpush1.msra.mxu0 0.0
        %5761 = vmatprep.subr.mxu0 0.0
        %5762 = vmatpush1.msra.mxu0 0.0
        %5763 = vmatprep.subr.mxu0 0.0
        %5764 = vmatpush1.msra.mxu0 0.0
        %5765 = vmatprep.subr.mxu0 0.0
        %5766 = vmatpush1.msra.mxu0 0.0
        %5767 = vmatprep.subr.mxu0 0.0
        %5768 = vmatpush1.msra.mxu0 0.0
        %5769 = vmatprep.subr.mxu0 0.0
        %5770 = vmatpush1.msra.mxu0 0.0
        %5771 = vmatprep.subr.mxu0 0.0
        %5772 = vmatpush1.msra.mxu0 0.0
        %5773 = vmatprep.subr.mxu0 0.0
        %5774 = vmatpush1.msra.mxu0 0.0
        %5775 = vmatprep.subr.mxu0 0.0
        %5776 = vmatpush1.msra.mxu0 0.0
        %5777 = vmatprep.subr.mxu0 0.0
        %5778 = vmatpush1.msra.mxu0 0.0
        %5779 = vmatprep.subr.mxu0 0.0
        %5780 = vmatpush1.msra.mxu0 0.0
        %5781 = vmatprep.subr.mxu0 0.0
        %5782 = vmatpush1.msra.mxu0 0.0
        %5783 = vmatprep.subr.mxu0 0.0
        %5784 = vmatpush1.msra.mxu0 0.0
        %5785 = vmatprep.subr.mxu0 0.0
        %5786 = vmatpush1.msra.mxu0 0.0
        %5787 = vmatprep.subr.mxu0 0.0
        %5788 = vmatpush1.msra.mxu0 0.0
        %5789 = vmatprep.subr.mxu0 0.0
        %5790 = vmatpush1.msra.mxu0 0.0
        %5791 = vmatprep.subr.mxu0 0.0
        %5792 = vmatpush1.msra.mxu0 0.0
        %5793 = vmatprep.subr.mxu0 0.0
        %5794 = vmatpush1.msra.mxu0 0.0
        %5795 = vmatprep.subr.mxu0 0.0
        %5796 = vmatpush1.msra.mxu0 0.0
        %5797 = vmatprep.subr.mxu0 0.0
        %5798 = vmatpush1.msra.mxu0 0.0
        %5799 = vmatprep.subr.mxu0 0.0
        %5800 = vmatpush1.msra.mxu0 0.0
        %5801 = vmatprep.subr.mxu0 0.0
        %5802 = vmatpush1.msra.mxu0 0.0
        %5803 = vmatprep.subr.mxu0 0.0
        %5804 = vmatpush1.msra.mxu0 0.0
        %5805 = vmatprep.subr.mxu0 0.0
        %5806 = vmatpush1.msra.mxu0 0.0
        %5807 = vmatprep.subr.mxu0 0.0
        %5808 = vmatpush1.msra.mxu0 0.0
        %5809 = vmatprep.subr.mxu0 0.0
        %5810 = vmatpush1.msra.mxu0 0.0
        %5811 = vmatprep.mubr.f32.mxu0 0.0
        %v5812 = vand.u32 %v5737, 4294901760
        %v5813 = vsub.f32 %v5737, %v5812
        %v5814 = vand.u32 %v5813, 4294901760
        %v5815 = vsub.f32 %v5813, %v5814
        %v5816 = vand.u32 %v5815, 4294901760
        %5817 = vmatmul.mubr.f32.gmra.mrb[0].mxu0 %v5816
        %v5818 = vpop.f32.mrb[0].mxu0
        %v5819 = vadd.f32 0.0, %v5818
        %v5820 = vpop.f32.mrb[0].mxu0
        %v5821 = vadd.f32 0.0, %v5820
        %5822 = vdwg.mxu0
        %v5823 = vand.u32 %v5743, 4294901760
        %v5824 = vsub.f32 %v5743, %v5823
        %v5825 = vand.u32 %v5824, 4294901760
        %v5826 = vsub.f32 %v5824, %v5825
        %v5827 = vand.u32 %v5826, 4294901760
        %5828 = vmatprep.subr.mxu0 %v5827
        %v5829 = vand.u32 %v5740, 4294901760
        %v5830 = vsub.f32 %v5740, %v5829
        %v5831 = vand.u32 %v5830, 4294901760
        %v5832 = vsub.f32 %v5830, %v5831
        %v5833 = vand.u32 %v5832, 4294901760
        %5834 = vmatpush1.msra.mxu0 %v5833
        %5835 = vmatprep.subr.mxu0 0.0
        %5836 = vmatpush1.msra.mxu0 0.0
        %5837 = vmatprep.subr.mxu0 0.0
        %5838 = vmatpush1.msra.mxu0 0.0
        %5839 = vmatprep.subr.mxu0 0.0
        %5840 = vmatpush1.msra.mxu0 0.0
        %5841 = vmatprep.subr.mxu0 0.0
        %5842 = vmatpush1.msra.mxu0 0.0
        %5843 = vmatprep.subr.mxu0 0.0
        %5844 = vmatpush1.msra.mxu0 0.0
        %5845 = vmatprep.subr.mxu0 0.0
        %5846 = vmatpush1.msra.mxu0 0.0
        %5847 = vmatprep.subr.mxu0 0.0
        %5848 = vmatpush1.msra.mxu0 0.0
        %5849 = vmatprep.subr.mxu0 0.0
        %5850 = vmatpush1.msra.mxu0 0.0
        %5851 = vmatprep.subr.mxu0 0.0
        %5852 = vmatpush1.msra.mxu0 0.0
        %5853 = vmatprep.subr.mxu0 0.0
        %5854 = vmatpush1.msra.mxu0 0.0
        %5855 = vmatprep.subr.mxu0 0.0
        %5856 = vmatpush1.msra.mxu0 0.0
        %5857 = vmatprep.subr.mxu0 0.0
        %5858 = vmatpush1.msra.mxu0 0.0
        %5859 = vmatprep.subr.mxu0 0.0
        %5860 = vmatpush1.msra.mxu0 0.0
        %5861 = vmatprep.subr.mxu0 0.0
        %5862 = vmatpush1.msra.mxu0 0.0
        %5863 = vmatprep.subr.mxu0 0.0
        %5864 = vmatpush1.msra.mxu0 0.0
        %5865 = vmatprep.subr.mxu0 0.0
        %5866 = vmatpush1.msra.mxu0 0.0
        %5867 = vmatprep.subr.mxu0 0.0
        %5868 = vmatpush1.msra.mxu0 0.0
        %5869 = vmatprep.subr.mxu0 0.0
        %5870 = vmatpush1.msra.mxu0 0.0
        %5871 = vmatprep.subr.mxu0 0.0
        %5872 = vmatpush1.msra.mxu0 0.0
        %5873 = vmatprep.subr.mxu0 0.0
        %5874 = vmatpush1.msra.mxu0 0.0
        %5875 = vmatprep.subr.mxu0 0.0
        %5876 = vmatpush1.msra.mxu0 0.0
        %5877 = vmatprep.subr.mxu0 0.0
        %5878 = vmatpush1.msra.mxu0 0.0
        %5879 = vmatprep.subr.mxu0 0.0
        %5880 = vmatpush1.msra.mxu0 0.0
        %5881 = vmatprep.subr.mxu0 0.0
        %5882 = vmatpush1.msra.mxu0 0.0
        %5883 = vmatprep.subr.mxu0 0.0
        %5884 = vmatpush1.msra.mxu0 0.0
        %5885 = vmatprep.subr.mxu0 0.0
        %5886 = vmatpush1.msra.mxu0 0.0
        %5887 = vmatprep.subr.mxu0 0.0
        %5888 = vmatpush1.msra.mxu0 0.0
        %5889 = vmatprep.subr.mxu0 0.0
        %5890 = vmatpush1.msra.mxu0 0.0
        %5891 = vmatprep.subr.mxu0 0.0
        %5892 = vmatpush1.msra.mxu0 0.0
        %5893 = vmatprep.subr.mxu0 0.0
        %5894 = vmatpush1.msra.mxu0 0.0
        %5895 = vmatprep.subr.mxu0 0.0
        %5896 = vmatpush1.msra.mxu0 0.0
        %5897 = vmatprep.mubr.f32.mxu0 0.0
        %v5898 = vand.u32 %v5737, 4294901760
        %5899 = vmatmul.mubr.f32.gmra.mrb[0].mxu0 %v5898
        %v5900 = vpop.f32.mrb[0].mxu0
        %v5901 = vadd.f32 %v5819, %v5900
        %v5902 = vpop.f32.mrb[0].mxu0
        %v5903 = vadd.f32 %v5821, %v5902
        %5904 = vdwg.mxu0
        %v5905 = vand.u32 %v5743, 4294901760
        %v5906 = vsub.f32 %v5743, %v5905
        %5907 = vmatprep.subr.mxu0 %v5906
        %v5908 = vand.u32 %v5740, 4294901760
        %v5909 = vsub.f32 %v5740, %v5908
        %5910 = vmatpush1.msra.mxu0 %v5909
        %5911 = vmatprep.subr.mxu0 0.0
        %5912 = vmatpush1.msra.mxu0 0.0
        %5913 = vmatprep.subr.mxu0 0.0
        %5914 = vmatpush1.msra.mxu0 0.0
        %5915 = vmatprep.subr.mxu0 0.0
        %5916 = vmatpush1.msra.mxu0 0.0
        %5917 = vmatprep.subr.mxu0 0.0
        %5918 = vmatpush1.msra.mxu0 0.0
        %5919 = vmatprep.subr.mxu0 0.0
        %5920 = vmatpush1.msra.mxu0 0.0
        %5921 = vmatprep.subr.mxu0 0.0
        %5922 = vmatpush1.msra.mxu0 0.0
        %5923 = vmatprep.subr.mxu0 0.0
        %5924 = vmatpush1.msra.mxu0 0.0
        %5925 = vmatprep.subr.mxu0 0.0
        %5926 = vmatpush1.msra.mxu0 0.0
        %5927 = vmatprep.subr.mxu0 0.0
        %5928 = vmatpush1.msra.mxu0 0.0
        %5929 = vmatprep.subr.mxu0 0.0
        %5930 = vmatpush1.msra.mxu0 0.0
        %5931 = vmatprep.subr.mxu0 0.0
        %5932 = vmatpush1.msra.mxu0 0.0
        %5933 = vmatprep.subr.mxu0 0.0
        %5934 = vmatpush1.msra.mxu0 0.0
        %5935 = vmatprep.subr.mxu0 0.0
        %5936 = vmatpush1.msra.mxu0 0.0
        %5937 = vmatprep.subr.mxu0 0.0
        %5938 = vmatpush1.msra.mxu0 0.0
        %5939 = vmatprep.subr.mxu0 0.0
        %5940 = vmatpush1.msra.mxu0 0.0
        %5941 = vmatprep.subr.mxu0 0.0
        %5942 = vmatpush1.msra.mxu0 0.0
        %5943 = vmatprep.subr.mxu0 0.0
        %5944 = vmatpush1.msra.mxu0 0.0
        %5945 = vmatprep.subr.mxu0 0.0
        %5946 = vmatpush1.msra.mxu0 0.0
        %5947 = vmatprep.subr.mxu0 0.0
        %5948 = vmatpush1.msra.mxu0 0.0
        %5949 = vmatprep.subr.mxu0 0.0
        %5950 = vmatpush1.msra.mxu0 0.0
        %5951 = vmatprep.subr.mxu0 0.0
        %5952 = vmatpush1.msra.mxu0 0.0
        %5953 = vmatprep.subr.mxu0 0.0
        %5954 = vmatpush1.msra.mxu0 0.0
        %5955 = vmatprep.subr.mxu0 0.0
        %5956 = vmatpush1.msra.mxu0 0.0
        %5957 = vmatprep.subr.mxu0 0.0
        %5958 = vmatpush1.msra.mxu0 0.0
        %5959 = vmatprep.subr.mxu0 0.0
        %5960 = vmatpush1.msra.mxu0 0.0
        %5961 = vmatprep.subr.mxu0 0.0
        %5962 = vmatpush1.msra.mxu0 0.0
        %5963 = vmatprep.subr.mxu0 0.0
        %5964 = vmatpush1.msra.mxu0 0.0
        %5965 = vmatprep.subr.mxu0 0.0
        %5966 = vmatpush1.msra.mxu0 0.0
        %5967 = vmatprep.subr.mxu0 0.0
        %5968 = vmatpush1.msra.mxu0 0.0
        %5969 = vmatprep.subr.mxu0 0.0
        %5970 = vmatpush1.msra.mxu0 0.0
        %5971 = vmatprep.subr.mxu0 0.0
        %5972 = vmatpush1.msra.mxu0 0.0
        %5973 = vmatprep.mubr.f32.mxu0 0.0
        %v5974 = vand.u32 %v5737, 4294901760
        %v5975 = vsub.f32 %v5737, %v5974
        %5976 = vmatmul.mubr.f32.gmra.mrb[0].mxu0 %v5975
        %v5977 = vpop.f32.mrb[0].mxu0
        %v5978 = vadd.f32 %v5901, %v5977
        %v5979 = vpop.f32.mrb[0].mxu0
        %v5980 = vadd.f32 %v5903, %v5979
        %5981 = vdwg.mxu0
        %v5982 = vand.u32 %v5743, 4294901760
        %5983 = vmatprep.subr.mxu0 %v5982
        %v5984 = vand.u32 %v5740, 4294901760
        %5985 = vmatpush1.msra.mxu0 %v5984
        %5986 = vmatprep.subr.mxu0 0.0
        %5987 = vmatpush1.msra.mxu0 0.0
        %5988 = vmatprep.subr.mxu0 0.0
        %5989 = vmatpush1.msra.mxu0 0.0
        %5990 = vmatprep.subr.mxu0 0.0
        %5991 = vmatpush1.msra.mxu0 0.0
        %5992 = vmatprep.subr.mxu0 0.0
        %5993 = vmatpush1.msra.mxu0 0.0
        %5994 = vmatprep.subr.mxu0 0.0
        %5995 = vmatpush1.msra.mxu0 0.0
        %5996 = vmatprep.subr.mxu0 0.0
        %5997 = vmatpush1.msra.mxu0 0.0
        %5998 = vmatprep.subr.mxu0 0.0
        %5999 = vmatpush1.msra.mxu0 0.0
        %6000 = vmatprep.subr.mxu0 0.0
        %6001 = vmatpush1.msra.mxu0 0.0
        %6002 = vmatprep.subr.mxu0 0.0
        %6003 = vmatpush1.msra.mxu0 0.0
        %6004 = vmatprep.subr.mxu0 0.0
        %6005 = vmatpush1.msra.mxu0 0.0
        %6006 = vmatprep.subr.mxu0 0.0
        %6007 = vmatpush1.msra.mxu0 0.0
        %6008 = vmatprep.subr.mxu0 0.0
        %6009 = vmatpush1.msra.mxu0 0.0
        %6010 = vmatprep.subr.mxu0 0.0
        %6011 = vmatpush1.msra.mxu0 0.0
        %6012 = vmatprep.subr.mxu0 0.0
        %6013 = vmatpush1.msra.mxu0 0.0
        %6014 = vmatprep.subr.mxu0 0.0
        %6015 = vmatpush1.msra.mxu0 0.0
        %6016 = vmatprep.subr.mxu0 0.0
        %6017 = vmatpush1.msra.mxu0 0.0
        %6018 = vmatprep.subr.mxu0 0.0
        %6019 = vmatpush1.msra.mxu0 0.0
        %6020 = vmatprep.subr.mxu0 0.0
        %6021 = vmatpush1.msra.mxu0 0.0
        %6022 = vmatprep.subr.mxu0 0.0
        %6023 = vmatpush1.msra.mxu0 0.0
        %6024 = vmatprep.subr.mxu0 0.0
        %6025 = vmatpush1.msra.mxu0 0.0
        %6026 = vmatprep.subr.mxu0 0.0
        %6027 = vmatpush1.msra.mxu0 0.0
        %6028 = vmatprep.subr.mxu0 0.0
        %6029 = vmatpush1.msra.mxu0 0.0
        %6030 = vmatprep.subr.mxu0 0.0
        %6031 = vmatpush1.msra.mxu0 0.0
        %6032 = vmatprep.subr.mxu0 0.0
        %6033 = vmatpush1.msra.mxu0 0.0
        %6034 = vmatprep.subr.mxu0 0.0
        %6035 = vmatpush1.msra.mxu0 0.0
        %6036 = vmatprep.subr.mxu0 0.0
        %6037 = vmatpush1.msra.mxu0 0.0
        %6038 = vmatprep.subr.mxu0 0.0
        %6039 = vmatpush1.msra.mxu0 0.0
        %6040 = vmatprep.subr.mxu0 0.0
        %6041 = vmatpush1.msra.mxu0 0.0
        %6042 = vmatprep.subr.mxu0 0.0
        %6043 = vmatpush1.msra.mxu0 0.0
        %6044 = vmatprep.subr.mxu0 0.0
        %6045 = vmatpush1.msra.mxu0 0.0
        %6046 = vmatprep.subr.mxu0 0.0
        %6047 = vmatpush1.msra.mxu0 0.0
        %6048 = vmatprep.mubr.f32.mxu0 0.0
        %v6049 = vand.u32 %v5737, 4294901760
        %v6050 = vsub.f32 %v5737, %v6049
        %v6051 = vand.u32 %v6050, 4294901760
        %6052 = vmatmul.mubr.f32.gmra.mrb[0].mxu0 %v6051
        %v6053 = vpop.f32.mrb[0].mxu0
        %v6054 = vadd.f32 %v5978, %v6053
        %v6055 = vpop.f32.mrb[0].mxu0
        %v6056 = vadd.f32 %v5980, %v6055
        %6057 = vdwg.mxu0
        %v6058 = vand.u32 %v5743, 4294901760
        %v6059 = vsub.f32 %v5743, %v6058
        %v6060 = vand.u32 %v6059, 4294901760
        %6061 = vmatprep.subr.mxu0 %v6060
        %v6062 = vand.u32 %v5740, 4294901760
        %v6063 = vsub.f32 %v5740, %v6062
        %v6064 = vand.u32 %v6063, 4294901760
        %6065 = vmatpush1.msra.mxu0 %v6064
        %6066 = vmatprep.subr.mxu0 0.0
        %6067 = vmatpush1.msra.mxu0 0.0
        %6068 = vmatprep.subr.mxu0 0.0
        %6069 = vmatpush1.msra.mxu0 0.0
        %6070 = vmatprep.subr.mxu0 0.0
        %6071 = vmatpush1.msra.mxu0 0.0
        %6072 = vmatprep.subr.mxu0 0.0
        %6073 = vmatpush1.msra.mxu0 0.0
        %6074 = vmatprep.subr.mxu0 0.0
        %6075 = vmatpush1.msra.mxu0 0.0
        %6076 = vmatprep.subr.mxu0 0.0
        %6077 = vmatpush1.msra.mxu0 0.0
        %6078 = vmatprep.subr.mxu0 0.0
        %6079 = vmatpush1.msra.mxu0 0.0
        %6080 = vmatprep.subr.mxu0 0.0
        %6081 = vmatpush1.msra.mxu0 0.0
        %6082 = vmatprep.subr.mxu0 0.0
        %6083 = vmatpush1.msra.mxu0 0.0
        %6084 = vmatprep.subr.mxu0 0.0
        %6085 = vmatpush1.msra.mxu0 0.0
        %6086 = vmatprep.subr.mxu0 0.0
        %6087 = vmatpush1.msra.mxu0 0.0
        %6088 = vmatprep.subr.mxu0 0.0
        %6089 = vmatpush1.msra.mxu0 0.0
        %6090 = vmatprep.subr.mxu0 0.0
        %6091 = vmatpush1.msra.mxu0 0.0
        %6092 = vmatprep.subr.mxu0 0.0
        %6093 = vmatpush1.msra.mxu0 0.0
        %6094 = vmatprep.subr.mxu0 0.0
        %6095 = vmatpush1.msra.mxu0 0.0
        %6096 = vmatprep.subr.mxu0 0.0
        %6097 = vmatpush1.msra.mxu0 0.0
        %6098 = vmatprep.subr.mxu0 0.0
        %6099 = vmatpush1.msra.mxu0 0.0
        %6100 = vmatprep.subr.mxu0 0.0
        %6101 = vmatpush1.msra.mxu0 0.0
        %6102 = vmatprep.subr.mxu0 0.0
        %6103 = vmatpush1.msra.mxu0 0.0
        %6104 = vmatprep.subr.mxu0 0.0
        %6105 = vmatpush1.msra.mxu0 0.0
        %6106 = vmatprep.subr.mxu0 0.0
        %6107 = vmatpush1.msra.mxu0 0.0
        %6108 = vmatprep.subr.mxu0 0.0
        %6109 = vmatpush1.msra.mxu0 0.0
        %6110 = vmatprep.subr.mxu0 0.0
        %6111 = vmatpush1.msra.mxu0 0.0
        %6112 = vmatprep.subr.mxu0 0.0
        %6113 = vmatpush1.msra.mxu0 0.0
        %6114 = vmatprep.subr.mxu0 0.0
        %6115 = vmatpush1.msra.mxu0 0.0
        %6116 = vmatprep.subr.mxu0 0.0
        %6117 = vmatpush1.msra.mxu0 0.0
        %6118 = vmatprep.subr.mxu0 0.0
        %6119 = vmatpush1.msra.mxu0 0.0
        %6120 = vmatprep.subr.mxu0 0.0
        %6121 = vmatpush1.msra.mxu0 0.0
        %6122 = vmatprep.subr.mxu0 0.0
        %6123 = vmatpush1.msra.mxu0 0.0
        %6124 = vmatprep.subr.mxu0 0.0
        %6125 = vmatpush1.msra.mxu0 0.0
        %6126 = vmatprep.subr.mxu0 0.0
        %6127 = vmatpush1.msra.mxu0 0.0
        %6128 = vmatprep.mubr.f32.mxu0 0.0
        %v6129 = vand.u32 %v5737, 4294901760
        %6130 = vmatmul.mubr.f32.gmra.mrb[0].mxu0 %v6129
        %v6131 = vpop.f32.mrb[0].mxu0
        %v6132 = vadd.f32 %v6054, %v6131
        %v6133 = vpop.f32.mrb[0].mxu0
        %v6134 = vadd.f32 %v6056, %v6133
        %6135 = vdwg.mxu0
        %v6136 = vand.u32 %v5743, 4294901760
        %6137 = vmatprep.subr.mxu0 %v6136
        %v6138 = vand.u32 %v5740, 4294901760
        %6139 = vmatpush1.msra.mxu0 %v6138
        %6140 = vmatprep.subr.mxu0 0.0
        %6141 = vmatpush1.msra.mxu0 0.0
        %6142 = vmatprep.subr.mxu0 0.0
        %6143 = vmatpush1.msra.mxu0 0.0
        %6144 = vmatprep.subr.mxu0 0.0
        %6145 = vmatpush1.msra.mxu0 0.0
        %6146 = vmatprep.subr.mxu0 0.0
        %6147 = vmatpush1.msra.mxu0 0.0
        %6148 = vmatprep.subr.mxu0 0.0
        %6149 = vmatpush1.msra.mxu0 0.0
        %6150 = vmatprep.subr.mxu0 0.0
        %6151 = vmatpush1.msra.mxu0 0.0
        %6152 = vmatprep.subr.mxu0 0.0
        %6153 = vmatpush1.msra.mxu0 0.0
        %6154 = vmatprep.subr.mxu0 0.0
        %6155 = vmatpush1.msra.mxu0 0.0
        %6156 = vmatprep.subr.mxu0 0.0
        %6157 = vmatpush1.msra.mxu0 0.0
        %6158 = vmatprep.subr.mxu0 0.0
        %6159 = vmatpush1.msra.mxu0 0.0
        %6160 = vmatprep.subr.mxu0 0.0
        %6161 = vmatpush1.msra.mxu0 0.0
        %6162 = vmatprep.subr.mxu0 0.0
        %6163 = vmatpush1.msra.mxu0 0.0
        %6164 = vmatprep.subr.mxu0 0.0
        %6165 = vmatpush1.msra.mxu0 0.0
        %6166 = vmatprep.subr.mxu0 0.0
        %6167 = vmatpush1.msra.mxu0 0.0
        %6168 = vmatprep.subr.mxu0 0.0
        %6169 = vmatpush1.msra.mxu0 0.0
        %6170 = vmatprep.subr.mxu0 0.0
        %6171 = vmatpush1.msra.mxu0 0.0
        %6172 = vmatprep.subr.mxu0 0.0
        %6173 = vmatpush1.msra.mxu0 0.0
        %6174 = vmatprep.subr.mxu0 0.0
        %6175 = vmatpush1.msra.mxu0 0.0
        %6176 = vmatprep.subr.mxu0 0.0
        %6177 = vmatpush1.msra.mxu0 0.0
        %6178 = vmatprep.subr.mxu0 0.0
        %6179 = vmatpush1.msra.mxu0 0.0
        %6180 = vmatprep.subr.mxu0 0.0
        %6181 = vmatpush1.msra.mxu0 0.0
        %6182 = vmatprep.subr.mxu0 0.0
        %6183 = vmatpush1.msra.mxu0 0.0
        %6184 = vmatprep.subr.mxu0 0.0
        %6185 = vmatpush1.msra.mxu0 0.0
        %6186 = vmatprep.subr.mxu0 0.0
        %6187 = vmatpush1.msra.mxu0 0.0
        %6188 = vmatprep.subr.mxu0 0.0
        %6189 = vmatpush1.msra.mxu0 0.0
        %6190 = vmatprep.subr.mxu0 0.0
        %6191 = vmatpush1.msra.mxu0 0.0
        %6192 = vmatprep.subr.mxu0 0.0
        %6193 = vmatpush1.msra.mxu0 0.0
        %6194 = vmatprep.subr.mxu0 0.0
        %6195 = vmatpush1.msra.mxu0 0.0
        %6196 = vmatprep.subr.mxu0 0.0
        %6197 = vmatpush1.msra.mxu0 0.0
        %6198 = vmatprep.subr.mxu0 0.0
        %6199 = vmatpush1.msra.mxu0 0.0
        %6200 = vmatprep.subr.mxu0 0.0
        %6201 = vmatpush1.msra.mxu0 0.0
        %6202 = vmatprep.mubr.f32.mxu0 0.0
        %v6203 = vand.u32 %v5737, 4294901760
        %6204 = vmatmul.mubr.f32.gmra.mrb[0].mxu0 %v6203
        %v6205 = vpop.f32.mrb[0].mxu0
        %v6206 = vadd.f32 %v6132, %v6205
        %v6207 = vpop.f32.mrb[0].mxu0
        %v6208 = vadd.f32 %v6134, %v6207
        %6209 = vdwg.mxu0
        %v6210 = vadd.f32 %v5732, %v6206
        %v6211 = vadd.f32 %v5733, %v6208
        %s6212 = scalar_lea.vmem %s3, 12
        %v6213 = vld [vmem:[%s6212] sm:$0x3]
        %6214 = vrot.lane.b32.xlu0 %v325, 113
        %v6215 = vpop.permute.xlu0 %6214
        %6216 = vrot.lane.b32.xlu0 %v329, 113
        %v6217 = vpop.permute.xlu0 %6216
        %vm6218 = vcmp.lt.s32.totalorder %v336, 113
        %v6219 = vsel %vm6218, %v6215, %v6217
        %v6220 = vsel %vm6218, %v6217, %v6215
        %v6222 = vlaneseq
        %v6223 = vshrl.u32 %v6222, 7
        %v6224 = vsub.s32 0, %v6223
        %v6225 = vrot.slane %v6213, %v6224
        %v6226 = vlaneseq
        %v6227 = vshrl.u32 %v6226, 7
        %v6228 = vsub.s32 1, %v6227
        %v6229 = vrot.slane %v6213, %v6228
        %v6232 = vmul.f32 %v6219, %v6225
        %v6233 = vmul.f32 %v6220, %v6229
        %6234 = vrot.lane.b32.xlu0 %v326, 113
        %v6235 = vpop.permute.xlu0 %6234
        %6236 = vrot.lane.b32.xlu0 %v354, 113
        %v6237 = vpop.permute.xlu0 %6236
        %v6238 = vsel %vm6218, %v6235, %v6237
        %v6239 = vsel %vm6218, %v6237, %v6235
        %v6240 = vmul.f32 %v6238, %v6225
        %v6241 = vmul.f32 %v6239, %v6229
        %s6242 = scalar_lea.vmem %s1, 24
        %v6243 = vld [vmem:[%s6242] sm:$0xf]
        %v6245 = vsel %vm366, %v6243, 0
        %v6248 = vsel %vm370, %v6232, 0
        %v6251 = vsel %vm370, %v6233, 0
        %v6253 = vand.u32 %v6251, 4294901760
        %6254 = vmatprep.subr.mxu0 %v6253
        %v6255 = vand.u32 %v6248, 4294901760
        %6256 = vmatpush1.msra.mxu0 %v6255
        %6257 = vmatprep.subr.mxu0 0.0
        %6258 = vmatpush1.msra.mxu0 0.0
        %6259 = vmatprep.subr.mxu0 0.0
        %6260 = vmatpush1.msra.mxu0 0.0
        %6261 = vmatprep.subr.mxu0 0.0
        %6262 = vmatpush1.msra.mxu0 0.0
        %6263 = vmatprep.subr.mxu0 0.0
        %6264 = vmatpush1.msra.mxu0 0.0
        %6265 = vmatprep.subr.mxu0 0.0
        %6266 = vmatpush1.msra.mxu0 0.0
        %6267 = vmatprep.subr.mxu0 0.0
        %6268 = vmatpush1.msra.mxu0 0.0
        %6269 = vmatprep.subr.mxu0 0.0
        %6270 = vmatpush1.msra.mxu0 0.0
        %6271 = vmatprep.subr.mxu0 0.0
        %6272 = vmatpush1.msra.mxu0 0.0
        %6273 = vmatprep.subr.mxu0 0.0
        %6274 = vmatpush1.msra.mxu0 0.0
        %6275 = vmatprep.subr.mxu0 0.0
        %6276 = vmatpush1.msra.mxu0 0.0
        %6277 = vmatprep.subr.mxu0 0.0
        %6278 = vmatpush1.msra.mxu0 0.0
        %6279 = vmatprep.subr.mxu0 0.0
        %6280 = vmatpush1.msra.mxu0 0.0
        %6281 = vmatprep.subr.mxu0 0.0
        %6282 = vmatpush1.msra.mxu0 0.0
        %6283 = vmatprep.subr.mxu0 0.0
        %6284 = vmatpush1.msra.mxu0 0.0
        %6285 = vmatprep.subr.mxu0 0.0
        %6286 = vmatpush1.msra.mxu0 0.0
        %6287 = vmatprep.subr.mxu0 0.0
        %6288 = vmatpush1.msra.mxu0 0.0
        %6289 = vmatprep.subr.mxu0 0.0
        %6290 = vmatpush1.msra.mxu0 0.0
        %6291 = vmatprep.subr.mxu0 0.0
        %6292 = vmatpush1.msra.mxu0 0.0
        %6293 = vmatprep.subr.mxu0 0.0
        %6294 = vmatpush1.msra.mxu0 0.0
        %6295 = vmatprep.subr.mxu0 0.0
        %6296 = vmatpush1.msra.mxu0 0.0
        %6297 = vmatprep.subr.mxu0 0.0
        %6298 = vmatpush1.msra.mxu0 0.0
        %6299 = vmatprep.subr.mxu0 0.0
        %6300 = vmatpush1.msra.mxu0 0.0
        %6301 = vmatprep.subr.mxu0 0.0
        %6302 = vmatpush1.msra.mxu0 0.0
        %6303 = vmatprep.subr.mxu0 0.0
        %6304 = vmatpush1.msra.mxu0 0.0
        %6305 = vmatprep.subr.mxu0 0.0
        %6306 = vmatpush1.msra.mxu0 0.0
        %6307 = vmatprep.subr.mxu0 0.0
        %6308 = vmatpush1.msra.mxu0 0.0
        %6309 = vmatprep.subr.mxu0 0.0
        %6310 = vmatpush1.msra.mxu0 0.0
        %6311 = vmatprep.subr.mxu0 0.0
        %6312 = vmatpush1.msra.mxu0 0.0
        %6313 = vmatprep.subr.mxu0 0.0
        %6314 = vmatpush1.msra.mxu0 0.0
        %6315 = vmatprep.subr.mxu0 0.0
        %6316 = vmatpush1.msra.mxu0 0.0
        %6317 = vmatprep.subr.mxu0 0.0
        %6318 = vmatpush1.msra.mxu0 0.0
        %6319 = vmatprep.mubr.f32.mxu0 0.0
        %v6320 = vand.u32 %v6245, 4294901760
        %v6321 = vsub.f32 %v6245, %v6320
        %v6322 = vand.u32 %v6321, 4294901760
        %v6323 = vsub.f32 %v6321, %v6322
        %v6324 = vand.u32 %v6323, 4294901760
        %6325 = vmatmul.mubr.f32.gmra.mrb[0].mxu0 %v6324
        %v6326 = vpop.f32.mrb[0].mxu0
        %v6327 = vadd.f32 0.0, %v6326
        %v6328 = vpop.f32.mrb[0].mxu0
        %v6329 = vadd.f32 0.0, %v6328
        %6330 = vdwg.mxu0
        %v6331 = vand.u32 %v6251, 4294901760
        %v6332 = vsub.f32 %v6251, %v6331
        %v6333 = vand.u32 %v6332, 4294901760
        %v6334 = vsub.f32 %v6332, %v6333
        %v6335 = vand.u32 %v6334, 4294901760
        %6336 = vmatprep.subr.mxu0 %v6335
        %v6337 = vand.u32 %v6248, 4294901760
        %v6338 = vsub.f32 %v6248, %v6337
        %v6339 = vand.u32 %v6338, 4294901760
        %v6340 = vsub.f32 %v6338, %v6339
        %v6341 = vand.u32 %v6340, 4294901760
        %6342 = vmatpush1.msra.mxu0 %v6341
        %6343 = vmatprep.subr.mxu0 0.0
        %6344 = vmatpush1.msra.mxu0 0.0
        %6345 = vmatprep.subr.mxu0 0.0
        %6346 = vmatpush1.msra.mxu0 0.0
        %6347 = vmatprep.subr.mxu0 0.0
        %6348 = vmatpush1.msra.mxu0 0.0
        %6349 = vmatprep.subr.mxu0 0.0
        %6350 = vmatpush1.msra.mxu0 0.0
        %6351 = vmatprep.subr.mxu0 0.0
        %6352 = vmatpush1.msra.mxu0 0.0
        %6353 = vmatprep.subr.mxu0 0.0
        %6354 = vmatpush1.msra.mxu0 0.0
        %6355 = vmatprep.subr.mxu0 0.0
        %6356 = vmatpush1.msra.mxu0 0.0
        %6357 = vmatprep.subr.mxu0 0.0
        %6358 = vmatpush1.msra.mxu0 0.0
        %6359 = vmatprep.subr.mxu0 0.0
        %6360 = vmatpush1.msra.mxu0 0.0
        %6361 = vmatprep.subr.mxu0 0.0
        %6362 = vmatpush1.msra.mxu0 0.0
        %6363 = vmatprep.subr.mxu0 0.0
        %6364 = vmatpush1.msra.mxu0 0.0
        %6365 = vmatprep.subr.mxu0 0.0
        %6366 = vmatpush1.msra.mxu0 0.0
        %6367 = vmatprep.subr.mxu0 0.0
        %6368 = vmatpush1.msra.mxu0 0.0
        %6369 = vmatprep.subr.mxu0 0.0
        %6370 = vmatpush1.msra.mxu0 0.0
        %6371 = vmatprep.subr.mxu0 0.0
        %6372 = vmatpush1.msra.mxu0 0.0
        %6373 = vmatprep.subr.mxu0 0.0
        %6374 = vmatpush1.msra.mxu0 0.0
        %6375 = vmatprep.subr.mxu0 0.0
        %6376 = vmatpush1.msra.mxu0 0.0
        %6377 = vmatprep.subr.mxu0 0.0
        %6378 = vmatpush1.msra.mxu0 0.0
        %6379 = vmatprep.subr.mxu0 0.0
        %6380 = vmatpush1.msra.mxu0 0.0
        %6381 = vmatprep.subr.mxu0 0.0
        %6382 = vmatpush1.msra.mxu0 0.0
        %6383 = vmatprep.subr.mxu0 0.0
        %6384 = vmatpush1.msra.mxu0 0.0
        %6385 = vmatprep.subr.mxu0 0.0
        %6386 = vmatpush1.msra.mxu0 0.0
        %6387 = vmatprep.subr.mxu0 0.0
        %6388 = vmatpush1.msra.mxu0 0.0
        %6389 = vmatprep.subr.mxu0 0.0
        %6390 = vmatpush1.msra.mxu0 0.0
        %6391 = vmatprep.subr.mxu0 0.0
        %6392 = vmatpush1.msra.mxu0 0.0
        %6393 = vmatprep.subr.mxu0 0.0
        %6394 = vmatpush1.msra.mxu0 0.0
        %6395 = vmatprep.subr.mxu0 0.0
        %6396 = vmatpush1.msra.mxu0 0.0
        %6397 = vmatprep.subr.mxu0 0.0
        %6398 = vmatpush1.msra.mxu0 0.0
        %6399 = vmatprep.subr.mxu0 0.0
        %6400 = vmatpush1.msra.mxu0 0.0
        %6401 = vmatprep.subr.mxu0 0.0
        %6402 = vmatpush1.msra.mxu0 0.0
        %6403 = vmatprep.subr.mxu0 0.0
        %6404 = vmatpush1.msra.mxu0 0.0
        %6405 = vmatprep.mubr.f32.mxu0 0.0
        %v6406 = vand.u32 %v6245, 4294901760
        %6407 = vmatmul.mubr.f32.gmra.mrb[0].mxu0 %v6406
        %v6408 = vpop.f32.mrb[0].mxu0
        %v6409 = vadd.f32 %v6327, %v6408
        %v6410 = vpop.f32.mrb[0].mxu0
        %v6411 = vadd.f32 %v6329, %v6410
        %6412 = vdwg.mxu0
        %v6413 = vand.u32 %v6251, 4294901760
        %v6414 = vsub.f32 %v6251, %v6413
        %6415 = vmatprep.subr.mxu0 %v6414
        %v6416 = vand.u32 %v6248, 4294901760
        %v6417 = vsub.f32 %v6248, %v6416
        %6418 = vmatpush1.msra.mxu0 %v6417
        %6419 = vmatprep.subr.mxu0 0.0
        %6420 = vmatpush1.msra.mxu0 0.0
        %6421 = vmatprep.subr.mxu0 0.0
        %6422 = vmatpush1.msra.mxu0 0.0
        %6423 = vmatprep.subr.mxu0 0.0
        %6424 = vmatpush1.msra.mxu0 0.0
        %6425 = vmatprep.subr.mxu0 0.0
        %6426 = vmatpush1.msra.mxu0 0.0
        %6427 = vmatprep.subr.mxu0 0.0
        %6428 = vmatpush1.msra.mxu0 0.0
        %6429 = vmatprep.subr.mxu0 0.0
        %6430 = vmatpush1.msra.mxu0 0.0
        %6431 = vmatprep.subr.mxu0 0.0
        %6432 = vmatpush1.msra.mxu0 0.0
        %6433 = vmatprep.subr.mxu0 0.0
        %6434 = vmatpush1.msra.mxu0 0.0
        %6435 = vmatprep.subr.mxu0 0.0
        %6436 = vmatpush1.msra.mxu0 0.0
        %6437 = vmatprep.subr.mxu0 0.0
        %6438 = vmatpush1.msra.mxu0 0.0
        %6439 = vmatprep.subr.mxu0 0.0
        %6440 = vmatpush1.msra.mxu0 0.0
        %6441 = vmatprep.subr.mxu0 0.0
        %6442 = vmatpush1.msra.mxu0 0.0
        %6443 = vmatprep.subr.mxu0 0.0
        %6444 = vmatpush1.msra.mxu0 0.0
        %6445 = vmatprep.subr.mxu0 0.0
        %6446 = vmatpush1.msra.mxu0 0.0
        %6447 = vmatprep.subr.mxu0 0.0
        %6448 = vmatpush1.msra.mxu0 0.0
        %6449 = vmatprep.subr.mxu0 0.0
        %6450 = vmatpush1.msra.mxu0 0.0
        %6451 = vmatprep.subr.mxu0 0.0
        %6452 = vmatpush1.msra.mxu0 0.0
        %6453 = vmatprep.subr.mxu0 0.0
        %6454 = vmatpush1.msra.mxu0 0.0
        %6455 = vmatprep.subr.mxu0 0.0
        %6456 = vmatpush1.msra.mxu0 0.0
        %6457 = vmatprep.subr.mxu0 0.0
        %6458 = vmatpush1.msra.mxu0 0.0
        %6459 = vmatprep.subr.mxu0 0.0
        %6460 = vmatpush1.msra.mxu0 0.0
        %6461 = vmatprep.subr.mxu0 0.0
        %6462 = vmatpush1.msra.mxu0 0.0
        %6463 = vmatprep.subr.mxu0 0.0
        %6464 = vmatpush1.msra.mxu0 0.0
        %6465 = vmatprep.subr.mxu0 0.0
        %6466 = vmatpush1.msra.mxu0 0.0
        %6467 = vmatprep.subr.mxu0 0.0
        %6468 = vmatpush1.msra.mxu0 0.0
        %6469 = vmatprep.subr.mxu0 0.0
        %6470 = vmatpush1.msra.mxu0 0.0
        %6471 = vmatprep.subr.mxu0 0.0
        %6472 = vmatpush1.msra.mxu0 0.0
        %6473 = vmatprep.subr.mxu0 0.0
        %6474 = vmatpush1.msra.mxu0 0.0
        %6475 = vmatprep.subr.mxu0 0.0
        %6476 = vmatpush1.msra.mxu0 0.0
        %6477 = vmatprep.subr.mxu0 0.0
        %6478 = vmatpush1.msra.mxu0 0.0
        %6479 = vmatprep.subr.mxu0 0.0
        %6480 = vmatpush1.msra.mxu0 0.0
        %6481 = vmatprep.mubr.f32.mxu0 0.0
        %v6482 = vand.u32 %v6245, 4294901760
        %v6483 = vsub.f32 %v6245, %v6482
        %6484 = vmatmul.mubr.f32.gmra.mrb[0].mxu0 %v6483
        %v6485 = vpop.f32.mrb[0].mxu0
        %v6486 = vadd.f32 %v6409, %v6485
        %v6487 = vpop.f32.mrb[0].mxu0
        %v6488 = vadd.f32 %v6411, %v6487
        %6489 = vdwg.mxu0
        %v6490 = vand.u32 %v6251, 4294901760
        %6491 = vmatprep.subr.mxu0 %v6490
        %v6492 = vand.u32 %v6248, 4294901760
        %6493 = vmatpush1.msra.mxu0 %v6492
        %6494 = vmatprep.subr.mxu0 0.0
        %6495 = vmatpush1.msra.mxu0 0.0
        %6496 = vmatprep.subr.mxu0 0.0
        %6497 = vmatpush1.msra.mxu0 0.0
        %6498 = vmatprep.subr.mxu0 0.0
        %6499 = vmatpush1.msra.mxu0 0.0
        %6500 = vmatprep.subr.mxu0 0.0
        %6501 = vmatpush1.msra.mxu0 0.0
        %6502 = vmatprep.subr.mxu0 0.0
        %6503 = vmatpush1.msra.mxu0 0.0
        %6504 = vmatprep.subr.mxu0 0.0
        %6505 = vmatpush1.msra.mxu0 0.0
        %6506 = vmatprep.subr.mxu0 0.0
        %6507 = vmatpush1.msra.mxu0 0.0
        %6508 = vmatprep.subr.mxu0 0.0
        %6509 = vmatpush1.msra.mxu0 0.0
        %6510 = vmatprep.subr.mxu0 0.0
        %6511 = vmatpush1.msra.mxu0 0.0
        %6512 = vmatprep.subr.mxu0 0.0
        %6513 = vmatpush1.msra.mxu0 0.0
        %6514 = vmatprep.subr.mxu0 0.0
        %6515 = vmatpush1.msra.mxu0 0.0
        %6516 = vmatprep.subr.mxu0 0.0
        %6517 = vmatpush1.msra.mxu0 0.0
        %6518 = vmatprep.subr.mxu0 0.0
        %6519 = vmatpush1.msra.mxu0 0.0
        %6520 = vmatprep.subr.mxu0 0.0
        %6521 = vmatpush1.msra.mxu0 0.0
        %6522 = vmatprep.subr.mxu0 0.0
        %6523 = vmatpush1.msra.mxu0 0.0
        %6524 = vmatprep.subr.mxu0 0.0
        %6525 = vmatpush1.msra.mxu0 0.0
        %6526 = vmatprep.subr.mxu0 0.0
        %6527 = vmatpush1.msra.mxu0 0.0
        %6528 = vmatprep.subr.mxu0 0.0
        %6529 = vmatpush1.msra.mxu0 0.0
        %6530 = vmatprep.subr.mxu0 0.0
        %6531 = vmatpush1.msra.mxu0 0.0
        %6532 = vmatprep.subr.mxu0 0.0
        %6533 = vmatpush1.msra.mxu0 0.0
        %6534 = vmatprep.subr.mxu0 0.0
        %6535 = vmatpush1.msra.mxu0 0.0
        %6536 = vmatprep.subr.mxu0 0.0
        %6537 = vmatpush1.msra.mxu0 0.0
        %6538 = vmatprep.subr.mxu0 0.0
        %6539 = vmatpush1.msra.mxu0 0.0
        %6540 = vmatprep.subr.mxu0 0.0
        %6541 = vmatpush1.msra.mxu0 0.0
        %6542 = vmatprep.subr.mxu0 0.0
        %6543 = vmatpush1.msra.mxu0 0.0
        %6544 = vmatprep.subr.mxu0 0.0
        %6545 = vmatpush1.msra.mxu0 0.0
        %6546 = vmatprep.subr.mxu0 0.0
        %6547 = vmatpush1.msra.mxu0 0.0
        %6548 = vmatprep.subr.mxu0 0.0
        %6549 = vmatpush1.msra.mxu0 0.0
        %6550 = vmatprep.subr.mxu0 0.0
        %6551 = vmatpush1.msra.mxu0 0.0
        %6552 = vmatprep.subr.mxu0 0.0
        %6553 = vmatpush1.msra.mxu0 0.0
        %6554 = vmatprep.subr.mxu0 0.0
        %6555 = vmatpush1.msra.mxu0 0.0
        %6556 = vmatprep.mubr.f32.mxu0 0.0
        %v6557 = vand.u32 %v6245, 4294901760
        %v6558 = vsub.f32 %v6245, %v6557
        %v6559 = vand.u32 %v6558, 4294901760
        %6560 = vmatmul.mubr.f32.gmra.mrb[0].mxu0 %v6559
        %v6561 = vpop.f32.mrb[0].mxu0
        %v6562 = vadd.f32 %v6486, %v6561
        %v6563 = vpop.f32.mrb[0].mxu0
        %v6564 = vadd.f32 %v6488, %v6563
        %6565 = vdwg.mxu0
        %v6566 = vand.u32 %v6251, 4294901760
        %v6567 = vsub.f32 %v6251, %v6566
        %v6568 = vand.u32 %v6567, 4294901760
        %6569 = vmatprep.subr.mxu0 %v6568
        %v6570 = vand.u32 %v6248, 4294901760
        %v6571 = vsub.f32 %v6248, %v6570
        %v6572 = vand.u32 %v6571, 4294901760
        %6573 = vmatpush1.msra.mxu0 %v6572
        %6574 = vmatprep.subr.mxu0 0.0
        %6575 = vmatpush1.msra.mxu0 0.0
        %6576 = vmatprep.subr.mxu0 0.0
        %6577 = vmatpush1.msra.mxu0 0.0
        %6578 = vmatprep.subr.mxu0 0.0
        %6579 = vmatpush1.msra.mxu0 0.0
        %6580 = vmatprep.subr.mxu0 0.0
        %6581 = vmatpush1.msra.mxu0 0.0
        %6582 = vmatprep.subr.mxu0 0.0
        %6583 = vmatpush1.msra.mxu0 0.0
        %6584 = vmatprep.subr.mxu0 0.0
        %6585 = vmatpush1.msra.mxu0 0.0
        %6586 = vmatprep.subr.mxu0 0.0
        %6587 = vmatpush1.msra.mxu0 0.0
        %6588 = vmatprep.subr.mxu0 0.0
        %6589 = vmatpush1.msra.mxu0 0.0
        %6590 = vmatprep.subr.mxu0 0.0
        %6591 = vmatpush1.msra.mxu0 0.0
        %6592 = vmatprep.subr.mxu0 0.0
        %6593 = vmatpush1.msra.mxu0 0.0
        %6594 = vmatprep.subr.mxu0 0.0
        %6595 = vmatpush1.msra.mxu0 0.0
        %6596 = vmatprep.subr.mxu0 0.0
        %6597 = vmatpush1.msra.mxu0 0.0
        %6598 = vmatprep.subr.mxu0 0.0
        %6599 = vmatpush1.msra.mxu0 0.0
        %6600 = vmatprep.subr.mxu0 0.0
        %6601 = vmatpush1.msra.mxu0 0.0
        %6602 = vmatprep.subr.mxu0 0.0
        %6603 = vmatpush1.msra.mxu0 0.0
        %6604 = vmatprep.subr.mxu0 0.0
        %6605 = vmatpush1.msra.mxu0 0.0
        %6606 = vmatprep.subr.mxu0 0.0
        %6607 = vmatpush1.msra.mxu0 0.0
        %6608 = vmatprep.subr.mxu0 0.0
        %6609 = vmatpush1.msra.mxu0 0.0
        %6610 = vmatprep.subr.mxu0 0.0
        %6611 = vmatpush1.msra.mxu0 0.0
        %6612 = vmatprep.subr.mxu0 0.0
        %6613 = vmatpush1.msra.mxu0 0.0
        %6614 = vmatprep.subr.mxu0 0.0
        %6615 = vmatpush1.msra.mxu0 0.0
        %6616 = vmatprep.subr.mxu0 0.0
        %6617 = vmatpush1.msra.mxu0 0.0
        %6618 = vmatprep.subr.mxu0 0.0
        %6619 = vmatpush1.msra.mxu0 0.0
        %6620 = vmatprep.subr.mxu0 0.0
        %6621 = vmatpush1.msra.mxu0 0.0
        %6622 = vmatprep.subr.mxu0 0.0
        %6623 = vmatpush1.msra.mxu0 0.0
        %6624 = vmatprep.subr.mxu0 0.0
        %6625 = vmatpush1.msra.mxu0 0.0
        %6626 = vmatprep.subr.mxu0 0.0
        %6627 = vmatpush1.msra.mxu0 0.0
        %6628 = vmatprep.subr.mxu0 0.0
        %6629 = vmatpush1.msra.mxu0 0.0
        %6630 = vmatprep.subr.mxu0 0.0
        %6631 = vmatpush1.msra.mxu0 0.0
        %6632 = vmatprep.subr.mxu0 0.0
        %6633 = vmatpush1.msra.mxu0 0.0
        %6634 = vmatprep.subr.mxu0 0.0
        %6635 = vmatpush1.msra.mxu0 0.0
        %6636 = vmatprep.mubr.f32.mxu0 0.0
        %v6637 = vand.u32 %v6245, 4294901760
        %6638 = vmatmul.mubr.f32.gmra.mrb[0].mxu0 %v6637
        %v6639 = vpop.f32.mrb[0].mxu0
        %v6640 = vadd.f32 %v6562, %v6639
        %v6641 = vpop.f32.mrb[0].mxu0
        %v6642 = vadd.f32 %v6564, %v6641
        %6643 = vdwg.mxu0
        %v6644 = vand.u32 %v6251, 4294901760
        %6645 = vmatprep.subr.mxu0 %v6644
        %v6646 = vand.u32 %v6248, 4294901760
        %6647 = vmatpush1.msra.mxu0 %v6646
        %6648 = vmatprep.subr.mxu0 0.0
        %6649 = vmatpush1.msra.mxu0 0.0
        %6650 = vmatprep.subr.mxu0 0.0
        %6651 = vmatpush1.msra.mxu0 0.0
        %6652 = vmatprep.subr.mxu0 0.0
        %6653 = vmatpush1.msra.mxu0 0.0
        %6654 = vmatprep.subr.mxu0 0.0
        %6655 = vmatpush1.msra.mxu0 0.0
        %6656 = vmatprep.subr.mxu0 0.0
        %6657 = vmatpush1.msra.mxu0 0.0
        %6658 = vmatprep.subr.mxu0 0.0
        %6659 = vmatpush1.msra.mxu0 0.0
        %6660 = vmatprep.subr.mxu0 0.0
        %6661 = vmatpush1.msra.mxu0 0.0
        %6662 = vmatprep.subr.mxu0 0.0
        %6663 = vmatpush1.msra.mxu0 0.0
        %6664 = vmatprep.subr.mxu0 0.0
        %6665 = vmatpush1.msra.mxu0 0.0
        %6666 = vmatprep.subr.mxu0 0.0
        %6667 = vmatpush1.msra.mxu0 0.0
        %6668 = vmatprep.subr.mxu0 0.0
        %6669 = vmatpush1.msra.mxu0 0.0
        %6670 = vmatprep.subr.mxu0 0.0
        %6671 = vmatpush1.msra.mxu0 0.0
        %6672 = vmatprep.subr.mxu0 0.0
        %6673 = vmatpush1.msra.mxu0 0.0
        %6674 = vmatprep.subr.mxu0 0.0
        %6675 = vmatpush1.msra.mxu0 0.0
        %6676 = vmatprep.subr.mxu0 0.0
        %6677 = vmatpush1.msra.mxu0 0.0
        %6678 = vmatprep.subr.mxu0 0.0
        %6679 = vmatpush1.msra.mxu0 0.0
        %6680 = vmatprep.subr.mxu0 0.0
        %6681 = vmatpush1.msra.mxu0 0.0
        %6682 = vmatprep.subr.mxu0 0.0
        %6683 = vmatpush1.msra.mxu0 0.0
        %6684 = vmatprep.subr.mxu0 0.0
        %6685 = vmatpush1.msra.mxu0 0.0
        %6686 = vmatprep.subr.mxu0 0.0
        %6687 = vmatpush1.msra.mxu0 0.0
        %6688 = vmatprep.subr.mxu0 0.0
        %6689 = vmatpush1.msra.mxu0 0.0
        %6690 = vmatprep.subr.mxu0 0.0
        %6691 = vmatpush1.msra.mxu0 0.0
        %6692 = vmatprep.subr.mxu0 0.0
        %6693 = vmatpush1.msra.mxu0 0.0
        %6694 = vmatprep.subr.mxu0 0.0
        %6695 = vmatpush1.msra.mxu0 0.0
        %6696 = vmatprep.subr.mxu0 0.0
        %6697 = vmatpush1.msra.mxu0 0.0
        %6698 = vmatprep.subr.mxu0 0.0
        %6699 = vmatpush1.msra.mxu0 0.0
        %6700 = vmatprep.subr.mxu0 0.0
        %6701 = vmatpush1.msra.mxu0 0.0
        %6702 = vmatprep.subr.mxu0 0.0
        %6703 = vmatpush1.msra.mxu0 0.0
        %6704 = vmatprep.subr.mxu0 0.0
        %6705 = vmatpush1.msra.mxu0 0.0
        %6706 = vmatprep.subr.mxu0 0.0
        %6707 = vmatpush1.msra.mxu0 0.0
        %6708 = vmatprep.subr.mxu0 0.0
        %6709 = vmatpush1.msra.mxu0 0.0
        %6710 = vmatprep.mubr.f32.mxu0 0.0
        %v6711 = vand.u32 %v6245, 4294901760
        %6712 = vmatmul.mubr.f32.gmra.mrb[0].mxu0 %v6711
        %v6713 = vpop.f32.mrb[0].mxu0
        %v6714 = vadd.f32 %v6640, %v6713
        %v6715 = vpop.f32.mrb[0].mxu0
        %v6716 = vadd.f32 %v6642, %v6715
        %6717 = vdwg.mxu0
        %v6718 = vadd.f32 %v6210, %v6714
        %v6719 = vadd.f32 %v6211, %v6716
        %s6720 = scalar_lea.vmem %s2, 24
        %v6721 = vld [vmem:[%s6720] sm:$0xf]
        %v6723 = vsel %vm366, %v6721, 0
        %v6726 = vsel %vm370, %v6240, 0
        %v6729 = vsel %vm370, %v6241, 0
        %v6731 = vand.u32 %v6729, 4294901760
        %6732 = vmatprep.subr.mxu0 %v6731
        %v6733 = vand.u32 %v6726, 4294901760
        %6734 = vmatpush1.msra.mxu0 %v6733
        %6735 = vmatprep.subr.mxu0 0.0
        %6736 = vmatpush1.msra.mxu0 0.0
        %6737 = vmatprep.subr.mxu0 0.0
        %6738 = vmatpush1.msra.mxu0 0.0
        %6739 = vmatprep.subr.mxu0 0.0
        %6740 = vmatpush1.msra.mxu0 0.0
        %6741 = vmatprep.subr.mxu0 0.0
        %6742 = vmatpush1.msra.mxu0 0.0
        %6743 = vmatprep.subr.mxu0 0.0
        %6744 = vmatpush1.msra.mxu0 0.0
        %6745 = vmatprep.subr.mxu0 0.0
        %6746 = vmatpush1.msra.mxu0 0.0
        %6747 = vmatprep.subr.mxu0 0.0
        %6748 = vmatpush1.msra.mxu0 0.0
        %6749 = vmatprep.subr.mxu0 0.0
        %6750 = vmatpush1.msra.mxu0 0.0
        %6751 = vmatprep.subr.mxu0 0.0
        %6752 = vmatpush1.msra.mxu0 0.0
        %6753 = vmatprep.subr.mxu0 0.0
        %6754 = vmatpush1.msra.mxu0 0.0
        %6755 = vmatprep.subr.mxu0 0.0
        %6756 = vmatpush1.msra.mxu0 0.0
        %6757 = vmatprep.subr.mxu0 0.0
        %6758 = vmatpush1.msra.mxu0 0.0
        %6759 = vmatprep.subr.mxu0 0.0
        %6760 = vmatpush1.msra.mxu0 0.0
        %6761 = vmatprep.subr.mxu0 0.0
        %6762 = vmatpush1.msra.mxu0 0.0
        %6763 = vmatprep.subr.mxu0 0.0
        %6764 = vmatpush1.msra.mxu0 0.0
        %6765 = vmatprep.subr.mxu0 0.0
        %6766 = vmatpush1.msra.mxu0 0.0
        %6767 = vmatprep.subr.mxu0 0.0
        %6768 = vmatpush1.msra.mxu0 0.0
        %6769 = vmatprep.subr.mxu0 0.0
        %6770 = vmatpush1.msra.mxu0 0.0
        %6771 = vmatprep.subr.mxu0 0.0
        %6772 = vmatpush1.msra.mxu0 0.0
        %6773 = vmatprep.subr.mxu0 0.0
        %6774 = vmatpush1.msra.mxu0 0.0
        %6775 = vmatprep.subr.mxu0 0.0
        %6776 = vmatpush1.msra.mxu0 0.0
        %6777 = vmatprep.subr.mxu0 0.0
        %6778 = vmatpush1.msra.mxu0 0.0
        %6779 = vmatprep.subr.mxu0 0.0
        %6780 = vmatpush1.msra.mxu0 0.0
        %6781 = vmatprep.subr.mxu0 0.0
        %6782 = vmatpush1.msra.mxu0 0.0
        %6783 = vmatprep.subr.mxu0 0.0
        %6784 = vmatpush1.msra.mxu0 0.0
        %6785 = vmatprep.subr.mxu0 0.0
        %6786 = vmatpush1.msra.mxu0 0.0
        %6787 = vmatprep.subr.mxu0 0.0
        %6788 = vmatpush1.msra.mxu0 0.0
        %6789 = vmatprep.subr.mxu0 0.0
        %6790 = vmatpush1.msra.mxu0 0.0
        %6791 = vmatprep.subr.mxu0 0.0
        %6792 = vmatpush1.msra.mxu0 0.0
        %6793 = vmatprep.subr.mxu0 0.0
        %6794 = vmatpush1.msra.mxu0 0.0
        %6795 = vmatprep.subr.mxu0 0.0
        %6796 = vmatpush1.msra.mxu0 0.0
        %6797 = vmatprep.mubr.f32.mxu0 0.0
        %v6798 = vand.u32 %v6723, 4294901760
        %v6799 = vsub.f32 %v6723, %v6798
        %v6800 = vand.u32 %v6799, 4294901760
        %v6801 = vsub.f32 %v6799, %v6800
        %v6802 = vand.u32 %v6801, 4294901760
        %6803 = vmatmul.mubr.f32.gmra.mrb[0].mxu0 %v6802
        %v6804 = vpop.f32.mrb[0].mxu0
        %v6805 = vadd.f32 0.0, %v6804
        %v6806 = vpop.f32.mrb[0].mxu0
        %v6807 = vadd.f32 0.0, %v6806
        %6808 = vdwg.mxu0
        %v6809 = vand.u32 %v6729, 4294901760
        %v6810 = vsub.f32 %v6729, %v6809
        %v6811 = vand.u32 %v6810, 4294901760
        %v6812 = vsub.f32 %v6810, %v6811
        %v6813 = vand.u32 %v6812, 4294901760
        %6814 = vmatprep.subr.mxu0 %v6813
        %v6815 = vand.u32 %v6726, 4294901760
        %v6816 = vsub.f32 %v6726, %v6815
        %v6817 = vand.u32 %v6816, 4294901760
        %v6818 = vsub.f32 %v6816, %v6817
        %v6819 = vand.u32 %v6818, 4294901760
        %6820 = vmatpush1.msra.mxu0 %v6819
        %6821 = vmatprep.subr.mxu0 0.0
        %6822 = vmatpush1.msra.mxu0 0.0
        %6823 = vmatprep.subr.mxu0 0.0
        %6824 = vmatpush1.msra.mxu0 0.0
        %6825 = vmatprep.subr.mxu0 0.0
        %6826 = vmatpush1.msra.mxu0 0.0
        %6827 = vmatprep.subr.mxu0 0.0
        %6828 = vmatpush1.msra.mxu0 0.0
        %6829 = vmatprep.subr.mxu0 0.0
        %6830 = vmatpush1.msra.mxu0 0.0
        %6831 = vmatprep.subr.mxu0 0.0
        %6832 = vmatpush1.msra.mxu0 0.0
        %6833 = vmatprep.subr.mxu0 0.0
        %6834 = vmatpush1.msra.mxu0 0.0
        %6835 = vmatprep.subr.mxu0 0.0
        %6836 = vmatpush1.msra.mxu0 0.0
        %6837 = vmatprep.subr.mxu0 0.0
        %6838 = vmatpush1.msra.mxu0 0.0
        %6839 = vmatprep.subr.mxu0 0.0
        %6840 = vmatpush1.msra.mxu0 0.0
        %6841 = vmatprep.subr.mxu0 0.0
        %6842 = vmatpush1.msra.mxu0 0.0
        %6843 = vmatprep.subr.mxu0 0.0
        %6844 = vmatpush1.msra.mxu0 0.0
        %6845 = vmatprep.subr.mxu0 0.0
        %6846 = vmatpush1.msra.mxu0 0.0
        %6847 = vmatprep.subr.mxu0 0.0
        %6848 = vmatpush1.msra.mxu0 0.0
        %6849 = vmatprep.subr.mxu0 0.0
        %6850 = vmatpush1.msra.mxu0 0.0
        %6851 = vmatprep.subr.mxu0 0.0
        %6852 = vmatpush1.msra.mxu0 0.0
        %6853 = vmatprep.subr.mxu0 0.0
        %6854 = vmatpush1.msra.mxu0 0.0
        %6855 = vmatprep.subr.mxu0 0.0
        %6856 = vmatpush1.msra.mxu0 0.0
        %6857 = vmatprep.subr.mxu0 0.0
        %6858 = vmatpush1.msra.mxu0 0.0
        %6859 = vmatprep.subr.mxu0 0.0
        %6860 = vmatpush1.msra.mxu0 0.0
        %6861 = vmatprep.subr.mxu0 0.0
        %6862 = vmatpush1.msra.mxu0 0.0
        %6863 = vmatprep.subr.mxu0 0.0
        %6864 = vmatpush1.msra.mxu0 0.0
        %6865 = vmatprep.subr.mxu0 0.0
        %6866 = vmatpush1.msra.mxu0 0.0
        %6867 = vmatprep.subr.mxu0 0.0
        %6868 = vmatpush1.msra.mxu0 0.0
        %6869 = vmatprep.subr.mxu0 0.0
        %6870 = vmatpush1.msra.mxu0 0.0
        %6871 = vmatprep.subr.mxu0 0.0
        %6872 = vmatpush1.msra.mxu0 0.0
        %6873 = vmatprep.subr.mxu0 0.0
        %6874 = vmatpush1.msra.mxu0 0.0
        %6875 = vmatprep.subr.mxu0 0.0
        %6876 = vmatpush1.msra.mxu0 0.0
        %6877 = vmatprep.subr.mxu0 0.0
        %6878 = vmatpush1.msra.mxu0 0.0
        %6879 = vmatprep.subr.mxu0 0.0
        %6880 = vmatpush1.msra.mxu0 0.0
        %6881 = vmatprep.subr.mxu0 0.0
        %6882 = vmatpush1.msra.mxu0 0.0
        %6883 = vmatprep.mubr.f32.mxu0 0.0
        %v6884 = vand.u32 %v6723, 4294901760
        %6885 = vmatmul.mubr.f32.gmra.mrb[0].mxu0 %v6884
        %v6886 = vpop.f32.mrb[0].mxu0
        %v6887 = vadd.f32 %v6805, %v6886
        %v6888 = vpop.f32.mrb[0].mxu0
        %v6889 = vadd.f32 %v6807, %v6888
        %6890 = vdwg.mxu0
        %v6891 = vand.u32 %v6729, 4294901760
        %v6892 = vsub.f32 %v6729, %v6891
        %6893 = vmatprep.subr.mxu0 %v6892
        %v6894 = vand.u32 %v6726, 4294901760
        %v6895 = vsub.f32 %v6726, %v6894
        %6896 = vmatpush1.msra.mxu0 %v6895
        %6897 = vmatprep.subr.mxu0 0.0
        %6898 = vmatpush1.msra.mxu0 0.0
        %6899 = vmatprep.subr.mxu0 0.0
        %6900 = vmatpush1.msra.mxu0 0.0
        %6901 = vmatprep.subr.mxu0 0.0
        %6902 = vmatpush1.msra.mxu0 0.0
        %6903 = vmatprep.subr.mxu0 0.0
        %6904 = vmatpush1.msra.mxu0 0.0
        %6905 = vmatprep.subr.mxu0 0.0
        %6906 = vmatpush1.msra.mxu0 0.0
        %6907 = vmatprep.subr.mxu0 0.0
        %6908 = vmatpush1.msra.mxu0 0.0
        %6909 = vmatprep.subr.mxu0 0.0
        %6910 = vmatpush1.msra.mxu0 0.0
        %6911 = vmatprep.subr.mxu0 0.0
        %6912 = vmatpush1.msra.mxu0 0.0
        %6913 = vmatprep.subr.mxu0 0.0
        %6914 = vmatpush1.msra.mxu0 0.0
        %6915 = vmatprep.subr.mxu0 0.0
        %6916 = vmatpush1.msra.mxu0 0.0
        %6917 = vmatprep.subr.mxu0 0.0
        %6918 = vmatpush1.msra.mxu0 0.0
        %6919 = vmatprep.subr.mxu0 0.0
        %6920 = vmatpush1.msra.mxu0 0.0
        %6921 = vmatprep.subr.mxu0 0.0
        %6922 = vmatpush1.msra.mxu0 0.0
        %6923 = vmatprep.subr.mxu0 0.0
        %6924 = vmatpush1.msra.mxu0 0.0
        %6925 = vmatprep.subr.mxu0 0.0
        %6926 = vmatpush1.msra.mxu0 0.0
        %6927 = vmatprep.subr.mxu0 0.0
        %6928 = vmatpush1.msra.mxu0 0.0
        %6929 = vmatprep.subr.mxu0 0.0
        %6930 = vmatpush1.msra.mxu0 0.0
        %6931 = vmatprep.subr.mxu0 0.0
        %6932 = vmatpush1.msra.mxu0 0.0
        %6933 = vmatprep.subr.mxu0 0.0
        %6934 = vmatpush1.msra.mxu0 0.0
        %6935 = vmatprep.subr.mxu0 0.0
        %6936 = vmatpush1.msra.mxu0 0.0
        %6937 = vmatprep.subr.mxu0 0.0
        %6938 = vmatpush1.msra.mxu0 0.0
        %6939 = vmatprep.subr.mxu0 0.0
        %6940 = vmatpush1.msra.mxu0 0.0
        %6941 = vmatprep.subr.mxu0 0.0
        %6942 = vmatpush1.msra.mxu0 0.0
        %6943 = vmatprep.subr.mxu0 0.0
        %6944 = vmatpush1.msra.mxu0 0.0
        %6945 = vmatprep.subr.mxu0 0.0
        %6946 = vmatpush1.msra.mxu0 0.0
        %6947 = vmatprep.subr.mxu0 0.0
        %6948 = vmatpush1.msra.mxu0 0.0
        %6949 = vmatprep.subr.mxu0 0.0
        %6950 = vmatpush1.msra.mxu0 0.0
        %6951 = vmatprep.subr.mxu0 0.0
        %6952 = vmatpush1.msra.mxu0 0.0
        %6953 = vmatprep.subr.mxu0 0.0
        %6954 = vmatpush1.msra.mxu0 0.0
        %6955 = vmatprep.subr.mxu0 0.0
        %6956 = vmatpush1.msra.mxu0 0.0
        %6957 = vmatprep.subr.mxu0 0.0
        %6958 = vmatpush1.msra.mxu0 0.0
        %6959 = vmatprep.mubr.f32.mxu0 0.0
        %v6960 = vand.u32 %v6723, 4294901760
        %v6961 = vsub.f32 %v6723, %v6960
        %6962 = vmatmul.mubr.f32.gmra.mrb[0].mxu0 %v6961
        %v6963 = vpop.f32.mrb[0].mxu0
        %v6964 = vadd.f32 %v6887, %v6963
        %v6965 = vpop.f32.mrb[0].mxu0
        %v6966 = vadd.f32 %v6889, %v6965
        %6967 = vdwg.mxu0
        %v6968 = vand.u32 %v6729, 4294901760
        %6969 = vmatprep.subr.mxu0 %v6968
        %v6970 = vand.u32 %v6726, 4294901760
        %6971 = vmatpush1.msra.mxu0 %v6970
        %6972 = vmatprep.subr.mxu0 0.0
        %6973 = vmatpush1.msra.mxu0 0.0
        %6974 = vmatprep.subr.mxu0 0.0
        %6975 = vmatpush1.msra.mxu0 0.0
        %6976 = vmatprep.subr.mxu0 0.0
        %6977 = vmatpush1.msra.mxu0 0.0
        %6978 = vmatprep.subr.mxu0 0.0
        %6979 = vmatpush1.msra.mxu0 0.0
        %6980 = vmatprep.subr.mxu0 0.0
        %6981 = vmatpush1.msra.mxu0 0.0
        %6982 = vmatprep.subr.mxu0 0.0
        %6983 = vmatpush1.msra.mxu0 0.0
        %6984 = vmatprep.subr.mxu0 0.0
        %6985 = vmatpush1.msra.mxu0 0.0
        %6986 = vmatprep.subr.mxu0 0.0
        %6987 = vmatpush1.msra.mxu0 0.0
        %6988 = vmatprep.subr.mxu0 0.0
        %6989 = vmatpush1.msra.mxu0 0.0
        %6990 = vmatprep.subr.mxu0 0.0
        %6991 = vmatpush1.msra.mxu0 0.0
        %6992 = vmatprep.subr.mxu0 0.0
        %6993 = vmatpush1.msra.mxu0 0.0
        %6994 = vmatprep.subr.mxu0 0.0
        %6995 = vmatpush1.msra.mxu0 0.0
        %6996 = vmatprep.subr.mxu0 0.0
        %6997 = vmatpush1.msra.mxu0 0.0
        %6998 = vmatprep.subr.mxu0 0.0
        %6999 = vmatpush1.msra.mxu0 0.0
        %7000 = vmatprep.subr.mxu0 0.0
        %7001 = vmatpush1.msra.mxu0 0.0
        %7002 = vmatprep.subr.mxu0 0.0
        %7003 = vmatpush1.msra.mxu0 0.0
        %7004 = vmatprep.subr.mxu0 0.0
        %7005 = vmatpush1.msra.mxu0 0.0
        %7006 = vmatprep.subr.mxu0 0.0
        %7007 = vmatpush1.msra.mxu0 0.0
        %7008 = vmatprep.subr.mxu0 0.0
        %7009 = vmatpush1.msra.mxu0 0.0
        %7010 = vmatprep.subr.mxu0 0.0
        %7011 = vmatpush1.msra.mxu0 0.0
        %7012 = vmatprep.subr.mxu0 0.0
        %7013 = vmatpush1.msra.mxu0 0.0
        %7014 = vmatprep.subr.mxu0 0.0
        %7015 = vmatpush1.msra.mxu0 0.0
        %7016 = vmatprep.subr.mxu0 0.0
        %7017 = vmatpush1.msra.mxu0 0.0
        %7018 = vmatprep.subr.mxu0 0.0
        %7019 = vmatpush1.msra.mxu0 0.0
        %7020 = vmatprep.subr.mxu0 0.0
        %7021 = vmatpush1.msra.mxu0 0.0
        %7022 = vmatprep.subr.mxu0 0.0
        %7023 = vmatpush1.msra.mxu0 0.0
        %7024 = vmatprep.subr.mxu0 0.0
        %7025 = vmatpush1.msra.mxu0 0.0
        %7026 = vmatprep.subr.mxu0 0.0
        %7027 = vmatpush1.msra.mxu0 0.0
        %7028 = vmatprep.subr.mxu0 0.0
        %7029 = vmatpush1.msra.mxu0 0.0
        %7030 = vmatprep.subr.mxu0 0.0
        %7031 = vmatpush1.msra.mxu0 0.0
        %7032 = vmatprep.subr.mxu0 0.0
        %7033 = vmatpush1.msra.mxu0 0.0
        %7034 = vmatprep.mubr.f32.mxu0 0.0
        %v7035 = vand.u32 %v6723, 4294901760
        %v7036 = vsub.f32 %v6723, %v7035
        %v7037 = vand.u32 %v7036, 4294901760
        %7038 = vmatmul.mubr.f32.gmra.mrb[0].mxu0 %v7037
        %v7039 = vpop.f32.mrb[0].mxu0
        %v7040 = vadd.f32 %v6964, %v7039
        %v7041 = vpop.f32.mrb[0].mxu0
        %v7042 = vadd.f32 %v6966, %v7041
        %7043 = vdwg.mxu0
        %v7044 = vand.u32 %v6729, 4294901760
        %v7045 = vsub.f32 %v6729, %v7044
        %v7046 = vand.u32 %v7045, 4294901760
        %7047 = vmatprep.subr.mxu0 %v7046
        %v7048 = vand.u32 %v6726, 4294901760
        %v7049 = vsub.f32 %v6726, %v7048
        %v7050 = vand.u32 %v7049, 4294901760
        %7051 = vmatpush1.msra.mxu0 %v7050
        %7052 = vmatprep.subr.mxu0 0.0
        %7053 = vmatpush1.msra.mxu0 0.0
        %7054 = vmatprep.subr.mxu0 0.0
        %7055 = vmatpush1.msra.mxu0 0.0
        %7056 = vmatprep.subr.mxu0 0.0
        %7057 = vmatpush1.msra.mxu0 0.0
        %7058 = vmatprep.subr.mxu0 0.0
        %7059 = vmatpush1.msra.mxu0 0.0
        %7060 = vmatprep.subr.mxu0 0.0
        %7061 = vmatpush1.msra.mxu0 0.0
        %7062 = vmatprep.subr.mxu0 0.0
        %7063 = vmatpush1.msra.mxu0 0.0
        %7064 = vmatprep.subr.mxu0 0.0
        %7065 = vmatpush1.msra.mxu0 0.0
        %7066 = vmatprep.subr.mxu0 0.0
        %7067 = vmatpush1.msra.mxu0 0.0
        %7068 = vmatprep.subr.mxu0 0.0
        %7069 = vmatpush1.msra.mxu0 0.0
        %7070 = vmatprep.subr.mxu0 0.0
        %7071 = vmatpush1.msra.mxu0 0.0
        %7072 = vmatprep.subr.mxu0 0.0
        %7073 = vmatpush1.msra.mxu0 0.0
        %7074 = vmatprep.subr.mxu0 0.0
        %7075 = vmatpush1.msra.mxu0 0.0
        %7076 = vmatprep.subr.mxu0 0.0
        %7077 = vmatpush1.msra.mxu0 0.0
        %7078 = vmatprep.subr.mxu0 0.0
        %7079 = vmatpush1.msra.mxu0 0.0
        %7080 = vmatprep.subr.mxu0 0.0
        %7081 = vmatpush1.msra.mxu0 0.0
        %7082 = vmatprep.subr.mxu0 0.0
        %7083 = vmatpush1.msra.mxu0 0.0
        %7084 = vmatprep.subr.mxu0 0.0
        %7085 = vmatpush1.msra.mxu0 0.0
        %7086 = vmatprep.subr.mxu0 0.0
        %7087 = vmatpush1.msra.mxu0 0.0
        %7088 = vmatprep.subr.mxu0 0.0
        %7089 = vmatpush1.msra.mxu0 0.0
        %7090 = vmatprep.subr.mxu0 0.0
        %7091 = vmatpush1.msra.mxu0 0.0
        %7092 = vmatprep.subr.mxu0 0.0
        %7093 = vmatpush1.msra.mxu0 0.0
        %7094 = vmatprep.subr.mxu0 0.0
        %7095 = vmatpush1.msra.mxu0 0.0
        %7096 = vmatprep.subr.mxu0 0.0
        %7097 = vmatpush1.msra.mxu0 0.0
        %7098 = vmatprep.subr.mxu0 0.0
        %7099 = vmatpush1.msra.mxu0 0.0
        %7100 = vmatprep.subr.mxu0 0.0
        %7101 = vmatpush1.msra.mxu0 0.0
        %7102 = vmatprep.subr.mxu0 0.0
        %7103 = vmatpush1.msra.mxu0 0.0
        %7104 = vmatprep.subr.mxu0 0.0
        %7105 = vmatpush1.msra.mxu0 0.0
        %7106 = vmatprep.subr.mxu0 0.0
        %7107 = vmatpush1.msra.mxu0 0.0
        %7108 = vmatprep.subr.mxu0 0.0
        %7109 = vmatpush1.msra.mxu0 0.0
        %7110 = vmatprep.subr.mxu0 0.0
        %7111 = vmatpush1.msra.mxu0 0.0
        %7112 = vmatprep.subr.mxu0 0.0
        %7113 = vmatpush1.msra.mxu0 0.0
        %7114 = vmatprep.mubr.f32.mxu0 0.0
        %v7115 = vand.u32 %v6723, 4294901760
        %7116 = vmatmul.mubr.f32.gmra.mrb[0].mxu0 %v7115
        %v7117 = vpop.f32.mrb[0].mxu0
        %v7118 = vadd.f32 %v7040, %v7117
        %v7119 = vpop.f32.mrb[0].mxu0
        %v7120 = vadd.f32 %v7042, %v7119
        %7121 = vdwg.mxu0
        %v7122 = vand.u32 %v6729, 4294901760
        %7123 = vmatprep.subr.mxu0 %v7122
        %v7124 = vand.u32 %v6726, 4294901760
        %7125 = vmatpush1.msra.mxu0 %v7124
        %7126 = vmatprep.subr.mxu0 0.0
        %7127 = vmatpush1.msra.mxu0 0.0
        %7128 = vmatprep.subr.mxu0 0.0
        %7129 = vmatpush1.msra.mxu0 0.0
        %7130 = vmatprep.subr.mxu0 0.0
        %7131 = vmatpush1.msra.mxu0 0.0
        %7132 = vmatprep.subr.mxu0 0.0
        %7133 = vmatpush1.msra.mxu0 0.0
        %7134 = vmatprep.subr.mxu0 0.0
        %7135 = vmatpush1.msra.mxu0 0.0
        %7136 = vmatprep.subr.mxu0 0.0
        %7137 = vmatpush1.msra.mxu0 0.0
        %7138 = vmatprep.subr.mxu0 0.0
        %7139 = vmatpush1.msra.mxu0 0.0
        %7140 = vmatprep.subr.mxu0 0.0
        %7141 = vmatpush1.msra.mxu0 0.0
        %7142 = vmatprep.subr.mxu0 0.0
        %7143 = vmatpush1.msra.mxu0 0.0
        %7144 = vmatprep.subr.mxu0 0.0
        %7145 = vmatpush1.msra.mxu0 0.0
        %7146 = vmatprep.subr.mxu0 0.0
        %7147 = vmatpush1.msra.mxu0 0.0
        %7148 = vmatprep.subr.mxu0 0.0
        %7149 = vmatpush1.msra.mxu0 0.0
        %7150 = vmatprep.subr.mxu0 0.0
        %7151 = vmatpush1.msra.mxu0 0.0
        %7152 = vmatprep.subr.mxu0 0.0
        %7153 = vmatpush1.msra.mxu0 0.0
        %7154 = vmatprep.subr.mxu0 0.0
        %7155 = vmatpush1.msra.mxu0 0.0
        %7156 = vmatprep.subr.mxu0 0.0
        %7157 = vmatpush1.msra.mxu0 0.0
        %7158 = vmatprep.subr.mxu0 0.0
        %7159 = vmatpush1.msra.mxu0 0.0
        %7160 = vmatprep.subr.mxu0 0.0
        %7161 = vmatpush1.msra.mxu0 0.0
        %7162 = vmatprep.subr.mxu0 0.0
        %7163 = vmatpush1.msra.mxu0 0.0
        %7164 = vmatprep.subr.mxu0 0.0
        %7165 = vmatpush1.msra.mxu0 0.0
        %7166 = vmatprep.subr.mxu0 0.0
        %7167 = vmatpush1.msra.mxu0 0.0
        %7168 = vmatprep.subr.mxu0 0.0
        %7169 = vmatpush1.msra.mxu0 0.0
        %7170 = vmatprep.subr.mxu0 0.0
        %7171 = vmatpush1.msra.mxu0 0.0
        %7172 = vmatprep.subr.mxu0 0.0
        %7173 = vmatpush1.msra.mxu0 0.0
        %7174 = vmatprep.subr.mxu0 0.0
        %7175 = vmatpush1.msra.mxu0 0.0
        %7176 = vmatprep.subr.mxu0 0.0
        %7177 = vmatpush1.msra.mxu0 0.0
        %7178 = vmatprep.subr.mxu0 0.0
        %7179 = vmatpush1.msra.mxu0 0.0
        %7180 = vmatprep.subr.mxu0 0.0
        %7181 = vmatpush1.msra.mxu0 0.0
        %7182 = vmatprep.subr.mxu0 0.0
        %7183 = vmatpush1.msra.mxu0 0.0
        %7184 = vmatprep.subr.mxu0 0.0
        %7185 = vmatpush1.msra.mxu0 0.0
        %7186 = vmatprep.subr.mxu0 0.0
        %7187 = vmatpush1.msra.mxu0 0.0
        %7188 = vmatprep.mubr.f32.mxu0 0.0
        %v7189 = vand.u32 %v6723, 4294901760
        %7190 = vmatmul.mubr.f32.gmra.mrb[0].mxu0 %v7189
        %v7191 = vpop.f32.mrb[0].mxu0
        %v7192 = vadd.f32 %v7118, %v7191
        %v7193 = vpop.f32.mrb[0].mxu0
        %v7194 = vadd.f32 %v7120, %v7193
        %7195 = vdwg.mxu0
        %v7196 = vadd.f32 %v6718, %v7192
        %v7197 = vadd.f32 %v6719, %v7194
        %s7198 = scalar_lea.vmem %s3, 14
        %v7199 = vld [vmem:[%s7198] sm:$0x3]
        %7200 = vrot.lane.b32.xlu0 %v325, 112
        %v7201 = vpop.permute.xlu0 %7200
        %7202 = vrot.lane.b32.xlu0 %v329, 112
        %v7203 = vpop.permute.xlu0 %7202
        %vm7204 = vcmp.lt.s32.totalorder %v336, 112
        %v7205 = vsel %vm7204, %v7201, %v7203
        %v7206 = vsel %vm7204, %v7203, %v7201
        %v7208 = vlaneseq
        %v7209 = vshrl.u32 %v7208, 7
        %v7210 = vsub.s32 0, %v7209
        %v7211 = vrot.slane %v7199, %v7210
        %v7212 = vlaneseq
        %v7213 = vshrl.u32 %v7212, 7
        %v7214 = vsub.s32 1, %v7213
        %v7215 = vrot.slane %v7199, %v7214
        %v7218 = vmul.f32 %v7205, %v7211
        %v7219 = vmul.f32 %v7206, %v7215
        %7220 = vrot.lane.b32.xlu0 %v326, 112
        %v7221 = vpop.permute.xlu0 %7220
        %7222 = vrot.lane.b32.xlu0 %v354, 112
        %v7223 = vpop.permute.xlu0 %7222
        %v7224 = vsel %vm7204, %v7221, %v7223
        %v7225 = vsel %vm7204, %v7223, %v7221
        %v7226 = vmul.f32 %v7224, %v7211
        %v7227 = vmul.f32 %v7225, %v7215
        %s7228 = scalar_lea.vmem %s1, 28
        %v7229 = vld [vmem:[%s7228] sm:$0xf]
        %v7231 = vsel %vm366, %v7229, 0
        %v7234 = vsel %vm370, %v7218, 0
        %v7237 = vsel %vm370, %v7219, 0
        %v7239 = vand.u32 %v7237, 4294901760
        %7240 = vmatprep.subr.mxu0 %v7239
        %v7241 = vand.u32 %v7234, 4294901760
        %7242 = vmatpush1.msra.mxu0 %v7241
        %7243 = vmatprep.subr.mxu0 0.0
        %7244 = vmatpush1.msra.mxu0 0.0
        %7245 = vmatprep.subr.mxu0 0.0
        %7246 = vmatpush1.msra.mxu0 0.0
        %7247 = vmatprep.subr.mxu0 0.0
        %7248 = vmatpush1.msra.mxu0 0.0
        %7249 = vmatprep.subr.mxu0 0.0
        %7250 = vmatpush1.msra.mxu0 0.0
        %7251 = vmatprep.subr.mxu0 0.0
        %7252 = vmatpush1.msra.mxu0 0.0
        %7253 = vmatprep.subr.mxu0 0.0
        %7254 = vmatpush1.msra.mxu0 0.0
        %7255 = vmatprep.subr.mxu0 0.0
        %7256 = vmatpush1.msra.mxu0 0.0
        %7257 = vmatprep.subr.mxu0 0.0
        %7258 = vmatpush1.msra.mxu0 0.0
        %7259 = vmatprep.subr.mxu0 0.0
        %7260 = vmatpush1.msra.mxu0 0.0
        %7261 = vmatprep.subr.mxu0 0.0
        %7262 = vmatpush1.msra.mxu0 0.0
        %7263 = vmatprep.subr.mxu0 0.0
        %7264 = vmatpush1.msra.mxu0 0.0
        %7265 = vmatprep.subr.mxu0 0.0
        %7266 = vmatpush1.msra.mxu0 0.0
        %7267 = vmatprep.subr.mxu0 0.0
        %7268 = vmatpush1.msra.mxu0 0.0
        %7269 = vmatprep.subr.mxu0 0.0
        %7270 = vmatpush1.msra.mxu0 0.0
        %7271 = vmatprep.subr.mxu0 0.0
        %7272 = vmatpush1.msra.mxu0 0.0
        %7273 = vmatprep.subr.mxu0 0.0
        %7274 = vmatpush1.msra.mxu0 0.0
        %7275 = vmatprep.subr.mxu0 0.0
        %7276 = vmatpush1.msra.mxu0 0.0
        %7277 = vmatprep.subr.mxu0 0.0
        %7278 = vmatpush1.msra.mxu0 0.0
        %7279 = vmatprep.subr.mxu0 0.0
        %7280 = vmatpush1.msra.mxu0 0.0
        %7281 = vmatprep.subr.mxu0 0.0
        %7282 = vmatpush1.msra.mxu0 0.0
        %7283 = vmatprep.subr.mxu0 0.0
        %7284 = vmatpush1.msra.mxu0 0.0
        %7285 = vmatprep.subr.mxu0 0.0
        %7286 = vmatpush1.msra.mxu0 0.0
        %7287 = vmatprep.subr.mxu0 0.0
        %7288 = vmatpush1.msra.mxu0 0.0
        %7289 = vmatprep.subr.mxu0 0.0
        %7290 = vmatpush1.msra.mxu0 0.0
        %7291 = vmatprep.subr.mxu0 0.0
        %7292 = vmatpush1.msra.mxu0 0.0
        %7293 = vmatprep.subr.mxu0 0.0
        %7294 = vmatpush1.msra.mxu0 0.0
        %7295 = vmatprep.subr.mxu0 0.0
        %7296 = vmatpush1.msra.mxu0 0.0
        %7297 = vmatprep.subr.mxu0 0.0
        %7298 = vmatpush1.msra.mxu0 0.0
        %7299 = vmatprep.subr.mxu0 0.0
        %7300 = vmatpush1.msra.mxu0 0.0
        %7301 = vmatprep.subr.mxu0 0.0
        %7302 = vmatpush1.msra.mxu0 0.0
        %7303 = vmatprep.subr.mxu0 0.0
        %7304 = vmatpush1.msra.mxu0 0.0
        %7305 = vmatprep.mubr.f32.mxu0 0.0
        %v7306 = vand.u32 %v7231, 4294901760
        %v7307 = vsub.f32 %v7231, %v7306
        %v7308 = vand.u32 %v7307, 4294901760
        %v7309 = vsub.f32 %v7307, %v7308
        %v7310 = vand.u32 %v7309, 4294901760
        %7311 = vmatmul.mubr.f32.gmra.mrb[0].mxu0 %v7310
        %v7312 = vpop.f32.mrb[0].mxu0
        %v7313 = vadd.f32 0.0, %v7312
        %v7314 = vpop.f32.mrb[0].mxu0
        %v7315 = vadd.f32 0.0, %v7314
        %7316 = vdwg.mxu0
        %v7317 = vand.u32 %v7237, 4294901760
        %v7318 = vsub.f32 %v7237, %v7317
        %v7319 = vand.u32 %v7318, 4294901760
        %v7320 = vsub.f32 %v7318, %v7319
        %v7321 = vand.u32 %v7320, 4294901760
        %7322 = vmatprep.subr.mxu0 %v7321
        %v7323 = vand.u32 %v7234, 4294901760
        %v7324 = vsub.f32 %v7234, %v7323
        %v7325 = vand.u32 %v7324, 4294901760
        %v7326 = vsub.f32 %v7324, %v7325
        %v7327 = vand.u32 %v7326, 4294901760
        %7328 = vmatpush1.msra.mxu0 %v7327
        %7329 = vmatprep.subr.mxu0 0.0
        %7330 = vmatpush1.msra.mxu0 0.0
        %7331 = vmatprep.subr.mxu0 0.0
        %7332 = vmatpush1.msra.mxu0 0.0
        %7333 = vmatprep.subr.mxu0 0.0
        %7334 = vmatpush1.msra.mxu0 0.0
        %7335 = vmatprep.subr.mxu0 0.0
        %7336 = vmatpush1.msra.mxu0 0.0
        %7337 = vmatprep.subr.mxu0 0.0
        %7338 = vmatpush1.msra.mxu0 0.0
        %7339 = vmatprep.subr.mxu0 0.0
        %7340 = vmatpush1.msra.mxu0 0.0
        %7341 = vmatprep.subr.mxu0 0.0
        %7342 = vmatpush1.msra.mxu0 0.0
        %7343 = vmatprep.subr.mxu0 0.0
        %7344 = vmatpush1.msra.mxu0 0.0
        %7345 = vmatprep.subr.mxu0 0.0
        %7346 = vmatpush1.msra.mxu0 0.0
        %7347 = vmatprep.subr.mxu0 0.0
        %7348 = vmatpush1.msra.mxu0 0.0
        %7349 = vmatprep.subr.mxu0 0.0
        %7350 = vmatpush1.msra.mxu0 0.0
        %7351 = vmatprep.subr.mxu0 0.0
        %7352 = vmatpush1.msra.mxu0 0.0
        %7353 = vmatprep.subr.mxu0 0.0
        %7354 = vmatpush1.msra.mxu0 0.0
        %7355 = vmatprep.subr.mxu0 0.0
        %7356 = vmatpush1.msra.mxu0 0.0
        %7357 = vmatprep.subr.mxu0 0.0
        %7358 = vmatpush1.msra.mxu0 0.0
        %7359 = vmatprep.subr.mxu0 0.0
        %7360 = vmatpush1.msra.mxu0 0.0
        %7361 = vmatprep.subr.mxu0 0.0
        %7362 = vmatpush1.msra.mxu0 0.0
        %7363 = vmatprep.subr.mxu0 0.0
        %7364 = vmatpush1.msra.mxu0 0.0
        %7365 = vmatprep.subr.mxu0 0.0
        %7366 = vmatpush1.msra.mxu0 0.0
        %7367 = vmatprep.subr.mxu0 0.0
        %7368 = vmatpush1.msra.mxu0 0.0
        %7369 = vmatprep.subr.mxu0 0.0
        %7370 = vmatpush1.msra.mxu0 0.0
        %7371 = vmatprep.subr.mxu0 0.0
        %7372 = vmatpush1.msra.mxu0 0.0
        %7373 = vmatprep.subr.mxu0 0.0
        %7374 = vmatpush1.msra.mxu0 0.0
        %7375 = vmatprep.subr.mxu0 0.0
        %7376 = vmatpush1.msra.mxu0 0.0
        %7377 = vmatprep.subr.mxu0 0.0
        %7378 = vmatpush1.msra.mxu0 0.0
        %7379 = vmatprep.subr.mxu0 0.0
        %7380 = vmatpush1.msra.mxu0 0.0
        %7381 = vmatprep.subr.mxu0 0.0
        %7382 = vmatpush1.msra.mxu0 0.0
        %7383 = vmatprep.subr.mxu0 0.0
        %7384 = vmatpush1.msra.mxu0 0.0
        %7385 = vmatprep.subr.mxu0 0.0
        %7386 = vmatpush1.msra.mxu0 0.0
        %7387 = vmatprep.subr.mxu0 0.0
        %7388 = vmatpush1.msra.mxu0 0.0
        %7389 = vmatprep.subr.mxu0 0.0
        %7390 = vmatpush1.msra.mxu0 0.0
        %7391 = vmatprep.mubr.f32.mxu0 0.0
        %v7392 = vand.u32 %v7231, 4294901760
        %7393 = vmatmul.mubr.f32.gmra.mrb[0].mxu0 %v7392
        %v7394 = vpop.f32.mrb[0].mxu0
        %v7395 = vadd.f32 %v7313, %v7394
        %v7396 = vpop.f32.mrb[0].mxu0
        %v7397 = vadd.f32 %v7315, %v7396
        %7398 = vdwg.mxu0
        %v7399 = vand.u32 %v7237, 4294901760
        %v7400 = vsub.f32 %v7237, %v7399
        %7401 = vmatprep.subr.mxu0 %v7400
        %v7402 = vand.u32 %v7234, 4294901760
        %v7403 = vsub.f32 %v7234, %v7402
        %7404 = vmatpush1.msra.mxu0 %v7403
        %7405 = vmatprep.subr.mxu0 0.0
        %7406 = vmatpush1.msra.mxu0 0.0
        %7407 = vmatprep.subr.mxu0 0.0
        %7408 = vmatpush1.msra.mxu0 0.0
        %7409 = vmatprep.subr.mxu0 0.0
        %7410 = vmatpush1.msra.mxu0 0.0
        %7411 = vmatprep.subr.mxu0 0.0
        %7412 = vmatpush1.msra.mxu0 0.0
        %7413 = vmatprep.subr.mxu0 0.0
        %7414 = vmatpush1.msra.mxu0 0.0
        %7415 = vmatprep.subr.mxu0 0.0
        %7416 = vmatpush1.msra.mxu0 0.0
        %7417 = vmatprep.subr.mxu0 0.0
        %7418 = vmatpush1.msra.mxu0 0.0
        %7419 = vmatprep.subr.mxu0 0.0
        %7420 = vmatpush1.msra.mxu0 0.0
        %7421 = vmatprep.subr.mxu0 0.0
        %7422 = vmatpush1.msra.mxu0 0.0
        %7423 = vmatprep.subr.mxu0 0.0
        %7424 = vmatpush1.msra.mxu0 0.0
        %7425 = vmatprep.subr.mxu0 0.0
        %7426 = vmatpush1.msra.mxu0 0.0
        %7427 = vmatprep.subr.mxu0 0.0
        %7428 = vmatpush1.msra.mxu0 0.0
        %7429 = vmatprep.subr.mxu0 0.0
        %7430 = vmatpush1.msra.mxu0 0.0
        %7431 = vmatprep.subr.mxu0 0.0
        %7432 = vmatpush1.msra.mxu0 0.0
        %7433 = vmatprep.subr.mxu0 0.0
        %7434 = vmatpush1.msra.mxu0 0.0
        %7435 = vmatprep.subr.mxu0 0.0
        %7436 = vmatpush1.msra.mxu0 0.0
        %7437 = vmatprep.subr.mxu0 0.0
        %7438 = vmatpush1.msra.mxu0 0.0
        %7439 = vmatprep.subr.mxu0 0.0
        %7440 = vmatpush1.msra.mxu0 0.0
        %7441 = vmatprep.subr.mxu0 0.0
        %7442 = vmatpush1.msra.mxu0 0.0
        %7443 = vmatprep.subr.mxu0 0.0
        %7444 = vmatpush1.msra.mxu0 0.0
        %7445 = vmatprep.subr.mxu0 0.0
        %7446 = vmatpush1.msra.mxu0 0.0
        %7447 = vmatprep.subr.mxu0 0.0
        %7448 = vmatpush1.msra.mxu0 0.0
        %7449 = vmatprep.subr.mxu0 0.0
        %7450 = vmatpush1.msra.mxu0 0.0
        %7451 = vmatprep.subr.mxu0 0.0
        %7452 = vmatpush1.msra.mxu0 0.0
        %7453 = vmatprep.subr.mxu0 0.0
        %7454 = vmatpush1.msra.mxu0 0.0
        %7455 = vmatprep.subr.mxu0 0.0
        %7456 = vmatpush1.msra.mxu0 0.0
        %7457 = vmatprep.subr.mxu0 0.0
        %7458 = vmatpush1.msra.mxu0 0.0
        %7459 = vmatprep.subr.mxu0 0.0
        %7460 = vmatpush1.msra.mxu0 0.0
        %7461 = vmatprep.subr.mxu0 0.0
        %7462 = vmatpush1.msra.mxu0 0.0
        %7463 = vmatprep.subr.mxu0 0.0
        %7464 = vmatpush1.msra.mxu0 0.0
        %7465 = vmatprep.subr.mxu0 0.0
        %7466 = vmatpush1.msra.mxu0 0.0
        %7467 = vmatprep.mubr.f32.mxu0 0.0
        %v7468 = vand.u32 %v7231, 4294901760
        %v7469 = vsub.f32 %v7231, %v7468
        %7470 = vmatmul.mubr.f32.gmra.mrb[0].mxu0 %v7469
        %v7471 = vpop.f32.mrb[0].mxu0
        %v7472 = vadd.f32 %v7395, %v7471
        %v7473 = vpop.f32.mrb[0].mxu0
        %v7474 = vadd.f32 %v7397, %v7473
        %7475 = vdwg.mxu0
        %v7476 = vand.u32 %v7237, 4294901760
        %7477 = vmatprep.subr.mxu0 %v7476
        %v7478 = vand.u32 %v7234, 4294901760
        %7479 = vmatpush1.msra.mxu0 %v7478
        %7480 = vmatprep.subr.mxu0 0.0
        %7481 = vmatpush1.msra.mxu0 0.0
        %7482 = vmatprep.subr.mxu0 0.0
        %7483 = vmatpush1.msra.mxu0 0.0
        %7484 = vmatprep.subr.mxu0 0.0
        %7485 = vmatpush1.msra.mxu0 0.0
        %7486 = vmatprep.subr.mxu0 0.0
        %7487 = vmatpush1.msra.mxu0 0.0
        %7488 = vmatprep.subr.mxu0 0.0
        %7489 = vmatpush1.msra.mxu0 0.0
        %7490 = vmatprep.subr.mxu0 0.0
        %7491 = vmatpush1.msra.mxu0 0.0
        %7492 = vmatprep.subr.mxu0 0.0
        %7493 = vmatpush1.msra.mxu0 0.0
        %7494 = vmatprep.subr.mxu0 0.0
        %7495 = vmatpush1.msra.mxu0 0.0
        %7496 = vmatprep.subr.mxu0 0.0
        %7497 = vmatpush1.msra.mxu0 0.0
        %7498 = vmatprep.subr.mxu0 0.0
        %7499 = vmatpush1.msra.mxu0 0.0
        %7500 = vmatprep.subr.mxu0 0.0
        %7501 = vmatpush1.msra.mxu0 0.0
        %7502 = vmatprep.subr.mxu0 0.0
        %7503 = vmatpush1.msra.mxu0 0.0
        %7504 = vmatprep.subr.mxu0 0.0
        %7505 = vmatpush1.msra.mxu0 0.0
        %7506 = vmatprep.subr.mxu0 0.0
        %7507 = vmatpush1.msra.mxu0 0.0
        %7508 = vmatprep.subr.mxu0 0.0
        %7509 = vmatpush1.msra.mxu0 0.0
        %7510 = vmatprep.subr.mxu0 0.0
        %7511 = vmatpush1.msra.mxu0 0.0
        %7512 = vmatprep.subr.mxu0 0.0
        %7513 = vmatpush1.msra.mxu0 0.0
        %7514 = vmatprep.subr.mxu0 0.0
        %7515 = vmatpush1.msra.mxu0 0.0
        %7516 = vmatprep.subr.mxu0 0.0
        %7517 = vmatpush1.msra.mxu0 0.0
        %7518 = vmatprep.subr.mxu0 0.0
        %7519 = vmatpush1.msra.mxu0 0.0
        %7520 = vmatprep.subr.mxu0 0.0
        %7521 = vmatpush1.msra.mxu0 0.0
        %7522 = vmatprep.subr.mxu0 0.0
        %7523 = vmatpush1.msra.mxu0 0.0
        %7524 = vmatprep.subr.mxu0 0.0
        %7525 = vmatpush1.msra.mxu0 0.0
        %7526 = vmatprep.subr.mxu0 0.0
        %7527 = vmatpush1.msra.mxu0 0.0
        %7528 = vmatprep.subr.mxu0 0.0
        %7529 = vmatpush1.msra.mxu0 0.0
        %7530 = vmatprep.subr.mxu0 0.0
        %7531 = vmatpush1.msra.mxu0 0.0
        %7532 = vmatprep.subr.mxu0 0.0
        %7533 = vmatpush1.msra.mxu0 0.0
        %7534 = vmatprep.subr.mxu0 0.0
        %7535 = vmatpush1.msra.mxu0 0.0
        %7536 = vmatprep.subr.mxu0 0.0
        %7537 = vmatpush1.msra.mxu0 0.0
        %7538 = vmatprep.subr.mxu0 0.0
        %7539 = vmatpush1.msra.mxu0 0.0
        %7540 = vmatprep.subr.mxu0 0.0
        %7541 = vmatpush1.msra.mxu0 0.0
        %7542 = vmatprep.mubr.f32.mxu0 0.0
        %v7543 = vand.u32 %v7231, 4294901760
        %v7544 = vsub.f32 %v7231, %v7543
        %v7545 = vand.u32 %v7544, 4294901760
        %7546 = vmatmul.mubr.f32.gmra.mrb[0].mxu0 %v7545
        %v7547 = vpop.f32.mrb[0].mxu0
        %v7548 = vadd.f32 %v7472, %v7547
        %v7549 = vpop.f32.mrb[0].mxu0
        %v7550 = vadd.f32 %v7474, %v7549
        %7551 = vdwg.mxu0
        %v7552 = vand.u32 %v7237, 4294901760
        %v7553 = vsub.f32 %v7237, %v7552
        %v7554 = vand.u32 %v7553, 4294901760
        %7555 = vmatprep.subr.mxu0 %v7554
        %v7556 = vand.u32 %v7234, 4294901760
        %v7557 = vsub.f32 %v7234, %v7556
        %v7558 = vand.u32 %v7557, 4294901760
        %7559 = vmatpush1.msra.mxu0 %v7558
        %7560 = vmatprep.subr.mxu0 0.0
        %7561 = vmatpush1.msra.mxu0 0.0
        %7562 = vmatprep.subr.mxu0 0.0
        %7563 = vmatpush1.msra.mxu0 0.0
        %7564 = vmatprep.subr.mxu0 0.0
        %7565 = vmatpush1.msra.mxu0 0.0
        %7566 = vmatprep.subr.mxu0 0.0
        %7567 = vmatpush1.msra.mxu0 0.0
        %7568 = vmatprep.subr.mxu0 0.0
        %7569 = vmatpush1.msra.mxu0 0.0
        %7570 = vmatprep.subr.mxu0 0.0
        %7571 = vmatpush1.msra.mxu0 0.0
        %7572 = vmatprep.subr.mxu0 0.0
        %7573 = vmatpush1.msra.mxu0 0.0
        %7574 = vmatprep.subr.mxu0 0.0
        %7575 = vmatpush1.msra.mxu0 0.0
        %7576 = vmatprep.subr.mxu0 0.0
        %7577 = vmatpush1.msra.mxu0 0.0
        %7578 = vmatprep.subr.mxu0 0.0
        %7579 = vmatpush1.msra.mxu0 0.0
        %7580 = vmatprep.subr.mxu0 0.0
        %7581 = vmatpush1.msra.mxu0 0.0
        %7582 = vmatprep.subr.mxu0 0.0
        %7583 = vmatpush1.msra.mxu0 0.0
        %7584 = vmatprep.subr.mxu0 0.0
        %7585 = vmatpush1.msra.mxu0 0.0
        %7586 = vmatprep.subr.mxu0 0.0
        %7587 = vmatpush1.msra.mxu0 0.0
        %7588 = vmatprep.subr.mxu0 0.0
        %7589 = vmatpush1.msra.mxu0 0.0
        %7590 = vmatprep.subr.mxu0 0.0
        %7591 = vmatpush1.msra.mxu0 0.0
        %7592 = vmatprep.subr.mxu0 0.0
        %7593 = vmatpush1.msra.mxu0 0.0
        %7594 = vmatprep.subr.mxu0 0.0
        %7595 = vmatpush1.msra.mxu0 0.0
        %7596 = vmatprep.subr.mxu0 0.0
        %7597 = vmatpush1.msra.mxu0 0.0
        %7598 = vmatprep.subr.mxu0 0.0
        %7599 = vmatpush1.msra.mxu0 0.0
        %7600 = vmatprep.subr.mxu0 0.0
        %7601 = vmatpush1.msra.mxu0 0.0
        %7602 = vmatprep.subr.mxu0 0.0
        %7603 = vmatpush1.msra.mxu0 0.0
        %7604 = vmatprep.subr.mxu0 0.0
        %7605 = vmatpush1.msra.mxu0 0.0
        %7606 = vmatprep.subr.mxu0 0.0
        %7607 = vmatpush1.msra.mxu0 0.0
        %7608 = vmatprep.subr.mxu0 0.0
        %7609 = vmatpush1.msra.mxu0 0.0
        %7610 = vmatprep.subr.mxu0 0.0
        %7611 = vmatpush1.msra.mxu0 0.0
        %7612 = vmatprep.subr.mxu0 0.0
        %7613 = vmatpush1.msra.mxu0 0.0
        %7614 = vmatprep.subr.mxu0 0.0
        %7615 = vmatpush1.msra.mxu0 0.0
        %7616 = vmatprep.subr.mxu0 0.0
        %7617 = vmatpush1.msra.mxu0 0.0
        %7618 = vmatprep.subr.mxu0 0.0
        %7619 = vmatpush1.msra.mxu0 0.0
        %7620 = vmatprep.subr.mxu0 0.0
        %7621 = vmatpush1.msra.mxu0 0.0
        %7622 = vmatprep.mubr.f32.mxu0 0.0
        %v7623 = vand.u32 %v7231, 4294901760
        %7624 = vmatmul.mubr.f32.gmra.mrb[0].mxu0 %v7623
        %v7625 = vpop.f32.mrb[0].mxu0
        %v7626 = vadd.f32 %v7548, %v7625
        %v7627 = vpop.f32.mrb[0].mxu0
        %v7628 = vadd.f32 %v7550, %v7627
        %7629 = vdwg.mxu0
        %v7630 = vand.u32 %v7237, 4294901760
        %7631 = vmatprep.subr.mxu0 %v7630
        %v7632 = vand.u32 %v7234, 4294901760
        %7633 = vmatpush1.msra.mxu0 %v7632
        %7634 = vmatprep.subr.mxu0 0.0
        %7635 = vmatpush1.msra.mxu0 0.0
        %7636 = vmatprep.subr.mxu0 0.0
        %7637 = vmatpush1.msra.mxu0 0.0
        %7638 = vmatprep.subr.mxu0 0.0
        %7639 = vmatpush1.msra.mxu0 0.0
        %7640 = vmatprep.subr.mxu0 0.0
        %7641 = vmatpush1.msra.mxu0 0.0
        %7642 = vmatprep.subr.mxu0 0.0
        %7643 = vmatpush1.msra.mxu0 0.0
        %7644 = vmatprep.subr.mxu0 0.0
        %7645 = vmatpush1.msra.mxu0 0.0
        %7646 = vmatprep.subr.mxu0 0.0
        %7647 = vmatpush1.msra.mxu0 0.0
        %7648 = vmatprep.subr.mxu0 0.0
        %7649 = vmatpush1.msra.mxu0 0.0
        %7650 = vmatprep.subr.mxu0 0.0
        %7651 = vmatpush1.msra.mxu0 0.0
        %7652 = vmatprep.subr.mxu0 0.0
        %7653 = vmatpush1.msra.mxu0 0.0
        %7654 = vmatprep.subr.mxu0 0.0
        %7655 = vmatpush1.msra.mxu0 0.0
        %7656 = vmatprep.subr.mxu0 0.0
        %7657 = vmatpush1.msra.mxu0 0.0
        %7658 = vmatprep.subr.mxu0 0.0
        %7659 = vmatpush1.msra.mxu0 0.0
        %7660 = vmatprep.subr.mxu0 0.0
        %7661 = vmatpush1.msra.mxu0 0.0
        %7662 = vmatprep.subr.mxu0 0.0
        %7663 = vmatpush1.msra.mxu0 0.0
        %7664 = vmatprep.subr.mxu0 0.0
        %7665 = vmatpush1.msra.mxu0 0.0
        %7666 = vmatprep.subr.mxu0 0.0
        %7667 = vmatpush1.msra.mxu0 0.0
        %7668 = vmatprep.subr.mxu0 0.0
        %7669 = vmatpush1.msra.mxu0 0.0
        %7670 = vmatprep.subr.mxu0 0.0
        %7671 = vmatpush1.msra.mxu0 0.0
        %7672 = vmatprep.subr.mxu0 0.0
        %7673 = vmatpush1.msra.mxu0 0.0
        %7674 = vmatprep.subr.mxu0 0.0
        %7675 = vmatpush1.msra.mxu0 0.0
        %7676 = vmatprep.subr.mxu0 0.0
        %7677 = vmatpush1.msra.mxu0 0.0
        %7678 = vmatprep.subr.mxu0 0.0
        %7679 = vmatpush1.msra.mxu0 0.0
        %7680 = vmatprep.subr.mxu0 0.0
        %7681 = vmatpush1.msra.mxu0 0.0
        %7682 = vmatprep.subr.mxu0 0.0
        %7683 = vmatpush1.msra.mxu0 0.0
        %7684 = vmatprep.subr.mxu0 0.0
        %7685 = vmatpush1.msra.mxu0 0.0
        %7686 = vmatprep.subr.mxu0 0.0
        %7687 = vmatpush1.msra.mxu0 0.0
        %7688 = vmatprep.subr.mxu0 0.0
        %7689 = vmatpush1.msra.mxu0 0.0
        %7690 = vmatprep.subr.mxu0 0.0
        %7691 = vmatpush1.msra.mxu0 0.0
        %7692 = vmatprep.subr.mxu0 0.0
        %7693 = vmatpush1.msra.mxu0 0.0
        %7694 = vmatprep.subr.mxu0 0.0
        %7695 = vmatpush1.msra.mxu0 0.0
        %7696 = vmatprep.mubr.f32.mxu0 0.0
        %v7697 = vand.u32 %v7231, 4294901760
        %7698 = vmatmul.mubr.f32.gmra.mrb[0].mxu0 %v7697
        %v7699 = vpop.f32.mrb[0].mxu0
        %v7700 = vadd.f32 %v7626, %v7699
        %v7701 = vpop.f32.mrb[0].mxu0
        %v7702 = vadd.f32 %v7628, %v7701
        %7703 = vdwg.mxu0
        %v7704 = vadd.f32 %v7196, %v7700
        %v7705 = vadd.f32 %v7197, %v7702
        %s7706 = scalar_lea.vmem %s2, 28
        %v7707 = vld [vmem:[%s7706] sm:$0xf]
        %v7709 = vsel %vm366, %v7707, 0
        %v7712 = vsel %vm370, %v7226, 0
        %v7715 = vsel %vm370, %v7227, 0
        %v7717 = vand.u32 %v7715, 4294901760
        %7718 = vmatprep.subr.mxu0 %v7717
        %v7719 = vand.u32 %v7712, 4294901760
        %7720 = vmatpush1.msra.mxu0 %v7719
        %7721 = vmatprep.subr.mxu0 0.0
        %7722 = vmatpush1.msra.mxu0 0.0
        %7723 = vmatprep.subr.mxu0 0.0
        %7724 = vmatpush1.msra.mxu0 0.0
        %7725 = vmatprep.subr.mxu0 0.0
        %7726 = vmatpush1.msra.mxu0 0.0
        %7727 = vmatprep.subr.mxu0 0.0
        %7728 = vmatpush1.msra.mxu0 0.0
        %7729 = vmatprep.subr.mxu0 0.0
        %7730 = vmatpush1.msra.mxu0 0.0
        %7731 = vmatprep.subr.mxu0 0.0
        %7732 = vmatpush1.msra.mxu0 0.0
        %7733 = vmatprep.subr.mxu0 0.0
        %7734 = vmatpush1.msra.mxu0 0.0
        %7735 = vmatprep.subr.mxu0 0.0
        %7736 = vmatpush1.msra.mxu0 0.0
        %7737 = vmatprep.subr.mxu0 0.0
        %7738 = vmatpush1.msra.mxu0 0.0
        %7739 = vmatprep.subr.mxu0 0.0
        %7740 = vmatpush1.msra.mxu0 0.0
        %7741 = vmatprep.subr.mxu0 0.0
        %7742 = vmatpush1.msra.mxu0 0.0
        %7743 = vmatprep.subr.mxu0 0.0
        %7744 = vmatpush1.msra.mxu0 0.0
        %7745 = vmatprep.subr.mxu0 0.0
        %7746 = vmatpush1.msra.mxu0 0.0
        %7747 = vmatprep.subr.mxu0 0.0
        %7748 = vmatpush1.msra.mxu0 0.0
        %7749 = vmatprep.subr.mxu0 0.0
        %7750 = vmatpush1.msra.mxu0 0.0
        %7751 = vmatprep.subr.mxu0 0.0
        %7752 = vmatpush1.msra.mxu0 0.0
        %7753 = vmatprep.subr.mxu0 0.0
        %7754 = vmatpush1.msra.mxu0 0.0
        %7755 = vmatprep.subr.mxu0 0.0
        %7756 = vmatpush1.msra.mxu0 0.0
        %7757 = vmatprep.subr.mxu0 0.0
        %7758 = vmatpush1.msra.mxu0 0.0
        %7759 = vmatprep.subr.mxu0 0.0
        %7760 = vmatpush1.msra.mxu0 0.0
        %7761 = vmatprep.subr.mxu0 0.0
        %7762 = vmatpush1.msra.mxu0 0.0
        %7763 = vmatprep.subr.mxu0 0.0
        %7764 = vmatpush1.msra.mxu0 0.0
        %7765 = vmatprep.subr.mxu0 0.0
        %7766 = vmatpush1.msra.mxu0 0.0
        %7767 = vmatprep.subr.mxu0 0.0
        %7768 = vmatpush1.msra.mxu0 0.0
        %7769 = vmatprep.subr.mxu0 0.0
        %7770 = vmatpush1.msra.mxu0 0.0
        %7771 = vmatprep.subr.mxu0 0.0
        %7772 = vmatpush1.msra.mxu0 0.0
        %7773 = vmatprep.subr.mxu0 0.0
        %7774 = vmatpush1.msra.mxu0 0.0
        %7775 = vmatprep.subr.mxu0 0.0
        %7776 = vmatpush1.msra.mxu0 0.0
        %7777 = vmatprep.subr.mxu0 0.0
        %7778 = vmatpush1.msra.mxu0 0.0
        %7779 = vmatprep.subr.mxu0 0.0
        %7780 = vmatpush1.msra.mxu0 0.0
        %7781 = vmatprep.subr.mxu0 0.0
        %7782 = vmatpush1.msra.mxu0 0.0
        %7783 = vmatprep.mubr.f32.mxu0 0.0
        %v7784 = vand.u32 %v7709, 4294901760
        %v7785 = vsub.f32 %v7709, %v7784
        %v7786 = vand.u32 %v7785, 4294901760
        %v7787 = vsub.f32 %v7785, %v7786
        %v7788 = vand.u32 %v7787, 4294901760
        %7789 = vmatmul.mubr.f32.gmra.mrb[0].mxu0 %v7788
        %v7790 = vpop.f32.mrb[0].mxu0
        %v7791 = vadd.f32 0.0, %v7790
        %v7792 = vpop.f32.mrb[0].mxu0
        %v7793 = vadd.f32 0.0, %v7792
        %7794 = vdwg.mxu0
        %v7795 = vand.u32 %v7715, 4294901760
        %v7796 = vsub.f32 %v7715, %v7795
        %v7797 = vand.u32 %v7796, 4294901760
        %v7798 = vsub.f32 %v7796, %v7797
        %v7799 = vand.u32 %v7798, 4294901760
        %7800 = vmatprep.subr.mxu0 %v7799
        %v7801 = vand.u32 %v7712, 4294901760
        %v7802 = vsub.f32 %v7712, %v7801
        %v7803 = vand.u32 %v7802, 4294901760
        %v7804 = vsub.f32 %v7802, %v7803
        %v7805 = vand.u32 %v7804, 4294901760
        %7806 = vmatpush1.msra.mxu0 %v7805
        %7807 = vmatprep.subr.mxu0 0.0
        %7808 = vmatpush1.msra.mxu0 0.0
        %7809 = vmatprep.subr.mxu0 0.0
        %7810 = vmatpush1.msra.mxu0 0.0
        %7811 = vmatprep.subr.mxu0 0.0
        %7812 = vmatpush1.msra.mxu0 0.0
        %7813 = vmatprep.subr.mxu0 0.0
        %7814 = vmatpush1.msra.mxu0 0.0
        %7815 = vmatprep.subr.mxu0 0.0
        %7816 = vmatpush1.msra.mxu0 0.0
        %7817 = vmatprep.subr.mxu0 0.0
        %7818 = vmatpush1.msra.mxu0 0.0
        %7819 = vmatprep.subr.mxu0 0.0
        %7820 = vmatpush1.msra.mxu0 0.0
        %7821 = vmatprep.subr.mxu0 0.0
        %7822 = vmatpush1.msra.mxu0 0.0
        %7823 = vmatprep.subr.mxu0 0.0
        %7824 = vmatpush1.msra.mxu0 0.0
        %7825 = vmatprep.subr.mxu0 0.0
        %7826 = vmatpush1.msra.mxu0 0.0
        %7827 = vmatprep.subr.mxu0 0.0
        %7828 = vmatpush1.msra.mxu0 0.0
        %7829 = vmatprep.subr.mxu0 0.0
        %7830 = vmatpush1.msra.mxu0 0.0
        %7831 = vmatprep.subr.mxu0 0.0
        %7832 = vmatpush1.msra.mxu0 0.0
        %7833 = vmatprep.subr.mxu0 0.0
        %7834 = vmatpush1.msra.mxu0 0.0
        %7835 = vmatprep.subr.mxu0 0.0
        %7836 = vmatpush1.msra.mxu0 0.0
        %7837 = vmatprep.subr.mxu0 0.0
        %7838 = vmatpush1.msra.mxu0 0.0
        %7839 = vmatprep.subr.mxu0 0.0
        %7840 = vmatpush1.msra.mxu0 0.0
        %7841 = vmatprep.subr.mxu0 0.0
        %7842 = vmatpush1.msra.mxu0 0.0
        %7843 = vmatprep.subr.mxu0 0.0
        %7844 = vmatpush1.msra.mxu0 0.0
        %7845 = vmatprep.subr.mxu0 0.0
        %7846 = vmatpush1.msra.mxu0 0.0
        %7847 = vmatprep.subr.mxu0 0.0
        %7848 = vmatpush1.msra.mxu0 0.0
        %7849 = vmatprep.subr.mxu0 0.0
        %7850 = vmatpush1.msra.mxu0 0.0
        %7851 = vmatprep.subr.mxu0 0.0
        %7852 = vmatpush1.msra.mxu0 0.0
        %7853 = vmatprep.subr.mxu0 0.0
        %7854 = vmatpush1.msra.mxu0 0.0
        %7855 = vmatprep.subr.mxu0 0.0
        %7856 = vmatpush1.msra.mxu0 0.0
        %7857 = vmatprep.subr.mxu0 0.0
        %7858 = vmatpush1.msra.mxu0 0.0
        %7859 = vmatprep.subr.mxu0 0.0
        %7860 = vmatpush1.msra.mxu0 0.0
        %7861 = vmatprep.subr.mxu0 0.0
        %7862 = vmatpush1.msra.mxu0 0.0
        %7863 = vmatprep.subr.mxu0 0.0
        %7864 = vmatpush1.msra.mxu0 0.0
        %7865 = vmatprep.subr.mxu0 0.0
        %7866 = vmatpush1.msra.mxu0 0.0
        %7867 = vmatprep.subr.mxu0 0.0
        %7868 = vmatpush1.msra.mxu0 0.0
        %7869 = vmatprep.mubr.f32.mxu0 0.0
        %v7870 = vand.u32 %v7709, 4294901760
        %7871 = vmatmul.mubr.f32.gmra.mrb[0].mxu0 %v7870
        %v7872 = vpop.f32.mrb[0].mxu0
        %v7873 = vadd.f32 %v7791, %v7872
        %v7874 = vpop.f32.mrb[0].mxu0
        %v7875 = vadd.f32 %v7793, %v7874
        %7876 = vdwg.mxu0
        %v7877 = vand.u32 %v7715, 4294901760
        %v7878 = vsub.f32 %v7715, %v7877
        %7879 = vmatprep.subr.mxu0 %v7878
        %v7880 = vand.u32 %v7712, 4294901760
        %v7881 = vsub.f32 %v7712, %v7880
        %7882 = vmatpush1.msra.mxu0 %v7881
        %7883 = vmatprep.subr.mxu0 0.0
        %7884 = vmatpush1.msra.mxu0 0.0
        %7885 = vmatprep.subr.mxu0 0.0
        %7886 = vmatpush1.msra.mxu0 0.0
        %7887 = vmatprep.subr.mxu0 0.0
        %7888 = vmatpush1.msra.mxu0 0.0
        %7889 = vmatprep.subr.mxu0 0.0
        %7890 = vmatpush1.msra.mxu0 0.0
        %7891 = vmatprep.subr.mxu0 0.0
        %7892 = vmatpush1.msra.mxu0 0.0
        %7893 = vmatprep.subr.mxu0 0.0
        %7894 = vmatpush1.msra.mxu0 0.0
        %7895 = vmatprep.subr.mxu0 0.0
        %7896 = vmatpush1.msra.mxu0 0.0
        %7897 = vmatprep.subr.mxu0 0.0
        %7898 = vmatpush1.msra.mxu0 0.0
        %7899 = vmatprep.subr.mxu0 0.0
        %7900 = vmatpush1.msra.mxu0 0.0
        %7901 = vmatprep.subr.mxu0 0.0
        %7902 = vmatpush1.msra.mxu0 0.0
        %7903 = vmatprep.subr.mxu0 0.0
        %7904 = vmatpush1.msra.mxu0 0.0
        %7905 = vmatprep.subr.mxu0 0.0
        %7906 = vmatpush1.msra.mxu0 0.0
        %7907 = vmatprep.subr.mxu0 0.0
        %7908 = vmatpush1.msra.mxu0 0.0
        %7909 = vmatprep.subr.mxu0 0.0
        %7910 = vmatpush1.msra.mxu0 0.0
        %7911 = vmatprep.subr.mxu0 0.0
        %7912 = vmatpush1.msra.mxu0 0.0
        %7913 = vmatprep.subr.mxu0 0.0
        %7914 = vmatpush1.msra.mxu0 0.0
        %7915 = vmatprep.subr.mxu0 0.0
        %7916 = vmatpush1.msra.mxu0 0.0
        %7917 = vmatprep.subr.mxu0 0.0
        %7918 = vmatpush1.msra.mxu0 0.0
        %7919 = vmatprep.subr.mxu0 0.0
        %7920 = vmatpush1.msra.mxu0 0.0
        %7921 = vmatprep.subr.mxu0 0.0
        %7922 = vmatpush1.msra.mxu0 0.0
        %7923 = vmatprep.subr.mxu0 0.0
        %7924 = vmatpush1.msra.mxu0 0.0
        %7925 = vmatprep.subr.mxu0 0.0
        %7926 = vmatpush1.msra.mxu0 0.0
        %7927 = vmatprep.subr.mxu0 0.0
        %7928 = vmatpush1.msra.mxu0 0.0
        %7929 = vmatprep.subr.mxu0 0.0
        %7930 = vmatpush1.msra.mxu0 0.0
        %7931 = vmatprep.subr.mxu0 0.0
        %7932 = vmatpush1.msra.mxu0 0.0
        %7933 = vmatprep.subr.mxu0 0.0
        %7934 = vmatpush1.msra.mxu0 0.0
        %7935 = vmatprep.subr.mxu0 0.0
        %7936 = vmatpush1.msra.mxu0 0.0
        %7937 = vmatprep.subr.mxu0 0.0
        %7938 = vmatpush1.msra.mxu0 0.0
        %7939 = vmatprep.subr.mxu0 0.0
        %7940 = vmatpush1.msra.mxu0 0.0
        %7941 = vmatprep.subr.mxu0 0.0
        %7942 = vmatpush1.msra.mxu0 0.0
        %7943 = vmatprep.subr.mxu0 0.0
        %7944 = vmatpush1.msra.mxu0 0.0
        %7945 = vmatprep.mubr.f32.mxu0 0.0
        %v7946 = vand.u32 %v7709, 4294901760
        %v7947 = vsub.f32 %v7709, %v7946
        %7948 = vmatmul.mubr.f32.gmra.mrb[0].mxu0 %v7947
        %v7949 = vpop.f32.mrb[0].mxu0
        %v7950 = vadd.f32 %v7873, %v7949
        %v7951 = vpop.f32.mrb[0].mxu0
        %v7952 = vadd.f32 %v7875, %v7951
        %7953 = vdwg.mxu0
        %v7954 = vand.u32 %v7715, 4294901760
        %7955 = vmatprep.subr.mxu0 %v7954
        %v7956 = vand.u32 %v7712, 4294901760
        %7957 = vmatpush1.msra.mxu0 %v7956
        %7958 = vmatprep.subr.mxu0 0.0
        %7959 = vmatpush1.msra.mxu0 0.0
        %7960 = vmatprep.subr.mxu0 0.0
        %7961 = vmatpush1.msra.mxu0 0.0
        %7962 = vmatprep.subr.mxu0 0.0
        %7963 = vmatpush1.msra.mxu0 0.0
        %7964 = vmatprep.subr.mxu0 0.0
        %7965 = vmatpush1.msra.mxu0 0.0
        %7966 = vmatprep.subr.mxu0 0.0
        %7967 = vmatpush1.msra.mxu0 0.0
        %7968 = vmatprep.subr.mxu0 0.0
        %7969 = vmatpush1.msra.mxu0 0.0
        %7970 = vmatprep.subr.mxu0 0.0
        %7971 = vmatpush1.msra.mxu0 0.0
        %7972 = vmatprep.subr.mxu0 0.0
        %7973 = vmatpush1.msra.mxu0 0.0
        %7974 = vmatprep.subr.mxu0 0.0
        %7975 = vmatpush1.msra.mxu0 0.0
        %7976 = vmatprep.subr.mxu0 0.0
        %7977 = vmatpush1.msra.mxu0 0.0
        %7978 = vmatprep.subr.mxu0 0.0
        %7979 = vmatpush1.msra.mxu0 0.0
        %7980 = vmatprep.subr.mxu0 0.0
        %7981 = vmatpush1.msra.mxu0 0.0
        %7982 = vmatprep.subr.mxu0 0.0
        %7983 = vmatpush1.msra.mxu0 0.0
        %7984 = vmatprep.subr.mxu0 0.0
        %7985 = vmatpush1.msra.mxu0 0.0
        %7986 = vmatprep.subr.mxu0 0.0
        %7987 = vmatpush1.msra.mxu0 0.0
        %7988 = vmatprep.subr.mxu0 0.0
        %7989 = vmatpush1.msra.mxu0 0.0
        %7990 = vmatprep.subr.mxu0 0.0
        %7991 = vmatpush1.msra.mxu0 0.0
        %7992 = vmatprep.subr.mxu0 0.0
        %7993 = vmatpush1.msra.mxu0 0.0
        %7994 = vmatprep.subr.mxu0 0.0
        %7995 = vmatpush1.msra.mxu0 0.0
        %7996 = vmatprep.subr.mxu0 0.0
        %7997 = vmatpush1.msra.mxu0 0.0
        %7998 = vmatprep.subr.mxu0 0.0
        %7999 = vmatpush1.msra.mxu0 0.0
        %8000 = vmatprep.subr.mxu0 0.0
        %8001 = vmatpush1.msra.mxu0 0.0
        %8002 = vmatprep.subr.mxu0 0.0
        %8003 = vmatpush1.msra.mxu0 0.0
        %8004 = vmatprep.subr.mxu0 0.0
        %8005 = vmatpush1.msra.mxu0 0.0
        %8006 = vmatprep.subr.mxu0 0.0
        %8007 = vmatpush1.msra.mxu0 0.0
        %8008 = vmatprep.subr.mxu0 0.0
        %8009 = vmatpush1.msra.mxu0 0.0
        %8010 = vmatprep.subr.mxu0 0.0
        %8011 = vmatpush1.msra.mxu0 0.0
        %8012 = vmatprep.subr.mxu0 0.0
        %8013 = vmatpush1.msra.mxu0 0.0
        %8014 = vmatprep.subr.mxu0 0.0
        %8015 = vmatpush1.msra.mxu0 0.0
        %8016 = vmatprep.subr.mxu0 0.0
        %8017 = vmatpush1.msra.mxu0 0.0
        %8018 = vmatprep.subr.mxu0 0.0
        %8019 = vmatpush1.msra.mxu0 0.0
        %8020 = vmatprep.mubr.f32.mxu0 0.0
        %v8021 = vand.u32 %v7709, 4294901760
        %v8022 = vsub.f32 %v7709, %v8021
        %v8023 = vand.u32 %v8022, 4294901760
        %8024 = vmatmul.mubr.f32.gmra.mrb[0].mxu0 %v8023
        %v8025 = vpop.f32.mrb[0].mxu0
        %v8026 = vadd.f32 %v7950, %v8025
        %v8027 = vpop.f32.mrb[0].mxu0
        %v8028 = vadd.f32 %v7952, %v8027
        %8029 = vdwg.mxu0
        %v8030 = vand.u32 %v7715, 4294901760
        %v8031 = vsub.f32 %v7715, %v8030
        %v8032 = vand.u32 %v8031, 4294901760
        %8033 = vmatprep.subr.mxu0 %v8032
        %v8034 = vand.u32 %v7712, 4294901760
        %v8035 = vsub.f32 %v7712, %v8034
        %v8036 = vand.u32 %v8035, 4294901760
        %8037 = vmatpush1.msra.mxu0 %v8036
        %8038 = vmatprep.subr.mxu0 0.0
        %8039 = vmatpush1.msra.mxu0 0.0
        %8040 = vmatprep.subr.mxu0 0.0
        %8041 = vmatpush1.msra.mxu0 0.0
        %8042 = vmatprep.subr.mxu0 0.0
        %8043 = vmatpush1.msra.mxu0 0.0
        %8044 = vmatprep.subr.mxu0 0.0
        %8045 = vmatpush1.msra.mxu0 0.0
        %8046 = vmatprep.subr.mxu0 0.0
        %8047 = vmatpush1.msra.mxu0 0.0
        %8048 = vmatprep.subr.mxu0 0.0
        %8049 = vmatpush1.msra.mxu0 0.0
        %8050 = vmatprep.subr.mxu0 0.0
        %8051 = vmatpush1.msra.mxu0 0.0
        %8052 = vmatprep.subr.mxu0 0.0
        %8053 = vmatpush1.msra.mxu0 0.0
        %8054 = vmatprep.subr.mxu0 0.0
        %8055 = vmatpush1.msra.mxu0 0.0
        %8056 = vmatprep.subr.mxu0 0.0
        %8057 = vmatpush1.msra.mxu0 0.0
        %8058 = vmatprep.subr.mxu0 0.0
        %8059 = vmatpush1.msra.mxu0 0.0
        %8060 = vmatprep.subr.mxu0 0.0
        %8061 = vmatpush1.msra.mxu0 0.0
        %8062 = vmatprep.subr.mxu0 0.0
        %8063 = vmatpush1.msra.mxu0 0.0
        %8064 = vmatprep.subr.mxu0 0.0
        %8065 = vmatpush1.msra.mxu0 0.0
        %8066 = vmatprep.subr.mxu0 0.0
        %8067 = vmatpush1.msra.mxu0 0.0
        %8068 = vmatprep.subr.mxu0 0.0
        %8069 = vmatpush1.msra.mxu0 0.0
        %8070 = vmatprep.subr.mxu0 0.0
        %8071 = vmatpush1.msra.mxu0 0.0
        %8072 = vmatprep.subr.mxu0 0.0
        %8073 = vmatpush1.msra.mxu0 0.0
        %8074 = vmatprep.subr.mxu0 0.0
        %8075 = vmatpush1.msra.mxu0 0.0
        %8076 = vmatprep.subr.mxu0 0.0
        %8077 = vmatpush1.msra.mxu0 0.0
        %8078 = vmatprep.subr.mxu0 0.0
        %8079 = vmatpush1.msra.mxu0 0.0
        %8080 = vmatprep.subr.mxu0 0.0
        %8081 = vmatpush1.msra.mxu0 0.0
        %8082 = vmatprep.subr.mxu0 0.0
        %8083 = vmatpush1.msra.mxu0 0.0
        %8084 = vmatprep.subr.mxu0 0.0
        %8085 = vmatpush1.msra.mxu0 0.0
        %8086 = vmatprep.subr.mxu0 0.0
        %8087 = vmatpush1.msra.mxu0 0.0
        %8088 = vmatprep.subr.mxu0 0.0
        %8089 = vmatpush1.msra.mxu0 0.0
        %8090 = vmatprep.subr.mxu0 0.0
        %8091 = vmatpush1.msra.mxu0 0.0
        %8092 = vmatprep.subr.mxu0 0.0
        %8093 = vmatpush1.msra.mxu0 0.0
        %8094 = vmatprep.subr.mxu0 0.0
        %8095 = vmatpush1.msra.mxu0 0.0
        %8096 = vmatprep.subr.mxu0 0.0
        %8097 = vmatpush1.msra.mxu0 0.0
        %8098 = vmatprep.subr.mxu0 0.0
        %8099 = vmatpush1.msra.mxu0 0.0
        %8100 = vmatprep.mubr.f32.mxu0 0.0
        %v8101 = vand.u32 %v7709, 4294901760
        %8102 = vmatmul.mubr.f32.gmra.mrb[0].mxu0 %v8101
        %v8103 = vpop.f32.mrb[0].mxu0
        %v8104 = vadd.f32 %v8026, %v8103
        %v8105 = vpop.f32.mrb[0].mxu0
        %v8106 = vadd.f32 %v8028, %v8105
        %8107 = vdwg.mxu0
        %v8108 = vand.u32 %v7715, 4294901760
        %8109 = vmatprep.subr.mxu0 %v8108
        %v8110 = vand.u32 %v7712, 4294901760
        %8111 = vmatpush1.msra.mxu0 %v8110
        %8112 = vmatprep.subr.mxu0 0.0
        %8113 = vmatpush1.msra.mxu0 0.0
        %8114 = vmatprep.subr.mxu0 0.0
        %8115 = vmatpush1.msra.mxu0 0.0
        %8116 = vmatprep.subr.mxu0 0.0
        %8117 = vmatpush1.msra.mxu0 0.0
        %8118 = vmatprep.subr.mxu0 0.0
        %8119 = vmatpush1.msra.mxu0 0.0
        %8120 = vmatprep.subr.mxu0 0.0
        %8121 = vmatpush1.msra.mxu0 0.0
        %8122 = vmatprep.subr.mxu0 0.0
        %8123 = vmatpush1.msra.mxu0 0.0
        %8124 = vmatprep.subr.mxu0 0.0
        %8125 = vmatpush1.msra.mxu0 0.0
        %8126 = vmatprep.subr.mxu0 0.0
        %8127 = vmatpush1.msra.mxu0 0.0
        %8128 = vmatprep.subr.mxu0 0.0
        %8129 = vmatpush1.msra.mxu0 0.0
        %8130 = vmatprep.subr.mxu0 0.0
        %8131 = vmatpush1.msra.mxu0 0.0
        %8132 = vmatprep.subr.mxu0 0.0
        %8133 = vmatpush1.msra.mxu0 0.0
        %8134 = vmatprep.subr.mxu0 0.0
        %8135 = vmatpush1.msra.mxu0 0.0
        %8136 = vmatprep.subr.mxu0 0.0
        %8137 = vmatpush1.msra.mxu0 0.0
        %8138 = vmatprep.subr.mxu0 0.0
        %8139 = vmatpush1.msra.mxu0 0.0
        %8140 = vmatprep.subr.mxu0 0.0
        %8141 = vmatpush1.msra.mxu0 0.0
        %8142 = vmatprep.subr.mxu0 0.0
        %8143 = vmatpush1.msra.mxu0 0.0
        %8144 = vmatprep.subr.mxu0 0.0
        %8145 = vmatpush1.msra.mxu0 0.0
        %8146 = vmatprep.subr.mxu0 0.0
        %8147 = vmatpush1.msra.mxu0 0.0
        %8148 = vmatprep.subr.mxu0 0.0
        %8149 = vmatpush1.msra.mxu0 0.0
        %8150 = vmatprep.subr.mxu0 0.0
        %8151 = vmatpush1.msra.mxu0 0.0
        %8152 = vmatprep.subr.mxu0 0.0
        %8153 = vmatpush1.msra.mxu0 0.0
        %8154 = vmatprep.subr.mxu0 0.0
        %8155 = vmatpush1.msra.mxu0 0.0
        %8156 = vmatprep.subr.mxu0 0.0
        %8157 = vmatpush1.msra.mxu0 0.0
        %8158 = vmatprep.subr.mxu0 0.0
        %8159 = vmatpush1.msra.mxu0 0.0
        %8160 = vmatprep.subr.mxu0 0.0
        %8161 = vmatpush1.msra.mxu0 0.0
        %8162 = vmatprep.subr.mxu0 0.0
        %8163 = vmatpush1.msra.mxu0 0.0
        %8164 = vmatprep.subr.mxu0 0.0
        %8165 = vmatpush1.msra.mxu0 0.0
        %8166 = vmatprep.subr.mxu0 0.0
        %8167 = vmatpush1.msra.mxu0 0.0
        %8168 = vmatprep.subr.mxu0 0.0
        %8169 = vmatpush1.msra.mxu0 0.0
        %8170 = vmatprep.subr.mxu0 0.0
        %8171 = vmatpush1.msra.mxu0 0.0
        %8172 = vmatprep.subr.mxu0 0.0
        %8173 = vmatpush1.msra.mxu0 0.0
        %8174 = vmatprep.mubr.f32.mxu0 0.0
        %v8175 = vand.u32 %v7709, 4294901760
        %8176 = vmatmul.mubr.f32.gmra.mrb[0].mxu0 %v8175
        %v8177 = vpop.f32.mrb[0].mxu0
        %v8178 = vadd.f32 %v8104, %v8177
        %v8179 = vpop.f32.mrb[0].mxu0
        %v8180 = vadd.f32 %v8106, %v8179
        %8181 = vdwg.mxu0
        %v8182 = vadd.f32 %v7704, %v8178
        %v8183 = vadd.f32 %v7705, %v8180
        %s8184 = scalar_lea.vmem %s3, 16
        %v8185 = vld [vmem:[%s8184] sm:$0x3]
        %8186 = vrot.lane.b32.xlu0 %v325, 111
        %v8187 = vpop.permute.xlu0 %8186
        %8188 = vrot.lane.b32.xlu0 %v329, 111
        %v8189 = vpop.permute.xlu0 %8188
        %vm8190 = vcmp.lt.s32.totalorder %v336, 111
        %v8191 = vsel %vm8190, %v8187, %v8189
        %v8192 = vsel %vm8190, %v8189, %v8187
        %v8194 = vlaneseq
        %v8195 = vshrl.u32 %v8194, 7
        %v8196 = vsub.s32 0, %v8195
        %v8197 = vrot.slane %v8185, %v8196
        %v8198 = vlaneseq
        %v8199 = vshrl.u32 %v8198, 7
        %v8200 = vsub.s32 1, %v8199
        %v8201 = vrot.slane %v8185, %v8200
        %v8204 = vmul.f32 %v8191, %v8197
        %v8205 = vmul.f32 %v8192, %v8201
        %8206 = vrot.lane.b32.xlu0 %v326, 111
        %v8207 = vpop.permute.xlu0 %8206
        %8208 = vrot.lane.b32.xlu0 %v354, 111
        %v8209 = vpop.permute.xlu0 %8208
        %v8210 = vsel %vm8190, %v8207, %v8209
        %v8211 = vsel %vm8190, %v8209, %v8207
        %v8212 = vmul.f32 %v8210, %v8197
        %v8213 = vmul.f32 %v8211, %v8201
        %s8214 = scalar_lea.vmem %s1, 32
        %v8215 = vld [vmem:[%s8214] sm:$0xf]
        %v8217 = vsel %vm366, %v8215, 0
        %v8220 = vsel %vm370, %v8204, 0
        %v8223 = vsel %vm370, %v8205, 0
        %v8225 = vand.u32 %v8223, 4294901760
        %8226 = vmatprep.subr.mxu0 %v8225
        %v8227 = vand.u32 %v8220, 4294901760
        %8228 = vmatpush1.msra.mxu0 %v8227
        %8229 = vmatprep.subr.mxu0 0.0
        %8230 = vmatpush1.msra.mxu0 0.0
        %8231 = vmatprep.subr.mxu0 0.0
        %8232 = vmatpush1.msra.mxu0 0.0
        %8233 = vmatprep.subr.mxu0 0.0
        %8234 = vmatpush1.msra.mxu0 0.0
        %8235 = vmatprep.subr.mxu0 0.0
        %8236 = vmatpush1.msra.mxu0 0.0
        %8237 = vmatprep.subr.mxu0 0.0
        %8238 = vmatpush1.msra.mxu0 0.0
        %8239 = vmatprep.subr.mxu0 0.0
        %8240 = vmatpush1.msra.mxu0 0.0
        %8241 = vmatprep.subr.mxu0 0.0
        %8242 = vmatpush1.msra.mxu0 0.0
        %8243 = vmatprep.subr.mxu0 0.0
        %8244 = vmatpush1.msra.mxu0 0.0
        %8245 = vmatprep.subr.mxu0 0.0
        %8246 = vmatpush1.msra.mxu0 0.0
        %8247 = vmatprep.subr.mxu0 0.0
        %8248 = vmatpush1.msra.mxu0 0.0
        %8249 = vmatprep.subr.mxu0 0.0
        %8250 = vmatpush1.msra.mxu0 0.0
        %8251 = vmatprep.subr.mxu0 0.0
        %8252 = vmatpush1.msra.mxu0 0.0
        %8253 = vmatprep.subr.mxu0 0.0
        %8254 = vmatpush1.msra.mxu0 0.0
        %8255 = vmatprep.subr.mxu0 0.0
        %8256 = vmatpush1.msra.mxu0 0.0
        %8257 = vmatprep.subr.mxu0 0.0
        %8258 = vmatpush1.msra.mxu0 0.0
        %8259 = vmatprep.subr.mxu0 0.0
        %8260 = vmatpush1.msra.mxu0 0.0
        %8261 = vmatprep.subr.mxu0 0.0
        %8262 = vmatpush1.msra.mxu0 0.0
        %8263 = vmatprep.subr.mxu0 0.0
        %8264 = vmatpush1.msra.mxu0 0.0
        %8265 = vmatprep.subr.mxu0 0.0
        %8266 = vmatpush1.msra.mxu0 0.0
        %8267 = vmatprep.subr.mxu0 0.0
        %8268 = vmatpush1.msra.mxu0 0.0
        %8269 = vmatprep.subr.mxu0 0.0
        %8270 = vmatpush1.msra.mxu0 0.0
        %8271 = vmatprep.subr.mxu0 0.0
        %8272 = vmatpush1.msra.mxu0 0.0
        %8273 = vmatprep.subr.mxu0 0.0
        %8274 = vmatpush1.msra.mxu0 0.0
        %8275 = vmatprep.subr.mxu0 0.0
        %8276 = vmatpush1.msra.mxu0 0.0
        %8277 = vmatprep.subr.mxu0 0.0
        %8278 = vmatpush1.msra.mxu0 0.0
        %8279 = vmatprep.subr.mxu0 0.0
        %8280 = vmatpush1.msra.mxu0 0.0
        %8281 = vmatprep.subr.mxu0 0.0
        %8282 = vmatpush1.msra.mxu0 0.0
        %8283 = vmatprep.subr.mxu0 0.0
        %8284 = vmatpush1.msra.mxu0 0.0
        %8285 = vmatprep.subr.mxu0 0.0
        %8286 = vmatpush1.msra.mxu0 0.0
        %8287 = vmatprep.subr.mxu0 0.0
        %8288 = vmatpush1.msra.mxu0 0.0
        %8289 = vmatprep.subr.mxu0 0.0
        %8290 = vmatpush1.msra.mxu0 0.0
        %8291 = vmatprep.mubr.f32.mxu0 0.0
        %v8292 = vand.u32 %v8217, 4294901760
        %v8293 = vsub.f32 %v8217, %v8292
        %v8294 = vand.u32 %v8293, 4294901760
        %v8295 = vsub.f32 %v8293, %v8294
        %v8296 = vand.u32 %v8295, 4294901760
        %8297 = vmatmul.mubr.f32.gmra.mrb[0].mxu0 %v8296
        %v8298 = vpop.f32.mrb[0].mxu0
        %v8299 = vadd.f32 0.0, %v8298
        %v8300 = vpop.f32.mrb[0].mxu0
        %v8301 = vadd.f32 0.0, %v8300
        %8302 = vdwg.mxu0
        %v8303 = vand.u32 %v8223, 4294901760
        %v8304 = vsub.f32 %v8223, %v8303
        %v8305 = vand.u32 %v8304, 4294901760
        %v8306 = vsub.f32 %v8304, %v8305
        %v8307 = vand.u32 %v8306, 4294901760
        %8308 = vmatprep.subr.mxu0 %v8307
        %v8309 = vand.u32 %v8220, 4294901760
        %v8310 = vsub.f32 %v8220, %v8309
        %v8311 = vand.u32 %v8310, 4294901760
        %v8312 = vsub.f32 %v8310, %v8311
        %v8313 = vand.u32 %v8312, 4294901760
        %8314 = vmatpush1.msra.mxu0 %v8313
        %8315 = vmatprep.subr.mxu0 0.0
        %8316 = vmatpush1.msra.mxu0 0.0
        %8317 = vmatprep.subr.mxu0 0.0
        %8318 = vmatpush1.msra.mxu0 0.0
        %8319 = vmatprep.subr.mxu0 0.0
        %8320 = vmatpush1.msra.mxu0 0.0
        %8321 = vmatprep.subr.mxu0 0.0
        %8322 = vmatpush1.msra.mxu0 0.0
        %8323 = vmatprep.subr.mxu0 0.0
        %8324 = vmatpush1.msra.mxu0 0.0
        %8325 = vmatprep.subr.mxu0 0.0
        %8326 = vmatpush1.msra.mxu0 0.0
        %8327 = vmatprep.subr.mxu0 0.0
        %8328 = vmatpush1.msra.mxu0 0.0
        %8329 = vmatprep.subr.mxu0 0.0
        %8330 = vmatpush1.msra.mxu0 0.0
        %8331 = vmatprep.subr.mxu0 0.0
        %8332 = vmatpush1.msra.mxu0 0.0
        %8333 = vmatprep.subr.mxu0 0.0
        %8334 = vmatpush1.msra.mxu0 0.0
        %8335 = vmatprep.subr.mxu0 0.0
        %8336 = vmatpush1.msra.mxu0 0.0
        %8337 = vmatprep.subr.mxu0 0.0
        %8338 = vmatpush1.msra.mxu0 0.0
        %8339 = vmatprep.subr.mxu0 0.0
        %8340 = vmatpush1.msra.mxu0 0.0
        %8341 = vmatprep.subr.mxu0 0.0
        %8342 = vmatpush1.msra.mxu0 0.0
        %8343 = vmatprep.subr.mxu0 0.0
        %8344 = vmatpush1.msra.mxu0 0.0
        %8345 = vmatprep.subr.mxu0 0.0
        %8346 = vmatpush1.msra.mxu0 0.0
        %8347 = vmatprep.subr.mxu0 0.0
        %8348 = vmatpush1.msra.mxu0 0.0
        %8349 = vmatprep.subr.mxu0 0.0
        %8350 = vmatpush1.msra.mxu0 0.0
        %8351 = vmatprep.subr.mxu0 0.0
        %8352 = vmatpush1.msra.mxu0 0.0
        %8353 = vmatprep.subr.mxu0 0.0
        %8354 = vmatpush1.msra.mxu0 0.0
        %8355 = vmatprep.subr.mxu0 0.0
        %8356 = vmatpush1.msra.mxu0 0.0
        %8357 = vmatprep.subr.mxu0 0.0
        %8358 = vmatpush1.msra.mxu0 0.0
        %8359 = vmatprep.subr.mxu0 0.0
        %8360 = vmatpush1.msra.mxu0 0.0
        %8361 = vmatprep.subr.mxu0 0.0
        %8362 = vmatpush1.msra.mxu0 0.0
        %8363 = vmatprep.subr.mxu0 0.0
        %8364 = vmatpush1.msra.mxu0 0.0
        %8365 = vmatprep.subr.mxu0 0.0
        %8366 = vmatpush1.msra.mxu0 0.0
        %8367 = vmatprep.subr.mxu0 0.0
        %8368 = vmatpush1.msra.mxu0 0.0
        %8369 = vmatprep.subr.mxu0 0.0
        %8370 = vmatpush1.msra.mxu0 0.0
        %8371 = vmatprep.subr.mxu0 0.0
        %8372 = vmatpush1.msra.mxu0 0.0
        %8373 = vmatprep.subr.mxu0 0.0
        %8374 = vmatpush1.msra.mxu0 0.0
        %8375 = vmatprep.subr.mxu0 0.0
        %8376 = vmatpush1.msra.mxu0 0.0
        %8377 = vmatprep.mubr.f32.mxu0 0.0
        %v8378 = vand.u32 %v8217, 4294901760
        %8379 = vmatmul.mubr.f32.gmra.mrb[0].mxu0 %v8378
        %v8380 = vpop.f32.mrb[0].mxu0
        %v8381 = vadd.f32 %v8299, %v8380
        %v8382 = vpop.f32.mrb[0].mxu0
        %v8383 = vadd.f32 %v8301, %v8382
        %8384 = vdwg.mxu0
        %v8385 = vand.u32 %v8223, 4294901760
        %v8386 = vsub.f32 %v8223, %v8385
        %8387 = vmatprep.subr.mxu0 %v8386
        %v8388 = vand.u32 %v8220, 4294901760
        %v8389 = vsub.f32 %v8220, %v8388
        %8390 = vmatpush1.msra.mxu0 %v8389
        %8391 = vmatprep.subr.mxu0 0.0
        %8392 = vmatpush1.msra.mxu0 0.0
        %8393 = vmatprep.subr.mxu0 0.0
        %8394 = vmatpush1.msra.mxu0 0.0
        %8395 = vmatprep.subr.mxu0 0.0
        %8396 = vmatpush1.msra.mxu0 0.0
        %8397 = vmatprep.subr.mxu0 0.0
        %8398 = vmatpush1.msra.mxu0 0.0
        %8399 = vmatprep.subr.mxu0 0.0
        %8400 = vmatpush1.msra.mxu0 0.0
        %8401 = vmatprep.subr.mxu0 0.0
        %8402 = vmatpush1.msra.mxu0 0.0
        %8403 = vmatprep.subr.mxu0 0.0
        %8404 = vmatpush1.msra.mxu0 0.0
        %8405 = vmatprep.subr.mxu0 0.0
        %8406 = vmatpush1.msra.mxu0 0.0
        %8407 = vmatprep.subr.mxu0 0.0
        %8408 = vmatpush1.msra.mxu0 0.0
        %8409 = vmatprep.subr.mxu0 0.0
        %8410 = vmatpush1.msra.mxu0 0.0
        %8411 = vmatprep.subr.mxu0 0.0
        %8412 = vmatpush1.msra.mxu0 0.0
        %8413 = vmatprep.subr.mxu0 0.0
        %8414 = vmatpush1.msra.mxu0 0.0
        %8415 = vmatprep.subr.mxu0 0.0
        %8416 = vmatpush1.msra.mxu0 0.0
        %8417 = vmatprep.subr.mxu0 0.0
        %8418 = vmatpush1.msra.mxu0 0.0
        %8419 = vmatprep.subr.mxu0 0.0
        %8420 = vmatpush1.msra.mxu0 0.0
        %8421 = vmatprep.subr.mxu0 0.0
        %8422 = vmatpush1.msra.mxu0 0.0
        %8423 = vmatprep.subr.mxu0 0.0
        %8424 = vmatpush1.msra.mxu0 0.0
        %8425 = vmatprep.subr.mxu0 0.0
        %8426 = vmatpush1.msra.mxu0 0.0
        %8427 = vmatprep.subr.mxu0 0.0
        %8428 = vmatpush1.msra.mxu0 0.0
        %8429 = vmatprep.subr.mxu0 0.0
        %8430 = vmatpush1.msra.mxu0 0.0
        %8431 = vmatprep.subr.mxu0 0.0
        %8432 = vmatpush1.msra.mxu0 0.0
        %8433 = vmatprep.subr.mxu0 0.0
        %8434 = vmatpush1.msra.mxu0 0.0
        %8435 = vmatprep.subr.mxu0 0.0
        %8436 = vmatpush1.msra.mxu0 0.0
        %8437 = vmatprep.subr.mxu0 0.0
        %8438 = vmatpush1.msra.mxu0 0.0
        %8439 = vmatprep.subr.mxu0 0.0
        %8440 = vmatpush1.msra.mxu0 0.0
        %8441 = vmatprep.subr.mxu0 0.0
        %8442 = vmatpush1.msra.mxu0 0.0
        %8443 = vmatprep.subr.mxu0 0.0
        %8444 = vmatpush1.msra.mxu0 0.0
        %8445 = vmatprep.subr.mxu0 0.0
        %8446 = vmatpush1.msra.mxu0 0.0
        %8447 = vmatprep.subr.mxu0 0.0
        %8448 = vmatpush1.msra.mxu0 0.0
        %8449 = vmatprep.subr.mxu0 0.0
        %8450 = vmatpush1.msra.mxu0 0.0
        %8451 = vmatprep.subr.mxu0 0.0
        %8452 = vmatpush1.msra.mxu0 0.0
        %8453 = vmatprep.mubr.f32.mxu0 0.0
        %v8454 = vand.u32 %v8217, 4294901760
        %v8455 = vsub.f32 %v8217, %v8454
        %8456 = vmatmul.mubr.f32.gmra.mrb[0].mxu0 %v8455
        %v8457 = vpop.f32.mrb[0].mxu0
        %v8458 = vadd.f32 %v8381, %v8457
        %v8459 = vpop.f32.mrb[0].mxu0
        %v8460 = vadd.f32 %v8383, %v8459
        %8461 = vdwg.mxu0
        %v8462 = vand.u32 %v8223, 4294901760
        %8463 = vmatprep.subr.mxu0 %v8462
        %v8464 = vand.u32 %v8220, 4294901760
        %8465 = vmatpush1.msra.mxu0 %v8464
        %8466 = vmatprep.subr.mxu0 0.0
        %8467 = vmatpush1.msra.mxu0 0.0
        %8468 = vmatprep.subr.mxu0 0.0
        %8469 = vmatpush1.msra.mxu0 0.0
        %8470 = vmatprep.subr.mxu0 0.0
        %8471 = vmatpush1.msra.mxu0 0.0
        %8472 = vmatprep.subr.mxu0 0.0
        %8473 = vmatpush1.msra.mxu0 0.0
        %8474 = vmatprep.subr.mxu0 0.0
        %8475 = vmatpush1.msra.mxu0 0.0
        %8476 = vmatprep.subr.mxu0 0.0
        %8477 = vmatpush1.msra.mxu0 0.0
        %8478 = vmatprep.subr.mxu0 0.0
        %8479 = vmatpush1.msra.mxu0 0.0
        %8480 = vmatprep.subr.mxu0 0.0
        %8481 = vmatpush1.msra.mxu0 0.0
        %8482 = vmatprep.subr.mxu0 0.0
        %8483 = vmatpush1.msra.mxu0 0.0
        %8484 = vmatprep.subr.mxu0 0.0
        %8485 = vmatpush1.msra.mxu0 0.0
        %8486 = vmatprep.subr.mxu0 0.0
        %8487 = vmatpush1.msra.mxu0 0.0
        %8488 = vmatprep.subr.mxu0 0.0
        %8489 = vmatpush1.msra.mxu0 0.0
        %8490 = vmatprep.subr.mxu0 0.0
        %8491 = vmatpush1.msra.mxu0 0.0
        %8492 = vmatprep.subr.mxu0 0.0
        %8493 = vmatpush1.msra.mxu0 0.0
        %8494 = vmatprep.subr.mxu0 0.0
        %8495 = vmatpush1.msra.mxu0 0.0
        %8496 = vmatprep.subr.mxu0 0.0
        %8497 = vmatpush1.msra.mxu0 0.0
        %8498 = vmatprep.subr.mxu0 0.0
        %8499 = vmatpush1.msra.mxu0 0.0
        %8500 = vmatprep.subr.mxu0 0.0
        %8501 = vmatpush1.msra.mxu0 0.0
        %8502 = vmatprep.subr.mxu0 0.0
        %8503 = vmatpush1.msra.mxu0 0.0
        %8504 = vmatprep.subr.mxu0 0.0
        %8505 = vmatpush1.msra.mxu0 0.0
        %8506 = vmatprep.subr.mxu0 0.0
        %8507 = vmatpush1.msra.mxu0 0.0
        %8508 = vmatprep.subr.mxu0 0.0
        %8509 = vmatpush1.msra.mxu0 0.0
        %8510 = vmatprep.subr.mxu0 0.0
        %8511 = vmatpush1.msra.mxu0 0.0
        %8512 = vmatprep.subr.mxu0 0.0
        %8513 = vmatpush1.msra.mxu0 0.0
        %8514 = vmatprep.subr.mxu0 0.0
        %8515 = vmatpush1.msra.mxu0 0.0
        %8516 = vmatprep.subr.mxu0 0.0
        %8517 = vmatpush1.msra.mxu0 0.0
        %8518 = vmatprep.subr.mxu0 0.0
        %8519 = vmatpush1.msra.mxu0 0.0
        %8520 = vmatprep.subr.mxu0 0.0
        %8521 = vmatpush1.msra.mxu0 0.0
        %8522 = vmatprep.subr.mxu0 0.0
        %8523 = vmatpush1.msra.mxu0 0.0
        %8524 = vmatprep.subr.mxu0 0.0
        %8525 = vmatpush1.msra.mxu0 0.0
        %8526 = vmatprep.subr.mxu0 0.0
        %8527 = vmatpush1.msra.mxu0 0.0
        %8528 = vmatprep.mubr.f32.mxu0 0.0
        %v8529 = vand.u32 %v8217, 4294901760
        %v8530 = vsub.f32 %v8217, %v8529
        %v8531 = vand.u32 %v8530, 4294901760
        %8532 = vmatmul.mubr.f32.gmra.mrb[0].mxu0 %v8531
        %v8533 = vpop.f32.mrb[0].mxu0
        %v8534 = vadd.f32 %v8458, %v8533
        %v8535 = vpop.f32.mrb[0].mxu0
        %v8536 = vadd.f32 %v8460, %v8535
        %8537 = vdwg.mxu0
        %v8538 = vand.u32 %v8223, 4294901760
        %v8539 = vsub.f32 %v8223, %v8538
        %v8540 = vand.u32 %v8539, 4294901760
        %8541 = vmatprep.subr.mxu0 %v8540
        %v8542 = vand.u32 %v8220, 4294901760
        %v8543 = vsub.f32 %v8220, %v8542
        %v8544 = vand.u32 %v8543, 4294901760
        %8545 = vmatpush1.msra.mxu0 %v8544
        %8546 = vmatprep.subr.mxu0 0.0
        %8547 = vmatpush1.msra.mxu0 0.0
        %8548 = vmatprep.subr.mxu0 0.0
        %8549 = vmatpush1.msra.mxu0 0.0
        %8550 = vmatprep.subr.mxu0 0.0
        %8551 = vmatpush1.msra.mxu0 0.0
        %8552 = vmatprep.subr.mxu0 0.0
        %8553 = vmatpush1.msra.mxu0 0.0
        %8554 = vmatprep.subr.mxu0 0.0
        %8555 = vmatpush1.msra.mxu0 0.0
        %8556 = vmatprep.subr.mxu0 0.0
        %8557 = vmatpush1.msra.mxu0 0.0
        %8558 = vmatprep.subr.mxu0 0.0
        %8559 = vmatpush1.msra.mxu0 0.0
        %8560 = vmatprep.subr.mxu0 0.0
        %8561 = vmatpush1.msra.mxu0 0.0
        %8562 = vmatprep.subr.mxu0 0.0
        %8563 = vmatpush1.msra.mxu0 0.0
        %8564 = vmatprep.subr.mxu0 0.0
        %8565 = vmatpush1.msra.mxu0 0.0
        %8566 = vmatprep.subr.mxu0 0.0
        %8567 = vmatpush1.msra.mxu0 0.0
        %8568 = vmatprep.subr.mxu0 0.0
        %8569 = vmatpush1.msra.mxu0 0.0
        %8570 = vmatprep.subr.mxu0 0.0
        %8571 = vmatpush1.msra.mxu0 0.0
        %8572 = vmatprep.subr.mxu0 0.0
        %8573 = vmatpush1.msra.mxu0 0.0
        %8574 = vmatprep.subr.mxu0 0.0
        %8575 = vmatpush1.msra.mxu0 0.0
        %8576 = vmatprep.subr.mxu0 0.0
        %8577 = vmatpush1.msra.mxu0 0.0
        %8578 = vmatprep.subr.mxu0 0.0
        %8579 = vmatpush1.msra.mxu0 0.0
        %8580 = vmatprep.subr.mxu0 0.0
        %8581 = vmatpush1.msra.mxu0 0.0
        %8582 = vmatprep.subr.mxu0 0.0
        %8583 = vmatpush1.msra.mxu0 0.0
        %8584 = vmatprep.subr.mxu0 0.0
        %8585 = vmatpush1.msra.mxu0 0.0
        %8586 = vmatprep.subr.mxu0 0.0
        %8587 = vmatpush1.msra.mxu0 0.0
        %8588 = vmatprep.subr.mxu0 0.0
        %8589 = vmatpush1.msra.mxu0 0.0
        %8590 = vmatprep.subr.mxu0 0.0
        %8591 = vmatpush1.msra.mxu0 0.0
        %8592 = vmatprep.subr.mxu0 0.0
        %8593 = vmatpush1.msra.mxu0 0.0
        %8594 = vmatprep.subr.mxu0 0.0
        %8595 = vmatpush1.msra.mxu0 0.0
        %8596 = vmatprep.subr.mxu0 0.0
        %8597 = vmatpush1.msra.mxu0 0.0
        %8598 = vmatprep.subr.mxu0 0.0
        %8599 = vmatpush1.msra.mxu0 0.0
        %8600 = vmatprep.subr.mxu0 0.0
        %8601 = vmatpush1.msra.mxu0 0.0
        %8602 = vmatprep.subr.mxu0 0.0
        %8603 = vmatpush1.msra.mxu0 0.0
        %8604 = vmatprep.subr.mxu0 0.0
        %8605 = vmatpush1.msra.mxu0 0.0
        %8606 = vmatprep.subr.mxu0 0.0
        %8607 = vmatpush1.msra.mxu0 0.0
        %8608 = vmatprep.mubr.f32.mxu0 0.0
        %v8609 = vand.u32 %v8217, 4294901760
        %8610 = vmatmul.mubr.f32.gmra.mrb[0].mxu0 %v8609
        %v8611 = vpop.f32.mrb[0].mxu0
        %v8612 = vadd.f32 %v8534, %v8611
        %v8613 = vpop.f32.mrb[0].mxu0
        %v8614 = vadd.f32 %v8536, %v8613
        %8615 = vdwg.mxu0
        %v8616 = vand.u32 %v8223, 4294901760
        %8617 = vmatprep.subr.mxu0 %v8616
        %v8618 = vand.u32 %v8220, 4294901760
        %8619 = vmatpush1.msra.mxu0 %v8618
        %8620 = vmatprep.subr.mxu0 0.0
        %8621 = vmatpush1.msra.mxu0 0.0
        %8622 = vmatprep.subr.mxu0 0.0
        %8623 = vmatpush1.msra.mxu0 0.0
        %8624 = vmatprep.subr.mxu0 0.0
        %8625 = vmatpush1.msra.mxu0 0.0
        %8626 = vmatprep.subr.mxu0 0.0
        %8627 = vmatpush1.msra.mxu0 0.0
        %8628 = vmatprep.subr.mxu0 0.0
        %8629 = vmatpush1.msra.mxu0 0.0
        %8630 = vmatprep.subr.mxu0 0.0
        %8631 = vmatpush1.msra.mxu0 0.0
        %8632 = vmatprep.subr.mxu0 0.0
        %8633 = vmatpush1.msra.mxu0 0.0
        %8634 = vmatprep.subr.mxu0 0.0
        %8635 = vmatpush1.msra.mxu0 0.0
        %8636 = vmatprep.subr.mxu0 0.0
        %8637 = vmatpush1.msra.mxu0 0.0
        %8638 = vmatprep.subr.mxu0 0.0
        %8639 = vmatpush1.msra.mxu0 0.0
        %8640 = vmatprep.subr.mxu0 0.0
        %8641 = vmatpush1.msra.mxu0 0.0
        %8642 = vmatprep.subr.mxu0 0.0
        %8643 = vmatpush1.msra.mxu0 0.0
        %8644 = vmatprep.subr.mxu0 0.0
        %8645 = vmatpush1.msra.mxu0 0.0
        %8646 = vmatprep.subr.mxu0 0.0
        %8647 = vmatpush1.msra.mxu0 0.0
        %8648 = vmatprep.subr.mxu0 0.0
        %8649 = vmatpush1.msra.mxu0 0.0
        %8650 = vmatprep.subr.mxu0 0.0
        %8651 = vmatpush1.msra.mxu0 0.0
        %8652 = vmatprep.subr.mxu0 0.0
        %8653 = vmatpush1.msra.mxu0 0.0
        %8654 = vmatprep.subr.mxu0 0.0
        %8655 = vmatpush1.msra.mxu0 0.0
        %8656 = vmatprep.subr.mxu0 0.0
        %8657 = vmatpush1.msra.mxu0 0.0
        %8658 = vmatprep.subr.mxu0 0.0
        %8659 = vmatpush1.msra.mxu0 0.0
        %8660 = vmatprep.subr.mxu0 0.0
        %8661 = vmatpush1.msra.mxu0 0.0
        %8662 = vmatprep.subr.mxu0 0.0
        %8663 = vmatpush1.msra.mxu0 0.0
        %8664 = vmatprep.subr.mxu0 0.0
        %8665 = vmatpush1.msra.mxu0 0.0
        %8666 = vmatprep.subr.mxu0 0.0
        %8667 = vmatpush1.msra.mxu0 0.0
        %8668 = vmatprep.subr.mxu0 0.0
        %8669 = vmatpush1.msra.mxu0 0.0
        %8670 = vmatprep.subr.mxu0 0.0
        %8671 = vmatpush1.msra.mxu0 0.0
        %8672 = vmatprep.subr.mxu0 0.0
        %8673 = vmatpush1.msra.mxu0 0.0
        %8674 = vmatprep.subr.mxu0 0.0
        %8675 = vmatpush1.msra.mxu0 0.0
        %8676 = vmatprep.subr.mxu0 0.0
        %8677 = vmatpush1.msra.mxu0 0.0
        %8678 = vmatprep.subr.mxu0 0.0
        %8679 = vmatpush1.msra.mxu0 0.0
        %8680 = vmatprep.subr.mxu0 0.0
        %8681 = vmatpush1.msra.mxu0 0.0
        %8682 = vmatprep.mubr.f32.mxu0 0.0
        %v8683 = vand.u32 %v8217, 4294901760
        %8684 = vmatmul.mubr.f32.gmra.mrb[0].mxu0 %v8683
        %v8685 = vpop.f32.mrb[0].mxu0
        %v8686 = vadd.f32 %v8612, %v8685
        %v8687 = vpop.f32.mrb[0].mxu0
        %v8688 = vadd.f32 %v8614, %v8687
        %8689 = vdwg.mxu0
        %v8690 = vadd.f32 %v8182, %v8686
        %v8691 = vadd.f32 %v8183, %v8688
        %s8692 = scalar_lea.vmem %s2, 32
        %v8693 = vld [vmem:[%s8692] sm:$0xf]
        %v8695 = vsel %vm366, %v8693, 0
        %v8698 = vsel %vm370, %v8212, 0
        %v8701 = vsel %vm370, %v8213, 0
        %v8703 = vand.u32 %v8701, 4294901760
        %8704 = vmatprep.subr.mxu0 %v8703
        %v8705 = vand.u32 %v8698, 4294901760
        %8706 = vmatpush1.msra.mxu0 %v8705
        %8707 = vmatprep.subr.mxu0 0.0
        %8708 = vmatpush1.msra.mxu0 0.0
        %8709 = vmatprep.subr.mxu0 0.0
        %8710 = vmatpush1.msra.mxu0 0.0
        %8711 = vmatprep.subr.mxu0 0.0
        %8712 = vmatpush1.msra.mxu0 0.0
        %8713 = vmatprep.subr.mxu0 0.0
        %8714 = vmatpush1.msra.mxu0 0.0
        %8715 = vmatprep.subr.mxu0 0.0
        %8716 = vmatpush1.msra.mxu0 0.0
        %8717 = vmatprep.subr.mxu0 0.0
        %8718 = vmatpush1.msra.mxu0 0.0
        %8719 = vmatprep.subr.mxu0 0.0
        %8720 = vmatpush1.msra.mxu0 0.0
        %8721 = vmatprep.subr.mxu0 0.0
        %8722 = vmatpush1.msra.mxu0 0.0
        %8723 = vmatprep.subr.mxu0 0.0
        %8724 = vmatpush1.msra.mxu0 0.0
        %8725 = vmatprep.subr.mxu0 0.0
        %8726 = vmatpush1.msra.mxu0 0.0
        %8727 = vmatprep.subr.mxu0 0.0
        %8728 = vmatpush1.msra.mxu0 0.0
        %8729 = vmatprep.subr.mxu0 0.0
        %8730 = vmatpush1.msra.mxu0 0.0
        %8731 = vmatprep.subr.mxu0 0.0
        %8732 = vmatpush1.msra.mxu0 0.0
        %8733 = vmatprep.subr.mxu0 0.0
        %8734 = vmatpush1.msra.mxu0 0.0
        %8735 = vmatprep.subr.mxu0 0.0
        %8736 = vmatpush1.msra.mxu0 0.0
        %8737 = vmatprep.subr.mxu0 0.0
        %8738 = vmatpush1.msra.mxu0 0.0
        %8739 = vmatprep.subr.mxu0 0.0
        %8740 = vmatpush1.msra.mxu0 0.0
        %8741 = vmatprep.subr.mxu0 0.0
        %8742 = vmatpush1.msra.mxu0 0.0
        %8743 = vmatprep.subr.mxu0 0.0
        %8744 = vmatpush1.msra.mxu0 0.0
        %8745 = vmatprep.subr.mxu0 0.0
        %8746 = vmatpush1.msra.mxu0 0.0
        %8747 = vmatprep.subr.mxu0 0.0
        %8748 = vmatpush1.msra.mxu0 0.0
        %8749 = vmatprep.subr.mxu0 0.0
        %8750 = vmatpush1.msra.mxu0 0.0
        %8751 = vmatprep.subr.mxu0 0.0
        %8752 = vmatpush1.msra.mxu0 0.0
        %8753 = vmatprep.subr.mxu0 0.0
        %8754 = vmatpush1.msra.mxu0 0.0
        %8755 = vmatprep.subr.mxu0 0.0
        %8756 = vmatpush1.msra.mxu0 0.0
        %8757 = vmatprep.subr.mxu0 0.0
        %8758 = vmatpush1.msra.mxu0 0.0
        %8759 = vmatprep.subr.mxu0 0.0
        %8760 = vmatpush1.msra.mxu0 0.0
        %8761 = vmatprep.subr.mxu0 0.0
        %8762 = vmatpush1.msra.mxu0 0.0
        %8763 = vmatprep.subr.mxu0 0.0
        %8764 = vmatpush1.msra.mxu0 0.0
        %8765 = vmatprep.subr.mxu0 0.0
        %8766 = vmatpush1.msra.mxu0 0.0
        %8767 = vmatprep.subr.mxu0 0.0
        %8768 = vmatpush1.msra.mxu0 0.0
        %8769 = vmatprep.mubr.f32.mxu0 0.0
        %v8770 = vand.u32 %v8695, 4294901760
        %v8771 = vsub.f32 %v8695, %v8770
        %v8772 = vand.u32 %v8771, 4294901760
        %v8773 = vsub.f32 %v8771, %v8772
        %v8774 = vand.u32 %v8773, 4294901760
        %8775 = vmatmul.mubr.f32.gmra.mrb[0].mxu0 %v8774
        %v8776 = vpop.f32.mrb[0].mxu0
        %v8777 = vadd.f32 0.0, %v8776
        %v8778 = vpop.f32.mrb[0].mxu0
        %v8779 = vadd.f32 0.0, %v8778
        %8780 = vdwg.mxu0
        %v8781 = vand.u32 %v8701, 4294901760
        %v8782 = vsub.f32 %v8701, %v8781
        %v8783 = vand.u32 %v8782, 4294901760
        %v8784 = vsub.f32 %v8782, %v8783
        %v8785 = vand.u32 %v8784, 4294901760
        %8786 = vmatprep.subr.mxu0 %v8785
        %v8787 = vand.u32 %v8698, 4294901760
        %v8788 = vsub.f32 %v8698, %v8787
        %v8789 = vand.u32 %v8788, 4294901760
        %v8790 = vsub.f32 %v8788, %v8789
        %v8791 = vand.u32 %v8790, 4294901760
        %8792 = vmatpush1.msra.mxu0 %v8791
        %8793 = vmatprep.subr.mxu0 0.0
        %8794 = vmatpush1.msra.mxu0 0.0
        %8795 = vmatprep.subr.mxu0 0.0
        %8796 = vmatpush1.msra.mxu0 0.0
        %8797 = vmatprep.subr.mxu0 0.0
        %8798 = vmatpush1.msra.mxu0 0.0
        %8799 = vmatprep.subr.mxu0 0.0
        %8800 = vmatpush1.msra.mxu0 0.0
        %8801 = vmatprep.subr.mxu0 0.0
        %8802 = vmatpush1.msra.mxu0 0.0
        %8803 = vmatprep.subr.mxu0 0.0
        %8804 = vmatpush1.msra.mxu0 0.0
        %8805 = vmatprep.subr.mxu0 0.0
        %8806 = vmatpush1.msra.mxu0 0.0
        %8807 = vmatprep.subr.mxu0 0.0
        %8808 = vmatpush1.msra.mxu0 0.0
        %8809 = vmatprep.subr.mxu0 0.0
        %8810 = vmatpush1.msra.mxu0 0.0
        %8811 = vmatprep.subr.mxu0 0.0
        %8812 = vmatpush1.msra.mxu0 0.0
        %8813 = vmatprep.subr.mxu0 0.0
        %8814 = vmatpush1.msra.mxu0 0.0
        %8815 = vmatprep.subr.mxu0 0.0
        %8816 = vmatpush1.msra.mxu0 0.0
        %8817 = vmatprep.subr.mxu0 0.0
        %8818 = vmatpush1.msra.mxu0 0.0
        %8819 = vmatprep.subr.mxu0 0.0
        %8820 = vmatpush1.msra.mxu0 0.0
        %8821 = vmatprep.subr.mxu0 0.0
        %8822 = vmatpush1.msra.mxu0 0.0
        %8823 = vmatprep.subr.mxu0 0.0
        %8824 = vmatpush1.msra.mxu0 0.0
        %8825 = vmatprep.subr.mxu0 0.0
        %8826 = vmatpush1.msra.mxu0 0.0
        %8827 = vmatprep.subr.mxu0 0.0
        %8828 = vmatpush1.msra.mxu0 0.0
        %8829 = vmatprep.subr.mxu0 0.0
        %8830 = vmatpush1.msra.mxu0 0.0
        %8831 = vmatprep.subr.mxu0 0.0
        %8832 = vmatpush1.msra.mxu0 0.0
        %8833 = vmatprep.subr.mxu0 0.0
        %8834 = vmatpush1.msra.mxu0 0.0
        %8835 = vmatprep.subr.mxu0 0.0
        %8836 = vmatpush1.msra.mxu0 0.0
        %8837 = vmatprep.subr.mxu0 0.0
        %8838 = vmatpush1.msra.mxu0 0.0
        %8839 = vmatprep.subr.mxu0 0.0
        %8840 = vmatpush1.msra.mxu0 0.0
        %8841 = vmatprep.subr.mxu0 0.0
        %8842 = vmatpush1.msra.mxu0 0.0
        %8843 = vmatprep.subr.mxu0 0.0
        %8844 = vmatpush1.msra.mxu0 0.0
        %8845 = vmatprep.subr.mxu0 0.0
        %8846 = vmatpush1.msra.mxu0 0.0
        %8847 = vmatprep.subr.mxu0 0.0
        %8848 = vmatpush1.msra.mxu0 0.0
        %8849 = vmatprep.subr.mxu0 0.0
        %8850 = vmatpush1.msra.mxu0 0.0
        %8851 = vmatprep.subr.mxu0 0.0
        %8852 = vmatpush1.msra.mxu0 0.0
        %8853 = vmatprep.subr.mxu0 0.0
        %8854 = vmatpush1.msra.mxu0 0.0
        %8855 = vmatprep.mubr.f32.mxu0 0.0
        %v8856 = vand.u32 %v8695, 4294901760
        %8857 = vmatmul.mubr.f32.gmra.mrb[0].mxu0 %v8856
        %v8858 = vpop.f32.mrb[0].mxu0
        %v8859 = vadd.f32 %v8777, %v8858
        %v8860 = vpop.f32.mrb[0].mxu0
        %v8861 = vadd.f32 %v8779, %v8860
        %8862 = vdwg.mxu0
        %v8863 = vand.u32 %v8701, 4294901760
        %v8864 = vsub.f32 %v8701, %v8863
        %8865 = vmatprep.subr.mxu0 %v8864
        %v8866 = vand.u32 %v8698, 4294901760
        %v8867 = vsub.f32 %v8698, %v8866
        %8868 = vmatpush1.msra.mxu0 %v8867
        %8869 = vmatprep.subr.mxu0 0.0
        %8870 = vmatpush1.msra.mxu0 0.0
        %8871 = vmatprep.subr.mxu0 0.0
        %8872 = vmatpush1.msra.mxu0 0.0
        %8873 = vmatprep.subr.mxu0 0.0
        %8874 = vmatpush1.msra.mxu0 0.0
        %8875 = vmatprep.subr.mxu0 0.0
        %8876 = vmatpush1.msra.mxu0 0.0
        %8877 = vmatprep.subr.mxu0 0.0
        %8878 = vmatpush1.msra.mxu0 0.0
        %8879 = vmatprep.subr.mxu0 0.0
        %8880 = vmatpush1.msra.mxu0 0.0
        %8881 = vmatprep.subr.mxu0 0.0
        %8882 = vmatpush1.msra.mxu0 0.0
        %8883 = vmatprep.subr.mxu0 0.0
        %8884 = vmatpush1.msra.mxu0 0.0
        %8885 = vmatprep.subr.mxu0 0.0
        %8886 = vmatpush1.msra.mxu0 0.0
        %8887 = vmatprep.subr.mxu0 0.0
        %8888 = vmatpush1.msra.mxu0 0.0
        %8889 = vmatprep.subr.mxu0 0.0
        %8890 = vmatpush1.msra.mxu0 0.0
        %8891 = vmatprep.subr.mxu0 0.0
        %8892 = vmatpush1.msra.mxu0 0.0
        %8893 = vmatprep.subr.mxu0 0.0
        %8894 = vmatpush1.msra.mxu0 0.0
        %8895 = vmatprep.subr.mxu0 0.0
        %8896 = vmatpush1.msra.mxu0 0.0
        %8897 = vmatprep.subr.mxu0 0.0
        %8898 = vmatpush1.msra.mxu0 0.0
        %8899 = vmatprep.subr.mxu0 0.0
        %8900 = vmatpush1.msra.mxu0 0.0
        %8901 = vmatprep.subr.mxu0 0.0
        %8902 = vmatpush1.msra.mxu0 0.0
        %8903 = vmatprep.subr.mxu0 0.0
        %8904 = vmatpush1.msra.mxu0 0.0
        %8905 = vmatprep.subr.mxu0 0.0
        %8906 = vmatpush1.msra.mxu0 0.0
        %8907 = vmatprep.subr.mxu0 0.0
        %8908 = vmatpush1.msra.mxu0 0.0
        %8909 = vmatprep.subr.mxu0 0.0
        %8910 = vmatpush1.msra.mxu0 0.0
        %8911 = vmatprep.subr.mxu0 0.0
        %8912 = vmatpush1.msra.mxu0 0.0
        %8913 = vmatprep.subr.mxu0 0.0
        %8914 = vmatpush1.msra.mxu0 0.0
        %8915 = vmatprep.subr.mxu0 0.0
        %8916 = vmatpush1.msra.mxu0 0.0
        %8917 = vmatprep.subr.mxu0 0.0
        %8918 = vmatpush1.msra.mxu0 0.0
        %8919 = vmatprep.subr.mxu0 0.0
        %8920 = vmatpush1.msra.mxu0 0.0
        %8921 = vmatprep.subr.mxu0 0.0
        %8922 = vmatpush1.msra.mxu0 0.0
        %8923 = vmatprep.subr.mxu0 0.0
        %8924 = vmatpush1.msra.mxu0 0.0
        %8925 = vmatprep.subr.mxu0 0.0
        %8926 = vmatpush1.msra.mxu0 0.0
        %8927 = vmatprep.subr.mxu0 0.0
        %8928 = vmatpush1.msra.mxu0 0.0
        %8929 = vmatprep.subr.mxu0 0.0
        %8930 = vmatpush1.msra.mxu0 0.0
        %8931 = vmatprep.mubr.f32.mxu0 0.0
        %v8932 = vand.u32 %v8695, 4294901760
        %v8933 = vsub.f32 %v8695, %v8932
        %8934 = vmatmul.mubr.f32.gmra.mrb[0].mxu0 %v8933
        %v8935 = vpop.f32.mrb[0].mxu0
        %v8936 = vadd.f32 %v8859, %v8935
        %v8937 = vpop.f32.mrb[0].mxu0
        %v8938 = vadd.f32 %v8861, %v8937
        %8939 = vdwg.mxu0
        %v8940 = vand.u32 %v8701, 4294901760
        %8941 = vmatprep.subr.mxu0 %v8940
        %v8942 = vand.u32 %v8698, 4294901760
        %8943 = vmatpush1.msra.mxu0 %v8942
        %8944 = vmatprep.subr.mxu0 0.0
        %8945 = vmatpush1.msra.mxu0 0.0
        %8946 = vmatprep.subr.mxu0 0.0
        %8947 = vmatpush1.msra.mxu0 0.0
        %8948 = vmatprep.subr.mxu0 0.0
        %8949 = vmatpush1.msra.mxu0 0.0
        %8950 = vmatprep.subr.mxu0 0.0
        %8951 = vmatpush1.msra.mxu0 0.0
        %8952 = vmatprep.subr.mxu0 0.0
        %8953 = vmatpush1.msra.mxu0 0.0
        %8954 = vmatprep.subr.mxu0 0.0
        %8955 = vmatpush1.msra.mxu0 0.0
        %8956 = vmatprep.subr.mxu0 0.0
        %8957 = vmatpush1.msra.mxu0 0.0
        %8958 = vmatprep.subr.mxu0 0.0
        %8959 = vmatpush1.msra.mxu0 0.0
        %8960 = vmatprep.subr.mxu0 0.0
        %8961 = vmatpush1.msra.mxu0 0.0
        %8962 = vmatprep.subr.mxu0 0.0
        %8963 = vmatpush1.msra.mxu0 0.0
        %8964 = vmatprep.subr.mxu0 0.0
        %8965 = vmatpush1.msra.mxu0 0.0
        %8966 = vmatprep.subr.mxu0 0.0
        %8967 = vmatpush1.msra.mxu0 0.0
        %8968 = vmatprep.subr.mxu0 0.0
        %8969 = vmatpush1.msra.mxu0 0.0
        %8970 = vmatprep.subr.mxu0 0.0
        %8971 = vmatpush1.msra.mxu0 0.0
        %8972 = vmatprep.subr.mxu0 0.0
        %8973 = vmatpush1.msra.mxu0 0.0
        %8974 = vmatprep.subr.mxu0 0.0
        %8975 = vmatpush1.msra.mxu0 0.0
        %8976 = vmatprep.subr.mxu0 0.0
        %8977 = vmatpush1.msra.mxu0 0.0
        %8978 = vmatprep.subr.mxu0 0.0
        %8979 = vmatpush1.msra.mxu0 0.0
        %8980 = vmatprep.subr.mxu0 0.0
        %8981 = vmatpush1.msra.mxu0 0.0
        %8982 = vmatprep.subr.mxu0 0.0
        %8983 = vmatpush1.msra.mxu0 0.0
        %8984 = vmatprep.subr.mxu0 0.0
        %8985 = vmatpush1.msra.mxu0 0.0
        %8986 = vmatprep.subr.mxu0 0.0
        %8987 = vmatpush1.msra.mxu0 0.0
        %8988 = vmatprep.subr.mxu0 0.0
        %8989 = vmatpush1.msra.mxu0 0.0
        %8990 = vmatprep.subr.mxu0 0.0
        %8991 = vmatpush1.msra.mxu0 0.0
        %8992 = vmatprep.subr.mxu0 0.0
        %8993 = vmatpush1.msra.mxu0 0.0
        %8994 = vmatprep.subr.mxu0 0.0
        %8995 = vmatpush1.msra.mxu0 0.0
        %8996 = vmatprep.subr.mxu0 0.0
        %8997 = vmatpush1.msra.mxu0 0.0
        %8998 = vmatprep.subr.mxu0 0.0
        %8999 = vmatpush1.msra.mxu0 0.0
        %9000 = vmatprep.subr.mxu0 0.0
        %9001 = vmatpush1.msra.mxu0 0.0
        %9002 = vmatprep.subr.mxu0 0.0
        %9003 = vmatpush1.msra.mxu0 0.0
        %9004 = vmatprep.subr.mxu0 0.0
        %9005 = vmatpush1.msra.mxu0 0.0
        %9006 = vmatprep.mubr.f32.mxu0 0.0
        %v9007 = vand.u32 %v8695, 4294901760
        %v9008 = vsub.f32 %v8695, %v9007
        %v9009 = vand.u32 %v9008, 4294901760
        %9010 = vmatmul.mubr.f32.gmra.mrb[0].mxu0 %v9009
        %v9011 = vpop.f32.mrb[0].mxu0
        %v9012 = vadd.f32 %v8936, %v9011
        %v9013 = vpop.f32.mrb[0].mxu0
        %v9014 = vadd.f32 %v8938, %v9013
        %9015 = vdwg.mxu0
        %v9016 = vand.u32 %v8701, 4294901760
        %v9017 = vsub.f32 %v8701, %v9016
        %v9018 = vand.u32 %v9017, 4294901760
        %9019 = vmatprep.subr.mxu0 %v9018
        %v9020 = vand.u32 %v8698, 4294901760
        %v9021 = vsub.f32 %v8698, %v9020
        %v9022 = vand.u32 %v9021, 4294901760
        %9023 = vmatpush1.msra.mxu0 %v9022
        %9024 = vmatprep.subr.mxu0 0.0
        %9025 = vmatpush1.msra.mxu0 0.0
        %9026 = vmatprep.subr.mxu0 0.0
        %9027 = vmatpush1.msra.mxu0 0.0
        %9028 = vmatprep.subr.mxu0 0.0
        %9029 = vmatpush1.msra.mxu0 0.0
        %9030 = vmatprep.subr.mxu0 0.0
        %9031 = vmatpush1.msra.mxu0 0.0
        %9032 = vmatprep.subr.mxu0 0.0
        %9033 = vmatpush1.msra.mxu0 0.0
        %9034 = vmatprep.subr.mxu0 0.0
        %9035 = vmatpush1.msra.mxu0 0.0
        %9036 = vmatprep.subr.mxu0 0.0
        %9037 = vmatpush1.msra.mxu0 0.0
        %9038 = vmatprep.subr.mxu0 0.0
        %9039 = vmatpush1.msra.mxu0 0.0
        %9040 = vmatprep.subr.mxu0 0.0
        %9041 = vmatpush1.msra.mxu0 0.0
        %9042 = vmatprep.subr.mxu0 0.0
        %9043 = vmatpush1.msra.mxu0 0.0
        %9044 = vmatprep.subr.mxu0 0.0
        %9045 = vmatpush1.msra.mxu0 0.0
        %9046 = vmatprep.subr.mxu0 0.0
        %9047 = vmatpush1.msra.mxu0 0.0
        %9048 = vmatprep.subr.mxu0 0.0
        %9049 = vmatpush1.msra.mxu0 0.0
        %9050 = vmatprep.subr.mxu0 0.0
        %9051 = vmatpush1.msra.mxu0 0.0
        %9052 = vmatprep.subr.mxu0 0.0
        %9053 = vmatpush1.msra.mxu0 0.0
        %9054 = vmatprep.subr.mxu0 0.0
        %9055 = vmatpush1.msra.mxu0 0.0
        %9056 = vmatprep.subr.mxu0 0.0
        %9057 = vmatpush1.msra.mxu0 0.0
        %9058 = vmatprep.subr.mxu0 0.0
        %9059 = vmatpush1.msra.mxu0 0.0
        %9060 = vmatprep.subr.mxu0 0.0
        %9061 = vmatpush1.msra.mxu0 0.0
        %9062 = vmatprep.subr.mxu0 0.0
        %9063 = vmatpush1.msra.mxu0 0.0
        %9064 = vmatprep.subr.mxu0 0.0
        %9065 = vmatpush1.msra.mxu0 0.0
        %9066 = vmatprep.subr.mxu0 0.0
        %9067 = vmatpush1.msra.mxu0 0.0
        %9068 = vmatprep.subr.mxu0 0.0
        %9069 = vmatpush1.msra.mxu0 0.0
        %9070 = vmatprep.subr.mxu0 0.0
        %9071 = vmatpush1.msra.mxu0 0.0
        %9072 = vmatprep.subr.mxu0 0.0
        %9073 = vmatpush1.msra.mxu0 0.0
        %9074 = vmatprep.subr.mxu0 0.0
        %9075 = vmatpush1.msra.mxu0 0.0
        %9076 = vmatprep.subr.mxu0 0.0
        %9077 = vmatpush1.msra.mxu0 0.0
        %9078 = vmatprep.subr.mxu0 0.0
        %9079 = vmatpush1.msra.mxu0 0.0
        %9080 = vmatprep.subr.mxu0 0.0
        %9081 = vmatpush1.msra.mxu0 0.0
        %9082 = vmatprep.subr.mxu0 0.0
        %9083 = vmatpush1.msra.mxu0 0.0
        %9084 = vmatprep.subr.mxu0 0.0
        %9085 = vmatpush1.msra.mxu0 0.0
        %9086 = vmatprep.mubr.f32.mxu0 0.0
        %v9087 = vand.u32 %v8695, 4294901760
        %9088 = vmatmul.mubr.f32.gmra.mrb[0].mxu0 %v9087
        %v9089 = vpop.f32.mrb[0].mxu0
        %v9090 = vadd.f32 %v9012, %v9089
        %v9091 = vpop.f32.mrb[0].mxu0
        %v9092 = vadd.f32 %v9014, %v9091
        %9093 = vdwg.mxu0
        %v9094 = vand.u32 %v8701, 4294901760
        %9095 = vmatprep.subr.mxu0 %v9094
        %v9096 = vand.u32 %v8698, 4294901760
        %9097 = vmatpush1.msra.mxu0 %v9096
        %9098 = vmatprep.subr.mxu0 0.0
        %9099 = vmatpush1.msra.mxu0 0.0
        %9100 = vmatprep.subr.mxu0 0.0
        %9101 = vmatpush1.msra.mxu0 0.0
        %9102 = vmatprep.subr.mxu0 0.0
        %9103 = vmatpush1.msra.mxu0 0.0
        %9104 = vmatprep.subr.mxu0 0.0
        %9105 = vmatpush1.msra.mxu0 0.0
        %9106 = vmatprep.subr.mxu0 0.0
        %9107 = vmatpush1.msra.mxu0 0.0
        %9108 = vmatprep.subr.mxu0 0.0
        %9109 = vmatpush1.msra.mxu0 0.0
        %9110 = vmatprep.subr.mxu0 0.0
        %9111 = vmatpush1.msra.mxu0 0.0
        %9112 = vmatprep.subr.mxu0 0.0
        %9113 = vmatpush1.msra.mxu0 0.0
        %9114 = vmatprep.subr.mxu0 0.0
        %9115 = vmatpush1.msra.mxu0 0.0
        %9116 = vmatprep.subr.mxu0 0.0
        %9117 = vmatpush1.msra.mxu0 0.0
        %9118 = vmatprep.subr.mxu0 0.0
        %9119 = vmatpush1.msra.mxu0 0.0
        %9120 = vmatprep.subr.mxu0 0.0
        %9121 = vmatpush1.msra.mxu0 0.0
        %9122 = vmatprep.subr.mxu0 0.0
        %9123 = vmatpush1.msra.mxu0 0.0
        %9124 = vmatprep.subr.mxu0 0.0
        %9125 = vmatpush1.msra.mxu0 0.0
        %9126 = vmatprep.subr.mxu0 0.0
        %9127 = vmatpush1.msra.mxu0 0.0
        %9128 = vmatprep.subr.mxu0 0.0
        %9129 = vmatpush1.msra.mxu0 0.0
        %9130 = vmatprep.subr.mxu0 0.0
        %9131 = vmatpush1.msra.mxu0 0.0
        %9132 = vmatprep.subr.mxu0 0.0
        %9133 = vmatpush1.msra.mxu0 0.0
        %9134 = vmatprep.subr.mxu0 0.0
        %9135 = vmatpush1.msra.mxu0 0.0
        %9136 = vmatprep.subr.mxu0 0.0
        %9137 = vmatpush1.msra.mxu0 0.0
        %9138 = vmatprep.subr.mxu0 0.0
        %9139 = vmatpush1.msra.mxu0 0.0
        %9140 = vmatprep.subr.mxu0 0.0
        %9141 = vmatpush1.msra.mxu0 0.0
        %9142 = vmatprep.subr.mxu0 0.0
        %9143 = vmatpush1.msra.mxu0 0.0
        %9144 = vmatprep.subr.mxu0 0.0
        %9145 = vmatpush1.msra.mxu0 0.0
        %9146 = vmatprep.subr.mxu0 0.0
        %9147 = vmatpush1.msra.mxu0 0.0
        %9148 = vmatprep.subr.mxu0 0.0
        %9149 = vmatpush1.msra.mxu0 0.0
        %9150 = vmatprep.subr.mxu0 0.0
        %9151 = vmatpush1.msra.mxu0 0.0
        %9152 = vmatprep.subr.mxu0 0.0
        %9153 = vmatpush1.msra.mxu0 0.0
        %9154 = vmatprep.subr.mxu0 0.0
        %9155 = vmatpush1.msra.mxu0 0.0
        %9156 = vmatprep.subr.mxu0 0.0
        %9157 = vmatpush1.msra.mxu0 0.0
        %9158 = vmatprep.subr.mxu0 0.0
        %9159 = vmatpush1.msra.mxu0 0.0
        %9160 = vmatprep.mubr.f32.mxu0 0.0
        %v9161 = vand.u32 %v8695, 4294901760
        %9162 = vmatmul.mubr.f32.gmra.mrb[0].mxu0 %v9161
        %v9163 = vpop.f32.mrb[0].mxu0
        %v9164 = vadd.f32 %v9090, %v9163
        %v9165 = vpop.f32.mrb[0].mxu0
        %v9166 = vadd.f32 %v9092, %v9165
        %9167 = vdwg.mxu0
        %v9168 = vadd.f32 %v8690, %v9164
        %v9169 = vadd.f32 %v8691, %v9166
        %v9170 = vld [vmem:[%s4] sm:$0xf]
        %9172 = vset.pattern.permute.xlu0 0
        %9173 = vperm.xlu0 %9172, %v9170
        %v9174 = vpop.permute.xlu0 %9173
        %v9176 = vadd.f32 %v9168, %v9174
        %v9177 = vadd.f32 %v9169, %v9174
        %v9178 = vmax.f32 %v9176, 0.0
        %v9179 = vmax.f32 %v9177, 0.0
        %v9180 = vld [vmem:[%s5] sm:$0x1]
        %s9181 = sld [smem:[#allocation2]]
        %v9182 = vstv %s9181
        %v9184 = vsel %vm366, %v9180, 0
        %v9187 = vsel %vm370, %v9178, 0
        %v9190 = vsel %vm370, %v9179, 0
        %v9192 = vand.u32 %v9190, 4294901760
        %9193 = vmatprep.subr.mxu0 %v9192
        %v9194 = vand.u32 %v9187, 4294901760
        %9195 = vmatpush1.msra.mxu0 %v9194
        %9196 = vmatprep.subr.mxu0 0.0
        %9197 = vmatpush1.msra.mxu0 0.0
        %9198 = vmatprep.subr.mxu0 0.0
        %9199 = vmatpush1.msra.mxu0 0.0
        %9200 = vmatprep.subr.mxu0 0.0
        %9201 = vmatpush1.msra.mxu0 0.0
        %9202 = vmatprep.subr.mxu0 0.0
        %9203 = vmatpush1.msra.mxu0 0.0
        %9204 = vmatprep.subr.mxu0 0.0
        %9205 = vmatpush1.msra.mxu0 0.0
        %9206 = vmatprep.subr.mxu0 0.0
        %9207 = vmatpush1.msra.mxu0 0.0
        %9208 = vmatprep.subr.mxu0 0.0
        %9209 = vmatpush1.msra.mxu0 0.0
        %9210 = vmatprep.subr.mxu0 0.0
        %9211 = vmatpush1.msra.mxu0 0.0
        %9212 = vmatprep.subr.mxu0 0.0
        %9213 = vmatpush1.msra.mxu0 0.0
        %9214 = vmatprep.subr.mxu0 0.0
        %9215 = vmatpush1.msra.mxu0 0.0
        %9216 = vmatprep.subr.mxu0 0.0
        %9217 = vmatpush1.msra.mxu0 0.0
        %9218 = vmatprep.subr.mxu0 0.0
        %9219 = vmatpush1.msra.mxu0 0.0
        %9220 = vmatprep.subr.mxu0 0.0
        %9221 = vmatpush1.msra.mxu0 0.0
        %9222 = vmatprep.subr.mxu0 0.0
        %9223 = vmatpush1.msra.mxu0 0.0
        %9224 = vmatprep.subr.mxu0 0.0
        %9225 = vmatpush1.msra.mxu0 0.0
        %9226 = vmatprep.subr.mxu0 0.0
        %9227 = vmatpush1.msra.mxu0 0.0
        %9228 = vmatprep.subr.mxu0 0.0
        %9229 = vmatpush1.msra.mxu0 0.0
        %9230 = vmatprep.subr.mxu0 0.0
        %9231 = vmatpush1.msra.mxu0 0.0
        %9232 = vmatprep.subr.mxu0 0.0
        %9233 = vmatpush1.msra.mxu0 0.0
        %9234 = vmatprep.subr.mxu0 0.0
        %9235 = vmatpush1.msra.mxu0 0.0
        %9236 = vmatprep.subr.mxu0 0.0
        %9237 = vmatpush1.msra.mxu0 0.0
        %9238 = vmatprep.subr.mxu0 0.0
        %9239 = vmatpush1.msra.mxu0 0.0
        %9240 = vmatprep.subr.mxu0 0.0
        %9241 = vmatpush1.msra.mxu0 0.0
        %9242 = vmatprep.subr.mxu0 0.0
        %9243 = vmatpush1.msra.mxu0 0.0
        %9244 = vmatprep.subr.mxu0 0.0
        %9245 = vmatpush1.msra.mxu0 0.0
        %9246 = vmatprep.subr.mxu0 0.0
        %9247 = vmatpush1.msra.mxu0 0.0
        %9248 = vmatprep.subr.mxu0 0.0
        %9249 = vmatpush1.msra.mxu0 0.0
        %9250 = vmatprep.subr.mxu0 0.0
        %9251 = vmatpush1.msra.mxu0 0.0
        %9252 = vmatprep.subr.mxu0 0.0
        %9253 = vmatpush1.msra.mxu0 0.0
        %9254 = vmatprep.subr.mxu0 0.0
        %9255 = vmatpush1.msra.mxu0 0.0
        %9256 = vmatprep.subr.mxu0 0.0
        %9257 = vmatpush1.msra.mxu0 0.0
        %9258 = vmatprep.mubr.f32.mxu0 0.0
        %v9259 = vand.u32 %v9184, 4294901760
        %v9260 = vsub.f32 %v9184, %v9259
        %v9261 = vand.u32 %v9260, 4294901760
        %v9262 = vsub.f32 %v9260, %v9261
        %v9263 = vand.u32 %v9262, 4294901760
        %9264 = vmatmul.mubr.f32.gmra.mrb[0].mxu0 %v9263
        %v9265 = vpop.f32.mrb[0].mxu0
        %v9266 = vadd.f32 %v9182, %v9265
        %v9267 = vpop.f32.mrb[0].mxu0
        %v9268 = vadd.f32 %v9182, %v9267
        %9269 = vdwg.mxu0
        %v9270 = vand.u32 %v9190, 4294901760
        %v9271 = vsub.f32 %v9190, %v9270
        %v9272 = vand.u32 %v9271, 4294901760
        %v9273 = vsub.f32 %v9271, %v9272
        %v9274 = vand.u32 %v9273, 4294901760
        %9275 = vmatprep.subr.mxu0 %v9274
        %v9276 = vand.u32 %v9187, 4294901760
        %v9277 = vsub.f32 %v9187, %v9276
        %v9278 = vand.u32 %v9277, 4294901760
        %v9279 = vsub.f32 %v9277, %v9278
        %v9280 = vand.u32 %v9279, 4294901760
        %9281 = vmatpush1.msra.mxu0 %v9280
        %9282 = vmatprep.subr.mxu0 0.0
        %9283 = vmatpush1.msra.mxu0 0.0
        %9284 = vmatprep.subr.mxu0 0.0
        %9285 = vmatpush1.msra.mxu0 0.0
        %9286 = vmatprep.subr.mxu0 0.0
        %9287 = vmatpush1.msra.mxu0 0.0
        %9288 = vmatprep.subr.mxu0 0.0
        %9289 = vmatpush1.msra.mxu0 0.0
        %9290 = vmatprep.subr.mxu0 0.0
        %9291 = vmatpush1.msra.mxu0 0.0
        %9292 = vmatprep.subr.mxu0 0.0
        %9293 = vmatpush1.msra.mxu0 0.0
        %9294 = vmatprep.subr.mxu0 0.0
        %9295 = vmatpush1.msra.mxu0 0.0
        %9296 = vmatprep.subr.mxu0 0.0
        %9297 = vmatpush1.msra.mxu0 0.0
        %9298 = vmatprep.subr.mxu0 0.0
        %9299 = vmatpush1.msra.mxu0 0.0
        %9300 = vmatprep.subr.mxu0 0.0
        %9301 = vmatpush1.msra.mxu0 0.0
        %9302 = vmatprep.subr.mxu0 0.0
        %9303 = vmatpush1.msra.mxu0 0.0
        %9304 = vmatprep.subr.mxu0 0.0
        %9305 = vmatpush1.msra.mxu0 0.0
        %9306 = vmatprep.subr.mxu0 0.0
        %9307 = vmatpush1.msra.mxu0 0.0
        %9308 = vmatprep.subr.mxu0 0.0
        %9309 = vmatpush1.msra.mxu0 0.0
        %9310 = vmatprep.subr.mxu0 0.0
        %9311 = vmatpush1.msra.mxu0 0.0
        %9312 = vmatprep.subr.mxu0 0.0
        %9313 = vmatpush1.msra.mxu0 0.0
        %9314 = vmatprep.subr.mxu0 0.0
        %9315 = vmatpush1.msra.mxu0 0.0
        %9316 = vmatprep.subr.mxu0 0.0
        %9317 = vmatpush1.msra.mxu0 0.0
        %9318 = vmatprep.subr.mxu0 0.0
        %9319 = vmatpush1.msra.mxu0 0.0
        %9320 = vmatprep.subr.mxu0 0.0
        %9321 = vmatpush1.msra.mxu0 0.0
        %9322 = vmatprep.subr.mxu0 0.0
        %9323 = vmatpush1.msra.mxu0 0.0
        %9324 = vmatprep.subr.mxu0 0.0
        %9325 = vmatpush1.msra.mxu0 0.0
        %9326 = vmatprep.subr.mxu0 0.0
        %9327 = vmatpush1.msra.mxu0 0.0
        %9328 = vmatprep.subr.mxu0 0.0
        %9329 = vmatpush1.msra.mxu0 0.0
        %9330 = vmatprep.subr.mxu0 0.0
        %9331 = vmatpush1.msra.mxu0 0.0
        %9332 = vmatprep.subr.mxu0 0.0
        %9333 = vmatpush1.msra.mxu0 0.0
        %9334 = vmatprep.subr.mxu0 0.0
        %9335 = vmatpush1.msra.mxu0 0.0
        %9336 = vmatprep.subr.mxu0 0.0
        %9337 = vmatpush1.msra.mxu0 0.0
        %9338 = vmatprep.subr.mxu0 0.0
        %9339 = vmatpush1.msra.mxu0 0.0
        %9340 = vmatprep.subr.mxu0 0.0
        %9341 = vmatpush1.msra.mxu0 0.0
        %9342 = vmatprep.subr.mxu0 0.0
        %9343 = vmatpush1.msra.mxu0 0.0
        %9344 = vmatprep.mubr.f32.mxu0 0.0
        %v9345 = vand.u32 %v9184, 4294901760
        %9346 = vmatmul.mubr.f32.gmra.mrb[0].mxu0 %v9345
        %v9347 = vpop.f32.mrb[0].mxu0
        %v9348 = vadd.f32 %v9266, %v9347
        %v9349 = vpop.f32.mrb[0].mxu0
        %v9350 = vadd.f32 %v9268, %v9349
        %9351 = vdwg.mxu0
        %v9352 = vand.u32 %v9190, 4294901760
        %v9353 = vsub.f32 %v9190, %v9352
        %9354 = vmatprep.subr.mxu0 %v9353
        %v9355 = vand.u32 %v9187, 4294901760
        %v9356 = vsub.f32 %v9187, %v9355
        %9357 = vmatpush1.msra.mxu0 %v9356
        %9358 = vmatprep.subr.mxu0 0.0
        %9359 = vmatpush1.msra.mxu0 0.0
        %9360 = vmatprep.subr.mxu0 0.0
        %9361 = vmatpush1.msra.mxu0 0.0
        %9362 = vmatprep.subr.mxu0 0.0
        %9363 = vmatpush1.msra.mxu0 0.0
        %9364 = vmatprep.subr.mxu0 0.0
        %9365 = vmatpush1.msra.mxu0 0.0
        %9366 = vmatprep.subr.mxu0 0.0
        %9367 = vmatpush1.msra.mxu0 0.0
        %9368 = vmatprep.subr.mxu0 0.0
        %9369 = vmatpush1.msra.mxu0 0.0
        %9370 = vmatprep.subr.mxu0 0.0
        %9371 = vmatpush1.msra.mxu0 0.0
        %9372 = vmatprep.subr.mxu0 0.0
        %9373 = vmatpush1.msra.mxu0 0.0
        %9374 = vmatprep.subr.mxu0 0.0
        %9375 = vmatpush1.msra.mxu0 0.0
        %9376 = vmatprep.subr.mxu0 0.0
        %9377 = vmatpush1.msra.mxu0 0.0
        %9378 = vmatprep.subr.mxu0 0.0
        %9379 = vmatpush1.msra.mxu0 0.0
        %9380 = vmatprep.subr.mxu0 0.0
        %9381 = vmatpush1.msra.mxu0 0.0
        %9382 = vmatprep.subr.mxu0 0.0
        %9383 = vmatpush1.msra.mxu0 0.0
        %9384 = vmatprep.subr.mxu0 0.0
        %9385 = vmatpush1.msra.mxu0 0.0
        %9386 = vmatprep.subr.mxu0 0.0
        %9387 = vmatpush1.msra.mxu0 0.0
        %9388 = vmatprep.subr.mxu0 0.0
        %9389 = vmatpush1.msra.mxu0 0.0
        %9390 = vmatprep.subr.mxu0 0.0
        %9391 = vmatpush1.msra.mxu0 0.0
        %9392 = vmatprep.subr.mxu0 0.0
        %9393 = vmatpush1.msra.mxu0 0.0
        %9394 = vmatprep.subr.mxu0 0.0
        %9395 = vmatpush1.msra.mxu0 0.0
        %9396 = vmatprep.subr.mxu0 0.0
        %9397 = vmatpush1.msra.mxu0 0.0
        %9398 = vmatprep.subr.mxu0 0.0
        %9399 = vmatpush1.msra.mxu0 0.0
        %9400 = vmatprep.subr.mxu0 0.0
        %9401 = vmatpush1.msra.mxu0 0.0
        %9402 = vmatprep.subr.mxu0 0.0
        %9403 = vmatpush1.msra.mxu0 0.0
        %9404 = vmatprep.subr.mxu0 0.0
        %9405 = vmatpush1.msra.mxu0 0.0
        %9406 = vmatprep.subr.mxu0 0.0
        %9407 = vmatpush1.msra.mxu0 0.0
        %9408 = vmatprep.subr.mxu0 0.0
        %9409 = vmatpush1.msra.mxu0 0.0
        %9410 = vmatprep.subr.mxu0 0.0
        %9411 = vmatpush1.msra.mxu0 0.0
        %9412 = vmatprep.subr.mxu0 0.0
        %9413 = vmatpush1.msra.mxu0 0.0
        %9414 = vmatprep.subr.mxu0 0.0
        %9415 = vmatpush1.msra.mxu0 0.0
        %9416 = vmatprep.subr.mxu0 0.0
        %9417 = vmatpush1.msra.mxu0 0.0
        %9418 = vmatprep.subr.mxu0 0.0
        %9419 = vmatpush1.msra.mxu0 0.0
        %9420 = vmatprep.mubr.f32.mxu0 0.0
        %v9421 = vand.u32 %v9184, 4294901760
        %v9422 = vsub.f32 %v9184, %v9421
        %9423 = vmatmul.mubr.f32.gmra.mrb[0].mxu0 %v9422
        %v9424 = vpop.f32.mrb[0].mxu0
        %v9425 = vadd.f32 %v9348, %v9424
        %v9426 = vpop.f32.mrb[0].mxu0
        %v9427 = vadd.f32 %v9350, %v9426
        %9428 = vdwg.mxu0
        %v9429 = vand.u32 %v9190, 4294901760
        %9430 = vmatprep.subr.mxu0 %v9429
        %v9431 = vand.u32 %v9187, 4294901760
        %9432 = vmatpush1.msra.mxu0 %v9431
        %9433 = vmatprep.subr.mxu0 0.0
        %9434 = vmatpush1.msra.mxu0 0.0
        %9435 = vmatprep.subr.mxu0 0.0
        %9436 = vmatpush1.msra.mxu0 0.0
        %9437 = vmatprep.subr.mxu0 0.0
        %9438 = vmatpush1.msra.mxu0 0.0
        %9439 = vmatprep.subr.mxu0 0.0
        %9440 = vmatpush1.msra.mxu0 0.0
        %9441 = vmatprep.subr.mxu0 0.0
        %9442 = vmatpush1.msra.mxu0 0.0
        %9443 = vmatprep.subr.mxu0 0.0
        %9444 = vmatpush1.msra.mxu0 0.0
        %9445 = vmatprep.subr.mxu0 0.0
        %9446 = vmatpush1.msra.mxu0 0.0
        %9447 = vmatprep.subr.mxu0 0.0
        %9448 = vmatpush1.msra.mxu0 0.0
        %9449 = vmatprep.subr.mxu0 0.0
        %9450 = vmatpush1.msra.mxu0 0.0
        %9451 = vmatprep.subr.mxu0 0.0
        %9452 = vmatpush1.msra.mxu0 0.0
        %9453 = vmatprep.subr.mxu0 0.0
        %9454 = vmatpush1.msra.mxu0 0.0
        %9455 = vmatprep.subr.mxu0 0.0
        %9456 = vmatpush1.msra.mxu0 0.0
        %9457 = vmatprep.subr.mxu0 0.0
        %9458 = vmatpush1.msra.mxu0 0.0
        %9459 = vmatprep.subr.mxu0 0.0
        %9460 = vmatpush1.msra.mxu0 0.0
        %9461 = vmatprep.subr.mxu0 0.0
        %9462 = vmatpush1.msra.mxu0 0.0
        %9463 = vmatprep.subr.mxu0 0.0
        %9464 = vmatpush1.msra.mxu0 0.0
        %9465 = vmatprep.subr.mxu0 0.0
        %9466 = vmatpush1.msra.mxu0 0.0
        %9467 = vmatprep.subr.mxu0 0.0
        %9468 = vmatpush1.msra.mxu0 0.0
        %9469 = vmatprep.subr.mxu0 0.0
        %9470 = vmatpush1.msra.mxu0 0.0
        %9471 = vmatprep.subr.mxu0 0.0
        %9472 = vmatpush1.msra.mxu0 0.0
        %9473 = vmatprep.subr.mxu0 0.0
        %9474 = vmatpush1.msra.mxu0 0.0
        %9475 = vmatprep.subr.mxu0 0.0
        %9476 = vmatpush1.msra.mxu0 0.0
        %9477 = vmatprep.subr.mxu0 0.0
        %9478 = vmatpush1.msra.mxu0 0.0
        %9479 = vmatprep.subr.mxu0 0.0
        %9480 = vmatpush1.msra.mxu0 0.0
        %9481 = vmatprep.subr.mxu0 0.0
        %9482 = vmatpush1.msra.mxu0 0.0
        %9483 = vmatprep.subr.mxu0 0.0
        %9484 = vmatpush1.msra.mxu0 0.0
        %9485 = vmatprep.subr.mxu0 0.0
        %9486 = vmatpush1.msra.mxu0 0.0
        %9487 = vmatprep.subr.mxu0 0.0
        %9488 = vmatpush1.msra.mxu0 0.0
        %9489 = vmatprep.subr.mxu0 0.0
        %9490 = vmatpush1.msra.mxu0 0.0
        %9491 = vmatprep.subr.mxu0 0.0
        %9492 = vmatpush1.msra.mxu0 0.0
        %9493 = vmatprep.subr.mxu0 0.0
        %9494 = vmatpush1.msra.mxu0 0.0
        %9495 = vmatprep.mubr.f32.mxu0 0.0
        %v9496 = vand.u32 %v9184, 4294901760
        %v9497 = vsub.f32 %v9184, %v9496
        %v9498 = vand.u32 %v9497, 4294901760
        %9499 = vmatmul.mubr.f32.gmra.mrb[0].mxu0 %v9498
        %v9500 = vpop.f32.mrb[0].mxu0
        %v9501 = vadd.f32 %v9425, %v9500
        %v9502 = vpop.f32.mrb[0].mxu0
        %v9503 = vadd.f32 %v9427, %v9502
        %9504 = vdwg.mxu0
        %v9505 = vand.u32 %v9190, 4294901760
        %v9506 = vsub.f32 %v9190, %v9505
        %v9507 = vand.u32 %v9506, 4294901760
        %9508 = vmatprep.subr.mxu0 %v9507
        %v9509 = vand.u32 %v9187, 4294901760
        %v9510 = vsub.f32 %v9187, %v9509
        %v9511 = vand.u32 %v9510, 4294901760
        %9512 = vmatpush1.msra.mxu0 %v9511
        %9513 = vmatprep.subr.mxu0 0.0
        %9514 = vmatpush1.msra.mxu0 0.0
        %9515 = vmatprep.subr.mxu0 0.0
        %9516 = vmatpush1.msra.mxu0 0.0
        %9517 = vmatprep.subr.mxu0 0.0
        %9518 = vmatpush1.msra.mxu0 0.0
        %9519 = vmatprep.subr.mxu0 0.0
        %9520 = vmatpush1.msra.mxu0 0.0
        %9521 = vmatprep.subr.mxu0 0.0
        %9522 = vmatpush1.msra.mxu0 0.0
        %9523 = vmatprep.subr.mxu0 0.0
        %9524 = vmatpush1.msra.mxu0 0.0
        %9525 = vmatprep.subr.mxu0 0.0
        %9526 = vmatpush1.msra.mxu0 0.0
        %9527 = vmatprep.subr.mxu0 0.0
        %9528 = vmatpush1.msra.mxu0 0.0
        %9529 = vmatprep.subr.mxu0 0.0
        %9530 = vmatpush1.msra.mxu0 0.0
        %9531 = vmatprep.subr.mxu0 0.0
        %9532 = vmatpush1.msra.mxu0 0.0
        %9533 = vmatprep.subr.mxu0 0.0
        %9534 = vmatpush1.msra.mxu0 0.0
        %9535 = vmatprep.subr.mxu0 0.0
        %9536 = vmatpush1.msra.mxu0 0.0
        %9537 = vmatprep.subr.mxu0 0.0
        %9538 = vmatpush1.msra.mxu0 0.0
        %9539 = vmatprep.subr.mxu0 0.0
        %9540 = vmatpush1.msra.mxu0 0.0
        %9541 = vmatprep.subr.mxu0 0.0
        %9542 = vmatpush1.msra.mxu0 0.0
        %9543 = vmatprep.subr.mxu0 0.0
        %9544 = vmatpush1.msra.mxu0 0.0
        %9545 = vmatprep.subr.mxu0 0.0
        %9546 = vmatpush1.msra.mxu0 0.0
        %9547 = vmatprep.subr.mxu0 0.0
        %9548 = vmatpush1.msra.mxu0 0.0
        %9549 = vmatprep.subr.mxu0 0.0
        %9550 = vmatpush1.msra.mxu0 0.0
        %9551 = vmatprep.subr.mxu0 0.0
        %9552 = vmatpush1.msra.mxu0 0.0
        %9553 = vmatprep.subr.mxu0 0.0
        %9554 = vmatpush1.msra.mxu0 0.0
        %9555 = vmatprep.subr.mxu0 0.0
        %9556 = vmatpush1.msra.mxu0 0.0
        %9557 = vmatprep.subr.mxu0 0.0
        %9558 = vmatpush1.msra.mxu0 0.0
        %9559 = vmatprep.subr.mxu0 0.0
        %9560 = vmatpush1.msra.mxu0 0.0
        %9561 = vmatprep.subr.mxu0 0.0
        %9562 = vmatpush1.msra.mxu0 0.0
        %9563 = vmatprep.subr.mxu0 0.0
        %9564 = vmatpush1.msra.mxu0 0.0
        %9565 = vmatprep.subr.mxu0 0.0
        %9566 = vmatpush1.msra.mxu0 0.0
        %9567 = vmatprep.subr.mxu0 0.0
        %9568 = vmatpush1.msra.mxu0 0.0
        %9569 = vmatprep.subr.mxu0 0.0
        %9570 = vmatpush1.msra.mxu0 0.0
        %9571 = vmatprep.subr.mxu0 0.0
        %9572 = vmatpush1.msra.mxu0 0.0
        %9573 = vmatprep.subr.mxu0 0.0
        %9574 = vmatpush1.msra.mxu0 0.0
        %9575 = vmatprep.mubr.f32.mxu0 0.0
        %v9576 = vand.u32 %v9184, 4294901760
        %9577 = vmatmul.mubr.f32.gmra.mrb[0].mxu0 %v9576
        %v9578 = vpop.f32.mrb[0].mxu0
        %v9579 = vadd.f32 %v9501, %v9578
        %v9580 = vpop.f32.mrb[0].mxu0
        %v9581 = vadd.f32 %v9503, %v9580
        %9582 = vdwg.mxu0
        %v9583 = vand.u32 %v9190, 4294901760
        %9584 = vmatprep.subr.mxu0 %v9583
        %v9585 = vand.u32 %v9187, 4294901760
        %9586 = vmatpush1.msra.mxu0 %v9585
        %9587 = vmatprep.subr.mxu0 0.0
        %9588 = vmatpush1.msra.mxu0 0.0
        %9589 = vmatprep.subr.mxu0 0.0
        %9590 = vmatpush1.msra.mxu0 0.0
        %9591 = vmatprep.subr.mxu0 0.0
        %9592 = vmatpush1.msra.mxu0 0.0
        %9593 = vmatprep.subr.mxu0 0.0
        %9594 = vmatpush1.msra.mxu0 0.0
        %9595 = vmatprep.subr.mxu0 0.0
        %9596 = vmatpush1.msra.mxu0 0.0
        %9597 = vmatprep.subr.mxu0 0.0
        %9598 = vmatpush1.msra.mxu0 0.0
        %9599 = vmatprep.subr.mxu0 0.0
        %9600 = vmatpush1.msra.mxu0 0.0
        %9601 = vmatprep.subr.mxu0 0.0
        %9602 = vmatpush1.msra.mxu0 0.0
        %9603 = vmatprep.subr.mxu0 0.0
        %9604 = vmatpush1.msra.mxu0 0.0
        %9605 = vmatprep.subr.mxu0 0.0
        %9606 = vmatpush1.msra.mxu0 0.0
        %9607 = vmatprep.subr.mxu0 0.0
        %9608 = vmatpush1.msra.mxu0 0.0
        %9609 = vmatprep.subr.mxu0 0.0
        %9610 = vmatpush1.msra.mxu0 0.0
        %9611 = vmatprep.subr.mxu0 0.0
        %9612 = vmatpush1.msra.mxu0 0.0
        %9613 = vmatprep.subr.mxu0 0.0
        %9614 = vmatpush1.msra.mxu0 0.0
        %9615 = vmatprep.subr.mxu0 0.0
        %9616 = vmatpush1.msra.mxu0 0.0
        %9617 = vmatprep.subr.mxu0 0.0
        %9618 = vmatpush1.msra.mxu0 0.0
        %9619 = vmatprep.subr.mxu0 0.0
        %9620 = vmatpush1.msra.mxu0 0.0
        %9621 = vmatprep.subr.mxu0 0.0
        %9622 = vmatpush1.msra.mxu0 0.0
        %9623 = vmatprep.subr.mxu0 0.0
        %9624 = vmatpush1.msra.mxu0 0.0
        %9625 = vmatprep.subr.mxu0 0.0
        %9626 = vmatpush1.msra.mxu0 0.0
        %9627 = vmatprep.subr.mxu0 0.0
        %9628 = vmatpush1.msra.mxu0 0.0
        %9629 = vmatprep.subr.mxu0 0.0
        %9630 = vmatpush1.msra.mxu0 0.0
        %9631 = vmatprep.subr.mxu0 0.0
        %9632 = vmatpush1.msra.mxu0 0.0
        %9633 = vmatprep.subr.mxu0 0.0
        %9634 = vmatpush1.msra.mxu0 0.0
        %9635 = vmatprep.subr.mxu0 0.0
        %9636 = vmatpush1.msra.mxu0 0.0
        %9637 = vmatprep.subr.mxu0 0.0
        %9638 = vmatpush1.msra.mxu0 0.0
        %9639 = vmatprep.subr.mxu0 0.0
        %9640 = vmatpush1.msra.mxu0 0.0
        %9641 = vmatprep.subr.mxu0 0.0
        %9642 = vmatpush1.msra.mxu0 0.0
        %9643 = vmatprep.subr.mxu0 0.0
        %9644 = vmatpush1.msra.mxu0 0.0
        %9645 = vmatprep.subr.mxu0 0.0
        %9646 = vmatpush1.msra.mxu0 0.0
        %9647 = vmatprep.subr.mxu0 0.0
        %9648 = vmatpush1.msra.mxu0 0.0
        %9649 = vmatprep.mubr.f32.mxu0 0.0
        %v9650 = vand.u32 %v9184, 4294901760
        %9651 = vmatmul.mubr.f32.gmra.mrb[0].mxu0 %v9650
        %v9652 = vpop.f32.mrb[0].mxu0
        %v9653 = vadd.f32 %v9579, %v9652
        %v9654 = vpop.f32.mrb[0].mxu0
        %v9655 = vadd.f32 %v9581, %v9654
        %9656 = vdwg.mxu0
        %v9657 = vsub.f32 0.0, %v9653
        %v9658 = vsub.f32 0.0, %v9655
        %v9659 = vmul.f32 %v9657, 1.442695
        %v9660 = vpow.pop %v9659
        %v9661 = vmul.f32 %v9658, 1.442695
        %v9662 = vpow.pop %v9661
        %v9663 = vadd.f32 %v9660, 1.0
        %v9664 = vadd.f32 %v9662, 1.0
        %v9665 = vrcp.pop %v9663
        %v9666 = vrcp.pop %v9664
        %v9667 = vlaneseq
        %v9668 = vshrl.u32 %v9667, 7
        %v9669 = vsub.s32 0, %v9668
        %v9670 = vrot.slane %v9665, %v9669
        %v9671 = vlaneseq
        %v9672 = vshrl.u32 %v9671, 7
        %v9673 = vsub.s32 0, %v9672
        %v9674 = vrot.slane %v9666, %v9673
        %v9677 = vcombine.low %v9670, %v9674
        %v9679 = vmul.f32 %v326, %v9677
        %9680 = vst [vmem:[%s314] sm:$0xff] %v9679
        %s9681 = sand.u32 %s209, 1
        %s9682 = scalar_lea.sflag [#allocation4], %s9681
        %s9683 = sand.u32 %s209, 1
        %s9684 = smul.addr %s9683, 8
        %s9685 = scalar_lea.vmem [#allocation3], %s9684
        // Predicated region
        $region53: #{tpu_custom_call.1} parent=51 // pred_check
          %p9686 = pneg %p219
        $region54: #{tpu_custom_call.1} parent=51 // pred_check_branch
          %9688 = sbr.rel (%p9686) target = $region56
        $region55: #{tpu_custom_call.1} parent=51 // pred_region
          %s9690 = ssub.s32 128, 128
          %9691 = vsyncadd %s9682, %s9690
          %s9692 = smul.addr %s23, 2
          %s9693 = smul.addr %s9692, 64
          %s9694 = scalar_lea.hbm %s8, %s9693
          %s9696 = sshll.u32 %s9685, 4
          %s9697 = int_to_ptr.vmem [resolvable:$true] %s9696
          %9699 = dma.vmem_to_hbm [thread:$0]  %s9697, 128, %s9694, %s9682
        $region56: #{tpu_custom_call.1} parent=51 // pred_fallthru
          _
      $region52: #{tpu_custom_call.1} parent=5 // pred_fallthru
        _
      %p9700 = scmp.le.s32.totalorder 2, %s18
      // Predicated region
      $region57: #{tpu_custom_call.1} parent=5 // pred_check
        %p9701 = pneg %p9700
      $region58: #{tpu_custom_call.1} parent=5 // pred_check_branch
        %9703 = sbr.rel (%p9701) target = $region60
      $region59: #{tpu_custom_call.1} parent=5 // pred_region
        %s9704 = ssub.s32 %s18, 2
        // Predicated region
        $region61: #{tpu_custom_call.1} parent=59 // pred_check
          %p9705 = pneg %p225
        $region62: #{tpu_custom_call.1} parent=59 // pred_check_branch
          %9707 = sbr.rel (%p9705) target = $region64
        $region63: #{tpu_custom_call.1} parent=59 // pred_region
          %s9708 = sand.u32 %s210, 1
          %s9709 = scalar_lea.sflag [#allocation4], %s9708
          %s9710 = sand.u32 %s210, 1
          %s9711 = smul.addr %s9710, 8
          %s9712 = scalar_lea.vmem [#allocation3], %s9711
          %9713 = dma.done %s9709, 128
        $region64: #{tpu_custom_call.1} parent=59 // pred_fallthru
          _
      $region60: #{tpu_custom_call.1} parent=5 // pred_fallthru
        _
    $region6: #{tpu_custom_call.1} parent=1 // loop_footer
      %s22 = sadd.s32 1, %s18
    $region7: #{tpu_custom_call.1} parent=1 // loop_footer_branch
      %17 = sbr.rel target = $region3
    $region8: #{tpu_custom_call.1} parent=1 // loop_exit
      _
    %9714 = vsyncpa [#allocation4], 1
    %s9715 = scalar_lea.sflag [#allocation4], 1
    %9716 = vsyncpa %s9715, 1

</llo_original>
